<compile_context>
chip_gen: v5e
topology: v5e:2x2
jax: 0.10.0
libtpu: 0.0.40
codegen_flags: <defaults>
</compile_context>

<pallas_src>
import functools

import numpy as np

import jax
import jax.numpy as jnp
from jax import lax
from jax.experimental import pallas as pl
from jax.experimental.pallas import tpu as pltpu


# ------------------------------ fused kernel ------------------------------- #
def _cnn_fused_kernel(x_ref, w1_ref, b1_ref, w2_ref, b2_ref, w3_ref, b3_ref,
                      fc1_ref, fc1b_ref, fc2_ref, fc2b_ref, out_ref, acc2_ref,
                      *, nb):
    """Whole forward pass for one batch tile of nb samples.

    Activation layout is 2-D (H*nb, W*C): row = h*nb + b.  Column layout of a
    conv output is even-w positions in the first half of lanes, odd-w in the
    second half (col = (w%2)*(Wo/2*C) + (w//2)*C + c), so the W-pool is a
    single max of the two halves and the pooled activation is lane-compact.
    """
    f32, bf16 = jnp.float32, jnp.bfloat16

    def relu_bias(acc, b_ref):
        return jnp.maximum(acc + b_ref[...], 0.0).astype(bf16)

    def maxpool2x2(y, h_out):
        lanes = y.shape[1]
        # H: pair adjacent row-groups (nb is a multiple of 16 -> bf16 aligned).
        z = y.reshape(h_out // 2, 2 * nb, lanes)
        hp = jnp.maximum(z[:, :nb, :], z[:, nb:, :]).reshape((h_out // 2) * nb, lanes)
        # W: even-w half vs odd-w half -> compact pooled layout col = pw*C + c.
        return jnp.maximum(hp[:, :lanes // 2], hp[:, lanes // 2:])

    # ---- conv1 5x5 (input pre-padded to 32x32 on host) + ReLU + pool ----
    # The 5 kh row-windows are concatenated along lanes -> a single K=160
    # matmul instead of 5 K=32 matmuls (MXU contraction much better filled).
    x = x_ref[...].reshape(32 * nb, 32)                               # bf16
    xw = jnp.concatenate([x[kh * nb:(kh + 28) * nb, :] for kh in range(5)], axis=1)
    a1 = maxpool2x2(
        relu_bias(jnp.dot(xw, w1_ref[...], preferred_element_type=f32), b1_ref),
        28)                                                           # (14*nb, 224)

    # ---- conv2 5x5 pad=2 + ReLU + pool ----
    # W padding folded into w2e; H padding handled by restricting the kh!=2
    # terms' row ranges into the persistent f32 accumulator (no padded copy).
    acc2_ref[...] = jnp.dot(a1, w2_ref[2], preferred_element_type=f32)
    acc2_ref[2 * nb:, :] += jnp.dot(a1[:12 * nb], w2_ref[0], preferred_element_type=f32)
    acc2_ref[nb:, :] += jnp.dot(a1[:13 * nb], w2_ref[1], preferred_element_type=f32)
    acc2_ref[:13 * nb, :] += jnp.dot(a1[nb:], w2_ref[3], preferred_element_type=f32)
    acc2_ref[:12 * nb, :] += jnp.dot(a1[2 * nb:], w2_ref[4], preferred_element_type=f32)
    a2 = maxpool2x2(relu_bias(acc2_ref[...], b2_ref), 14)             # (7*nb, 224)

    # ---- conv3 4x4 no pad + ReLU + pool ----
    acc3 = jnp.dot(a2[:4 * nb], w3_ref[0], preferred_element_type=f32)
    for kh in range(1, 4):
        acc3 += jnp.dot(a2[kh * nb:(kh + 4) * nb], w3_ref[kh], preferred_element_type=f32)
    a3 = maxpool2x2(relu_bias(acc3, b3_ref), 4)                       # (2*nb, 128)

    # ---- fc: NCHW flatten folded into fc1e; fc outputs padded to 128 lanes ----
    h = (jnp.dot(a3[:nb], fc1_ref[0], preferred_element_type=f32)
         + jnp.dot(a3[nb:], fc1_ref[1], preferred_element_type=f32))
    h = jnp.maximum(h + fc1b_ref[...], 0.0).astype(bf16)              # (nb, 128)
    y = jnp.dot(h, fc2_ref[...], preferred_element_type=f32) + fc2b_ref[...]
    out_ref[...] = y.astype(out_ref.dtype)                            # (nb, 128)
    # Dropout(p=0.5) layers are identity in eval mode.
    # TODO(synk): train-mode dropout would need pltpu.prng_seed/prng_random_bits.


def _full_spec(a):
    """Whole-array block with a constant index_map (fetched once, stays in VMEM)."""
    zeros = (0,) * a.ndim
    return pl.BlockSpec(a.shape, lambda i, _z=zeros: _z)


def cnn_forward(x_nchw, prep, nb=None):
    n = x_nchw.shape[0]
    if nb is None:
        # nb in {16, 32, 64}: multiple of 16 (bf16 packing), as large as
        # possible, but keep >= 2 grid tiles when the batch allows (v7x has 2
        # TensorCores; the parallel grid axis is what shards batch tiles).
        nb = 64
        while nb > 16 and (n + nb - 1) // nb < 2:
            nb //= 2
    n_pad = ((n + nb - 1) // nb) * nb

    # NCHW (Cin=1) -> (H+4, Npad, W+4) bf16: conv1's pad=2 applied here (cheap,
    # raw input only); batch on dim 1 so one tile is a contiguous sublane group
    # in the kernel's (H*nb, W) layout.
    x = jnp.pad(x_nchw[:, 0, :, :], ((0, n_pad - n), (2, 2), (2, 2)))
    x = jnp.transpose(x, (1, 0, 2)).astype(jnp.bfloat16)              # (32, Npad, 32)

    kernel = functools.partial(_cnn_fused_kernel, nb=nb)
    out = pl.pallas_call(
        kernel,
        out_shape=jax.ShapeDtypeStruct((n_pad, 128), jnp.float32),    # lane-dense out
        grid_spec=pltpu.PrefetchScalarGridSpec(
            num_scalar_prefetch=0,
            grid=(n_pad // nb,),
            in_specs=[
                pl.BlockSpec((32, nb, 32), lambda i: (0, i, 0)),      # input tile
                _full_spec(prep["w1m"]), _full_spec(prep["b1e"]),
                _full_spec(prep["w2e"]), _full_spec(prep["b2e"]),
                _full_spec(prep["w3e"]), _full_spec(prep["b3e"]),
                _full_spec(prep["fc1e"]), _full_spec(prep["fc1b"]),
                _full_spec(prep["fc2p"]), _full_spec(prep["fc2b"]),
            ],
            out_specs=pl.BlockSpec((nb, 128), lambda i: (i, 0)),
            scratch_shapes=[pltpu.VMEM((14 * nb, 448), jnp.float32)],  # conv2 acc
        ),
        compiler_params=pltpu.CompilerParams(
            dimension_semantics=("parallel",),          # shard batch tiles over TCs
            vmem_limit_bytes=32 * 1024 * 1024,          # well above actual use, < v7x 64 MiB
        ),
    )(x, prep["w1m"], prep["b1e"], prep["w2e"], prep["b2e"],
      prep["w3e"], prep["b3e"], prep["fc1e"], prep["fc1b"],
      prep["fc2p"], prep["fc2b"])
    return out[:n, :10]


# --------------------- host-side parameter preparation --------------------- #
def _expand_conv(w_oihw, *, n_in, in_stride, in_width, w_out, pad):
    """Fold a conv's KW loop, W padding and the previous pool's column layout
    into per-kh matrices E[kh]: (in_width, w_out*Cout).

    Input row encoding: col = in_stride*p + ci.  Output column encoding is
    even-w first / odd-w second: col = (wo%2)*(w_out/2*Cout) + (wo//2)*Cout + c,
    so the following 2x2 pool's W-step is max(first half, second half)."""
    w = np.asarray(w_oihw, np.float32)                  # (Cout, Cin, KH, KW)
    c_out, c_in, kh_n, kw_n = w.shape
    half = (w_out // 2) * c_out
    e = np.zeros((kh_n, in_width, w_out * c_out), np.float32)
    for kw in range(kw_n):
        for wo in range(w_out):
            p = wo - pad + kw
            if 0 <= p < n_in:
                oc0 = (wo % 2) * half + (wo // 2) * c_out
                e[:, in_stride * p:in_stride * p + c_in, oc0:oc0 + c_out] = \
                    np.transpose(w[:, :, :, kw], (2, 1, 0))
    return e


def _expand_fc1(fc1_w):
    """Fold the NCHW flatten (f = c*4 + ph*2 + pw) into per-ph fc1 matrices,
    input col = pw*64 + c (pooled conv3 layout), output padded to 128."""
    w = np.asarray(fc1_w, np.float32).reshape(64, 64, 2, 2)   # (out, c, ph, pw)
    e = np.zeros((2, 128, 128), np.float32)
    for ph in range(2):
        for pw in range(2):
            e[ph, 64 * pw:64 * pw + 64, :64] = w[:, :, ph, pw].T
    return e


def prepare_params(p):
    """One-time host prep: folded bf16 matmul weights + f32 row-tiled biases."""
    bf = jnp.bfloat16

    def tile_bias(b, reps):
        return jnp.asarray(np.tile(np.asarray(b, np.float32), reps)[None, :])

    w1e = _expand_conv(p["w1"], n_in=32, in_stride=1, in_width=32, w_out=28, pad=0)
    w2e = _expand_conv(p["w2"], n_in=14, in_stride=16, in_width=224, w_out=14, pad=2)
    w3e = _expand_conv(p["w3"], n_in=7, in_stride=32, in_width=224, w_out=4, pad=0)
    fc1b = np.zeros((1, 128), np.float32)
    fc1b[0, :64] = np.asarray(p["fc1_b"], np.float32)
    fc2p = np.zeros((128, 128), np.float32)
    fc2p[:64, :10] = np.asarray(p["fc2_w"], np.float32).T
    fc2b = np.zeros((1, 128), np.float32)
    fc2b[0, :10] = np.asarray(p["fc2_b"], np.float32)
    return {
        "w1m": jnp.asarray(w1e.reshape(5 * 32, 28 * 16), bf),   # (160, 448) merged K
        "b1e": tile_bias(p["b1"], 28),                          # (1, 448)
        "w2e": jnp.asarray(w2e, bf),                            # (5, 224, 448)
        "b2e": tile_bias(p["b2"], 14),                          # (1, 448)
        "w3e": jnp.asarray(w3e, bf),                            # (4, 224, 256)
        "b3e": tile_bias(p["b3"], 4),                           # (1, 256)
        "fc1e": jnp.asarray(_expand_fc1(p["fc1_w"]), bf),       # (2, 128, 128)
        "fc1b": jnp.asarray(fc1b),                              # (1, 128)
        "fc2p": jnp.asarray(fc2p, bf),                          # (128, 128)
        "fc2b": jnp.asarray(fc2b),                              # (1, 128)
    }


# --------------------------- pure-JAX reference ---------------------------- #
def cnn_reference(x_nchw, p):
    def block(x, w, b, pad):
        y = lax.conv_general_dilated(x, w, (1, 1), [(pad, pad), (pad, pad)],
                                     dimension_numbers=("NCHW", "OIHW", "NCHW"),
                                     precision=lax.Precision.HIGHEST)
        y = jnp.maximum(y + b[None, :, None, None], 0.0)
        return lax.reduce_window(y, -jnp.inf, lax.max,
                                 (1, 1, 2, 2), (1, 1, 2, 2), "VALID")
    y = block(x_nchw, p["w1"], p["b1"], 2)
    y = block(y, p["w2"], p["b2"], 2)
    y = block(y, p["w3"], p["b3"], 0)
    y = y.reshape(y.shape[0], -1)
    h = jnp.maximum(y @ p["fc1_w"].T + p["fc1_b"], 0.0)
    return h @ p["fc2_w"].T + p["fc2_b"]


# ----------------------------- parameter init ------------------------------ #
def init_params(key):
    ks = jax.random.split(key, 10)

    def u(k, shape, fan_in):
        bound = 1.0 / jnp.sqrt(jnp.float32(fan_in))
        return jax.random.uniform(k, shape, jnp.float32, -bound, bound)

    return {
        # PyTorch layouts: conv (Cout, Cin, KH, KW), linear (out, in)
        "w1": u(ks[0], (16, 1, 5, 5), 1 * 5 * 5),
        "b1": u(ks[1], (16,), 1 * 5 * 5),
        "w2": u(ks[2], (32, 16, 5, 5), 16 * 5 * 5),
        "b2": u(ks[3], (32,), 16 * 5 * 5),
        "w3": u(ks[4], (64, 32, 4, 4), 32 * 4 * 4),
        "b3": u(ks[5], (64,), 32 * 4 * 4),
        "fc1_w": u(ks[6], (64, 256), 256),
        "fc1_b": u(ks[7], (64,), 256),
        "fc2_w": u(ks[8], (10, 64), 64),
        "fc2_b": u(ks[9], (10,), 64),
    }


if __name__ == "__main__":
    key = jax.random.PRNGKey(0)
    pkey, xkey = jax.random.split(key)
    params = init_params(pkey)
    prep = prepare_params(params)          # host-side, one-time weight folding
    # 28x28 single-channel input is implied by the module (64*2*2 flatten).
    x = jax.random.normal(xkey, (2, 1, 28, 28), jnp.float32)

    fwd = jax.jit(cnn_forward)
    out = jax.block_until_ready(fwd(x, prep))
    assert out.shape == (2, 10) and out.dtype == jnp.float32

    ref = jax.block_until_ready(jax.jit(cnn_reference)(x, params))
    np.testing.assert_allclose(np.asarray(out), np.asarray(ref), rtol=2e-2, atol=2e-2)
    print("KERNEL_OK")
</pallas_src>

<mosaic_0001>
module attributes {stable_mosaic.version = 11 : i64} {
  func.func @_cnn_fused_kernel(%arg0: i32, %arg1: memref<32x16x32xbf16, #tpu.memory_space<vmem>>, %arg2: memref<160x448xbf16, #tpu.memory_space<vmem>>, %arg3: memref<1x448xf32, #tpu.memory_space<vmem>>, %arg4: memref<5x224x448xbf16, #tpu.memory_space<vmem>>, %arg5: memref<1x448xf32, #tpu.memory_space<vmem>>, %arg6: memref<4x224x256xbf16, #tpu.memory_space<vmem>>, %arg7: memref<1x256xf32, #tpu.memory_space<vmem>>, %arg8: memref<2x128x128xbf16, #tpu.memory_space<vmem>>, %arg9: memref<1x128xf32, #tpu.memory_space<vmem>>, %arg10: memref<128x128xbf16, #tpu.memory_space<vmem>>, %arg11: memref<1x128xf32, #tpu.memory_space<vmem>>, %arg12: memref<16x128xf32, #tpu.memory_space<vmem>>, %arg13: memref<224x448xf32, #tpu.memory_space<vmem>>) attributes {dimension_semantics = [#tpu.dimension_semantics<parallel>], iteration_bounds = array<i64: 1>, scalar_prefetch = 0 : i64, scratch_operands = 1 : i64, tpu.core_type = #tpu.core_type<tc>, window_params = [{transform_indices = @transform_0, window_bounds = array<i64: 32, 16, 32>}, {pipeline_mode = #tpu.pipeline_mode<synchronous>, transform_indices = @transform_1, window_bounds = array<i64: 160, 448>}, {pipeline_mode = #tpu.pipeline_mode<synchronous>, transform_indices = @transform_2, window_bounds = array<i64: 1, 448>}, {pipeline_mode = #tpu.pipeline_mode<synchronous>, transform_indices = @transform_3, window_bounds = array<i64: 5, 224, 448>}, {pipeline_mode = #tpu.pipeline_mode<synchronous>, transform_indices = @transform_4, window_bounds = array<i64: 1, 448>}, {pipeline_mode = #tpu.pipeline_mode<synchronous>, transform_indices = @transform_5, window_bounds = array<i64: 4, 224, 256>}, {pipeline_mode = #tpu.pipeline_mode<synchronous>, transform_indices = @transform_6, window_bounds = array<i64: 1, 256>}, {pipeline_mode = #tpu.pipeline_mode<synchronous>, transform_indices = @transform_7, window_bounds = array<i64: 2, 128, 128>}, {pipeline_mode = #tpu.pipeline_mode<synchronous>, transform_indices = @transform_8, window_bounds = array<i64: 1, 128>}, {pipeline_mode = #tpu.pipeline_mode<synchronous>, transform_indices = @transform_9, window_bounds = array<i64: 128, 128>}, {pipeline_mode = #tpu.pipeline_mode<synchronous>, transform_indices = @transform_10, window_bounds = array<i64: 1, 128>}, {transform_indices = @transform_11, window_bounds = array<i64: 16, 128>}]} {
    %c0 = arith.constant 0 : index
    %c0_0 = arith.constant 0 : index
    %c0_1 = arith.constant 0 : index
    %0 = vector.load %arg1[%c0, %c0_0, %c0_1] : memref<32x16x32xbf16, #tpu.memory_space<vmem>>, vector<32x16x32xbf16>
    %1 = vector.shape_cast %0 : vector<32x16x32xbf16> to vector<512x32xbf16>
    %2 = vector.extract_strided_slice %1 {offsets = [0, 0], sizes = [448, 32], strides = [1, 1]} : vector<512x32xbf16> to vector<448x32xbf16>
    %3 = vector.extract_strided_slice %1 {offsets = [16, 0], sizes = [448, 32], strides = [1, 1]} : vector<512x32xbf16> to vector<448x32xbf16>
    %4 = vector.extract_strided_slice %1 {offsets = [32, 0], sizes = [448, 32], strides = [1, 1]} : vector<512x32xbf16> to vector<448x32xbf16>
    %5 = vector.extract_strided_slice %1 {offsets = [48, 0], sizes = [448, 32], strides = [1, 1]} : vector<512x32xbf16> to vector<448x32xbf16>
    %6 = vector.extract_strided_slice %1 {offsets = [64, 0], sizes = [448, 32], strides = [1, 1]} : vector<512x32xbf16> to vector<448x32xbf16>
    %7 = tpu.concatenate %2, %3, %4, %5, %6 in 1 : vector<448x32xbf16>, vector<448x32xbf16>, vector<448x32xbf16>, vector<448x32xbf16>, vector<448x32xbf16> -> vector<448x160xbf16>
    %c0_2 = arith.constant 0 : index
    %c0_3 = arith.constant 0 : index
    %8 = vector.load %arg2[%c0_2, %c0_3] : memref<160x448xbf16, #tpu.memory_space<vmem>>, vector<160x448xbf16>
    %cst = arith.constant dense<0.000000e+00> : vector<448x448xf32>
    %9 = tpu.matmul %7, %8, %cst {dimension_numbers = #tpu.dot_dimension_numbers<[1], [0], [0], [1], [0, 0, 1, 1], [], []>} : vector<448x160xbf16>, vector<160x448xbf16>, vector<448x448xf32> -> vector<448x448xf32>
    %c0_4 = arith.constant 0 : index
    %c0_5 = arith.constant 0 : index
    %10 = vector.load %arg3[%c0_4, %c0_5] : memref<1x448xf32, #tpu.memory_space<vmem>>, vector<1x448xf32>
    %11 = vector.broadcast %10 : vector<1x448xf32> to vector<448x448xf32>
    %12 = arith.addf %9, %11 : vector<448x448xf32>
    %cst_6 = arith.constant 0.000000e+00 : f32
    %13 = vector.broadcast %cst_6 : f32 to vector<448x448xf32>
    %14 = arith.maximumf %12, %13 : vector<448x448xf32>
    %15 = arith.truncf %14 : vector<448x448xf32> to vector<448x448xbf16>
    %16 = vector.shape_cast %15 : vector<448x448xbf16> to vector<14x32x448xbf16>
    %17 = vector.extract_strided_slice %16 {offsets = [0, 0, 0], sizes = [14, 16, 448], strides = [1, 1, 1]} : vector<14x32x448xbf16> to vector<14x16x448xbf16>
    %18 = vector.extract_strided_slice %16 {offsets = [0, 16, 0], sizes = [14, 16, 448], strides = [1, 1, 1]} : vector<14x32x448xbf16> to vector<14x16x448xbf16>
    %19 = arith.maximumf %17, %18 : vector<14x16x448xbf16>
    %20 = vector.shape_cast %19 : vector<14x16x448xbf16> to vector<224x448xbf16>
    %21 = vector.extract_strided_slice %20 {offsets = [0, 0], sizes = [224, 224], strides = [1, 1]} : vector<224x448xbf16> to vector<224x224xbf16>
    %22 = vector.extract_strided_slice %20 {offsets = [0, 224], sizes = [224, 224], strides = [1, 1]} : vector<224x448xbf16> to vector<224x224xbf16>
    %23 = arith.maximumf %21, %22 : vector<224x224xbf16>
    %c2 = arith.constant 2 : index
    %c0_7 = arith.constant 0 : index
    %c0_8 = arith.constant 0 : index
    %24 = vector.load %arg4[%c2, %c0_7, %c0_8] : memref<5x224x448xbf16, #tpu.memory_space<vmem>>, vector<1x224x448xbf16>
    %25 = vector.shape_cast %24 : vector<1x224x448xbf16> to vector<224x448xbf16>
    %cst_9 = arith.constant dense<0.000000e+00> : vector<224x448xf32>
    %26 = tpu.matmul %23, %25, %cst_9 {dimension_numbers = #tpu.dot_dimension_numbers<[1], [0], [0], [1], [0, 0, 1, 1], [], []>} : vector<224x224xbf16>, vector<224x448xbf16>, vector<224x448xf32> -> vector<224x448xf32>
    %c0_10 = arith.constant 0 : index
    %c0_11 = arith.constant 0 : index
    %27 = vector.load %arg13[%c0_10, %c0_11] : memref<224x448xf32, #tpu.memory_space<vmem>>, vector<224x448xf32>
    tpu.vector_store %arg13[%c0_10, %c0_11], %26 {strides = array<i32>} : memref<224x448xf32, #tpu.memory_space<vmem>>, vector<224x448xf32>,
    %c32 = arith.constant 32 : index
    %c0_12 = arith.constant 0 : index
    %28 = vector.load %arg13[%c32, %c0_12] : memref<224x448xf32, #tpu.memory_space<vmem>>, vector<192x448xf32>
    %29 = vector.extract_strided_slice %23 {offsets = [0, 0], sizes = [192, 224], strides = [1, 1]} : vector<224x224xbf16> to vector<192x224xbf16>
    %c0_13 = arith.constant 0 : index
    %c0_14 = arith.constant 0 : index
    %c0_15 = arith.constant 0 : index
    %30 = vector.load %arg4[%c0_13, %c0_14, %c0_15] : memref<5x224x448xbf16, #tpu.memory_space<vmem>>, vector<1x224x448xbf16>
    %31 = vector.shape_cast %30 : vector<1x224x448xbf16> to vector<224x448xbf16>
    %cst_16 = arith.constant dense<0.000000e+00> : vector<192x448xf32>
    %32 = tpu.matmul %29, %31, %cst_16 {dimension_numbers = #tpu.dot_dimension_numbers<[1], [0], [0], [1], [0, 0, 1, 1], [], []>} : vector<192x224xbf16>, vector<224x448xbf16>, vector<192x448xf32> -> vector<192x448xf32>
    %33 = arith.addf %28, %32 : vector<192x448xf32>
    %c32_17 = arith.constant 32 : index
    %c0_18 = arith.constant 0 : index
    %34 = vector.load %arg13[%c32_17, %c0_18] : memref<224x448xf32, #tpu.memory_space<vmem>>, vector<192x448xf32>
    tpu.vector_store %arg13[%c32_17, %c0_18], %33 {strides = array<i32>} : memref<224x448xf32, #tpu.memory_space<vmem>>, vector<192x448xf32>,
    %c16 = arith.constant 16 : index
    %c0_19 = arith.constant 0 : index
    %35 = vector.load %arg13[%c16, %c0_19] : memref<224x448xf32, #tpu.memory_space<vmem>>, vector<208x448xf32>
    %36 = vector.extract_strided_slice %23 {offsets = [0, 0], sizes = [208, 224], strides = [1, 1]} : vector<224x224xbf16> to vector<208x224xbf16>
    %c1 = arith.constant 1 : index
    %c0_20 = arith.constant 0 : index
    %c0_21 = arith.constant 0 : index
    %37 = vector.load %arg4[%c1, %c0_20, %c0_21] : memref<5x224x448xbf16, #tpu.memory_space<vmem>>, vector<1x224x448xbf16>
    %38 = vector.shape_cast %37 : vector<1x224x448xbf16> to vector<224x448xbf16>
    %cst_22 = arith.constant dense<0.000000e+00> : vector<208x448xf32>
    %39 = tpu.matmul %36, %38, %cst_22 {dimension_numbers = #tpu.dot_dimension_numbers<[1], [0], [0], [1], [0, 0, 1, 1], [], []>} : vector<208x224xbf16>, vector<224x448xbf16>, vector<208x448xf32> -> vector<208x448xf32>
    %40 = arith.addf %35, %39 : vector<208x448xf32>
    %c16_23 = arith.constant 16 : index
    %c0_24 = arith.constant 0 : index
    %41 = vector.load %arg13[%c16_23, %c0_24] : memref<224x448xf32, #tpu.memory_space<vmem>>, vector<208x448xf32>
    tpu.vector_store %arg13[%c16_23, %c0_24], %40 {strides = array<i32>} : memref<224x448xf32, #tpu.memory_space<vmem>>, vector<208x448xf32>,
    %c0_25 = arith.constant 0 : index
    %c0_26 = arith.constant 0 : index
    %42 = vector.load %arg13[%c0_25, %c0_26] : memref<224x448xf32, #tpu.memory_space<vmem>>, vector<208x448xf32>
    %43 = vector.extract_strided_slice %23 {offsets = [16, 0], sizes = [208, 224], strides = [1, 1]} : vector<224x224xbf16> to vector<208x224xbf16>
    %c3 = arith.constant 3 : index
    %c0_27 = arith.constant 0 : index
    %c0_28 = arith.constant 0 : index
    %44 = vector.load %arg4[%c3, %c0_27, %c0_28] : memref<5x224x448xbf16, #tpu.memory_space<vmem>>, vector<1x224x448xbf16>
    %45 = vector.shape_cast %44 : vector<1x224x448xbf16> to vector<224x448xbf16>
    %cst_29 = arith.constant dense<0.000000e+00> : vector<208x448xf32>
    %46 = tpu.matmul %43, %45, %cst_29 {dimension_numbers = #tpu.dot_dimension_numbers<[1], [0], [0], [1], [0, 0, 1, 1], [], []>} : vector<208x224xbf16>, vector<224x448xbf16>, vector<208x448xf32> -> vector<208x448xf32>
    %47 = arith.addf %42, %46 : vector<208x448xf32>
    %c0_30 = arith.constant 0 : index
    %c0_31 = arith.constant 0 : index
    %48 = vector.load %arg13[%c0_30, %c0_31] : memref<224x448xf32, #tpu.memory_space<vmem>>, vector<208x448xf32>
    tpu.vector_store %arg13[%c0_30, %c0_31], %47 {strides = array<i32>} : memref<224x448xf32, #tpu.memory_space<vmem>>, vector<208x448xf32>,
    %c0_32 = arith.constant 0 : index
    %c0_33 = arith.constant 0 : index
    %49 = vector.load %arg13[%c0_32, %c0_33] : memref<224x448xf32, #tpu.memory_space<vmem>>, vector<192x448xf32>
    %50 = vector.extract_strided_slice %23 {offsets = [32, 0], sizes = [192, 224], strides = [1, 1]} : vector<224x224xbf16> to vector<192x224xbf16>
    %c4 = arith.constant 4 : index
    %c0_34 = arith.constant 0 : index
    %c0_35 = arith.constant 0 : index
    %51 = vector.load %arg4[%c4, %c0_34, %c0_35] : memref<5x224x448xbf16, #tpu.memory_space<vmem>>, vector<1x224x448xbf16>
    %52 = vector.shape_cast %51 : vector<1x224x448xbf16> to vector<224x448xbf16>
    %cst_36 = arith.constant dense<0.000000e+00> : vector<192x448xf32>
    %53 = tpu.matmul %50, %52, %cst_36 {dimension_numbers = #tpu.dot_dimension_numbers<[1], [0], [0], [1], [0, 0, 1, 1], [], []>} : vector<192x224xbf16>, vector<224x448xbf16>, vector<192x448xf32> -> vector<192x448xf32>
    %54 = arith.addf %49, %53 : vector<192x448xf32>
    %c0_37 = arith.constant 0 : index
    %c0_38 = arith.constant 0 : index
    %55 = vector.load %arg13[%c0_37, %c0_38] : memref<224x448xf32, #tpu.memory_space<vmem>>, vector<192x448xf32>
    tpu.vector_store %arg13[%c0_37, %c0_38], %54 {strides = array<i32>} : memref<224x448xf32, #tpu.memory_space<vmem>>, vector<192x448xf32>,
    %c0_39 = arith.constant 0 : index
    %c0_40 = arith.constant 0 : index
    %56 = vector.load %arg13[%c0_39, %c0_40] : memref<224x448xf32, #tpu.memory_space<vmem>>, vector<224x448xf32>
    %c0_41 = arith.constant 0 : index
    %c0_42 = arith.constant 0 : index
    %57 = vector.load %arg5[%c0_41, %c0_42] : memref<1x448xf32, #tpu.memory_space<vmem>>, vector<1x448xf32>
    %58 = vector.broadcast %57 : vector<1x448xf32> to vector<224x448xf32>
    %59 = arith.addf %56, %58 : vector<224x448xf32>
    %cst_43 = arith.constant 0.000000e+00 : f32
    %60 = vector.broadcast %cst_43 : f32 to vector<224x448xf32>
    %61 = arith.maximumf %59, %60 : vector<224x448xf32>
    %62 = arith.truncf %61 : vector<224x448xf32> to vector<224x448xbf16>
    %63 = vector.shape_cast %62 : vector<224x448xbf16> to vector<7x32x448xbf16>
    %64 = vector.extract_strided_slice %63 {offsets = [0, 0, 0], sizes = [7, 16, 448], strides = [1, 1, 1]} : vector<7x32x448xbf16> to vector<7x16x448xbf16>
    %65 = vector.extract_strided_slice %63 {offsets = [0, 16, 0], sizes = [7, 16, 448], strides = [1, 1, 1]} : vector<7x32x448xbf16> to vector<7x16x448xbf16>
    %66 = arith.maximumf %64, %65 : vector<7x16x448xbf16>
    %67 = vector.shape_cast %66 : vector<7x16x448xbf16> to vector<112x448xbf16>
    %68 = vector.extract_strided_slice %67 {offsets = [0, 0], sizes = [112, 224], strides = [1, 1]} : vector<112x448xbf16> to vector<112x224xbf16>
    %69 = vector.extract_strided_slice %67 {offsets = [0, 224], sizes = [112, 224], strides = [1, 1]} : vector<112x448xbf16> to vector<112x224xbf16>
    %70 = arith.maximumf %68, %69 : vector<112x224xbf16>
    %71 = vector.extract_strided_slice %70 {offsets = [0, 0], sizes = [64, 224], strides = [1, 1]} : vector<112x224xbf16> to vector<64x224xbf16>
    %c0_44 = arith.constant 0 : index
    %c0_45 = arith.constant 0 : index
    %c0_46 = arith.constant 0 : index
    %72 = vector.load %arg6[%c0_44, %c0_45, %c0_46] : memref<4x224x256xbf16, #tpu.memory_space<vmem>>, vector<1x224x256xbf16>
    %73 = vector.shape_cast %72 : vector<1x224x256xbf16> to vector<224x256xbf16>
    %cst_47 = arith.constant dense<0.000000e+00> : vector<64x256xf32>
    %74 = tpu.matmul %71, %73, %cst_47 {dimension_numbers = #tpu.dot_dimension_numbers<[1], [0], [0], [1], [0, 0, 1, 1], [], []>} : vector<64x224xbf16>, vector<224x256xbf16>, vector<64x256xf32> -> vector<64x256xf32>
    %75 = vector.extract_strided_slice %70 {offsets = [16, 0], sizes = [64, 224], strides = [1, 1]} : vector<112x224xbf16> to vector<64x224xbf16>
    %c1_48 = arith.constant 1 : index
    %c0_49 = arith.constant 0 : index
    %c0_50 = arith.constant 0 : index
    %76 = vector.load %arg6[%c1_48, %c0_49, %c0_50] : memref<4x224x256xbf16, #tpu.memory_space<vmem>>, vector<1x224x256xbf16>
    %77 = vector.shape_cast %76 : vector<1x224x256xbf16> to vector<224x256xbf16>
    %cst_51 = arith.constant dense<0.000000e+00> : vector<64x256xf32>
    %78 = tpu.matmul %75, %77, %cst_51 {dimension_numbers = #tpu.dot_dimension_numbers<[1], [0], [0], [1], [0, 0, 1, 1], [], []>} : vector<64x224xbf16>, vector<224x256xbf16>, vector<64x256xf32> -> vector<64x256xf32>
    %79 = arith.addf %74, %78 : vector<64x256xf32>
    %80 = vector.extract_strided_slice %70 {offsets = [32, 0], sizes = [64, 224], strides = [1, 1]} : vector<112x224xbf16> to vector<64x224xbf16>
    %c2_52 = arith.constant 2 : index
    %c0_53 = arith.constant 0 : index
    %c0_54 = arith.constant 0 : index
    %81 = vector.load %arg6[%c2_52, %c0_53, %c0_54] : memref<4x224x256xbf16, #tpu.memory_space<vmem>>, vector<1x224x256xbf16>
    %82 = vector.shape_cast %81 : vector<1x224x256xbf16> to vector<224x256xbf16>
    %cst_55 = arith.constant dense<0.000000e+00> : vector<64x256xf32>
    %83 = tpu.matmul %80, %82, %cst_55 {dimension_numbers = #tpu.dot_dimension_numbers<[1], [0], [0], [1], [0, 0, 1, 1], [], []>} : vector<64x224xbf16>, vector<224x256xbf16>, vector<64x256xf32> -> vector<64x256xf32>
    %84 = arith.addf %79, %83 : vector<64x256xf32>
    %85 = vector.extract_strided_slice %70 {offsets = [48, 0], sizes = [64, 224], strides = [1, 1]} : vector<112x224xbf16> to vector<64x224xbf16>
    %c3_56 = arith.constant 3 : index
    %c0_57 = arith.constant 0 : index
    %c0_58 = arith.constant 0 : index
    %86 = vector.load %arg6[%c3_56, %c0_57, %c0_58] : memref<4x224x256xbf16, #tpu.memory_space<vmem>>, vector<1x224x256xbf16>
    %87 = vector.shape_cast %86 : vector<1x224x256xbf16> to vector<224x256xbf16>
    %cst_59 = arith.constant dense<0.000000e+00> : vector<64x256xf32>
    %88 = tpu.matmul %85, %87, %cst_59 {dimension_numbers = #tpu.dot_dimension_numbers<[1], [0], [0], [1], [0, 0, 1, 1], [], []>} : vector<64x224xbf16>, vector<224x256xbf16>, vector<64x256xf32> -> vector<64x256xf32>
    %89 = arith.addf %84, %88 : vector<64x256xf32>
    %c0_60 = arith.constant 0 : index
    %c0_61 = arith.constant 0 : index
    %90 = vector.load %arg7[%c0_60, %c0_61] : memref<1x256xf32, #tpu.memory_space<vmem>>, vector<1x256xf32>
    %91 = vector.broadcast %90 : vector<1x256xf32> to vector<64x256xf32>
    %92 = arith.addf %89, %91 : vector<64x256xf32>
    %cst_62 = arith.constant 0.000000e+00 : f32
    %93 = vector.broadcast %cst_62 : f32 to vector<64x256xf32>
    %94 = arith.maximumf %92, %93 : vector<64x256xf32>
    %95 = arith.truncf %94 : vector<64x256xf32> to vector<64x256xbf16>
    %96 = vector.shape_cast %95 : vector<64x256xbf16> to vector<2x32x256xbf16>
    %97 = vector.extract_strided_slice %96 {offsets = [0, 0, 0], sizes = [2, 16, 256], strides = [1, 1, 1]} : vector<2x32x256xbf16> to vector<2x16x256xbf16>
    %98 = vector.extract_strided_slice %96 {offsets = [0, 16, 0], sizes = [2, 16, 256], strides = [1, 1, 1]} : vector<2x32x256xbf16> to vector<2x16x256xbf16>
    %99 = arith.maximumf %97, %98 : vector<2x16x256xbf16>
    %100 = vector.shape_cast %99 : vector<2x16x256xbf16> to vector<32x256xbf16>
    %101 = vector.extract_strided_slice %100 {offsets = [0, 0], sizes = [32, 128], strides = [1, 1]} : vector<32x256xbf16> to vector<32x128xbf16>
    %102 = vector.extract_strided_slice %100 {offsets = [0, 128], sizes = [32, 128], strides = [1, 1]} : vector<32x256xbf16> to vector<32x128xbf16>
    %103 = arith.maximumf %101, %102 : vector<32x128xbf16>
    %104 = vector.extract_strided_slice %103 {offsets = [0, 0], sizes = [16, 128], strides = [1, 1]} : vector<32x128xbf16> to vector<16x128xbf16>
    %c0_63 = arith.constant 0 : index
    %c0_64 = arith.constant 0 : index
    %c0_65 = arith.constant 0 : index
    %105 = vector.load %arg8[%c0_63, %c0_64, %c0_65] : memref<2x128x128xbf16, #tpu.memory_space<vmem>>, vector<1x128x128xbf16>
    %106 = vector.shape_cast %105 : vector<1x128x128xbf16> to vector<128x128xbf16>
    %cst_66 = arith.constant dense<0.000000e+00> : vector<16x128xf32>
    %107 = tpu.matmul %104, %106, %cst_66 {dimension_numbers = #tpu.dot_dimension_numbers<[1], [0], [0], [1], [0, 0, 1, 1], [], []>} : vector<16x128xbf16>, vector<128x128xbf16>, vector<16x128xf32> -> vector<16x128xf32>
    %108 = vector.extract_strided_slice %103 {offsets = [16, 0], sizes = [16, 128], strides = [1, 1]} : vector<32x128xbf16> to vector<16x128xbf16>
    %c1_67 = arith.constant 1 : index
    %c0_68 = arith.constant 0 : index
    %c0_69 = arith.constant 0 : index
    %109 = vector.load %arg8[%c1_67, %c0_68, %c0_69] : memref<2x128x128xbf16, #tpu.memory_space<vmem>>, vector<1x128x128xbf16>
    %110 = vector.shape_cast %109 : vector<1x128x128xbf16> to vector<128x128xbf16>
    %cst_70 = arith.constant dense<0.000000e+00> : vector<16x128xf32>
    %111 = tpu.matmul %108, %110, %cst_70 {dimension_numbers = #tpu.dot_dimension_numbers<[1], [0], [0], [1], [0, 0, 1, 1], [], []>} : vector<16x128xbf16>, vector<128x128xbf16>, vector<16x128xf32> -> vector<16x128xf32>
    %112 = arith.addf %107, %111 : vector<16x128xf32>
    %c0_71 = arith.constant 0 : index
    %c0_72 = arith.constant 0 : index
    %113 = vector.load %arg9[%c0_71, %c0_72] : memref<1x128xf32, #tpu.memory_space<vmem>>, vector<1x128xf32>
    %114 = vector.broadcast %113 : vector<1x128xf32> to vector<16x128xf32>
    %115 = arith.addf %112, %114 : vector<16x128xf32>
    %cst_73 = arith.constant 0.000000e+00 : f32
    %116 = vector.broadcast %cst_73 : f32 to vector<16x128xf32>
    %117 = arith.maximumf %115, %116 : vector<16x128xf32>
    %118 = arith.truncf %117 : vector<16x128xf32> to vector<16x128xbf16>
    %c0_74 = arith.constant 0 : index
    %c0_75 = arith.constant 0 : index
    %119 = vector.load %arg10[%c0_74, %c0_75] : memref<128x128xbf16, #tpu.memory_space<vmem>>, vector<128x128xbf16>
    %cst_76 = arith.constant dense<0.000000e+00> : vector<16x128xf32>
    %120 = tpu.matmul %118, %119, %cst_76 {dimension_numbers = #tpu.dot_dimension_numbers<[1], [0], [0], [1], [0, 0, 1, 1], [], []>} : vector<16x128xbf16>, vector<128x128xbf16>, vector<16x128xf32> -> vector<16x128xf32>
    %c0_77 = arith.constant 0 : index
    %c0_78 = arith.constant 0 : index
    %121 = vector.load %arg11[%c0_77, %c0_78] : memref<1x128xf32, #tpu.memory_space<vmem>>, vector<1x128xf32>
    %122 = vector.broadcast %121 : vector<1x128xf32> to vector<16x128xf32>
    %123 = arith.addf %120, %122 : vector<16x128xf32>
    %c0_79 = arith.constant 0 : index
    %c0_80 = arith.constant 0 : index
    %124 = vector.load %arg12[%c0_79, %c0_80] : memref<16x128xf32, #tpu.memory_space<vmem>>, vector<16x128xf32>
    tpu.vector_store %arg12[%c0_79, %c0_80], %123 {strides = array<i32>} : memref<16x128xf32, #tpu.memory_space<vmem>>, vector<16x128xf32>,
    return
  }
  func.func @transform_0(%arg0: i32) -> (i32, i32, i32) {
    %c0_i32 = arith.constant 0 : i32
    %c0_i32_0 = arith.constant 0 : i32
    %c0_i32_1 = arith.constant 0 : i32
    return %c0_i32, %arg0, %c0_i32_0 : i32, i32, i32
  }
  func.func @transform_1(%arg0: i32) -> (i32, i32) {
    %c0_i32 = arith.constant 0 : i32
    %c0_i32_0 = arith.constant 0 : i32
    %c0_i32_1 = arith.constant 0 : i32
    return %c0_i32, %c0_i32_0 : i32, i32
  }
  func.func @transform_2(%arg0: i32) -> (i32, i32) {
    %c0_i32 = arith.constant 0 : i32
    %c0_i32_0 = arith.constant 0 : i32
    %c0_i32_1 = arith.constant 0 : i32
    return %c0_i32, %c0_i32_0 : i32, i32
  }
  func.func @transform_3(%arg0: i32) -> (i32, i32, i32) {
    %c0_i32 = arith.constant 0 : i32
    %c0_i32_0 = arith.constant 0 : i32
    %c0_i32_1 = arith.constant 0 : i32
    %c0_i32_2 = arith.constant 0 : i32
    return %c0_i32, %c0_i32_0, %c0_i32_1 : i32, i32, i32
  }
  func.func @transform_4(%arg0: i32) -> (i32, i32) {
    %c0_i32 = arith.constant 0 : i32
    %c0_i32_0 = arith.constant 0 : i32
    %c0_i32_1 = arith.constant 0 : i32
    return %c0_i32, %c0_i32_0 : i32, i32
  }
  func.func @transform_5(%arg0: i32) -> (i32, i32, i32) {
    %c0_i32 = arith.constant 0 : i32
    %c0_i32_0 = arith.constant 0 : i32
    %c0_i32_1 = arith.constant 0 : i32
    %c0_i32_2 = arith.constant 0 : i32
    return %c0_i32, %c0_i32_0, %c0_i32_1 : i32, i32, i32
  }
  func.func @transform_6(%arg0: i32) -> (i32, i32) {
    %c0_i32 = arith.constant 0 : i32
    %c0_i32_0 = arith.constant 0 : i32
    %c0_i32_1 = arith.constant 0 : i32
    return %c0_i32, %c0_i32_0 : i32, i32
  }
  func.func @transform_7(%arg0: i32) -> (i32, i32, i32) {
    %c0_i32 = arith.constant 0 : i32
    %c0_i32_0 = arith.constant 0 : i32
    %c0_i32_1 = arith.constant 0 : i32
    %c0_i32_2 = arith.constant 0 : i32
    return %c0_i32, %c0_i32_0, %c0_i32_1 : i32, i32, i32
  }
  func.func @transform_8(%arg0: i32) -> (i32, i32) {
    %c0_i32 = arith.constant 0 : i32
    %c0_i32_0 = arith.constant 0 : i32
    %c0_i32_1 = arith.constant 0 : i32
    return %c0_i32, %c0_i32_0 : i32, i32
  }
  func.func @transform_9(%arg0: i32) -> (i32, i32) {
    %c0_i32 = arith.constant 0 : i32
    %c0_i32_0 = arith.constant 0 : i32
    %c0_i32_1 = arith.constant 0 : i32
    return %c0_i32, %c0_i32_0 : i32, i32
  }
  func.func @transform_10(%arg0: i32) -> (i32, i32) {
    %c0_i32 = arith.constant 0 : i32
    %c0_i32_0 = arith.constant 0 : i32
    %c0_i32_1 = arith.constant 0 : i32
    return %c0_i32, %c0_i32_0 : i32, i32
  }
  func.func @transform_11(%arg0: i32) -> (i32, i32) {
    %c0_i32 = arith.constant 0 : i32
    %c0_i32_0 = arith.constant 0 : i32
    return %arg0, %c0_i32 : i32, i32
  }
}

</mosaic_0001>

<llo_original>
// kernel: cnn_forward.1
$region0: #{cnn_forward.1}
  #allocation0 [shape = 'u32[]', space=smem, size = 0x4, offset = 0x4, fixed_abs, tag = 'smem constant byte address 0x4 - core index']
  #allocation1 [shape = 'u32[72,128]{1,0:T(1,128)}', space=vmem, size = 0x9000, scoped, tag = 'internal scratch']
  #allocation2 [shape = 'f32[224,448]{1,0:T(8,128)}', space=vmem, size = 0x70000, scoped, tag = 'scratch operand']
  %s0 = inlined_call_operand.vmem [shape: bf16[32,16,32], index: 0, kind: input, shape index: {}]
  %s1 = inlined_call_operand.hbm [shape: bf16[160,448], index: 1, kind: input, shape index: {}]
  %s2 = inlined_call_operand.hbm [shape: f32[1,448], index: 2, kind: input, shape index: {}]
  %s3 = inlined_call_operand.hbm [shape: bf16[5,224,448], index: 3, kind: input, shape index: {}]
  %s4 = inlined_call_operand.hbm [shape: f32[1,448], index: 4, kind: input, shape index: {}]
  %s5 = inlined_call_operand.hbm [shape: bf16[4,224,256], index: 5, kind: input, shape index: {}]
  %s6 = inlined_call_operand.hbm [shape: f32[1,256], index: 6, kind: input, shape index: {}]
  %s7 = inlined_call_operand.hbm [shape: bf16[2,128,128], index: 7, kind: input, shape index: {}]
  %s8 = inlined_call_operand.hbm [shape: f32[1,128], index: 8, kind: input, shape index: {}]
  %s9 = inlined_call_operand.hbm [shape: bf16[128,128], index: 9, kind: input, shape index: {}]
  %s10 = inlined_call_operand.hbm [shape: f32[1,128], index: 10, kind: input, shape index: {}]
  %s11 = inlined_call_operand.vmem [shape: f32[16,128], index: 11, kind: output, shape index: {}]
  %s12 = sld [smem:[#allocation0]]
  $region94: #{cnn_forward.1} parent=0
    _
  %s14 = ssub.s32 1, %s12
  %s15 = scalar_select 0, %s14, %s12
  $region1: #{cnn_forward.1} parent=0
    #allocation3 [shape = 'u8[163840]{0}', space=vmem, size = 0x28000, scoped, tag = 'input window, operand 1, single buffered']
    #allocation4 [shape = 's32[1]{0}', space=sflag, size = 0x4, scoped, tag = 'scoped memory for cnn_forward.1']
    #allocation5 [shape = 'u8[2048]{0}', space=vmem, size = 0x800, scoped, tag = 'input window, operand 2, single buffered']
    #allocation6 [shape = 's32[1]{0}', space=sflag, size = 0x4, scoped, tag = 'scoped memory for cnn_forward.1']
    #allocation7 [shape = 'u8[1146880]{0}', space=vmem, size = 0x118000, scoped, tag = 'input window, operand 3, single buffered']
    #allocation8 [shape = 'u8[2048]{0}', space=vmem, size = 0x800, scoped, tag = 'input window, operand 4, single buffered']
    #allocation9 [shape = 's32[1]{0}', space=sflag, size = 0x4, scoped, tag = 'scoped memory for cnn_forward.1']
    #allocation10 [shape = 'u8[458752]{0}', space=vmem, size = 0x70000, scoped, tag = 'input window, operand 5, single buffered']
    #allocation11 [shape = 'u8[1024]{0}', space=vmem, size = 0x400, scoped, tag = 'input window, operand 6, single buffered']
    #allocation12 [shape = 's32[1]{0}', space=sflag, size = 0x4, scoped, tag = 'scoped memory for cnn_forward.1']
    #allocation13 [shape = 'u8[65536]{0}', space=vmem, size = 0x10000, scoped, tag = 'input window, operand 7, single buffered']
    #allocation14 [shape = 'u8[512]{0}', space=vmem, size = 0x400, scoped, tag = 'input window, operand 8, single buffered']
    #allocation15 [shape = 's32[1]{0}', space=sflag, size = 0x4, scoped, tag = 'scoped memory for cnn_forward.1']
    #allocation16 [shape = 'u8[32768]{0}', space=vmem, size = 0x8000, scoped, tag = 'input window, operand 9, single buffered']
    #allocation17 [shape = 'u8[512]{0}', space=vmem, size = 0x400, scoped, tag = 'input window, operand 10, single buffered']
    #allocation18 [shape = 's32[1]{0}', space=sflag, size = 0x4, scoped, tag = 'scoped memory for cnn_forward.1']
    %16 = vsyncpa [#allocation4], 0
    %17 = vsyncpa [#allocation6], 0
    %18 = vsyncpa [#allocation9], 0
    %19 = vsyncpa [#allocation12], 0
    %20 = vsyncpa [#allocation15], 0
    %21 = vsyncpa [#allocation18], 0
    // Predicated region
    $region2: #{cnn_forward.1} parent=1 // pred_check
      _
    $region3: #{cnn_forward.1} parent=1 // pred_check_branch
      %23 = sbr.rel (0) target = $region5
    $region4: #{cnn_forward.1} parent=1 // pred_region
      _
    $region5: #{cnn_forward.1} parent=1 // pred_fallthru
      _
    // Predicated region
    $region6: #{cnn_forward.1} parent=1 // pred_check
      _
    $region7: #{cnn_forward.1} parent=1 // pred_check_branch
      %25 = sbr.rel (0) target = $region9
    $region8: #{cnn_forward.1} parent=1 // pred_region
      %27 = vsyncadd [#allocation4], 0
      %s28 = sshll.u32 %s1, 4
      %s29 = int_to_ptr.hbm [resolvable:$true] %s28
      %s30 = sshll.u32 [#allocation3], 4
      %s31 = int_to_ptr.vmem [resolvable:$true] %s30
      %36 = dma.hbm_to_vmem [thread:$0]  %s29, 5120, %s31, [#allocation4], 256, 256, 16
    $region9: #{cnn_forward.1} parent=1 // pred_fallthru
      _
    // Predicated region
    $region10: #{cnn_forward.1} parent=1 // pred_check
      _
    $region11: #{cnn_forward.1} parent=1 // pred_check_branch
      %38 = sbr.rel (0) target = $region13
    $region12: #{cnn_forward.1} parent=1 // pred_region
      %40 = vsyncadd [#allocation6], 0
      %s42 = sshll.u32 %s2, 4
      %s43 = int_to_ptr.hbm [resolvable:$true] %s42
      %s44 = sshll.u32 [#allocation5], 4
      %s45 = int_to_ptr.vmem [resolvable:$true] %s44
      %47 = dma.hbm_to_vmem [thread:$0]  %s43, 64, %s45, [#allocation6]
    $region13: #{cnn_forward.1} parent=1 // pred_fallthru
      _
    // Predicated region
    $region14: #{cnn_forward.1} parent=1 // pred_check
      _
    $region15: #{cnn_forward.1} parent=1 // pred_check_branch
      %49 = sbr.rel (0) target = $region17
    $region16: #{cnn_forward.1} parent=1 // pred_region
      %51 = vsyncadd [#allocation6], 0
      %s52 = sshll.u32 %s3, 4
      %s53 = int_to_ptr.hbm [resolvable:$true] %s52
      %s54 = sshll.u32 [#allocation7], 4
      %s55 = int_to_ptr.vmem [resolvable:$true] %s54
      %60 = dma.hbm_to_vmem [thread:$0]  %s53, 35840, %s55, [#allocation6], 256, 256, 16
    $region17: #{cnn_forward.1} parent=1 // pred_fallthru
      _
    // Predicated region
    $region18: #{cnn_forward.1} parent=1 // pred_check
      _
    $region19: #{cnn_forward.1} parent=1 // pred_check_branch
      %62 = sbr.rel (0) target = $region21
    $region20: #{cnn_forward.1} parent=1 // pred_region
      %64 = vsyncadd [#allocation9], 0
      %s66 = sshll.u32 %s4, 4
      %s67 = int_to_ptr.hbm [resolvable:$true] %s66
      %s68 = sshll.u32 [#allocation8], 4
      %s69 = int_to_ptr.vmem [resolvable:$true] %s68
      %71 = dma.hbm_to_vmem [thread:$0]  %s67, 64, %s69, [#allocation9]
    $region21: #{cnn_forward.1} parent=1 // pred_fallthru
      _
    // Predicated region
    $region22: #{cnn_forward.1} parent=1 // pred_check
      _
    $region23: #{cnn_forward.1} parent=1 // pred_check_branch
      %73 = sbr.rel (0) target = $region25
    $region24: #{cnn_forward.1} parent=1 // pred_region
      %75 = vsyncadd [#allocation9], 0
      %s76 = sshll.u32 %s5, 4
      %s77 = int_to_ptr.hbm [resolvable:$true] %s76
      %s78 = sshll.u32 [#allocation10], 4
      %s79 = int_to_ptr.vmem [resolvable:$true] %s78
      %84 = dma.hbm_to_vmem [thread:$0]  %s77, 14336, %s79, [#allocation9], 128, 128, 8
    $region25: #{cnn_forward.1} parent=1 // pred_fallthru
      _
    // Predicated region
    $region26: #{cnn_forward.1} parent=1 // pred_check
      _
    $region27: #{cnn_forward.1} parent=1 // pred_check_branch
      %86 = sbr.rel (0) target = $region29
    $region28: #{cnn_forward.1} parent=1 // pred_region
      %88 = vsyncadd [#allocation12], 0
      %s90 = sshll.u32 %s6, 4
      %s91 = int_to_ptr.hbm [resolvable:$true] %s90
      %s92 = sshll.u32 [#allocation11], 4
      %s93 = int_to_ptr.vmem [resolvable:$true] %s92
      %95 = dma.hbm_to_vmem [thread:$0]  %s91, 32, %s93, [#allocation12]
    $region29: #{cnn_forward.1} parent=1 // pred_fallthru
      _
    // Predicated region
    $region30: #{cnn_forward.1} parent=1 // pred_check
      _
    $region31: #{cnn_forward.1} parent=1 // pred_check_branch
      %97 = sbr.rel (0) target = $region33
    $region32: #{cnn_forward.1} parent=1 // pred_region
      %99 = vsyncadd [#allocation12], 0
      %s100 = sshll.u32 %s7, 4
      %s101 = int_to_ptr.hbm [resolvable:$true] %s100
      %s102 = sshll.u32 [#allocation13], 4
      %s103 = int_to_ptr.vmem [resolvable:$true] %s102
      %108 = dma.hbm_to_vmem [thread:$0]  %s101, 2048, %s103, [#allocation12], 64, 64, 4
    $region33: #{cnn_forward.1} parent=1 // pred_fallthru
      _
    // Predicated region
    $region34: #{cnn_forward.1} parent=1 // pred_check
      _
    $region35: #{cnn_forward.1} parent=1 // pred_check_branch
      %110 = sbr.rel (0) target = $region37
    $region36: #{cnn_forward.1} parent=1 // pred_region
      %112 = vsyncadd [#allocation15], 0
      %s114 = sshll.u32 %s8, 4
      %s115 = int_to_ptr.hbm [resolvable:$true] %s114
      %s116 = sshll.u32 [#allocation14], 4
      %s117 = int_to_ptr.vmem [resolvable:$true] %s116
      %119 = dma.hbm_to_vmem [thread:$0]  %s115, 16, %s117, [#allocation15]
    $region37: #{cnn_forward.1} parent=1 // pred_fallthru
      _
    // Predicated region
    $region38: #{cnn_forward.1} parent=1 // pred_check
      _
    $region39: #{cnn_forward.1} parent=1 // pred_check_branch
      %121 = sbr.rel (0) target = $region41
    $region40: #{cnn_forward.1} parent=1 // pred_region
      %123 = vsyncadd [#allocation15], 0
      %s124 = sshll.u32 %s9, 4
      %s125 = int_to_ptr.hbm [resolvable:$true] %s124
      %s126 = sshll.u32 [#allocation16], 4
      %s127 = int_to_ptr.vmem [resolvable:$true] %s126
      %132 = dma.hbm_to_vmem [thread:$0]  %s125, 1024, %s127, [#allocation15], 64, 64, 4
    $region41: #{cnn_forward.1} parent=1 // pred_fallthru
      _
    // Predicated region
    $region42: #{cnn_forward.1} parent=1 // pred_check
      _
    $region43: #{cnn_forward.1} parent=1 // pred_check_branch
      %134 = sbr.rel (0) target = $region45
    $region44: #{cnn_forward.1} parent=1 // pred_region
      %136 = vsyncadd [#allocation18], 0
      %s138 = sshll.u32 %s10, 4
      %s139 = int_to_ptr.hbm [resolvable:$true] %s138
      %s140 = sshll.u32 [#allocation17], 4
      %s141 = int_to_ptr.vmem [resolvable:$true] %s140
      %143 = dma.hbm_to_vmem [thread:$0]  %s139, 16, %s141, [#allocation18]
    $region45: #{cnn_forward.1} parent=1 // pred_fallthru
      _
    // Predicated region
    $region46: #{cnn_forward.1} parent=1 // pred_check
      _
    $region47: #{cnn_forward.1} parent=1 // pred_check_branch
      %145 = sbr.rel (0) target = $region49
    $region48: #{cnn_forward.1} parent=1 // pred_region
      %147 = dma.done [#allocation4], 5120
    $region49: #{cnn_forward.1} parent=1 // pred_fallthru
      _
    // Predicated region
    $region50: #{cnn_forward.1} parent=1 // pred_check
      _
    $region51: #{cnn_forward.1} parent=1 // pred_check_branch
      %149 = sbr.rel (0) target = $region53
    $region52: #{cnn_forward.1} parent=1 // pred_region
      %151 = dma.done [#allocation6], 64
    $region53: #{cnn_forward.1} parent=1 // pred_fallthru
      _
    // Predicated region
    $region54: #{cnn_forward.1} parent=1 // pred_check
      _
    $region55: #{cnn_forward.1} parent=1 // pred_check_branch
      %153 = sbr.rel (0) target = $region57
    $region56: #{cnn_forward.1} parent=1 // pred_region
      %155 = dma.done [#allocation6], 35840
    $region57: #{cnn_forward.1} parent=1 // pred_fallthru
      _
    // Predicated region
    $region58: #{cnn_forward.1} parent=1 // pred_check
      _
    $region59: #{cnn_forward.1} parent=1 // pred_check_branch
      %157 = sbr.rel (0) target = $region61
    $region60: #{cnn_forward.1} parent=1 // pred_region
      %159 = dma.done [#allocation9], 64
    $region61: #{cnn_forward.1} parent=1 // pred_fallthru
      _
    // Predicated region
    $region62: #{cnn_forward.1} parent=1 // pred_check
      _
    $region63: #{cnn_forward.1} parent=1 // pred_check_branch
      %161 = sbr.rel (0) target = $region65
    $region64: #{cnn_forward.1} parent=1 // pred_region
      %163 = dma.done [#allocation9], 14336
    $region65: #{cnn_forward.1} parent=1 // pred_fallthru
      _
    // Predicated region
    $region66: #{cnn_forward.1} parent=1 // pred_check
      _
    $region67: #{cnn_forward.1} parent=1 // pred_check_branch
      %165 = sbr.rel (0) target = $region69
    $region68: #{cnn_forward.1} parent=1 // pred_region
      %167 = dma.done [#allocation12], 32
    $region69: #{cnn_forward.1} parent=1 // pred_fallthru
      _
    // Predicated region
    $region70: #{cnn_forward.1} parent=1 // pred_check
      _
    $region71: #{cnn_forward.1} parent=1 // pred_check_branch
      %169 = sbr.rel (0) target = $region73
    $region72: #{cnn_forward.1} parent=1 // pred_region
      %171 = dma.done [#allocation12], 2048
    $region73: #{cnn_forward.1} parent=1 // pred_fallthru
      _
    // Predicated region
    $region74: #{cnn_forward.1} parent=1 // pred_check
      _
    $region75: #{cnn_forward.1} parent=1 // pred_check_branch
      %173 = sbr.rel (0) target = $region77
    $region76: #{cnn_forward.1} parent=1 // pred_region
      %175 = dma.done [#allocation15], 16
    $region77: #{cnn_forward.1} parent=1 // pred_fallthru
      _
    // Predicated region
    $region78: #{cnn_forward.1} parent=1 // pred_check
      _
    $region79: #{cnn_forward.1} parent=1 // pred_check_branch
      %177 = sbr.rel (0) target = $region81
    $region80: #{cnn_forward.1} parent=1 // pred_region
      %179 = dma.done [#allocation15], 1024
    $region81: #{cnn_forward.1} parent=1 // pred_fallthru
      _
    // Predicated region
    $region82: #{cnn_forward.1} parent=1 // pred_check
      _
    $region83: #{cnn_forward.1} parent=1 // pred_check_branch
      %181 = sbr.rel (0) target = $region85
    $region84: #{cnn_forward.1} parent=1 // pred_region
      %183 = dma.done [#allocation18], 16
    $region85: #{cnn_forward.1} parent=1 // pred_fallthru
      _
    %v185 = vld [vmem:[%s0] sm:$0xf]
    %v186 = vld [vmem:[%s0 + $0x4] sm:$0xf]
    %v187 = vld [vmem:[%s0 + $0x8] sm:$0xf]
    %v188 = vld [vmem:[%s0 + $0xc] sm:$0xf]
    %v189 = vld [vmem:[%s0 + $0x10] sm:$0xf]
    %v190 = vld [vmem:[%s0 + $0x14] sm:$0xf]
    %v191 = vld [vmem:[%s0 + $0x18] sm:$0xf]
    %v192 = vld [vmem:[%s0 + $0x1c] sm:$0xf]
    %v193 = vld [vmem:[%s0 + $0x20] sm:$0xf]
    %v194 = vld [vmem:[%s0 + $0x24] sm:$0xf]
    %v195 = vld [vmem:[%s0 + $0x28] sm:$0xf]
    %v196 = vld [vmem:[%s0 + $0x2c] sm:$0xf]
    %v197 = vld [vmem:[%s0 + $0x30] sm:$0xf]
    %v198 = vld [vmem:[%s0 + $0x34] sm:$0xf]
    %v199 = vld [vmem:[%s0 + $0x38] sm:$0xf]
    %v200 = vld [vmem:[%s0 + $0x3c] sm:$0xf]
    %v201 = vld [vmem:[%s0 + $0x40] sm:$0xf]
    %v202 = vld [vmem:[%s0 + $0x44] sm:$0xf]
    %v203 = vld [vmem:[%s0 + $0x48] sm:$0xf]
    %v204 = vld [vmem:[%s0 + $0x4c] sm:$0xf]
    %v205 = vld [vmem:[%s0 + $0x50] sm:$0xf]
    %v206 = vld [vmem:[%s0 + $0x54] sm:$0xf]
    %v207 = vld [vmem:[%s0 + $0x58] sm:$0xf]
    %v208 = vld [vmem:[%s0 + $0x5c] sm:$0xf]
    %v209 = vld [vmem:[%s0 + $0x60] sm:$0xf]
    %v210 = vld [vmem:[%s0 + $0x64] sm:$0xf]
    %v211 = vld [vmem:[%s0 + $0x68] sm:$0xf]
    %v212 = vld [vmem:[%s0 + $0x6c] sm:$0xf]
    %v213 = vld [vmem:[%s0 + $0x70] sm:$0xf]
    %v214 = vld [vmem:[%s0 + $0x74] sm:$0xf]
    %v215 = vld [vmem:[%s0 + $0x78] sm:$0xf]
    %v216 = vld [vmem:[%s0 + $0x7c] sm:$0xf]
    %v217 = vld [vmem:[%s0 + $0x80] sm:$0xf]
    %v218 = vld [vmem:[%s0 + $0x84] sm:$0xf]
    %v219 = vld [vmem:[%s0 + $0x88] sm:$0xf]
    %v220 = vld [vmem:[%s0 + $0x8c] sm:$0xf]
    %v221 = vld [vmem:[%s0 + $0x90] sm:$0xf]
    %v222 = vld [vmem:[%s0 + $0x94] sm:$0xf]
    %v223 = vld [vmem:[%s0 + $0x98] sm:$0xf]
    %v224 = vld [vmem:[%s0 + $0x9c] sm:$0xf]
    %v225 = vld [vmem:[%s0 + $0xa0] sm:$0xf]
    %v226 = vld [vmem:[%s0 + $0xa4] sm:$0xf]
    %v227 = vld [vmem:[%s0 + $0xa8] sm:$0xf]
    %v228 = vld [vmem:[%s0 + $0xac] sm:$0xf]
    %v229 = vld [vmem:[%s0 + $0xb0] sm:$0xf]
    %v230 = vld [vmem:[%s0 + $0xb4] sm:$0xf]
    %v231 = vld [vmem:[%s0 + $0xb8] sm:$0xf]
    %v232 = vld [vmem:[%s0 + $0xbc] sm:$0xf]
    %v233 = vld [vmem:[%s0 + $0xc0] sm:$0xf]
    %v234 = vld [vmem:[%s0 + $0xc4] sm:$0xf]
    %v235 = vld [vmem:[%s0 + $0xc8] sm:$0xf]
    %v236 = vld [vmem:[%s0 + $0xcc] sm:$0xf]
    %v237 = vld [vmem:[%s0 + $0xd0] sm:$0xf]
    %v238 = vld [vmem:[%s0 + $0xd4] sm:$0xf]
    %v239 = vld [vmem:[%s0 + $0xd8] sm:$0xf]
    %v240 = vld [vmem:[%s0 + $0xdc] sm:$0xf]
    %v241 = vld [vmem:[%s0 + $0xe0] sm:$0xf]
    %v242 = vld [vmem:[%s0 + $0xe4] sm:$0xf]
    %v243 = vld [vmem:[%s0 + $0xe8] sm:$0xf]
    %v244 = vld [vmem:[%s0 + $0xec] sm:$0xf]
    %v245 = vld [vmem:[%s0 + $0xf0] sm:$0xf]
    %v246 = vld [vmem:[%s0 + $0xf4] sm:$0xf]
    %v247 = vld [vmem:[%s0 + $0xf8] sm:$0xf]
    %v248 = vld [vmem:[%s0 + $0xfc] sm:$0xf]
    %v305 = vunpack.c.l.b16 %v185
    %v306 = vunpack.c.l.b16 %v186
    %v307 = vunpack.c.l.b16 %v187
    %v308 = vunpack.c.l.b16 %v188
    %v309 = vunpack.c.l.b16 %v189
    %v310 = vunpack.c.l.b16 %v190
    %v311 = vunpack.c.l.b16 %v191
    %v312 = vunpack.c.l.b16 %v192
    %v313 = vunpack.c.l.b16 %v193
    %v314 = vunpack.c.l.b16 %v194
    %v315 = vunpack.c.l.b16 %v195
    %v316 = vunpack.c.l.b16 %v196
    %v317 = vunpack.c.l.b16 %v197
    %v318 = vunpack.c.l.b16 %v198
    %v319 = vunpack.c.l.b16 %v199
    %v320 = vunpack.c.l.b16 %v200
    %v321 = vunpack.c.l.b16 %v201
    %v322 = vunpack.c.l.b16 %v202
    %v323 = vunpack.c.l.b16 %v203
    %v324 = vunpack.c.l.b16 %v204
    %v325 = vunpack.c.l.b16 %v205
    %v326 = vunpack.c.l.b16 %v206
    %v327 = vunpack.c.l.b16 %v207
    %v328 = vunpack.c.l.b16 %v208
    %v329 = vunpack.c.l.b16 %v209
    %v330 = vunpack.c.l.b16 %v210
    %v331 = vunpack.c.l.b16 %v211
    %v332 = vunpack.c.l.b16 %v212
    %v333 = vunpack.c.l.b16 %v213
    %v334 = vunpack.c.l.b16 %v214
    %v335 = vunpack.c.l.b16 %v215
    %v336 = vunpack.c.l.b16 %v216
    %v337 = vunpack.c.l.b16 %v217
    %v338 = vunpack.c.l.b16 %v218
    %v339 = vunpack.c.l.b16 %v219
    %v340 = vunpack.c.l.b16 %v220
    %v341 = vunpack.c.l.b16 %v221
    %v342 = vunpack.c.l.b16 %v222
    %v343 = vunpack.c.l.b16 %v223
    %v344 = vunpack.c.l.b16 %v224
    %v345 = vunpack.c.l.b16 %v225
    %v346 = vunpack.c.l.b16 %v226
    %v347 = vunpack.c.l.b16 %v227
    %v348 = vunpack.c.l.b16 %v228
    %v349 = vunpack.c.l.b16 %v229
    %v350 = vunpack.c.l.b16 %v230
    %v351 = vunpack.c.l.b16 %v231
    %v352 = vunpack.c.l.b16 %v232
    %v353 = vunpack.c.l.b16 %v233
    %v354 = vunpack.c.l.b16 %v234
    %v355 = vunpack.c.l.b16 %v235
    %v356 = vunpack.c.l.b16 %v236
    %v357 = vunpack.c.l.b16 %v237
    %v358 = vunpack.c.l.b16 %v238
    %v359 = vunpack.c.l.b16 %v239
    %v360 = vunpack.c.l.b16 %v240
    %v361 = vpack.c.b16 %v306, %v305
    %v362 = vpack.c.b16 %v308, %v307
    %v363 = vpack.c.b16 %v310, %v309
    %v364 = vpack.c.b16 %v312, %v311
    %v365 = vpack.c.b16 %v314, %v313
    %v366 = vpack.c.b16 %v316, %v315
    %v367 = vpack.c.b16 %v318, %v317
    %v368 = vpack.c.b16 %v320, %v319
    %v369 = vpack.c.b16 %v322, %v321
    %v370 = vpack.c.b16 %v324, %v323
    %v371 = vpack.c.b16 %v326, %v325
    %v372 = vpack.c.b16 %v328, %v327
    %v373 = vpack.c.b16 %v330, %v329
    %v374 = vpack.c.b16 %v332, %v331
    %v375 = vpack.c.b16 %v334, %v333
    %v376 = vpack.c.b16 %v336, %v335
    %v377 = vpack.c.b16 %v338, %v337
    %v378 = vpack.c.b16 %v340, %v339
    %v379 = vpack.c.b16 %v342, %v341
    %v380 = vpack.c.b16 %v344, %v343
    %v381 = vpack.c.b16 %v346, %v345
    %v382 = vpack.c.b16 %v348, %v347
    %v383 = vpack.c.b16 %v350, %v349
    %v384 = vpack.c.b16 %v352, %v351
    %v385 = vpack.c.b16 %v354, %v353
    %v386 = vpack.c.b16 %v356, %v355
    %v387 = vpack.c.b16 %v358, %v357
    %v388 = vpack.c.b16 %v360, %v359
    %v391 = vunpack.c.l.b16 %v241
    %v392 = vunpack.c.l.b16 %v242
    %v393 = vpack.c.b16 %v392, %v391
    %394 = vrot.lane.b32.xlu0 %v362, 32
    %v395 = vpop.permute.xlu0 %394
    %396 = vrot.lane.b32.xlu0 %v363, 32
    %v397 = vpop.permute.xlu0 %396
    %398 = vrot.lane.b32.xlu0 %v364, 32
    %v399 = vpop.permute.xlu0 %398
    %400 = vrot.lane.b32.xlu0 %v365, 32
    %v401 = vpop.permute.xlu0 %400
    %402 = vrot.lane.b32.xlu0 %v366, 32
    %v403 = vpop.permute.xlu0 %402
    %404 = vrot.lane.b32.xlu0 %v367, 32
    %v405 = vpop.permute.xlu0 %404
    %406 = vrot.lane.b32.xlu0 %v368, 32
    %v407 = vpop.permute.xlu0 %406
    %408 = vrot.lane.b32.xlu0 %v369, 32
    %v409 = vpop.permute.xlu0 %408
    %410 = vrot.lane.b32.xlu0 %v370, 32
    %v411 = vpop.permute.xlu0 %410
    %412 = vrot.lane.b32.xlu0 %v371, 32
    %v413 = vpop.permute.xlu0 %412
    %414 = vrot.lane.b32.xlu0 %v372, 32
    %v415 = vpop.permute.xlu0 %414
    %416 = vrot.lane.b32.xlu0 %v373, 32
    %v417 = vpop.permute.xlu0 %416
    %418 = vrot.lane.b32.xlu0 %v374, 32
    %v419 = vpop.permute.xlu0 %418
    %420 = vrot.lane.b32.xlu0 %v375, 32
    %v421 = vpop.permute.xlu0 %420
    %422 = vrot.lane.b32.xlu0 %v376, 32
    %v423 = vpop.permute.xlu0 %422
    %424 = vrot.lane.b32.xlu0 %v377, 32
    %v425 = vpop.permute.xlu0 %424
    %426 = vrot.lane.b32.xlu0 %v378, 32
    %v427 = vpop.permute.xlu0 %426
    %428 = vrot.lane.b32.xlu0 %v379, 32
    %v429 = vpop.permute.xlu0 %428
    %430 = vrot.lane.b32.xlu0 %v380, 32
    %v431 = vpop.permute.xlu0 %430
    %432 = vrot.lane.b32.xlu0 %v381, 32
    %v433 = vpop.permute.xlu0 %432
    %434 = vrot.lane.b32.xlu0 %v382, 32
    %v435 = vpop.permute.xlu0 %434
    %436 = vrot.lane.b32.xlu0 %v383, 32
    %v437 = vpop.permute.xlu0 %436
    %438 = vrot.lane.b32.xlu0 %v384, 32
    %v439 = vpop.permute.xlu0 %438
    %440 = vrot.lane.b32.xlu0 %v385, 32
    %v441 = vpop.permute.xlu0 %440
    %442 = vrot.lane.b32.xlu0 %v386, 32
    %v443 = vpop.permute.xlu0 %442
    %444 = vrot.lane.b32.xlu0 %v387, 32
    %v445 = vpop.permute.xlu0 %444
    %446 = vrot.lane.b32.xlu0 %v388, 32
    %v447 = vpop.permute.xlu0 %446
    %448 = vrot.lane.b32.xlu0 %v393, 32
    %v449 = vpop.permute.xlu0 %448
    %v452 = vunpack.c.l.b16 %v243
    %v453 = vunpack.c.l.b16 %v244
    %v454 = vpack.c.b16 %v453, %v452
    %455 = vrot.lane.b32.xlu0 %v363, 64
    %v456 = vpop.permute.xlu0 %455
    %457 = vrot.lane.b32.xlu0 %v364, 64
    %v458 = vpop.permute.xlu0 %457
    %459 = vrot.lane.b32.xlu0 %v365, 64
    %v460 = vpop.permute.xlu0 %459
    %461 = vrot.lane.b32.xlu0 %v366, 64
    %v462 = vpop.permute.xlu0 %461
    %463 = vrot.lane.b32.xlu0 %v367, 64
    %v464 = vpop.permute.xlu0 %463
    %465 = vrot.lane.b32.xlu0 %v368, 64
    %v466 = vpop.permute.xlu0 %465
    %467 = vrot.lane.b32.xlu0 %v369, 64
    %v468 = vpop.permute.xlu0 %467
    %469 = vrot.lane.b32.xlu0 %v370, 64
    %v470 = vpop.permute.xlu0 %469
    %471 = vrot.lane.b32.xlu0 %v371, 64
    %v472 = vpop.permute.xlu0 %471
    %473 = vrot.lane.b32.xlu0 %v372, 64
    %v474 = vpop.permute.xlu0 %473
    %475 = vrot.lane.b32.xlu0 %v373, 64
    %v476 = vpop.permute.xlu0 %475
    %477 = vrot.lane.b32.xlu0 %v374, 64
    %v478 = vpop.permute.xlu0 %477
    %479 = vrot.lane.b32.xlu0 %v375, 64
    %v480 = vpop.permute.xlu0 %479
    %481 = vrot.lane.b32.xlu0 %v376, 64
    %v482 = vpop.permute.xlu0 %481
    %483 = vrot.lane.b32.xlu0 %v377, 64
    %v484 = vpop.permute.xlu0 %483
    %485 = vrot.lane.b32.xlu0 %v378, 64
    %v486 = vpop.permute.xlu0 %485
    %487 = vrot.lane.b32.xlu0 %v379, 64
    %v488 = vpop.permute.xlu0 %487
    %489 = vrot.lane.b32.xlu0 %v380, 64
    %v490 = vpop.permute.xlu0 %489
    %491 = vrot.lane.b32.xlu0 %v381, 64
    %v492 = vpop.permute.xlu0 %491
    %493 = vrot.lane.b32.xlu0 %v382, 64
    %v494 = vpop.permute.xlu0 %493
    %495 = vrot.lane.b32.xlu0 %v383, 64
    %v496 = vpop.permute.xlu0 %495
    %497 = vrot.lane.b32.xlu0 %v384, 64
    %v498 = vpop.permute.xlu0 %497
    %499 = vrot.lane.b32.xlu0 %v385, 64
    %v500 = vpop.permute.xlu0 %499
    %501 = vrot.lane.b32.xlu0 %v386, 64
    %v502 = vpop.permute.xlu0 %501
    %503 = vrot.lane.b32.xlu0 %v387, 64
    %v504 = vpop.permute.xlu0 %503
    %505 = vrot.lane.b32.xlu0 %v388, 64
    %v506 = vpop.permute.xlu0 %505
    %507 = vrot.lane.b32.xlu0 %v393, 64
    %v508 = vpop.permute.xlu0 %507
    %509 = vrot.lane.b32.xlu0 %v454, 64
    %v510 = vpop.permute.xlu0 %509
    %v513 = vunpack.c.l.b16 %v245
    %v514 = vunpack.c.l.b16 %v246
    %v515 = vpack.c.b16 %v514, %v513
    %516 = vrot.lane.b32.xlu0 %v364, 96
    %v517 = vpop.permute.xlu0 %516
    %518 = vrot.lane.b32.xlu0 %v365, 96
    %v519 = vpop.permute.xlu0 %518
    %520 = vrot.lane.b32.xlu0 %v366, 96
    %v521 = vpop.permute.xlu0 %520
    %522 = vrot.lane.b32.xlu0 %v367, 96
    %v523 = vpop.permute.xlu0 %522
    %524 = vrot.lane.b32.xlu0 %v368, 96
    %v525 = vpop.permute.xlu0 %524
    %526 = vrot.lane.b32.xlu0 %v369, 96
    %v527 = vpop.permute.xlu0 %526
    %528 = vrot.lane.b32.xlu0 %v370, 96
    %v529 = vpop.permute.xlu0 %528
    %530 = vrot.lane.b32.xlu0 %v371, 96
    %v531 = vpop.permute.xlu0 %530
    %532 = vrot.lane.b32.xlu0 %v372, 96
    %v533 = vpop.permute.xlu0 %532
    %534 = vrot.lane.b32.xlu0 %v373, 96
    %v535 = vpop.permute.xlu0 %534
    %536 = vrot.lane.b32.xlu0 %v374, 96
    %v537 = vpop.permute.xlu0 %536
    %538 = vrot.lane.b32.xlu0 %v375, 96
    %v539 = vpop.permute.xlu0 %538
    %540 = vrot.lane.b32.xlu0 %v376, 96
    %v541 = vpop.permute.xlu0 %540
    %542 = vrot.lane.b32.xlu0 %v377, 96
    %v543 = vpop.permute.xlu0 %542
    %544 = vrot.lane.b32.xlu0 %v378, 96
    %v545 = vpop.permute.xlu0 %544
    %546 = vrot.lane.b32.xlu0 %v379, 96
    %v547 = vpop.permute.xlu0 %546
    %548 = vrot.lane.b32.xlu0 %v380, 96
    %v549 = vpop.permute.xlu0 %548
    %550 = vrot.lane.b32.xlu0 %v381, 96
    %v551 = vpop.permute.xlu0 %550
    %552 = vrot.lane.b32.xlu0 %v382, 96
    %v553 = vpop.permute.xlu0 %552
    %554 = vrot.lane.b32.xlu0 %v383, 96
    %v555 = vpop.permute.xlu0 %554
    %556 = vrot.lane.b32.xlu0 %v384, 96
    %v557 = vpop.permute.xlu0 %556
    %558 = vrot.lane.b32.xlu0 %v385, 96
    %v559 = vpop.permute.xlu0 %558
    %560 = vrot.lane.b32.xlu0 %v386, 96
    %v561 = vpop.permute.xlu0 %560
    %562 = vrot.lane.b32.xlu0 %v387, 96
    %v563 = vpop.permute.xlu0 %562
    %564 = vrot.lane.b32.xlu0 %v388, 96
    %v565 = vpop.permute.xlu0 %564
    %566 = vrot.lane.b32.xlu0 %v393, 96
    %v567 = vpop.permute.xlu0 %566
    %568 = vrot.lane.b32.xlu0 %v454, 96
    %v569 = vpop.permute.xlu0 %568
    %570 = vrot.lane.b32.xlu0 %v515, 96
    %v571 = vpop.permute.xlu0 %570
    %v574 = vunpack.c.l.b16 %v247
    %v575 = vunpack.c.l.b16 %v248
    %v576 = vpack.c.b16 %v575, %v574
    %vm577 = vcmask 261120
    %v580 = vsel %vm577, %v361, %v395
    %v583 = vsel %vm577, %v362, %v397
    %v586 = vsel %vm577, %v363, %v399
    %v589 = vsel %vm577, %v364, %v401
    %v592 = vsel %vm577, %v365, %v403
    %v595 = vsel %vm577, %v366, %v405
    %v598 = vsel %vm577, %v367, %v407
    %v601 = vsel %vm577, %v368, %v409
    %v604 = vsel %vm577, %v369, %v411
    %v607 = vsel %vm577, %v370, %v413
    %v610 = vsel %vm577, %v371, %v415
    %v613 = vsel %vm577, %v372, %v417
    %v616 = vsel %vm577, %v373, %v419
    %v619 = vsel %vm577, %v374, %v421
    %v622 = vsel %vm577, %v375, %v423
    %v625 = vsel %vm577, %v376, %v425
    %v628 = vsel %vm577, %v377, %v427
    %v631 = vsel %vm577, %v378, %v429
    %v634 = vsel %vm577, %v379, %v431
    %v637 = vsel %vm577, %v380, %v433
    %v640 = vsel %vm577, %v381, %v435
    %v643 = vsel %vm577, %v382, %v437
    %v646 = vsel %vm577, %v383, %v439
    %v649 = vsel %vm577, %v384, %v441
    %v652 = vsel %vm577, %v385, %v443
    %v655 = vsel %vm577, %v386, %v445
    %v658 = vsel %vm577, %v387, %v447
    %v661 = vsel %vm577, %v388, %v449
    %vm662 = vcmask 523264
    %v664 = vsel %vm662, %v580, %v456
    %v666 = vsel %vm662, %v583, %v458
    %v668 = vsel %vm662, %v586, %v460
    %v670 = vsel %vm662, %v589, %v462
    %v672 = vsel %vm662, %v592, %v464
    %v674 = vsel %vm662, %v595, %v466
    %v676 = vsel %vm662, %v598, %v468
    %v678 = vsel %vm662, %v601, %v470
    %v680 = vsel %vm662, %v604, %v472
    %v682 = vsel %vm662, %v607, %v474
    %v684 = vsel %vm662, %v610, %v476
    %v686 = vsel %vm662, %v613, %v478
    %v688 = vsel %vm662, %v616, %v480
    %v690 = vsel %vm662, %v619, %v482
    %v692 = vsel %vm662, %v622, %v484
    %v694 = vsel %vm662, %v625, %v486
    %v696 = vsel %vm662, %v628, %v488
    %v698 = vsel %vm662, %v631, %v490
    %v700 = vsel %vm662, %v634, %v492
    %v702 = vsel %vm662, %v637, %v494
    %v704 = vsel %vm662, %v640, %v496
    %v706 = vsel %vm662, %v643, %v498
    %v708 = vsel %vm662, %v646, %v500
    %v710 = vsel %vm662, %v649, %v502
    %v712 = vsel %vm662, %v652, %v504
    %v714 = vsel %vm662, %v655, %v506
    %v716 = vsel %vm662, %v658, %v508
    %v718 = vsel %vm662, %v661, %v510
    %vm719 = vcmask 785408
    %v721 = vsel %vm719, %v664, %v517
    %v724 = vsel %vm719, %v666, %v519
    %v727 = vsel %vm719, %v668, %v521
    %v730 = vsel %vm719, %v670, %v523
    %v733 = vsel %vm719, %v672, %v525
    %v736 = vsel %vm719, %v674, %v527
    %v739 = vsel %vm719, %v676, %v529
    %v742 = vsel %vm719, %v678, %v531
    %v745 = vsel %vm719, %v680, %v533
    %v748 = vsel %vm719, %v682, %v535
    %v751 = vsel %vm719, %v684, %v537
    %v754 = vsel %vm719, %v686, %v539
    %v757 = vsel %vm719, %v688, %v541
    %v760 = vsel %vm719, %v690, %v543
    %v763 = vsel %vm719, %v692, %v545
    %v766 = vsel %vm719, %v694, %v547
    %v769 = vsel %vm719, %v696, %v549
    %v772 = vsel %vm719, %v698, %v551
    %v775 = vsel %vm719, %v700, %v553
    %v778 = vsel %vm719, %v702, %v555
    %v781 = vsel %vm719, %v704, %v557
    %v784 = vsel %vm719, %v706, %v559
    %v787 = vsel %vm719, %v708, %v561
    %v790 = vsel %vm719, %v710, %v563
    %v793 = vsel %vm719, %v712, %v565
    %v796 = vsel %vm719, %v714, %v567
    %v799 = vsel %vm719, %v716, %v569
    %v802 = vsel %vm719, %v718, %v571
    %v804 = vld [vmem:[#allocation3] sm:$0xff]
    %v805 = vld [vmem:[#allocation3 + $0x8] sm:$0xff]
    %v806 = vld [vmem:[#allocation3 + $0x10] sm:$0xff]
    %v807 = vld [vmem:[#allocation3 + $0x18] sm:$0xff]
    %v808 = vld [vmem:[#allocation3 + $0x20] sm:$0xff]
    %v809 = vld [vmem:[#allocation3 + $0x28] sm:$0xff]
    %v810 = vld [vmem:[#allocation3 + $0x30] sm:$0xff]
    %v811 = vld [vmem:[#allocation3 + $0x38] sm:$0xff]
    %v812 = vld [vmem:[#allocation3 + $0x40] sm:$0xff]
    %v813 = vld [vmem:[#allocation3 + $0x48] sm:$0xff]
    %v814 = vld [vmem:[#allocation3 + $0x50] sm:$0xff]
    %v815 = vld [vmem:[#allocation3 + $0x58] sm:$0xff]
    %v816 = vld [vmem:[#allocation3 + $0x60] sm:$0xff]
    %v817 = vld [vmem:[#allocation3 + $0x68] sm:$0xff]
    %v818 = vld [vmem:[#allocation3 + $0x70] sm:$0xff]
    %v819 = vld [vmem:[#allocation3 + $0x78] sm:$0xff]
    %v820 = vld [vmem:[#allocation3 + $0x80] sm:$0xff]
    %v821 = vld [vmem:[#allocation3 + $0x88] sm:$0xff]
    %v822 = vld [vmem:[#allocation3 + $0x90] sm:$0xff]
    %v823 = vld [vmem:[#allocation3 + $0x98] sm:$0xff]
    %v824 = vld [vmem:[#allocation3 + $0xa0] sm:$0xff]
    %v825 = vld [vmem:[#allocation3 + $0xa8] sm:$0xff]
    %v826 = vld [vmem:[#allocation3 + $0xb0] sm:$0xff]
    %v827 = vld [vmem:[#allocation3 + $0xb8] sm:$0xff]
    %v828 = vld [vmem:[#allocation3 + $0xc0] sm:$0xff]
    %v829 = vld [vmem:[#allocation3 + $0xc8] sm:$0xff]
    %v830 = vld [vmem:[#allocation3 + $0xd0] sm:$0xff]
    %v831 = vld [vmem:[#allocation3 + $0xd8] sm:$0xff]
    %v832 = vld [vmem:[#allocation3 + $0xe0] sm:$0xff]
    %v833 = vld [vmem:[#allocation3 + $0xe8] sm:$0xff]
    %v834 = vld [vmem:[#allocation3 + $0xf0] sm:$0xff]
    %v835 = vld [vmem:[#allocation3 + $0xf8] sm:$0xff]
    %v836 = vld [vmem:[#allocation3 + $0x100] sm:$0xff]
    %v837 = vld [vmem:[#allocation3 + $0x108] sm:$0xff]
    %v838 = vld [vmem:[#allocation3 + $0x110] sm:$0xff]
    %v839 = vld [vmem:[#allocation3 + $0x118] sm:$0xff]
    %v840 = vld [vmem:[#allocation3 + $0x120] sm:$0xff]
    %v841 = vld [vmem:[#allocation3 + $0x128] sm:$0xff]
    %v842 = vld [vmem:[#allocation3 + $0x130] sm:$0xff]
    %v843 = vld [vmem:[#allocation3 + $0x138] sm:$0xff]
    %v844 = vld [vmem:[#allocation5] sm:$0xf]
    %v846 = vperm.slane %v844, 0
    %v847 = vperm.slane %v844, 1
    %v848 = vperm.slane %v844, 2
    %v849 = vperm.slane %v844, 3
    %v894 = vunpack.c.l.b16 %v804
    %v895 = vunpack.c.h.b16 %v804
    %v896 = vunpack.c.l.b16 %v805
    %v897 = vunpack.c.h.b16 %v805
    %v898 = vunpack.c.l.b16 %v806
    %v899 = vunpack.c.h.b16 %v806
    %v900 = vunpack.c.l.b16 %v807
    %v901 = vunpack.c.h.b16 %v807
    %v902 = vunpack.c.l.b16 %v808
    %v903 = vunpack.c.h.b16 %v808
    %v904 = vunpack.c.l.b16 %v809
    %v905 = vunpack.c.h.b16 %v809
    %v906 = vunpack.c.l.b16 %v810
    %v907 = vunpack.c.h.b16 %v810
    %v908 = vunpack.c.l.b16 %v811
    %v909 = vunpack.c.h.b16 %v811
    %v910 = vunpack.c.l.b16 %v812
    %v911 = vunpack.c.h.b16 %v812
    %v912 = vunpack.c.l.b16 %v813
    %v913 = vunpack.c.h.b16 %v813
    %v914 = vunpack.c.l.b16 %v814
    %v915 = vunpack.c.h.b16 %v814
    %v916 = vunpack.c.l.b16 %v815
    %v917 = vunpack.c.h.b16 %v815
    %v918 = vunpack.c.l.b16 %v816
    %v919 = vunpack.c.h.b16 %v816
    %v920 = vunpack.c.l.b16 %v817
    %v921 = vunpack.c.h.b16 %v817
    %v922 = vunpack.c.l.b16 %v818
    %v923 = vunpack.c.h.b16 %v818
    %v924 = vunpack.c.l.b16 %v819
    %v925 = vunpack.c.h.b16 %v819
    %v926 = vunpack.c.l.b16 %v820
    %v927 = vunpack.c.h.b16 %v820
    %v928 = vunpack.c.l.b16 %v821
    %v929 = vunpack.c.h.b16 %v821
    %v930 = vunpack.c.l.b16 %v822
    %v931 = vunpack.c.h.b16 %v822
    %v932 = vunpack.c.l.b16 %v823
    %v933 = vunpack.c.h.b16 %v823
    %v934 = vunpack.c.l.b16 %v824
    %v935 = vunpack.c.h.b16 %v824
    %v936 = vunpack.c.l.b16 %v825
    %v937 = vunpack.c.h.b16 %v825
    %v938 = vunpack.c.l.b16 %v826
    %v939 = vunpack.c.h.b16 %v826
    %v940 = vunpack.c.l.b16 %v827
    %v941 = vunpack.c.h.b16 %v827
    %v942 = vunpack.c.l.b16 %v828
    %v943 = vunpack.c.h.b16 %v828
    %v944 = vunpack.c.l.b16 %v829
    %v945 = vunpack.c.h.b16 %v829
    %v946 = vunpack.c.l.b16 %v830
    %v947 = vunpack.c.h.b16 %v830
    %v948 = vunpack.c.l.b16 %v831
    %v949 = vunpack.c.h.b16 %v831
    %v950 = vunpack.c.l.b16 %v832
    %v951 = vunpack.c.h.b16 %v832
    %v952 = vunpack.c.l.b16 %v833
    %v953 = vunpack.c.h.b16 %v833
    %v954 = vunpack.c.l.b16 %v834
    %v955 = vunpack.c.h.b16 %v834
    %v956 = vunpack.c.l.b16 %v835
    %v957 = vunpack.c.h.b16 %v835
    %v958 = vunpack.c.l.b16 %v836
    %v959 = vunpack.c.h.b16 %v836
    %v960 = vunpack.c.l.b16 %v837
    %v961 = vunpack.c.h.b16 %v837
    %v962 = vunpack.c.l.b16 %v838
    %v963 = vunpack.c.h.b16 %v838
    %v964 = vunpack.c.l.b16 %v839
    %v965 = vunpack.c.h.b16 %v839
    %v966 = vunpack.c.l.b16 %v840
    %v967 = vunpack.c.h.b16 %v840
    %v968 = vunpack.c.l.b16 %v841
    %v969 = vunpack.c.h.b16 %v841
    %v970 = vunpack.c.l.b16 %v842
    %v971 = vunpack.c.h.b16 %v842
    %v972 = vunpack.c.l.b16 %v843
    %v973 = vunpack.c.h.b16 %v843
    %v974 = vpack.c.b16 %v898, %v894
    %v975 = vpack.c.b16 %v899, %v895
    %v976 = vpack.c.b16 %v900, %v896
    %v977 = vpack.c.b16 %v901, %v897
    %v978 = vpack.c.b16 %v906, %v902
    %v979 = vpack.c.b16 %v907, %v903
    %v980 = vpack.c.b16 %v908, %v904
    %v981 = vpack.c.b16 %v909, %v905
    %v982 = vpack.c.b16 %v914, %v910
    %v983 = vpack.c.b16 %v915, %v911
    %v984 = vpack.c.b16 %v916, %v912
    %v985 = vpack.c.b16 %v917, %v913
    %v986 = vpack.c.b16 %v922, %v918
    %v987 = vpack.c.b16 %v923, %v919
    %v988 = vpack.c.b16 %v924, %v920
    %v989 = vpack.c.b16 %v925, %v921
    %v990 = vpack.c.b16 %v930, %v926
    %v991 = vpack.c.b16 %v931, %v927
    %v992 = vpack.c.b16 %v932, %v928
    %v993 = vpack.c.b16 %v933, %v929
    %v994 = vpack.c.b16 %v938, %v934
    %v995 = vpack.c.b16 %v939, %v935
    %v996 = vpack.c.b16 %v940, %v936
    %v997 = vpack.c.b16 %v941, %v937
    %v998 = vpack.c.b16 %v946, %v942
    %v999 = vpack.c.b16 %v947, %v943
    %v1000 = vpack.c.b16 %v948, %v944
    %v1001 = vpack.c.b16 %v949, %v945
    %v1002 = vpack.c.b16 %v954, %v950
    %v1003 = vpack.c.b16 %v955, %v951
    %v1004 = vpack.c.b16 %v956, %v952
    %v1005 = vpack.c.b16 %v957, %v953
    %v1006 = vpack.c.b16 %v962, %v958
    %v1007 = vpack.c.b16 %v963, %v959
    %v1008 = vpack.c.b16 %v964, %v960
    %v1009 = vpack.c.b16 %v965, %v961
    %v1010 = vpack.c.b16 %v970, %v966
    %v1011 = vpack.c.b16 %v971, %v967
    %v1012 = vpack.c.b16 %v972, %v968
    %v1013 = vpack.c.b16 %v973, %v969
    %v1054 = vsel %vm577, %v365, 0
    %v1056 = vsel %vm577, %v366, 0
    %v1058 = vsel %vm577, %v367, 0
    %v1060 = vsel %vm577, %v368, 0
    %v1062 = vsel %vm577, %v369, 0
    %v1064 = vsel %vm577, %v370, 0
    %v1066 = vsel %vm577, %v371, 0
    %v1068 = vsel %vm577, %v372, 0
    %v1070 = vsel %vm577, %v373, 0
    %v1072 = vsel %vm577, %v374, 0
    %v1074 = vsel %vm577, %v375, 0
    %v1076 = vsel %vm577, %v376, 0
    %v1078 = vsel %vm577, %v377, 0
    %v1080 = vsel %vm577, %v378, 0
    %v1082 = vsel %vm577, %v379, 0
    %v1084 = vsel %vm577, %v380, 0
    %v1086 = vsel %vm577, %v381, 0
    %v1088 = vsel %vm577, %v382, 0
    %v1090 = vsel %vm577, %v383, 0
    %v1092 = vsel %vm577, %v384, 0
    %v1094 = vsel %vm577, %v385, 0
    %v1096 = vsel %vm577, %v386, 0
    %v1098 = vsel %vm577, %v387, 0
    %v1100 = vsel %vm577, %v388, 0
    %v1103 = vsel %vm577, %v393, 0
    %v1106 = vsel %vm577, %v454, 0
    %v1109 = vsel %vm577, %v515, 0
    %v1112 = vsel %vm577, %v576, 0
    %1114 = vmatpush.bf16.msra.mxu0 %v1002
    %1115 = vmatpush.bf16.msra.mxu0 %v998
    %1116 = vmatpush.bf16.msra.mxu0 %v994
    %1117 = vmatpush.bf16.msra.mxu0 %v990
    %1118 = vmatpush.bf16.msra.mxu0 %v986
    %1119 = vmatpush.bf16.msra.mxu0 %v982
    %1120 = vmatpush.bf16.msra.mxu0 %v978
    %1121 = vmatpush.bf16.msra.mxu0 %v974
    %1122 = vmatmul.bf16.gmra.mxu0 %v721
    %v1123 = vpop.f32.mrf.mxu0
    %v1124 = vadd.f32 %v846, %v1123
    %v1125 = vpop.f32.mrf.mxu0
    %v1126 = vadd.f32 %v846, %v1125
    %1127 = vmatmul.bf16.gmra.mxu0 %v724
    %v1128 = vpop.f32.mrf.mxu0
    %v1129 = vadd.f32 %v846, %v1128
    %v1130 = vpop.f32.mrf.mxu0
    %v1131 = vadd.f32 %v846, %v1130
    %1132 = vmatmul.bf16.gmra.mxu0 %v727
    %v1133 = vpop.f32.mrf.mxu0
    %v1134 = vadd.f32 %v846, %v1133
    %v1135 = vpop.f32.mrf.mxu0
    %v1136 = vadd.f32 %v846, %v1135
    %1137 = vmatmul.bf16.gmra.mxu0 %v730
    %v1138 = vpop.f32.mrf.mxu0
    %v1139 = vadd.f32 %v846, %v1138
    %v1140 = vpop.f32.mrf.mxu0
    %v1141 = vadd.f32 %v846, %v1140
    %1142 = vmatmul.bf16.gmra.mxu0 %v733
    %v1143 = vpop.f32.mrf.mxu0
    %v1144 = vadd.f32 %v846, %v1143
    %v1145 = vpop.f32.mrf.mxu0
    %v1146 = vadd.f32 %v846, %v1145
    %1147 = vmatmul.bf16.gmra.mxu0 %v736
    %v1148 = vpop.f32.mrf.mxu0
    %v1149 = vadd.f32 %v846, %v1148
    %v1150 = vpop.f32.mrf.mxu0
    %v1151 = vadd.f32 %v846, %v1150
    %1152 = vmatmul.bf16.gmra.mxu0 %v739
    %v1153 = vpop.f32.mrf.mxu0
    %v1154 = vadd.f32 %v846, %v1153
    %v1155 = vpop.f32.mrf.mxu0
    %v1156 = vadd.f32 %v846, %v1155
    %1157 = vmatmul.bf16.gmra.mxu0 %v742
    %v1158 = vpop.f32.mrf.mxu0
    %v1159 = vadd.f32 %v846, %v1158
    %v1160 = vpop.f32.mrf.mxu0
    %v1161 = vadd.f32 %v846, %v1160
    %1162 = vmatmul.bf16.gmra.mxu0 %v745
    %v1163 = vpop.f32.mrf.mxu0
    %v1164 = vadd.f32 %v846, %v1163
    %v1165 = vpop.f32.mrf.mxu0
    %v1166 = vadd.f32 %v846, %v1165
    %1167 = vmatmul.bf16.gmra.mxu0 %v748
    %v1168 = vpop.f32.mrf.mxu0
    %v1169 = vadd.f32 %v846, %v1168
    %v1170 = vpop.f32.mrf.mxu0
    %v1171 = vadd.f32 %v846, %v1170
    %1172 = vmatmul.bf16.gmra.mxu0 %v751
    %v1173 = vpop.f32.mrf.mxu0
    %v1174 = vadd.f32 %v846, %v1173
    %v1175 = vpop.f32.mrf.mxu0
    %v1176 = vadd.f32 %v846, %v1175
    %1177 = vmatmul.bf16.gmra.mxu0 %v754
    %v1178 = vpop.f32.mrf.mxu0
    %v1179 = vadd.f32 %v846, %v1178
    %v1180 = vpop.f32.mrf.mxu0
    %v1181 = vadd.f32 %v846, %v1180
    %1182 = vmatmul.bf16.gmra.mxu0 %v757
    %v1183 = vpop.f32.mrf.mxu0
    %v1184 = vadd.f32 %v846, %v1183
    %v1185 = vpop.f32.mrf.mxu0
    %v1186 = vadd.f32 %v846, %v1185
    %1187 = vmatmul.bf16.gmra.mxu0 %v760
    %v1188 = vpop.f32.mrf.mxu0
    %v1189 = vadd.f32 %v846, %v1188
    %v1190 = vpop.f32.mrf.mxu0
    %v1191 = vadd.f32 %v846, %v1190
    %1192 = vmatmul.bf16.gmra.mxu0 %v763
    %v1193 = vpop.f32.mrf.mxu0
    %v1194 = vadd.f32 %v846, %v1193
    %v1195 = vpop.f32.mrf.mxu0
    %v1196 = vadd.f32 %v846, %v1195
    %1197 = vmatmul.bf16.gmra.mxu0 %v766
    %v1198 = vpop.f32.mrf.mxu0
    %v1199 = vadd.f32 %v846, %v1198
    %v1200 = vpop.f32.mrf.mxu0
    %v1201 = vadd.f32 %v846, %v1200
    %1202 = vmatmul.bf16.gmra.mxu0 %v769
    %v1203 = vpop.f32.mrf.mxu0
    %v1204 = vadd.f32 %v846, %v1203
    %v1205 = vpop.f32.mrf.mxu0
    %v1206 = vadd.f32 %v846, %v1205
    %1207 = vmatmul.bf16.gmra.mxu0 %v772
    %v1208 = vpop.f32.mrf.mxu0
    %v1209 = vadd.f32 %v846, %v1208
    %v1210 = vpop.f32.mrf.mxu0
    %v1211 = vadd.f32 %v846, %v1210
    %1212 = vmatmul.bf16.gmra.mxu0 %v775
    %v1213 = vpop.f32.mrf.mxu0
    %v1214 = vadd.f32 %v846, %v1213
    %v1215 = vpop.f32.mrf.mxu0
    %v1216 = vadd.f32 %v846, %v1215
    %1217 = vmatmul.bf16.gmra.mxu0 %v778
    %v1218 = vpop.f32.mrf.mxu0
    %v1219 = vadd.f32 %v846, %v1218
    %v1220 = vpop.f32.mrf.mxu0
    %v1221 = vadd.f32 %v846, %v1220
    %1222 = vmatmul.bf16.gmra.mxu0 %v781
    %v1223 = vpop.f32.mrf.mxu0
    %v1224 = vadd.f32 %v846, %v1223
    %v1225 = vpop.f32.mrf.mxu0
    %v1226 = vadd.f32 %v846, %v1225
    %1227 = vmatmul.bf16.gmra.mxu0 %v784
    %v1228 = vpop.f32.mrf.mxu0
    %v1229 = vadd.f32 %v846, %v1228
    %v1230 = vpop.f32.mrf.mxu0
    %v1231 = vadd.f32 %v846, %v1230
    %1232 = vmatmul.bf16.gmra.mxu0 %v787
    %v1233 = vpop.f32.mrf.mxu0
    %v1234 = vadd.f32 %v846, %v1233
    %v1235 = vpop.f32.mrf.mxu0
    %v1236 = vadd.f32 %v846, %v1235
    %1237 = vmatmul.bf16.gmra.mxu0 %v790
    %v1238 = vpop.f32.mrf.mxu0
    %v1239 = vadd.f32 %v846, %v1238
    %v1240 = vpop.f32.mrf.mxu0
    %v1241 = vadd.f32 %v846, %v1240
    %1242 = vmatmul.bf16.gmra.mxu0 %v793
    %v1243 = vpop.f32.mrf.mxu0
    %v1244 = vadd.f32 %v846, %v1243
    %v1245 = vpop.f32.mrf.mxu0
    %v1246 = vadd.f32 %v846, %v1245
    %1247 = vmatmul.bf16.gmra.mxu0 %v796
    %v1248 = vpop.f32.mrf.mxu0
    %v1249 = vadd.f32 %v846, %v1248
    %v1250 = vpop.f32.mrf.mxu0
    %v1251 = vadd.f32 %v846, %v1250
    %1252 = vmatmul.bf16.gmra.mxu0 %v799
    %v1253 = vpop.f32.mrf.mxu0
    %v1254 = vadd.f32 %v846, %v1253
    %v1255 = vpop.f32.mrf.mxu0
    %v1256 = vadd.f32 %v846, %v1255
    %1257 = vmatmul.bf16.gmra.mxu0 %v802
    %v1258 = vpop.f32.mrf.mxu0
    %v1259 = vadd.f32 %v846, %v1258
    %v1260 = vpop.f32.mrf.mxu0
    %v1261 = vadd.f32 %v846, %v1260
    %1262 = vdwg.mxu0
    %1263 = vmatpush.bf16.msra.mxu0 0
    %1264 = vmatpush.bf16.msra.mxu0 0
    %1265 = vmatpush.bf16.msra.mxu0 0
    %1266 = vmatpush.bf16.msra.mxu0 0
    %1267 = vmatpush.bf16.msra.mxu0 0
    %1268 = vmatpush.bf16.msra.mxu0 0
    %1269 = vmatpush.bf16.msra.mxu0 %v1010
    %1270 = vmatpush.bf16.msra.mxu0 %v1006
    %1271 = vmatmul.bf16.gmra.mxu0 %v1054
    %v1272 = vpop.f32.mrf.mxu0
    %v1273 = vadd.f32 %v1124, %v1272
    %v1274 = vpop.f32.mrf.mxu0
    %v1275 = vadd.f32 %v1126, %v1274
    %1276 = vmatmul.bf16.gmra.mxu0 %v1056
    %v1277 = vpop.f32.mrf.mxu0
    %v1278 = vadd.f32 %v1129, %v1277
    %v1279 = vpop.f32.mrf.mxu0
    %v1280 = vadd.f32 %v1131, %v1279
    %1281 = vmatmul.bf16.gmra.mxu0 %v1058
    %v1282 = vpop.f32.mrf.mxu0
    %v1283 = vadd.f32 %v1134, %v1282
    %v1284 = vpop.f32.mrf.mxu0
    %v1285 = vadd.f32 %v1136, %v1284
    %1286 = vmatmul.bf16.gmra.mxu0 %v1060
    %v1287 = vpop.f32.mrf.mxu0
    %v1288 = vadd.f32 %v1139, %v1287
    %v1289 = vpop.f32.mrf.mxu0
    %v1290 = vadd.f32 %v1141, %v1289
    %1291 = vmatmul.bf16.gmra.mxu0 %v1062
    %v1292 = vpop.f32.mrf.mxu0
    %v1293 = vadd.f32 %v1144, %v1292
    %v1294 = vpop.f32.mrf.mxu0
    %v1295 = vadd.f32 %v1146, %v1294
    %1296 = vmatmul.bf16.gmra.mxu0 %v1064
    %v1297 = vpop.f32.mrf.mxu0
    %v1298 = vadd.f32 %v1149, %v1297
    %v1299 = vpop.f32.mrf.mxu0
    %v1300 = vadd.f32 %v1151, %v1299
    %1301 = vmatmul.bf16.gmra.mxu0 %v1066
    %v1302 = vpop.f32.mrf.mxu0
    %v1303 = vadd.f32 %v1154, %v1302
    %v1304 = vpop.f32.mrf.mxu0
    %v1305 = vadd.f32 %v1156, %v1304
    %1306 = vmatmul.bf16.gmra.mxu0 %v1068
    %v1307 = vpop.f32.mrf.mxu0
    %v1308 = vadd.f32 %v1159, %v1307
    %v1309 = vpop.f32.mrf.mxu0
    %v1310 = vadd.f32 %v1161, %v1309
    %1311 = vmatmul.bf16.gmra.mxu0 %v1070
    %v1312 = vpop.f32.mrf.mxu0
    %v1313 = vadd.f32 %v1164, %v1312
    %v1314 = vpop.f32.mrf.mxu0
    %v1315 = vadd.f32 %v1166, %v1314
    %1316 = vmatmul.bf16.gmra.mxu0 %v1072
    %v1317 = vpop.f32.mrf.mxu0
    %v1318 = vadd.f32 %v1169, %v1317
    %v1319 = vpop.f32.mrf.mxu0
    %v1320 = vadd.f32 %v1171, %v1319
    %1321 = vmatmul.bf16.gmra.mxu0 %v1074
    %v1322 = vpop.f32.mrf.mxu0
    %v1323 = vadd.f32 %v1174, %v1322
    %v1324 = vpop.f32.mrf.mxu0
    %v1325 = vadd.f32 %v1176, %v1324
    %1326 = vmatmul.bf16.gmra.mxu0 %v1076
    %v1327 = vpop.f32.mrf.mxu0
    %v1328 = vadd.f32 %v1179, %v1327
    %v1329 = vpop.f32.mrf.mxu0
    %v1330 = vadd.f32 %v1181, %v1329
    %1331 = vmatmul.bf16.gmra.mxu0 %v1078
    %v1332 = vpop.f32.mrf.mxu0
    %v1333 = vadd.f32 %v1184, %v1332
    %v1334 = vpop.f32.mrf.mxu0
    %v1335 = vadd.f32 %v1186, %v1334
    %1336 = vmatmul.bf16.gmra.mxu0 %v1080
    %v1337 = vpop.f32.mrf.mxu0
    %v1338 = vadd.f32 %v1189, %v1337
    %v1339 = vpop.f32.mrf.mxu0
    %v1340 = vadd.f32 %v1191, %v1339
    %1341 = vmatmul.bf16.gmra.mxu0 %v1082
    %v1342 = vpop.f32.mrf.mxu0
    %v1343 = vadd.f32 %v1194, %v1342
    %v1344 = vpop.f32.mrf.mxu0
    %v1345 = vadd.f32 %v1196, %v1344
    %1346 = vmatmul.bf16.gmra.mxu0 %v1084
    %v1347 = vpop.f32.mrf.mxu0
    %v1348 = vadd.f32 %v1199, %v1347
    %v1349 = vpop.f32.mrf.mxu0
    %v1350 = vadd.f32 %v1201, %v1349
    %1351 = vmatmul.bf16.gmra.mxu0 %v1086
    %v1352 = vpop.f32.mrf.mxu0
    %v1353 = vadd.f32 %v1204, %v1352
    %v1354 = vpop.f32.mrf.mxu0
    %v1355 = vadd.f32 %v1206, %v1354
    %1356 = vmatmul.bf16.gmra.mxu0 %v1088
    %v1357 = vpop.f32.mrf.mxu0
    %v1358 = vadd.f32 %v1209, %v1357
    %v1359 = vpop.f32.mrf.mxu0
    %v1360 = vadd.f32 %v1211, %v1359
    %1361 = vmatmul.bf16.gmra.mxu0 %v1090
    %v1362 = vpop.f32.mrf.mxu0
    %v1363 = vadd.f32 %v1214, %v1362
    %v1364 = vpop.f32.mrf.mxu0
    %v1365 = vadd.f32 %v1216, %v1364
    %1366 = vmatmul.bf16.gmra.mxu0 %v1092
    %v1367 = vpop.f32.mrf.mxu0
    %v1368 = vadd.f32 %v1219, %v1367
    %v1369 = vpop.f32.mrf.mxu0
    %v1370 = vadd.f32 %v1221, %v1369
    %1371 = vmatmul.bf16.gmra.mxu0 %v1094
    %v1372 = vpop.f32.mrf.mxu0
    %v1373 = vadd.f32 %v1224, %v1372
    %v1374 = vpop.f32.mrf.mxu0
    %v1375 = vadd.f32 %v1226, %v1374
    %1376 = vmatmul.bf16.gmra.mxu0 %v1096
    %v1377 = vpop.f32.mrf.mxu0
    %v1378 = vadd.f32 %v1229, %v1377
    %v1379 = vpop.f32.mrf.mxu0
    %v1380 = vadd.f32 %v1231, %v1379
    %1381 = vmatmul.bf16.gmra.mxu0 %v1098
    %v1382 = vpop.f32.mrf.mxu0
    %v1383 = vadd.f32 %v1234, %v1382
    %v1384 = vpop.f32.mrf.mxu0
    %v1385 = vadd.f32 %v1236, %v1384
    %1386 = vmatmul.bf16.gmra.mxu0 %v1100
    %v1387 = vpop.f32.mrf.mxu0
    %v1388 = vadd.f32 %v1239, %v1387
    %v1389 = vpop.f32.mrf.mxu0
    %v1390 = vadd.f32 %v1241, %v1389
    %1391 = vmatmul.bf16.gmra.mxu0 %v1103
    %v1392 = vpop.f32.mrf.mxu0
    %v1393 = vadd.f32 %v1244, %v1392
    %v1394 = vpop.f32.mrf.mxu0
    %v1395 = vadd.f32 %v1246, %v1394
    %1396 = vmatmul.bf16.gmra.mxu0 %v1106
    %v1397 = vpop.f32.mrf.mxu0
    %v1398 = vadd.f32 %v1249, %v1397
    %v1399 = vpop.f32.mrf.mxu0
    %v1400 = vadd.f32 %v1251, %v1399
    %1401 = vmatmul.bf16.gmra.mxu0 %v1109
    %v1402 = vpop.f32.mrf.mxu0
    %v1403 = vadd.f32 %v1254, %v1402
    %v1404 = vpop.f32.mrf.mxu0
    %v1405 = vadd.f32 %v1256, %v1404
    %1406 = vmatmul.bf16.gmra.mxu0 %v1112
    %v1407 = vpop.f32.mrf.mxu0
    %v1408 = vadd.f32 %v1259, %v1407
    %v1409 = vpop.f32.mrf.mxu0
    %v1410 = vadd.f32 %v1261, %v1409
    %1411 = vdwg.mxu0
    %1412 = vmatpush.bf16.msra.mxu0 %v1003
    %1413 = vmatpush.bf16.msra.mxu0 %v999
    %1414 = vmatpush.bf16.msra.mxu0 %v995
    %1415 = vmatpush.bf16.msra.mxu0 %v991
    %1416 = vmatpush.bf16.msra.mxu0 %v987
    %1417 = vmatpush.bf16.msra.mxu0 %v983
    %1418 = vmatpush.bf16.msra.mxu0 %v979
    %1419 = vmatpush.bf16.msra.mxu0 %v975
    %1420 = vmatmul.bf16.gmra.mxu0 %v721
    %v1421 = vpop.f32.mrf.mxu0
    %v1422 = vadd.f32 %v847, %v1421
    %v1423 = vpop.f32.mrf.mxu0
    %v1424 = vadd.f32 %v847, %v1423
    %1425 = vmatmul.bf16.gmra.mxu0 %v724
    %v1426 = vpop.f32.mrf.mxu0
    %v1427 = vadd.f32 %v847, %v1426
    %v1428 = vpop.f32.mrf.mxu0
    %v1429 = vadd.f32 %v847, %v1428
    %1430 = vmatmul.bf16.gmra.mxu0 %v727
    %v1431 = vpop.f32.mrf.mxu0
    %v1432 = vadd.f32 %v847, %v1431
    %v1433 = vpop.f32.mrf.mxu0
    %v1434 = vadd.f32 %v847, %v1433
    %1435 = vmatmul.bf16.gmra.mxu0 %v730
    %v1436 = vpop.f32.mrf.mxu0
    %v1437 = vadd.f32 %v847, %v1436
    %v1438 = vpop.f32.mrf.mxu0
    %v1439 = vadd.f32 %v847, %v1438
    %1440 = vmatmul.bf16.gmra.mxu0 %v733
    %v1441 = vpop.f32.mrf.mxu0
    %v1442 = vadd.f32 %v847, %v1441
    %v1443 = vpop.f32.mrf.mxu0
    %v1444 = vadd.f32 %v847, %v1443
    %1445 = vmatmul.bf16.gmra.mxu0 %v736
    %v1446 = vpop.f32.mrf.mxu0
    %v1447 = vadd.f32 %v847, %v1446
    %v1448 = vpop.f32.mrf.mxu0
    %v1449 = vadd.f32 %v847, %v1448
    %1450 = vmatmul.bf16.gmra.mxu0 %v739
    %v1451 = vpop.f32.mrf.mxu0
    %v1452 = vadd.f32 %v847, %v1451
    %v1453 = vpop.f32.mrf.mxu0
    %v1454 = vadd.f32 %v847, %v1453
    %1455 = vmatmul.bf16.gmra.mxu0 %v742
    %v1456 = vpop.f32.mrf.mxu0
    %v1457 = vadd.f32 %v847, %v1456
    %v1458 = vpop.f32.mrf.mxu0
    %v1459 = vadd.f32 %v847, %v1458
    %1460 = vmatmul.bf16.gmra.mxu0 %v745
    %v1461 = vpop.f32.mrf.mxu0
    %v1462 = vadd.f32 %v847, %v1461
    %v1463 = vpop.f32.mrf.mxu0
    %v1464 = vadd.f32 %v847, %v1463
    %1465 = vmatmul.bf16.gmra.mxu0 %v748
    %v1466 = vpop.f32.mrf.mxu0
    %v1467 = vadd.f32 %v847, %v1466
    %v1468 = vpop.f32.mrf.mxu0
    %v1469 = vadd.f32 %v847, %v1468
    %1470 = vmatmul.bf16.gmra.mxu0 %v751
    %v1471 = vpop.f32.mrf.mxu0
    %v1472 = vadd.f32 %v847, %v1471
    %v1473 = vpop.f32.mrf.mxu0
    %v1474 = vadd.f32 %v847, %v1473
    %1475 = vmatmul.bf16.gmra.mxu0 %v754
    %v1476 = vpop.f32.mrf.mxu0
    %v1477 = vadd.f32 %v847, %v1476
    %v1478 = vpop.f32.mrf.mxu0
    %v1479 = vadd.f32 %v847, %v1478
    %1480 = vmatmul.bf16.gmra.mxu0 %v757
    %v1481 = vpop.f32.mrf.mxu0
    %v1482 = vadd.f32 %v847, %v1481
    %v1483 = vpop.f32.mrf.mxu0
    %v1484 = vadd.f32 %v847, %v1483
    %1485 = vmatmul.bf16.gmra.mxu0 %v760
    %v1486 = vpop.f32.mrf.mxu0
    %v1487 = vadd.f32 %v847, %v1486
    %v1488 = vpop.f32.mrf.mxu0
    %v1489 = vadd.f32 %v847, %v1488
    %1490 = vmatmul.bf16.gmra.mxu0 %v763
    %v1491 = vpop.f32.mrf.mxu0
    %v1492 = vadd.f32 %v847, %v1491
    %v1493 = vpop.f32.mrf.mxu0
    %v1494 = vadd.f32 %v847, %v1493
    %1495 = vmatmul.bf16.gmra.mxu0 %v766
    %v1496 = vpop.f32.mrf.mxu0
    %v1497 = vadd.f32 %v847, %v1496
    %v1498 = vpop.f32.mrf.mxu0
    %v1499 = vadd.f32 %v847, %v1498
    %1500 = vmatmul.bf16.gmra.mxu0 %v769
    %v1501 = vpop.f32.mrf.mxu0
    %v1502 = vadd.f32 %v847, %v1501
    %v1503 = vpop.f32.mrf.mxu0
    %v1504 = vadd.f32 %v847, %v1503
    %1505 = vmatmul.bf16.gmra.mxu0 %v772
    %v1506 = vpop.f32.mrf.mxu0
    %v1507 = vadd.f32 %v847, %v1506
    %v1508 = vpop.f32.mrf.mxu0
    %v1509 = vadd.f32 %v847, %v1508
    %1510 = vmatmul.bf16.gmra.mxu0 %v775
    %v1511 = vpop.f32.mrf.mxu0
    %v1512 = vadd.f32 %v847, %v1511
    %v1513 = vpop.f32.mrf.mxu0
    %v1514 = vadd.f32 %v847, %v1513
    %1515 = vmatmul.bf16.gmra.mxu0 %v778
    %v1516 = vpop.f32.mrf.mxu0
    %v1517 = vadd.f32 %v847, %v1516
    %v1518 = vpop.f32.mrf.mxu0
    %v1519 = vadd.f32 %v847, %v1518
    %1520 = vmatmul.bf16.gmra.mxu0 %v781
    %v1521 = vpop.f32.mrf.mxu0
    %v1522 = vadd.f32 %v847, %v1521
    %v1523 = vpop.f32.mrf.mxu0
    %v1524 = vadd.f32 %v847, %v1523
    %1525 = vmatmul.bf16.gmra.mxu0 %v784
    %v1526 = vpop.f32.mrf.mxu0
    %v1527 = vadd.f32 %v847, %v1526
    %v1528 = vpop.f32.mrf.mxu0
    %v1529 = vadd.f32 %v847, %v1528
    %1530 = vmatmul.bf16.gmra.mxu0 %v787
    %v1531 = vpop.f32.mrf.mxu0
    %v1532 = vadd.f32 %v847, %v1531
    %v1533 = vpop.f32.mrf.mxu0
    %v1534 = vadd.f32 %v847, %v1533
    %1535 = vmatmul.bf16.gmra.mxu0 %v790
    %v1536 = vpop.f32.mrf.mxu0
    %v1537 = vadd.f32 %v847, %v1536
    %v1538 = vpop.f32.mrf.mxu0
    %v1539 = vadd.f32 %v847, %v1538
    %1540 = vmatmul.bf16.gmra.mxu0 %v793
    %v1541 = vpop.f32.mrf.mxu0
    %v1542 = vadd.f32 %v847, %v1541
    %v1543 = vpop.f32.mrf.mxu0
    %v1544 = vadd.f32 %v847, %v1543
    %1545 = vmatmul.bf16.gmra.mxu0 %v796
    %v1546 = vpop.f32.mrf.mxu0
    %v1547 = vadd.f32 %v847, %v1546
    %v1548 = vpop.f32.mrf.mxu0
    %v1549 = vadd.f32 %v847, %v1548
    %1550 = vmatmul.bf16.gmra.mxu0 %v799
    %v1551 = vpop.f32.mrf.mxu0
    %v1552 = vadd.f32 %v847, %v1551
    %v1553 = vpop.f32.mrf.mxu0
    %v1554 = vadd.f32 %v847, %v1553
    %1555 = vmatmul.bf16.gmra.mxu0 %v802
    %v1556 = vpop.f32.mrf.mxu0
    %v1557 = vadd.f32 %v847, %v1556
    %v1558 = vpop.f32.mrf.mxu0
    %v1559 = vadd.f32 %v847, %v1558
    %1560 = vdwg.mxu0
    %1561 = vmatpush.bf16.msra.mxu0 0
    %1562 = vmatpush.bf16.msra.mxu0 0
    %1563 = vmatpush.bf16.msra.mxu0 0
    %1564 = vmatpush.bf16.msra.mxu0 0
    %1565 = vmatpush.bf16.msra.mxu0 0
    %1566 = vmatpush.bf16.msra.mxu0 0
    %1567 = vmatpush.bf16.msra.mxu0 %v1011
    %1568 = vmatpush.bf16.msra.mxu0 %v1007
    %1569 = vmatmul.bf16.gmra.mxu0 %v1054
    %v1570 = vpop.f32.mrf.mxu0
    %v1571 = vadd.f32 %v1422, %v1570
    %v1572 = vpop.f32.mrf.mxu0
    %v1573 = vadd.f32 %v1424, %v1572
    %1574 = vmatmul.bf16.gmra.mxu0 %v1056
    %v1575 = vpop.f32.mrf.mxu0
    %v1576 = vadd.f32 %v1427, %v1575
    %v1577 = vpop.f32.mrf.mxu0
    %v1578 = vadd.f32 %v1429, %v1577
    %1579 = vmatmul.bf16.gmra.mxu0 %v1058
    %v1580 = vpop.f32.mrf.mxu0
    %v1581 = vadd.f32 %v1432, %v1580
    %v1582 = vpop.f32.mrf.mxu0
    %v1583 = vadd.f32 %v1434, %v1582
    %1584 = vmatmul.bf16.gmra.mxu0 %v1060
    %v1585 = vpop.f32.mrf.mxu0
    %v1586 = vadd.f32 %v1437, %v1585
    %v1587 = vpop.f32.mrf.mxu0
    %v1588 = vadd.f32 %v1439, %v1587
    %1589 = vmatmul.bf16.gmra.mxu0 %v1062
    %v1590 = vpop.f32.mrf.mxu0
    %v1591 = vadd.f32 %v1442, %v1590
    %v1592 = vpop.f32.mrf.mxu0
    %v1593 = vadd.f32 %v1444, %v1592
    %1594 = vmatmul.bf16.gmra.mxu0 %v1064
    %v1595 = vpop.f32.mrf.mxu0
    %v1596 = vadd.f32 %v1447, %v1595
    %v1597 = vpop.f32.mrf.mxu0
    %v1598 = vadd.f32 %v1449, %v1597
    %1599 = vmatmul.bf16.gmra.mxu0 %v1066
    %v1600 = vpop.f32.mrf.mxu0
    %v1601 = vadd.f32 %v1452, %v1600
    %v1602 = vpop.f32.mrf.mxu0
    %v1603 = vadd.f32 %v1454, %v1602
    %1604 = vmatmul.bf16.gmra.mxu0 %v1068
    %v1605 = vpop.f32.mrf.mxu0
    %v1606 = vadd.f32 %v1457, %v1605
    %v1607 = vpop.f32.mrf.mxu0
    %v1608 = vadd.f32 %v1459, %v1607
    %1609 = vmatmul.bf16.gmra.mxu0 %v1070
    %v1610 = vpop.f32.mrf.mxu0
    %v1611 = vadd.f32 %v1462, %v1610
    %v1612 = vpop.f32.mrf.mxu0
    %v1613 = vadd.f32 %v1464, %v1612
    %1614 = vmatmul.bf16.gmra.mxu0 %v1072
    %v1615 = vpop.f32.mrf.mxu0
    %v1616 = vadd.f32 %v1467, %v1615
    %v1617 = vpop.f32.mrf.mxu0
    %v1618 = vadd.f32 %v1469, %v1617
    %1619 = vmatmul.bf16.gmra.mxu0 %v1074
    %v1620 = vpop.f32.mrf.mxu0
    %v1621 = vadd.f32 %v1472, %v1620
    %v1622 = vpop.f32.mrf.mxu0
    %v1623 = vadd.f32 %v1474, %v1622
    %1624 = vmatmul.bf16.gmra.mxu0 %v1076
    %v1625 = vpop.f32.mrf.mxu0
    %v1626 = vadd.f32 %v1477, %v1625
    %v1627 = vpop.f32.mrf.mxu0
    %v1628 = vadd.f32 %v1479, %v1627
    %1629 = vmatmul.bf16.gmra.mxu0 %v1078
    %v1630 = vpop.f32.mrf.mxu0
    %v1631 = vadd.f32 %v1482, %v1630
    %v1632 = vpop.f32.mrf.mxu0
    %v1633 = vadd.f32 %v1484, %v1632
    %1634 = vmatmul.bf16.gmra.mxu0 %v1080
    %v1635 = vpop.f32.mrf.mxu0
    %v1636 = vadd.f32 %v1487, %v1635
    %v1637 = vpop.f32.mrf.mxu0
    %v1638 = vadd.f32 %v1489, %v1637
    %1639 = vmatmul.bf16.gmra.mxu0 %v1082
    %v1640 = vpop.f32.mrf.mxu0
    %v1641 = vadd.f32 %v1492, %v1640
    %v1642 = vpop.f32.mrf.mxu0
    %v1643 = vadd.f32 %v1494, %v1642
    %1644 = vmatmul.bf16.gmra.mxu0 %v1084
    %v1645 = vpop.f32.mrf.mxu0
    %v1646 = vadd.f32 %v1497, %v1645
    %v1647 = vpop.f32.mrf.mxu0
    %v1648 = vadd.f32 %v1499, %v1647
    %1649 = vmatmul.bf16.gmra.mxu0 %v1086
    %v1650 = vpop.f32.mrf.mxu0
    %v1651 = vadd.f32 %v1502, %v1650
    %v1652 = vpop.f32.mrf.mxu0
    %v1653 = vadd.f32 %v1504, %v1652
    %1654 = vmatmul.bf16.gmra.mxu0 %v1088
    %v1655 = vpop.f32.mrf.mxu0
    %v1656 = vadd.f32 %v1507, %v1655
    %v1657 = vpop.f32.mrf.mxu0
    %v1658 = vadd.f32 %v1509, %v1657
    %1659 = vmatmul.bf16.gmra.mxu0 %v1090
    %v1660 = vpop.f32.mrf.mxu0
    %v1661 = vadd.f32 %v1512, %v1660
    %v1662 = vpop.f32.mrf.mxu0
    %v1663 = vadd.f32 %v1514, %v1662
    %1664 = vmatmul.bf16.gmra.mxu0 %v1092
    %v1665 = vpop.f32.mrf.mxu0
    %v1666 = vadd.f32 %v1517, %v1665
    %v1667 = vpop.f32.mrf.mxu0
    %v1668 = vadd.f32 %v1519, %v1667
    %1669 = vmatmul.bf16.gmra.mxu0 %v1094
    %v1670 = vpop.f32.mrf.mxu0
    %v1671 = vadd.f32 %v1522, %v1670
    %v1672 = vpop.f32.mrf.mxu0
    %v1673 = vadd.f32 %v1524, %v1672
    %1674 = vmatmul.bf16.gmra.mxu0 %v1096
    %v1675 = vpop.f32.mrf.mxu0
    %v1676 = vadd.f32 %v1527, %v1675
    %v1677 = vpop.f32.mrf.mxu0
    %v1678 = vadd.f32 %v1529, %v1677
    %1679 = vmatmul.bf16.gmra.mxu0 %v1098
    %v1680 = vpop.f32.mrf.mxu0
    %v1681 = vadd.f32 %v1532, %v1680
    %v1682 = vpop.f32.mrf.mxu0
    %v1683 = vadd.f32 %v1534, %v1682
    %1684 = vmatmul.bf16.gmra.mxu0 %v1100
    %v1685 = vpop.f32.mrf.mxu0
    %v1686 = vadd.f32 %v1537, %v1685
    %v1687 = vpop.f32.mrf.mxu0
    %v1688 = vadd.f32 %v1539, %v1687
    %1689 = vmatmul.bf16.gmra.mxu0 %v1103
    %v1690 = vpop.f32.mrf.mxu0
    %v1691 = vadd.f32 %v1542, %v1690
    %v1692 = vpop.f32.mrf.mxu0
    %v1693 = vadd.f32 %v1544, %v1692
    %1694 = vmatmul.bf16.gmra.mxu0 %v1106
    %v1695 = vpop.f32.mrf.mxu0
    %v1696 = vadd.f32 %v1547, %v1695
    %v1697 = vpop.f32.mrf.mxu0
    %v1698 = vadd.f32 %v1549, %v1697
    %1699 = vmatmul.bf16.gmra.mxu0 %v1109
    %v1700 = vpop.f32.mrf.mxu0
    %v1701 = vadd.f32 %v1552, %v1700
    %v1702 = vpop.f32.mrf.mxu0
    %v1703 = vadd.f32 %v1554, %v1702
    %1704 = vmatmul.bf16.gmra.mxu0 %v1112
    %v1705 = vpop.f32.mrf.mxu0
    %v1706 = vadd.f32 %v1557, %v1705
    %v1707 = vpop.f32.mrf.mxu0
    %v1708 = vadd.f32 %v1559, %v1707
    %1709 = vdwg.mxu0
    %1710 = vmatpush.bf16.msra.mxu0 %v1004
    %1711 = vmatpush.bf16.msra.mxu0 %v1000
    %1712 = vmatpush.bf16.msra.mxu0 %v996
    %1713 = vmatpush.bf16.msra.mxu0 %v992
    %1714 = vmatpush.bf16.msra.mxu0 %v988
    %1715 = vmatpush.bf16.msra.mxu0 %v984
    %1716 = vmatpush.bf16.msra.mxu0 %v980
    %1717 = vmatpush.bf16.msra.mxu0 %v976
    %1718 = vmatmul.bf16.gmra.mxu0 %v721
    %v1719 = vpop.f32.mrf.mxu0
    %v1720 = vadd.f32 %v848, %v1719
    %v1721 = vpop.f32.mrf.mxu0
    %v1722 = vadd.f32 %v848, %v1721
    %1723 = vmatmul.bf16.gmra.mxu0 %v724
    %v1724 = vpop.f32.mrf.mxu0
    %v1725 = vadd.f32 %v848, %v1724
    %v1726 = vpop.f32.mrf.mxu0
    %v1727 = vadd.f32 %v848, %v1726
    %1728 = vmatmul.bf16.gmra.mxu0 %v727
    %v1729 = vpop.f32.mrf.mxu0
    %v1730 = vadd.f32 %v848, %v1729
    %v1731 = vpop.f32.mrf.mxu0
    %v1732 = vadd.f32 %v848, %v1731
    %1733 = vmatmul.bf16.gmra.mxu0 %v730
    %v1734 = vpop.f32.mrf.mxu0
    %v1735 = vadd.f32 %v848, %v1734
    %v1736 = vpop.f32.mrf.mxu0
    %v1737 = vadd.f32 %v848, %v1736
    %1738 = vmatmul.bf16.gmra.mxu0 %v733
    %v1739 = vpop.f32.mrf.mxu0
    %v1740 = vadd.f32 %v848, %v1739
    %v1741 = vpop.f32.mrf.mxu0
    %v1742 = vadd.f32 %v848, %v1741
    %1743 = vmatmul.bf16.gmra.mxu0 %v736
    %v1744 = vpop.f32.mrf.mxu0
    %v1745 = vadd.f32 %v848, %v1744
    %v1746 = vpop.f32.mrf.mxu0
    %v1747 = vadd.f32 %v848, %v1746
    %1748 = vmatmul.bf16.gmra.mxu0 %v739
    %v1749 = vpop.f32.mrf.mxu0
    %v1750 = vadd.f32 %v848, %v1749
    %v1751 = vpop.f32.mrf.mxu0
    %v1752 = vadd.f32 %v848, %v1751
    %1753 = vmatmul.bf16.gmra.mxu0 %v742
    %v1754 = vpop.f32.mrf.mxu0
    %v1755 = vadd.f32 %v848, %v1754
    %v1756 = vpop.f32.mrf.mxu0
    %v1757 = vadd.f32 %v848, %v1756
    %1758 = vmatmul.bf16.gmra.mxu0 %v745
    %v1759 = vpop.f32.mrf.mxu0
    %v1760 = vadd.f32 %v848, %v1759
    %v1761 = vpop.f32.mrf.mxu0
    %v1762 = vadd.f32 %v848, %v1761
    %1763 = vmatmul.bf16.gmra.mxu0 %v748
    %v1764 = vpop.f32.mrf.mxu0
    %v1765 = vadd.f32 %v848, %v1764
    %v1766 = vpop.f32.mrf.mxu0
    %v1767 = vadd.f32 %v848, %v1766
    %1768 = vmatmul.bf16.gmra.mxu0 %v751
    %v1769 = vpop.f32.mrf.mxu0
    %v1770 = vadd.f32 %v848, %v1769
    %v1771 = vpop.f32.mrf.mxu0
    %v1772 = vadd.f32 %v848, %v1771
    %1773 = vmatmul.bf16.gmra.mxu0 %v754
    %v1774 = vpop.f32.mrf.mxu0
    %v1775 = vadd.f32 %v848, %v1774
    %v1776 = vpop.f32.mrf.mxu0
    %v1777 = vadd.f32 %v848, %v1776
    %1778 = vmatmul.bf16.gmra.mxu0 %v757
    %v1779 = vpop.f32.mrf.mxu0
    %v1780 = vadd.f32 %v848, %v1779
    %v1781 = vpop.f32.mrf.mxu0
    %v1782 = vadd.f32 %v848, %v1781
    %1783 = vmatmul.bf16.gmra.mxu0 %v760
    %v1784 = vpop.f32.mrf.mxu0
    %v1785 = vadd.f32 %v848, %v1784
    %v1786 = vpop.f32.mrf.mxu0
    %v1787 = vadd.f32 %v848, %v1786
    %1788 = vmatmul.bf16.gmra.mxu0 %v763
    %v1789 = vpop.f32.mrf.mxu0
    %v1790 = vadd.f32 %v848, %v1789
    %v1791 = vpop.f32.mrf.mxu0
    %v1792 = vadd.f32 %v848, %v1791
    %1793 = vmatmul.bf16.gmra.mxu0 %v766
    %v1794 = vpop.f32.mrf.mxu0
    %v1795 = vadd.f32 %v848, %v1794
    %v1796 = vpop.f32.mrf.mxu0
    %v1797 = vadd.f32 %v848, %v1796
    %1798 = vmatmul.bf16.gmra.mxu0 %v769
    %v1799 = vpop.f32.mrf.mxu0
    %v1800 = vadd.f32 %v848, %v1799
    %v1801 = vpop.f32.mrf.mxu0
    %v1802 = vadd.f32 %v848, %v1801
    %1803 = vmatmul.bf16.gmra.mxu0 %v772
    %v1804 = vpop.f32.mrf.mxu0
    %v1805 = vadd.f32 %v848, %v1804
    %v1806 = vpop.f32.mrf.mxu0
    %v1807 = vadd.f32 %v848, %v1806
    %1808 = vmatmul.bf16.gmra.mxu0 %v775
    %v1809 = vpop.f32.mrf.mxu0
    %v1810 = vadd.f32 %v848, %v1809
    %v1811 = vpop.f32.mrf.mxu0
    %v1812 = vadd.f32 %v848, %v1811
    %1813 = vmatmul.bf16.gmra.mxu0 %v778
    %v1814 = vpop.f32.mrf.mxu0
    %v1815 = vadd.f32 %v848, %v1814
    %v1816 = vpop.f32.mrf.mxu0
    %v1817 = vadd.f32 %v848, %v1816
    %1818 = vmatmul.bf16.gmra.mxu0 %v781
    %v1819 = vpop.f32.mrf.mxu0
    %v1820 = vadd.f32 %v848, %v1819
    %v1821 = vpop.f32.mrf.mxu0
    %v1822 = vadd.f32 %v848, %v1821
    %1823 = vmatmul.bf16.gmra.mxu0 %v784
    %v1824 = vpop.f32.mrf.mxu0
    %v1825 = vadd.f32 %v848, %v1824
    %v1826 = vpop.f32.mrf.mxu0
    %v1827 = vadd.f32 %v848, %v1826
    %1828 = vmatmul.bf16.gmra.mxu0 %v787
    %v1829 = vpop.f32.mrf.mxu0
    %v1830 = vadd.f32 %v848, %v1829
    %v1831 = vpop.f32.mrf.mxu0
    %v1832 = vadd.f32 %v848, %v1831
    %1833 = vmatmul.bf16.gmra.mxu0 %v790
    %v1834 = vpop.f32.mrf.mxu0
    %v1835 = vadd.f32 %v848, %v1834
    %v1836 = vpop.f32.mrf.mxu0
    %v1837 = vadd.f32 %v848, %v1836
    %1838 = vmatmul.bf16.gmra.mxu0 %v793
    %v1839 = vpop.f32.mrf.mxu0
    %v1840 = vadd.f32 %v848, %v1839
    %v1841 = vpop.f32.mrf.mxu0
    %v1842 = vadd.f32 %v848, %v1841
    %1843 = vmatmul.bf16.gmra.mxu0 %v796
    %v1844 = vpop.f32.mrf.mxu0
    %v1845 = vadd.f32 %v848, %v1844
    %v1846 = vpop.f32.mrf.mxu0
    %v1847 = vadd.f32 %v848, %v1846
    %1848 = vmatmul.bf16.gmra.mxu0 %v799
    %v1849 = vpop.f32.mrf.mxu0
    %v1850 = vadd.f32 %v848, %v1849
    %v1851 = vpop.f32.mrf.mxu0
    %v1852 = vadd.f32 %v848, %v1851
    %1853 = vmatmul.bf16.gmra.mxu0 %v802
    %v1854 = vpop.f32.mrf.mxu0
    %v1855 = vadd.f32 %v848, %v1854
    %v1856 = vpop.f32.mrf.mxu0
    %v1857 = vadd.f32 %v848, %v1856
    %1858 = vdwg.mxu0
    %1859 = vmatpush.bf16.msra.mxu0 0
    %1860 = vmatpush.bf16.msra.mxu0 0
    %1861 = vmatpush.bf16.msra.mxu0 0
    %1862 = vmatpush.bf16.msra.mxu0 0
    %1863 = vmatpush.bf16.msra.mxu0 0
    %1864 = vmatpush.bf16.msra.mxu0 0
    %1865 = vmatpush.bf16.msra.mxu0 %v1012
    %1866 = vmatpush.bf16.msra.mxu0 %v1008
    %1867 = vmatmul.bf16.gmra.mxu0 %v1054
    %v1868 = vpop.f32.mrf.mxu0
    %v1869 = vadd.f32 %v1720, %v1868
    %v1870 = vpop.f32.mrf.mxu0
    %v1871 = vadd.f32 %v1722, %v1870
    %1872 = vmatmul.bf16.gmra.mxu0 %v1056
    %v1873 = vpop.f32.mrf.mxu0
    %v1874 = vadd.f32 %v1725, %v1873
    %v1875 = vpop.f32.mrf.mxu0
    %v1876 = vadd.f32 %v1727, %v1875
    %1877 = vmatmul.bf16.gmra.mxu0 %v1058
    %v1878 = vpop.f32.mrf.mxu0
    %v1879 = vadd.f32 %v1730, %v1878
    %v1880 = vpop.f32.mrf.mxu0
    %v1881 = vadd.f32 %v1732, %v1880
    %1882 = vmatmul.bf16.gmra.mxu0 %v1060
    %v1883 = vpop.f32.mrf.mxu0
    %v1884 = vadd.f32 %v1735, %v1883
    %v1885 = vpop.f32.mrf.mxu0
    %v1886 = vadd.f32 %v1737, %v1885
    %1887 = vmatmul.bf16.gmra.mxu0 %v1062
    %v1888 = vpop.f32.mrf.mxu0
    %v1889 = vadd.f32 %v1740, %v1888
    %v1890 = vpop.f32.mrf.mxu0
    %v1891 = vadd.f32 %v1742, %v1890
    %1892 = vmatmul.bf16.gmra.mxu0 %v1064
    %v1893 = vpop.f32.mrf.mxu0
    %v1894 = vadd.f32 %v1745, %v1893
    %v1895 = vpop.f32.mrf.mxu0
    %v1896 = vadd.f32 %v1747, %v1895
    %1897 = vmatmul.bf16.gmra.mxu0 %v1066
    %v1898 = vpop.f32.mrf.mxu0
    %v1899 = vadd.f32 %v1750, %v1898
    %v1900 = vpop.f32.mrf.mxu0
    %v1901 = vadd.f32 %v1752, %v1900
    %1902 = vmatmul.bf16.gmra.mxu0 %v1068
    %v1903 = vpop.f32.mrf.mxu0
    %v1904 = vadd.f32 %v1755, %v1903
    %v1905 = vpop.f32.mrf.mxu0
    %v1906 = vadd.f32 %v1757, %v1905
    %1907 = vmatmul.bf16.gmra.mxu0 %v1070
    %v1908 = vpop.f32.mrf.mxu0
    %v1909 = vadd.f32 %v1760, %v1908
    %v1910 = vpop.f32.mrf.mxu0
    %v1911 = vadd.f32 %v1762, %v1910
    %1912 = vmatmul.bf16.gmra.mxu0 %v1072
    %v1913 = vpop.f32.mrf.mxu0
    %v1914 = vadd.f32 %v1765, %v1913
    %v1915 = vpop.f32.mrf.mxu0
    %v1916 = vadd.f32 %v1767, %v1915
    %1917 = vmatmul.bf16.gmra.mxu0 %v1074
    %v1918 = vpop.f32.mrf.mxu0
    %v1919 = vadd.f32 %v1770, %v1918
    %v1920 = vpop.f32.mrf.mxu0
    %v1921 = vadd.f32 %v1772, %v1920
    %1922 = vmatmul.bf16.gmra.mxu0 %v1076
    %v1923 = vpop.f32.mrf.mxu0
    %v1924 = vadd.f32 %v1775, %v1923
    %v1925 = vpop.f32.mrf.mxu0
    %v1926 = vadd.f32 %v1777, %v1925
    %1927 = vmatmul.bf16.gmra.mxu0 %v1078
    %v1928 = vpop.f32.mrf.mxu0
    %v1929 = vadd.f32 %v1780, %v1928
    %v1930 = vpop.f32.mrf.mxu0
    %v1931 = vadd.f32 %v1782, %v1930
    %1932 = vmatmul.bf16.gmra.mxu0 %v1080
    %v1933 = vpop.f32.mrf.mxu0
    %v1934 = vadd.f32 %v1785, %v1933
    %v1935 = vpop.f32.mrf.mxu0
    %v1936 = vadd.f32 %v1787, %v1935
    %1937 = vmatmul.bf16.gmra.mxu0 %v1082
    %v1938 = vpop.f32.mrf.mxu0
    %v1939 = vadd.f32 %v1790, %v1938
    %v1940 = vpop.f32.mrf.mxu0
    %v1941 = vadd.f32 %v1792, %v1940
    %1942 = vmatmul.bf16.gmra.mxu0 %v1084
    %v1943 = vpop.f32.mrf.mxu0
    %v1944 = vadd.f32 %v1795, %v1943
    %v1945 = vpop.f32.mrf.mxu0
    %v1946 = vadd.f32 %v1797, %v1945
    %1947 = vmatmul.bf16.gmra.mxu0 %v1086
    %v1948 = vpop.f32.mrf.mxu0
    %v1949 = vadd.f32 %v1800, %v1948
    %v1950 = vpop.f32.mrf.mxu0
    %v1951 = vadd.f32 %v1802, %v1950
    %1952 = vmatmul.bf16.gmra.mxu0 %v1088
    %v1953 = vpop.f32.mrf.mxu0
    %v1954 = vadd.f32 %v1805, %v1953
    %v1955 = vpop.f32.mrf.mxu0
    %v1956 = vadd.f32 %v1807, %v1955
    %1957 = vmatmul.bf16.gmra.mxu0 %v1090
    %v1958 = vpop.f32.mrf.mxu0
    %v1959 = vadd.f32 %v1810, %v1958
    %v1960 = vpop.f32.mrf.mxu0
    %v1961 = vadd.f32 %v1812, %v1960
    %1962 = vmatmul.bf16.gmra.mxu0 %v1092
    %v1963 = vpop.f32.mrf.mxu0
    %v1964 = vadd.f32 %v1815, %v1963
    %v1965 = vpop.f32.mrf.mxu0
    %v1966 = vadd.f32 %v1817, %v1965
    %1967 = vmatmul.bf16.gmra.mxu0 %v1094
    %v1968 = vpop.f32.mrf.mxu0
    %v1969 = vadd.f32 %v1820, %v1968
    %v1970 = vpop.f32.mrf.mxu0
    %v1971 = vadd.f32 %v1822, %v1970
    %1972 = vmatmul.bf16.gmra.mxu0 %v1096
    %v1973 = vpop.f32.mrf.mxu0
    %v1974 = vadd.f32 %v1825, %v1973
    %v1975 = vpop.f32.mrf.mxu0
    %v1976 = vadd.f32 %v1827, %v1975
    %1977 = vmatmul.bf16.gmra.mxu0 %v1098
    %v1978 = vpop.f32.mrf.mxu0
    %v1979 = vadd.f32 %v1830, %v1978
    %v1980 = vpop.f32.mrf.mxu0
    %v1981 = vadd.f32 %v1832, %v1980
    %1982 = vmatmul.bf16.gmra.mxu0 %v1100
    %v1983 = vpop.f32.mrf.mxu0
    %v1984 = vadd.f32 %v1835, %v1983
    %v1985 = vpop.f32.mrf.mxu0
    %v1986 = vadd.f32 %v1837, %v1985
    %1987 = vmatmul.bf16.gmra.mxu0 %v1103
    %v1988 = vpop.f32.mrf.mxu0
    %v1989 = vadd.f32 %v1840, %v1988
    %v1990 = vpop.f32.mrf.mxu0
    %v1991 = vadd.f32 %v1842, %v1990
    %1992 = vmatmul.bf16.gmra.mxu0 %v1106
    %v1993 = vpop.f32.mrf.mxu0
    %v1994 = vadd.f32 %v1845, %v1993
    %v1995 = vpop.f32.mrf.mxu0
    %v1996 = vadd.f32 %v1847, %v1995
    %1997 = vmatmul.bf16.gmra.mxu0 %v1109
    %v1998 = vpop.f32.mrf.mxu0
    %v1999 = vadd.f32 %v1850, %v1998
    %v2000 = vpop.f32.mrf.mxu0
    %v2001 = vadd.f32 %v1852, %v2000
    %2002 = vmatmul.bf16.gmra.mxu0 %v1112
    %v2003 = vpop.f32.mrf.mxu0
    %v2004 = vadd.f32 %v1855, %v2003
    %v2005 = vpop.f32.mrf.mxu0
    %v2006 = vadd.f32 %v1857, %v2005
    %2007 = vdwg.mxu0
    %2008 = vmatpush.bf16.msra.mxu0 %v1005
    %2009 = vmatpush.bf16.msra.mxu0 %v1001
    %2010 = vmatpush.bf16.msra.mxu0 %v997
    %2011 = vmatpush.bf16.msra.mxu0 %v993
    %2012 = vmatpush.bf16.msra.mxu0 %v989
    %2013 = vmatpush.bf16.msra.mxu0 %v985
    %2014 = vmatpush.bf16.msra.mxu0 %v981
    %2015 = vmatpush.bf16.msra.mxu0 %v977
    %2016 = vmatmul.bf16.gmra.mxu0 %v721
    %v2017 = vpop.f32.mrf.mxu0
    %v2018 = vadd.f32 %v849, %v2017
    %v2019 = vpop.f32.mrf.mxu0
    %v2020 = vadd.f32 %v849, %v2019
    %2021 = vmatmul.bf16.gmra.mxu0 %v724
    %v2022 = vpop.f32.mrf.mxu0
    %v2023 = vadd.f32 %v849, %v2022
    %v2024 = vpop.f32.mrf.mxu0
    %v2025 = vadd.f32 %v849, %v2024
    %2026 = vmatmul.bf16.gmra.mxu0 %v727
    %v2027 = vpop.f32.mrf.mxu0
    %v2028 = vadd.f32 %v849, %v2027
    %v2029 = vpop.f32.mrf.mxu0
    %v2030 = vadd.f32 %v849, %v2029
    %2031 = vmatmul.bf16.gmra.mxu0 %v730
    %v2032 = vpop.f32.mrf.mxu0
    %v2033 = vadd.f32 %v849, %v2032
    %v2034 = vpop.f32.mrf.mxu0
    %v2035 = vadd.f32 %v849, %v2034
    %2036 = vmatmul.bf16.gmra.mxu0 %v733
    %v2037 = vpop.f32.mrf.mxu0
    %v2038 = vadd.f32 %v849, %v2037
    %v2039 = vpop.f32.mrf.mxu0
    %v2040 = vadd.f32 %v849, %v2039
    %2041 = vmatmul.bf16.gmra.mxu0 %v736
    %v2042 = vpop.f32.mrf.mxu0
    %v2043 = vadd.f32 %v849, %v2042
    %v2044 = vpop.f32.mrf.mxu0
    %v2045 = vadd.f32 %v849, %v2044
    %2046 = vmatmul.bf16.gmra.mxu0 %v739
    %v2047 = vpop.f32.mrf.mxu0
    %v2048 = vadd.f32 %v849, %v2047
    %v2049 = vpop.f32.mrf.mxu0
    %v2050 = vadd.f32 %v849, %v2049
    %2051 = vmatmul.bf16.gmra.mxu0 %v742
    %v2052 = vpop.f32.mrf.mxu0
    %v2053 = vadd.f32 %v849, %v2052
    %v2054 = vpop.f32.mrf.mxu0
    %v2055 = vadd.f32 %v849, %v2054
    %2056 = vmatmul.bf16.gmra.mxu0 %v745
    %v2057 = vpop.f32.mrf.mxu0
    %v2058 = vadd.f32 %v849, %v2057
    %v2059 = vpop.f32.mrf.mxu0
    %v2060 = vadd.f32 %v849, %v2059
    %2061 = vmatmul.bf16.gmra.mxu0 %v748
    %v2062 = vpop.f32.mrf.mxu0
    %v2063 = vadd.f32 %v849, %v2062
    %v2064 = vpop.f32.mrf.mxu0
    %v2065 = vadd.f32 %v849, %v2064
    %2066 = vmatmul.bf16.gmra.mxu0 %v751
    %v2067 = vpop.f32.mrf.mxu0
    %v2068 = vadd.f32 %v849, %v2067
    %v2069 = vpop.f32.mrf.mxu0
    %v2070 = vadd.f32 %v849, %v2069
    %2071 = vmatmul.bf16.gmra.mxu0 %v754
    %v2072 = vpop.f32.mrf.mxu0
    %v2073 = vadd.f32 %v849, %v2072
    %v2074 = vpop.f32.mrf.mxu0
    %v2075 = vadd.f32 %v849, %v2074
    %2076 = vmatmul.bf16.gmra.mxu0 %v757
    %v2077 = vpop.f32.mrf.mxu0
    %v2078 = vadd.f32 %v849, %v2077
    %v2079 = vpop.f32.mrf.mxu0
    %v2080 = vadd.f32 %v849, %v2079
    %2081 = vmatmul.bf16.gmra.mxu0 %v760
    %v2082 = vpop.f32.mrf.mxu0
    %v2083 = vadd.f32 %v849, %v2082
    %v2084 = vpop.f32.mrf.mxu0
    %v2085 = vadd.f32 %v849, %v2084
    %2086 = vmatmul.bf16.gmra.mxu0 %v763
    %v2087 = vpop.f32.mrf.mxu0
    %v2088 = vadd.f32 %v849, %v2087
    %v2089 = vpop.f32.mrf.mxu0
    %v2090 = vadd.f32 %v849, %v2089
    %2091 = vmatmul.bf16.gmra.mxu0 %v766
    %v2092 = vpop.f32.mrf.mxu0
    %v2093 = vadd.f32 %v849, %v2092
    %v2094 = vpop.f32.mrf.mxu0
    %v2095 = vadd.f32 %v849, %v2094
    %2096 = vmatmul.bf16.gmra.mxu0 %v769
    %v2097 = vpop.f32.mrf.mxu0
    %v2098 = vadd.f32 %v849, %v2097
    %v2099 = vpop.f32.mrf.mxu0
    %v2100 = vadd.f32 %v849, %v2099
    %2101 = vmatmul.bf16.gmra.mxu0 %v772
    %v2102 = vpop.f32.mrf.mxu0
    %v2103 = vadd.f32 %v849, %v2102
    %v2104 = vpop.f32.mrf.mxu0
    %v2105 = vadd.f32 %v849, %v2104
    %2106 = vmatmul.bf16.gmra.mxu0 %v775
    %v2107 = vpop.f32.mrf.mxu0
    %v2108 = vadd.f32 %v849, %v2107
    %v2109 = vpop.f32.mrf.mxu0
    %v2110 = vadd.f32 %v849, %v2109
    %2111 = vmatmul.bf16.gmra.mxu0 %v778
    %v2112 = vpop.f32.mrf.mxu0
    %v2113 = vadd.f32 %v849, %v2112
    %v2114 = vpop.f32.mrf.mxu0
    %v2115 = vadd.f32 %v849, %v2114
    %2116 = vmatmul.bf16.gmra.mxu0 %v781
    %v2117 = vpop.f32.mrf.mxu0
    %v2118 = vadd.f32 %v849, %v2117
    %v2119 = vpop.f32.mrf.mxu0
    %v2120 = vadd.f32 %v849, %v2119
    %2121 = vmatmul.bf16.gmra.mxu0 %v784
    %v2122 = vpop.f32.mrf.mxu0
    %v2123 = vadd.f32 %v849, %v2122
    %v2124 = vpop.f32.mrf.mxu0
    %v2125 = vadd.f32 %v849, %v2124
    %2126 = vmatmul.bf16.gmra.mxu0 %v787
    %v2127 = vpop.f32.mrf.mxu0
    %v2128 = vadd.f32 %v849, %v2127
    %v2129 = vpop.f32.mrf.mxu0
    %v2130 = vadd.f32 %v849, %v2129
    %2131 = vmatmul.bf16.gmra.mxu0 %v790
    %v2132 = vpop.f32.mrf.mxu0
    %v2133 = vadd.f32 %v849, %v2132
    %v2134 = vpop.f32.mrf.mxu0
    %v2135 = vadd.f32 %v849, %v2134
    %2136 = vmatmul.bf16.gmra.mxu0 %v793
    %v2137 = vpop.f32.mrf.mxu0
    %v2138 = vadd.f32 %v849, %v2137
    %v2139 = vpop.f32.mrf.mxu0
    %v2140 = vadd.f32 %v849, %v2139
    %2141 = vmatmul.bf16.gmra.mxu0 %v796
    %v2142 = vpop.f32.mrf.mxu0
    %v2143 = vadd.f32 %v849, %v2142
    %v2144 = vpop.f32.mrf.mxu0
    %v2145 = vadd.f32 %v849, %v2144
    %2146 = vmatmul.bf16.gmra.mxu0 %v799
    %v2147 = vpop.f32.mrf.mxu0
    %v2148 = vadd.f32 %v849, %v2147
    %v2149 = vpop.f32.mrf.mxu0
    %v2150 = vadd.f32 %v849, %v2149
    %2151 = vmatmul.bf16.gmra.mxu0 %v802
    %v2152 = vpop.f32.mrf.mxu0
    %v2153 = vadd.f32 %v849, %v2152
    %v2154 = vpop.f32.mrf.mxu0
    %v2155 = vadd.f32 %v849, %v2154
    %2156 = vdwg.mxu0
    %2157 = vmatpush.bf16.msra.mxu0 0
    %2158 = vmatpush.bf16.msra.mxu0 0
    %2159 = vmatpush.bf16.msra.mxu0 0
    %2160 = vmatpush.bf16.msra.mxu0 0
    %2161 = vmatpush.bf16.msra.mxu0 0
    %2162 = vmatpush.bf16.msra.mxu0 0
    %2163 = vmatpush.bf16.msra.mxu0 %v1013
    %2164 = vmatpush.bf16.msra.mxu0 %v1009
    %2165 = vmatmul.bf16.gmra.mxu0 %v1054
    %v2166 = vpop.f32.mrf.mxu0
    %v2167 = vadd.f32 %v2018, %v2166
    %v2168 = vpop.f32.mrf.mxu0
    %v2169 = vadd.f32 %v2020, %v2168
    %2170 = vmatmul.bf16.gmra.mxu0 %v1056
    %v2171 = vpop.f32.mrf.mxu0
    %v2172 = vadd.f32 %v2023, %v2171
    %v2173 = vpop.f32.mrf.mxu0
    %v2174 = vadd.f32 %v2025, %v2173
    %2175 = vmatmul.bf16.gmra.mxu0 %v1058
    %v2176 = vpop.f32.mrf.mxu0
    %v2177 = vadd.f32 %v2028, %v2176
    %v2178 = vpop.f32.mrf.mxu0
    %v2179 = vadd.f32 %v2030, %v2178
    %2180 = vmatmul.bf16.gmra.mxu0 %v1060
    %v2181 = vpop.f32.mrf.mxu0
    %v2182 = vadd.f32 %v2033, %v2181
    %v2183 = vpop.f32.mrf.mxu0
    %v2184 = vadd.f32 %v2035, %v2183
    %2185 = vmatmul.bf16.gmra.mxu0 %v1062
    %v2186 = vpop.f32.mrf.mxu0
    %v2187 = vadd.f32 %v2038, %v2186
    %v2188 = vpop.f32.mrf.mxu0
    %v2189 = vadd.f32 %v2040, %v2188
    %2190 = vmatmul.bf16.gmra.mxu0 %v1064
    %v2191 = vpop.f32.mrf.mxu0
    %v2192 = vadd.f32 %v2043, %v2191
    %v2193 = vpop.f32.mrf.mxu0
    %v2194 = vadd.f32 %v2045, %v2193
    %2195 = vmatmul.bf16.gmra.mxu0 %v1066
    %v2196 = vpop.f32.mrf.mxu0
    %v2197 = vadd.f32 %v2048, %v2196
    %v2198 = vpop.f32.mrf.mxu0
    %v2199 = vadd.f32 %v2050, %v2198
    %2200 = vmatmul.bf16.gmra.mxu0 %v1068
    %v2201 = vpop.f32.mrf.mxu0
    %v2202 = vadd.f32 %v2053, %v2201
    %v2203 = vpop.f32.mrf.mxu0
    %v2204 = vadd.f32 %v2055, %v2203
    %2205 = vmatmul.bf16.gmra.mxu0 %v1070
    %v2206 = vpop.f32.mrf.mxu0
    %v2207 = vadd.f32 %v2058, %v2206
    %v2208 = vpop.f32.mrf.mxu0
    %v2209 = vadd.f32 %v2060, %v2208
    %2210 = vmatmul.bf16.gmra.mxu0 %v1072
    %v2211 = vpop.f32.mrf.mxu0
    %v2212 = vadd.f32 %v2063, %v2211
    %v2213 = vpop.f32.mrf.mxu0
    %v2214 = vadd.f32 %v2065, %v2213
    %2215 = vmatmul.bf16.gmra.mxu0 %v1074
    %v2216 = vpop.f32.mrf.mxu0
    %v2217 = vadd.f32 %v2068, %v2216
    %v2218 = vpop.f32.mrf.mxu0
    %v2219 = vadd.f32 %v2070, %v2218
    %2220 = vmatmul.bf16.gmra.mxu0 %v1076
    %v2221 = vpop.f32.mrf.mxu0
    %v2222 = vadd.f32 %v2073, %v2221
    %v2223 = vpop.f32.mrf.mxu0
    %v2224 = vadd.f32 %v2075, %v2223
    %2225 = vmatmul.bf16.gmra.mxu0 %v1078
    %v2226 = vpop.f32.mrf.mxu0
    %v2227 = vadd.f32 %v2078, %v2226
    %v2228 = vpop.f32.mrf.mxu0
    %v2229 = vadd.f32 %v2080, %v2228
    %2230 = vmatmul.bf16.gmra.mxu0 %v1080
    %v2231 = vpop.f32.mrf.mxu0
    %v2232 = vadd.f32 %v2083, %v2231
    %v2233 = vpop.f32.mrf.mxu0
    %v2234 = vadd.f32 %v2085, %v2233
    %2235 = vmatmul.bf16.gmra.mxu0 %v1082
    %v2236 = vpop.f32.mrf.mxu0
    %v2237 = vadd.f32 %v2088, %v2236
    %v2238 = vpop.f32.mrf.mxu0
    %v2239 = vadd.f32 %v2090, %v2238
    %2240 = vmatmul.bf16.gmra.mxu0 %v1084
    %v2241 = vpop.f32.mrf.mxu0
    %v2242 = vadd.f32 %v2093, %v2241
    %v2243 = vpop.f32.mrf.mxu0
    %v2244 = vadd.f32 %v2095, %v2243
    %2245 = vmatmul.bf16.gmra.mxu0 %v1086
    %v2246 = vpop.f32.mrf.mxu0
    %v2247 = vadd.f32 %v2098, %v2246
    %v2248 = vpop.f32.mrf.mxu0
    %v2249 = vadd.f32 %v2100, %v2248
    %2250 = vmatmul.bf16.gmra.mxu0 %v1088
    %v2251 = vpop.f32.mrf.mxu0
    %v2252 = vadd.f32 %v2103, %v2251
    %v2253 = vpop.f32.mrf.mxu0
    %v2254 = vadd.f32 %v2105, %v2253
    %2255 = vmatmul.bf16.gmra.mxu0 %v1090
    %v2256 = vpop.f32.mrf.mxu0
    %v2257 = vadd.f32 %v2108, %v2256
    %v2258 = vpop.f32.mrf.mxu0
    %v2259 = vadd.f32 %v2110, %v2258
    %2260 = vmatmul.bf16.gmra.mxu0 %v1092
    %v2261 = vpop.f32.mrf.mxu0
    %v2262 = vadd.f32 %v2113, %v2261
    %v2263 = vpop.f32.mrf.mxu0
    %v2264 = vadd.f32 %v2115, %v2263
    %2265 = vmatmul.bf16.gmra.mxu0 %v1094
    %v2266 = vpop.f32.mrf.mxu0
    %v2267 = vadd.f32 %v2118, %v2266
    %v2268 = vpop.f32.mrf.mxu0
    %v2269 = vadd.f32 %v2120, %v2268
    %2270 = vmatmul.bf16.gmra.mxu0 %v1096
    %v2271 = vpop.f32.mrf.mxu0
    %v2272 = vadd.f32 %v2123, %v2271
    %v2273 = vpop.f32.mrf.mxu0
    %v2274 = vadd.f32 %v2125, %v2273
    %2275 = vmatmul.bf16.gmra.mxu0 %v1098
    %v2276 = vpop.f32.mrf.mxu0
    %v2277 = vadd.f32 %v2128, %v2276
    %v2278 = vpop.f32.mrf.mxu0
    %v2279 = vadd.f32 %v2130, %v2278
    %2280 = vmatmul.bf16.gmra.mxu0 %v1100
    %v2281 = vpop.f32.mrf.mxu0
    %v2282 = vadd.f32 %v2133, %v2281
    %v2283 = vpop.f32.mrf.mxu0
    %v2284 = vadd.f32 %v2135, %v2283
    %2285 = vmatmul.bf16.gmra.mxu0 %v1103
    %v2286 = vpop.f32.mrf.mxu0
    %v2287 = vadd.f32 %v2138, %v2286
    %v2288 = vpop.f32.mrf.mxu0
    %v2289 = vadd.f32 %v2140, %v2288
    %2290 = vmatmul.bf16.gmra.mxu0 %v1106
    %v2291 = vpop.f32.mrf.mxu0
    %v2292 = vadd.f32 %v2143, %v2291
    %v2293 = vpop.f32.mrf.mxu0
    %v2294 = vadd.f32 %v2145, %v2293
    %2295 = vmatmul.bf16.gmra.mxu0 %v1109
    %v2296 = vpop.f32.mrf.mxu0
    %v2297 = vadd.f32 %v2148, %v2296
    %v2298 = vpop.f32.mrf.mxu0
    %v2299 = vadd.f32 %v2150, %v2298
    %2300 = vmatmul.bf16.gmra.mxu0 %v1112
    %v2301 = vpop.f32.mrf.mxu0
    %v2302 = vadd.f32 %v2153, %v2301
    %v2303 = vpop.f32.mrf.mxu0
    %v2304 = vadd.f32 %v2155, %v2303
    %2305 = vdwg.mxu0
    %v2306 = vmax.f32 %v1273, 0.0
    %v2307 = vmax.f32 %v1571, 0.0
    %v2308 = vmax.f32 %v1869, 0.0
    %v2309 = vmax.f32 %v2167, 0.0
    %v2310 = vmax.f32 %v1275, 0.0
    %v2311 = vmax.f32 %v1573, 0.0
    %v2312 = vmax.f32 %v1871, 0.0
    %v2313 = vmax.f32 %v2169, 0.0
    %v2314 = vmax.f32 %v1278, 0.0
    %v2315 = vmax.f32 %v1576, 0.0
    %v2316 = vmax.f32 %v1874, 0.0
    %v2317 = vmax.f32 %v2172, 0.0
    %v2318 = vmax.f32 %v1280, 0.0
    %v2319 = vmax.f32 %v1578, 0.0
    %v2320 = vmax.f32 %v1876, 0.0
    %v2321 = vmax.f32 %v2174, 0.0
    %v2322 = vmax.f32 %v1283, 0.0
    %v2323 = vmax.f32 %v1581, 0.0
    %v2324 = vmax.f32 %v1879, 0.0
    %v2325 = vmax.f32 %v2177, 0.0
    %v2326 = vmax.f32 %v1285, 0.0
    %v2327 = vmax.f32 %v1583, 0.0
    %v2328 = vmax.f32 %v1881, 0.0
    %v2329 = vmax.f32 %v2179, 0.0
    %v2330 = vmax.f32 %v1288, 0.0
    %v2331 = vmax.f32 %v1586, 0.0
    %v2332 = vmax.f32 %v1884, 0.0
    %v2333 = vmax.f32 %v2182, 0.0
    %v2334 = vmax.f32 %v1290, 0.0
    %v2335 = vmax.f32 %v1588, 0.0
    %v2336 = vmax.f32 %v1886, 0.0
    %v2337 = vmax.f32 %v2184, 0.0
    %v2338 = vmax.f32 %v1293, 0.0
    %v2339 = vmax.f32 %v1591, 0.0
    %v2340 = vmax.f32 %v1889, 0.0
    %v2341 = vmax.f32 %v2187, 0.0
    %v2342 = vmax.f32 %v1295, 0.0
    %v2343 = vmax.f32 %v1593, 0.0
    %v2344 = vmax.f32 %v1891, 0.0
    %v2345 = vmax.f32 %v2189, 0.0
    %v2346 = vmax.f32 %v1298, 0.0
    %v2347 = vmax.f32 %v1596, 0.0
    %v2348 = vmax.f32 %v1894, 0.0
    %v2349 = vmax.f32 %v2192, 0.0
    %v2350 = vmax.f32 %v1300, 0.0
    %v2351 = vmax.f32 %v1598, 0.0
    %v2352 = vmax.f32 %v1896, 0.0
    %v2353 = vmax.f32 %v2194, 0.0
    %v2354 = vmax.f32 %v1303, 0.0
    %v2355 = vmax.f32 %v1601, 0.0
    %v2356 = vmax.f32 %v1899, 0.0
    %v2357 = vmax.f32 %v2197, 0.0
    %v2358 = vmax.f32 %v1305, 0.0
    %v2359 = vmax.f32 %v1603, 0.0
    %v2360 = vmax.f32 %v1901, 0.0
    %v2361 = vmax.f32 %v2199, 0.0
    %v2362 = vmax.f32 %v1308, 0.0
    %v2363 = vmax.f32 %v1606, 0.0
    %v2364 = vmax.f32 %v1904, 0.0
    %v2365 = vmax.f32 %v2202, 0.0
    %v2366 = vmax.f32 %v1310, 0.0
    %v2367 = vmax.f32 %v1608, 0.0
    %v2368 = vmax.f32 %v1906, 0.0
    %v2369 = vmax.f32 %v2204, 0.0
    %v2370 = vmax.f32 %v1313, 0.0
    %v2371 = vmax.f32 %v1611, 0.0
    %v2372 = vmax.f32 %v1909, 0.0
    %v2373 = vmax.f32 %v2207, 0.0
    %v2374 = vmax.f32 %v1315, 0.0
    %v2375 = vmax.f32 %v1613, 0.0
    %v2376 = vmax.f32 %v1911, 0.0
    %v2377 = vmax.f32 %v2209, 0.0
    %v2378 = vmax.f32 %v1318, 0.0
    %v2379 = vmax.f32 %v1616, 0.0
    %v2380 = vmax.f32 %v1914, 0.0
    %v2381 = vmax.f32 %v2212, 0.0
    %v2382 = vmax.f32 %v1320, 0.0
    %v2383 = vmax.f32 %v1618, 0.0
    %v2384 = vmax.f32 %v1916, 0.0
    %v2385 = vmax.f32 %v2214, 0.0
    %v2386 = vmax.f32 %v1323, 0.0
    %v2387 = vmax.f32 %v1621, 0.0
    %v2388 = vmax.f32 %v1919, 0.0
    %v2389 = vmax.f32 %v2217, 0.0
    %v2390 = vmax.f32 %v1325, 0.0
    %v2391 = vmax.f32 %v1623, 0.0
    %v2392 = vmax.f32 %v1921, 0.0
    %v2393 = vmax.f32 %v2219, 0.0
    %v2394 = vmax.f32 %v1328, 0.0
    %v2395 = vmax.f32 %v1626, 0.0
    %v2396 = vmax.f32 %v1924, 0.0
    %v2397 = vmax.f32 %v2222, 0.0
    %v2398 = vmax.f32 %v1330, 0.0
    %v2399 = vmax.f32 %v1628, 0.0
    %v2400 = vmax.f32 %v1926, 0.0
    %v2401 = vmax.f32 %v2224, 0.0
    %v2402 = vmax.f32 %v1333, 0.0
    %v2403 = vmax.f32 %v1631, 0.0
    %v2404 = vmax.f32 %v1929, 0.0
    %v2405 = vmax.f32 %v2227, 0.0
    %v2406 = vmax.f32 %v1335, 0.0
    %v2407 = vmax.f32 %v1633, 0.0
    %v2408 = vmax.f32 %v1931, 0.0
    %v2409 = vmax.f32 %v2229, 0.0
    %v2410 = vmax.f32 %v1338, 0.0
    %v2411 = vmax.f32 %v1636, 0.0
    %v2412 = vmax.f32 %v1934, 0.0
    %v2413 = vmax.f32 %v2232, 0.0
    %v2414 = vmax.f32 %v1340, 0.0
    %v2415 = vmax.f32 %v1638, 0.0
    %v2416 = vmax.f32 %v1936, 0.0
    %v2417 = vmax.f32 %v2234, 0.0
    %v2418 = vmax.f32 %v1343, 0.0
    %v2419 = vmax.f32 %v1641, 0.0
    %v2420 = vmax.f32 %v1939, 0.0
    %v2421 = vmax.f32 %v2237, 0.0
    %v2422 = vmax.f32 %v1345, 0.0
    %v2423 = vmax.f32 %v1643, 0.0
    %v2424 = vmax.f32 %v1941, 0.0
    %v2425 = vmax.f32 %v2239, 0.0
    %v2426 = vmax.f32 %v1348, 0.0
    %v2427 = vmax.f32 %v1646, 0.0
    %v2428 = vmax.f32 %v1944, 0.0
    %v2429 = vmax.f32 %v2242, 0.0
    %v2430 = vmax.f32 %v1350, 0.0
    %v2431 = vmax.f32 %v1648, 0.0
    %v2432 = vmax.f32 %v1946, 0.0
    %v2433 = vmax.f32 %v2244, 0.0
    %v2434 = vmax.f32 %v1353, 0.0
    %v2435 = vmax.f32 %v1651, 0.0
    %v2436 = vmax.f32 %v1949, 0.0
    %v2437 = vmax.f32 %v2247, 0.0
    %v2438 = vmax.f32 %v1355, 0.0
    %v2439 = vmax.f32 %v1653, 0.0
    %v2440 = vmax.f32 %v1951, 0.0
    %v2441 = vmax.f32 %v2249, 0.0
    %v2442 = vmax.f32 %v1358, 0.0
    %v2443 = vmax.f32 %v1656, 0.0
    %v2444 = vmax.f32 %v1954, 0.0
    %v2445 = vmax.f32 %v2252, 0.0
    %v2446 = vmax.f32 %v1360, 0.0
    %v2447 = vmax.f32 %v1658, 0.0
    %v2448 = vmax.f32 %v1956, 0.0
    %v2449 = vmax.f32 %v2254, 0.0
    %v2450 = vmax.f32 %v1363, 0.0
    %v2451 = vmax.f32 %v1661, 0.0
    %v2452 = vmax.f32 %v1959, 0.0
    %v2453 = vmax.f32 %v2257, 0.0
    %v2454 = vmax.f32 %v1365, 0.0
    %v2455 = vmax.f32 %v1663, 0.0
    %v2456 = vmax.f32 %v1961, 0.0
    %v2457 = vmax.f32 %v2259, 0.0
    %v2458 = vmax.f32 %v1368, 0.0
    %v2459 = vmax.f32 %v1666, 0.0
    %v2460 = vmax.f32 %v1964, 0.0
    %v2461 = vmax.f32 %v2262, 0.0
    %v2462 = vmax.f32 %v1370, 0.0
    %v2463 = vmax.f32 %v1668, 0.0
    %v2464 = vmax.f32 %v1966, 0.0
    %v2465 = vmax.f32 %v2264, 0.0
    %v2466 = vmax.f32 %v1373, 0.0
    %v2467 = vmax.f32 %v1671, 0.0
    %v2468 = vmax.f32 %v1969, 0.0
    %v2469 = vmax.f32 %v2267, 0.0
    %v2470 = vmax.f32 %v1375, 0.0
    %v2471 = vmax.f32 %v1673, 0.0
    %v2472 = vmax.f32 %v1971, 0.0
    %v2473 = vmax.f32 %v2269, 0.0
    %v2474 = vmax.f32 %v1378, 0.0
    %v2475 = vmax.f32 %v1676, 0.0
    %v2476 = vmax.f32 %v1974, 0.0
    %v2477 = vmax.f32 %v2272, 0.0
    %v2478 = vmax.f32 %v1380, 0.0
    %v2479 = vmax.f32 %v1678, 0.0
    %v2480 = vmax.f32 %v1976, 0.0
    %v2481 = vmax.f32 %v2274, 0.0
    %v2482 = vmax.f32 %v1383, 0.0
    %v2483 = vmax.f32 %v1681, 0.0
    %v2484 = vmax.f32 %v1979, 0.0
    %v2485 = vmax.f32 %v2277, 0.0
    %v2486 = vmax.f32 %v1385, 0.0
    %v2487 = vmax.f32 %v1683, 0.0
    %v2488 = vmax.f32 %v1981, 0.0
    %v2489 = vmax.f32 %v2279, 0.0
    %v2490 = vmax.f32 %v1388, 0.0
    %v2491 = vmax.f32 %v1686, 0.0
    %v2492 = vmax.f32 %v1984, 0.0
    %v2493 = vmax.f32 %v2282, 0.0
    %v2494 = vmax.f32 %v1390, 0.0
    %v2495 = vmax.f32 %v1688, 0.0
    %v2496 = vmax.f32 %v1986, 0.0
    %v2497 = vmax.f32 %v2284, 0.0
    %v2498 = vmax.f32 %v1393, 0.0
    %v2499 = vmax.f32 %v1691, 0.0
    %v2500 = vmax.f32 %v1989, 0.0
    %v2501 = vmax.f32 %v2287, 0.0
    %v2502 = vmax.f32 %v1395, 0.0
    %v2503 = vmax.f32 %v1693, 0.0
    %v2504 = vmax.f32 %v1991, 0.0
    %v2505 = vmax.f32 %v2289, 0.0
    %v2506 = vmax.f32 %v1398, 0.0
    %v2507 = vmax.f32 %v1696, 0.0
    %v2508 = vmax.f32 %v1994, 0.0
    %v2509 = vmax.f32 %v2292, 0.0
    %v2510 = vmax.f32 %v1400, 0.0
    %v2511 = vmax.f32 %v1698, 0.0
    %v2512 = vmax.f32 %v1996, 0.0
    %v2513 = vmax.f32 %v2294, 0.0
    %v2514 = vmax.f32 %v1403, 0.0
    %v2515 = vmax.f32 %v1701, 0.0
    %v2516 = vmax.f32 %v1999, 0.0
    %v2517 = vmax.f32 %v2297, 0.0
    %v2518 = vmax.f32 %v1405, 0.0
    %v2519 = vmax.f32 %v1703, 0.0
    %v2520 = vmax.f32 %v2001, 0.0
    %v2521 = vmax.f32 %v2299, 0.0
    %v2522 = vmax.f32 %v1408, 0.0
    %v2523 = vmax.f32 %v1706, 0.0
    %v2524 = vmax.f32 %v2004, 0.0
    %v2525 = vmax.f32 %v2302, 0.0
    %v2526 = vmax.f32 %v1410, 0.0
    %v2527 = vmax.f32 %v1708, 0.0
    %v2528 = vmax.f32 %v2006, 0.0
    %v2529 = vmax.f32 %v2304, 0.0
    %v2530 = vpack.c.bf16 %v2307, %v2306
    %v2531 = vpack.c.bf16 %v2309, %v2308
    %v2532 = vpack.c.bf16 %v2311, %v2310
    %v2533 = vpack.c.bf16 %v2313, %v2312
    %v2534 = vpack.c.bf16 %v2315, %v2314
    %v2535 = vpack.c.bf16 %v2317, %v2316
    %v2536 = vpack.c.bf16 %v2319, %v2318
    %v2537 = vpack.c.bf16 %v2321, %v2320
    %v2538 = vpack.c.bf16 %v2323, %v2322
    %v2539 = vpack.c.bf16 %v2325, %v2324
    %v2540 = vpack.c.bf16 %v2327, %v2326
    %v2541 = vpack.c.bf16 %v2329, %v2328
    %v2542 = vpack.c.bf16 %v2331, %v2330
    %v2543 = vpack.c.bf16 %v2333, %v2332
    %v2544 = vpack.c.bf16 %v2335, %v2334
    %v2545 = vpack.c.bf16 %v2337, %v2336
    %v2546 = vpack.c.bf16 %v2339, %v2338
    %v2547 = vpack.c.bf16 %v2341, %v2340
    %v2548 = vpack.c.bf16 %v2343, %v2342
    %v2549 = vpack.c.bf16 %v2345, %v2344
    %v2550 = vpack.c.bf16 %v2347, %v2346
    %v2551 = vpack.c.bf16 %v2349, %v2348
    %v2552 = vpack.c.bf16 %v2351, %v2350
    %v2553 = vpack.c.bf16 %v2353, %v2352
    %v2554 = vpack.c.bf16 %v2355, %v2354
    %v2555 = vpack.c.bf16 %v2357, %v2356
    %v2556 = vpack.c.bf16 %v2359, %v2358
    %v2557 = vpack.c.bf16 %v2361, %v2360
    %v2558 = vpack.c.bf16 %v2363, %v2362
    %v2559 = vpack.c.bf16 %v2365, %v2364
    %v2560 = vpack.c.bf16 %v2367, %v2366
    %v2561 = vpack.c.bf16 %v2369, %v2368
    %v2562 = vpack.c.bf16 %v2371, %v2370
    %v2563 = vpack.c.bf16 %v2373, %v2372
    %v2564 = vpack.c.bf16 %v2375, %v2374
    %v2565 = vpack.c.bf16 %v2377, %v2376
    %v2566 = vpack.c.bf16 %v2379, %v2378
    %v2567 = vpack.c.bf16 %v2381, %v2380
    %v2568 = vpack.c.bf16 %v2383, %v2382
    %v2569 = vpack.c.bf16 %v2385, %v2384
    %v2570 = vpack.c.bf16 %v2387, %v2386
    %v2571 = vpack.c.bf16 %v2389, %v2388
    %v2572 = vpack.c.bf16 %v2391, %v2390
    %v2573 = vpack.c.bf16 %v2393, %v2392
    %v2574 = vpack.c.bf16 %v2395, %v2394
    %v2575 = vpack.c.bf16 %v2397, %v2396
    %v2576 = vpack.c.bf16 %v2399, %v2398
    %v2577 = vpack.c.bf16 %v2401, %v2400
    %v2578 = vpack.c.bf16 %v2403, %v2402
    %v2579 = vpack.c.bf16 %v2405, %v2404
    %v2580 = vpack.c.bf16 %v2407, %v2406
    %v2581 = vpack.c.bf16 %v2409, %v2408
    %v2582 = vpack.c.bf16 %v2411, %v2410
    %v2583 = vpack.c.bf16 %v2413, %v2412
    %v2584 = vpack.c.bf16 %v2415, %v2414
    %v2585 = vpack.c.bf16 %v2417, %v2416
    %v2586 = vpack.c.bf16 %v2419, %v2418
    %v2587 = vpack.c.bf16 %v2421, %v2420
    %v2588 = vpack.c.bf16 %v2423, %v2422
    %v2589 = vpack.c.bf16 %v2425, %v2424
    %v2590 = vpack.c.bf16 %v2427, %v2426
    %v2591 = vpack.c.bf16 %v2429, %v2428
    %v2592 = vpack.c.bf16 %v2431, %v2430
    %v2593 = vpack.c.bf16 %v2433, %v2432
    %v2594 = vpack.c.bf16 %v2435, %v2434
    %v2595 = vpack.c.bf16 %v2437, %v2436
    %v2596 = vpack.c.bf16 %v2439, %v2438
    %v2597 = vpack.c.bf16 %v2441, %v2440
    %v2598 = vpack.c.bf16 %v2443, %v2442
    %v2599 = vpack.c.bf16 %v2445, %v2444
    %v2600 = vpack.c.bf16 %v2447, %v2446
    %v2601 = vpack.c.bf16 %v2449, %v2448
    %v2602 = vpack.c.bf16 %v2451, %v2450
    %v2603 = vpack.c.bf16 %v2453, %v2452
    %v2604 = vpack.c.bf16 %v2455, %v2454
    %v2605 = vpack.c.bf16 %v2457, %v2456
    %v2606 = vpack.c.bf16 %v2459, %v2458
    %v2607 = vpack.c.bf16 %v2461, %v2460
    %v2608 = vpack.c.bf16 %v2463, %v2462
    %v2609 = vpack.c.bf16 %v2465, %v2464
    %v2610 = vpack.c.bf16 %v2467, %v2466
    %v2611 = vpack.c.bf16 %v2469, %v2468
    %v2612 = vpack.c.bf16 %v2471, %v2470
    %v2613 = vpack.c.bf16 %v2473, %v2472
    %v2614 = vpack.c.bf16 %v2475, %v2474
    %v2615 = vpack.c.bf16 %v2477, %v2476
    %v2616 = vpack.c.bf16 %v2479, %v2478
    %v2617 = vpack.c.bf16 %v2481, %v2480
    %v2618 = vpack.c.bf16 %v2483, %v2482
    %v2619 = vpack.c.bf16 %v2485, %v2484
    %v2620 = vpack.c.bf16 %v2487, %v2486
    %v2621 = vpack.c.bf16 %v2489, %v2488
    %v2622 = vpack.c.bf16 %v2491, %v2490
    %v2623 = vpack.c.bf16 %v2493, %v2492
    %v2624 = vpack.c.bf16 %v2495, %v2494
    %v2625 = vpack.c.bf16 %v2497, %v2496
    %v2626 = vpack.c.bf16 %v2499, %v2498
    %v2627 = vpack.c.bf16 %v2501, %v2500
    %v2628 = vpack.c.bf16 %v2503, %v2502
    %v2629 = vpack.c.bf16 %v2505, %v2504
    %v2630 = vpack.c.bf16 %v2507, %v2506
    %v2631 = vpack.c.bf16 %v2509, %v2508
    %v2632 = vpack.c.bf16 %v2511, %v2510
    %v2633 = vpack.c.bf16 %v2513, %v2512
    %v2634 = vpack.c.bf16 %v2515, %v2514
    %v2635 = vpack.c.bf16 %v2517, %v2516
    %v2636 = vpack.c.bf16 %v2519, %v2518
    %v2637 = vpack.c.bf16 %v2521, %v2520
    %v2638 = vpack.c.bf16 %v2523, %v2522
    %v2639 = vpack.c.bf16 %v2525, %v2524
    %v2640 = vpack.c.bf16 %v2527, %v2526
    %v2641 = vpack.c.bf16 %v2529, %v2528
    %v2642 = vunpack.c.l.bf16 %v2530
    %v2643 = vunpack.c.h.bf16 %v2530
    %v2644 = vunpack.c.l.bf16 %v2531
    %v2645 = vunpack.c.h.bf16 %v2531
    %v2646 = vunpack.c.l.bf16 %v2532
    %v2647 = vunpack.c.h.bf16 %v2532
    %v2648 = vunpack.c.l.bf16 %v2533
    %v2649 = vunpack.c.h.bf16 %v2533
    %v2650 = vunpack.c.l.bf16 %v2538
    %v2651 = vunpack.c.h.bf16 %v2538
    %v2652 = vunpack.c.l.bf16 %v2539
    %v2653 = vunpack.c.h.bf16 %v2539
    %v2654 = vunpack.c.l.bf16 %v2540
    %v2655 = vunpack.c.h.bf16 %v2540
    %v2656 = vunpack.c.l.bf16 %v2541
    %v2657 = vunpack.c.h.bf16 %v2541
    %v2658 = vunpack.c.l.bf16 %v2546
    %v2659 = vunpack.c.h.bf16 %v2546
    %v2660 = vunpack.c.l.bf16 %v2547
    %v2661 = vunpack.c.h.bf16 %v2547
    %v2662 = vunpack.c.l.bf16 %v2548
    %v2663 = vunpack.c.h.bf16 %v2548
    %v2664 = vunpack.c.l.bf16 %v2549
    %v2665 = vunpack.c.h.bf16 %v2549
    %v2666 = vunpack.c.l.bf16 %v2554
    %v2667 = vunpack.c.h.bf16 %v2554
    %v2668 = vunpack.c.l.bf16 %v2555
    %v2669 = vunpack.c.h.bf16 %v2555
    %v2670 = vunpack.c.l.bf16 %v2556
    %v2671 = vunpack.c.h.bf16 %v2556
    %v2672 = vunpack.c.l.bf16 %v2557
    %v2673 = vunpack.c.h.bf16 %v2557
    %v2674 = vunpack.c.l.bf16 %v2562
    %v2675 = vunpack.c.h.bf16 %v2562
    %v2676 = vunpack.c.l.bf16 %v2563
    %v2677 = vunpack.c.h.bf16 %v2563
    %v2678 = vunpack.c.l.bf16 %v2564
    %v2679 = vunpack.c.h.bf16 %v2564
    %v2680 = vunpack.c.l.bf16 %v2565
    %v2681 = vunpack.c.h.bf16 %v2565
    %v2682 = vunpack.c.l.bf16 %v2570
    %v2683 = vunpack.c.h.bf16 %v2570
    %v2684 = vunpack.c.l.bf16 %v2571
    %v2685 = vunpack.c.h.bf16 %v2571
    %v2686 = vunpack.c.l.bf16 %v2572
    %v2687 = vunpack.c.h.bf16 %v2572
    %v2688 = vunpack.c.l.bf16 %v2573
    %v2689 = vunpack.c.h.bf16 %v2573
    %v2690 = vunpack.c.l.bf16 %v2578
    %v2691 = vunpack.c.h.bf16 %v2578
    %v2692 = vunpack.c.l.bf16 %v2579
    %v2693 = vunpack.c.h.bf16 %v2579
    %v2694 = vunpack.c.l.bf16 %v2580
    %v2695 = vunpack.c.h.bf16 %v2580
    %v2696 = vunpack.c.l.bf16 %v2581
    %v2697 = vunpack.c.h.bf16 %v2581
    %v2698 = vunpack.c.l.bf16 %v2586
    %v2699 = vunpack.c.h.bf16 %v2586
    %v2700 = vunpack.c.l.bf16 %v2587
    %v2701 = vunpack.c.h.bf16 %v2587
    %v2702 = vunpack.c.l.bf16 %v2588
    %v2703 = vunpack.c.h.bf16 %v2588
    %v2704 = vunpack.c.l.bf16 %v2589
    %v2705 = vunpack.c.h.bf16 %v2589
    %v2706 = vunpack.c.l.bf16 %v2594
    %v2707 = vunpack.c.h.bf16 %v2594
    %v2708 = vunpack.c.l.bf16 %v2595
    %v2709 = vunpack.c.h.bf16 %v2595
    %v2710 = vunpack.c.l.bf16 %v2596
    %v2711 = vunpack.c.h.bf16 %v2596
    %v2712 = vunpack.c.l.bf16 %v2597
    %v2713 = vunpack.c.h.bf16 %v2597
    %v2714 = vunpack.c.l.bf16 %v2602
    %v2715 = vunpack.c.h.bf16 %v2602
    %v2716 = vunpack.c.l.bf16 %v2603
    %v2717 = vunpack.c.h.bf16 %v2603
    %v2718 = vunpack.c.l.bf16 %v2604
    %v2719 = vunpack.c.h.bf16 %v2604
    %v2720 = vunpack.c.l.bf16 %v2605
    %v2721 = vunpack.c.h.bf16 %v2605
    %v2722 = vunpack.c.l.bf16 %v2610
    %v2723 = vunpack.c.h.bf16 %v2610
    %v2724 = vunpack.c.l.bf16 %v2611
    %v2725 = vunpack.c.h.bf16 %v2611
    %v2726 = vunpack.c.l.bf16 %v2612
    %v2727 = vunpack.c.h.bf16 %v2612
    %v2728 = vunpack.c.l.bf16 %v2613
    %v2729 = vunpack.c.h.bf16 %v2613
    %v2730 = vunpack.c.l.bf16 %v2618
    %v2731 = vunpack.c.h.bf16 %v2618
    %v2732 = vunpack.c.l.bf16 %v2619
    %v2733 = vunpack.c.h.bf16 %v2619
    %v2734 = vunpack.c.l.bf16 %v2620
    %v2735 = vunpack.c.h.bf16 %v2620
    %v2736 = vunpack.c.l.bf16 %v2621
    %v2737 = vunpack.c.h.bf16 %v2621
    %v2738 = vunpack.c.l.bf16 %v2626
    %v2739 = vunpack.c.h.bf16 %v2626
    %v2740 = vunpack.c.l.bf16 %v2627
    %v2741 = vunpack.c.h.bf16 %v2627
    %v2742 = vunpack.c.l.bf16 %v2628
    %v2743 = vunpack.c.h.bf16 %v2628
    %v2744 = vunpack.c.l.bf16 %v2629
    %v2745 = vunpack.c.h.bf16 %v2629
    %v2746 = vunpack.c.l.bf16 %v2634
    %v2747 = vunpack.c.h.bf16 %v2634
    %v2748 = vunpack.c.l.bf16 %v2635
    %v2749 = vunpack.c.h.bf16 %v2635
    %v2750 = vunpack.c.l.bf16 %v2636
    %v2751 = vunpack.c.h.bf16 %v2636
    %v2752 = vunpack.c.l.bf16 %v2637
    %v2753 = vunpack.c.h.bf16 %v2637
    %v2754 = vunpack.c.l.bf16 %v2534
    %v2755 = vunpack.c.h.bf16 %v2534
    %v2756 = vunpack.c.l.bf16 %v2535
    %v2757 = vunpack.c.h.bf16 %v2535
    %v2758 = vunpack.c.l.bf16 %v2536
    %v2759 = vunpack.c.h.bf16 %v2536
    %v2760 = vunpack.c.l.bf16 %v2537
    %v2761 = vunpack.c.h.bf16 %v2537
    %v2762 = vunpack.c.l.bf16 %v2542
    %v2763 = vunpack.c.h.bf16 %v2542
    %v2764 = vunpack.c.l.bf16 %v2543
    %v2765 = vunpack.c.h.bf16 %v2543
    %v2766 = vunpack.c.l.bf16 %v2544
    %v2767 = vunpack.c.h.bf16 %v2544
    %v2768 = vunpack.c.l.bf16 %v2545
    %v2769 = vunpack.c.h.bf16 %v2545
    %v2770 = vunpack.c.l.bf16 %v2550
    %v2771 = vunpack.c.h.bf16 %v2550
    %v2772 = vunpack.c.l.bf16 %v2551
    %v2773 = vunpack.c.h.bf16 %v2551
    %v2774 = vunpack.c.l.bf16 %v2552
    %v2775 = vunpack.c.h.bf16 %v2552
    %v2776 = vunpack.c.l.bf16 %v2553
    %v2777 = vunpack.c.h.bf16 %v2553
    %v2778 = vunpack.c.l.bf16 %v2558
    %v2779 = vunpack.c.h.bf16 %v2558
    %v2780 = vunpack.c.l.bf16 %v2559
    %v2781 = vunpack.c.h.bf16 %v2559
    %v2782 = vunpack.c.l.bf16 %v2560
    %v2783 = vunpack.c.h.bf16 %v2560
    %v2784 = vunpack.c.l.bf16 %v2561
    %v2785 = vunpack.c.h.bf16 %v2561
    %v2786 = vunpack.c.l.bf16 %v2566
    %v2787 = vunpack.c.h.bf16 %v2566
    %v2788 = vunpack.c.l.bf16 %v2567
    %v2789 = vunpack.c.h.bf16 %v2567
    %v2790 = vunpack.c.l.bf16 %v2568
    %v2791 = vunpack.c.h.bf16 %v2568
    %v2792 = vunpack.c.l.bf16 %v2569
    %v2793 = vunpack.c.h.bf16 %v2569
    %v2794 = vunpack.c.l.bf16 %v2574
    %v2795 = vunpack.c.h.bf16 %v2574
    %v2796 = vunpack.c.l.bf16 %v2575
    %v2797 = vunpack.c.h.bf16 %v2575
    %v2798 = vunpack.c.l.bf16 %v2576
    %v2799 = vunpack.c.h.bf16 %v2576
    %v2800 = vunpack.c.l.bf16 %v2577
    %v2801 = vunpack.c.h.bf16 %v2577
    %v2802 = vunpack.c.l.bf16 %v2582
    %v2803 = vunpack.c.h.bf16 %v2582
    %v2804 = vunpack.c.l.bf16 %v2583
    %v2805 = vunpack.c.h.bf16 %v2583
    %v2806 = vunpack.c.l.bf16 %v2584
    %v2807 = vunpack.c.h.bf16 %v2584
    %v2808 = vunpack.c.l.bf16 %v2585
    %v2809 = vunpack.c.h.bf16 %v2585
    %v2810 = vunpack.c.l.bf16 %v2590
    %v2811 = vunpack.c.h.bf16 %v2590
    %v2812 = vunpack.c.l.bf16 %v2591
    %v2813 = vunpack.c.h.bf16 %v2591
    %v2814 = vunpack.c.l.bf16 %v2592
    %v2815 = vunpack.c.h.bf16 %v2592
    %v2816 = vunpack.c.l.bf16 %v2593
    %v2817 = vunpack.c.h.bf16 %v2593
    %v2818 = vunpack.c.l.bf16 %v2598
    %v2819 = vunpack.c.h.bf16 %v2598
    %v2820 = vunpack.c.l.bf16 %v2599
    %v2821 = vunpack.c.h.bf16 %v2599
    %v2822 = vunpack.c.l.bf16 %v2600
    %v2823 = vunpack.c.h.bf16 %v2600
    %v2824 = vunpack.c.l.bf16 %v2601
    %v2825 = vunpack.c.h.bf16 %v2601
    %v2826 = vunpack.c.l.bf16 %v2606
    %v2827 = vunpack.c.h.bf16 %v2606
    %v2828 = vunpack.c.l.bf16 %v2607
    %v2829 = vunpack.c.h.bf16 %v2607
    %v2830 = vunpack.c.l.bf16 %v2608
    %v2831 = vunpack.c.h.bf16 %v2608
    %v2832 = vunpack.c.l.bf16 %v2609
    %v2833 = vunpack.c.h.bf16 %v2609
    %v2834 = vunpack.c.l.bf16 %v2614
    %v2835 = vunpack.c.h.bf16 %v2614
    %v2836 = vunpack.c.l.bf16 %v2615
    %v2837 = vunpack.c.h.bf16 %v2615
    %v2838 = vunpack.c.l.bf16 %v2616
    %v2839 = vunpack.c.h.bf16 %v2616
    %v2840 = vunpack.c.l.bf16 %v2617
    %v2841 = vunpack.c.h.bf16 %v2617
    %v2842 = vunpack.c.l.bf16 %v2622
    %v2843 = vunpack.c.h.bf16 %v2622
    %v2844 = vunpack.c.l.bf16 %v2623
    %v2845 = vunpack.c.h.bf16 %v2623
    %v2846 = vunpack.c.l.bf16 %v2624
    %v2847 = vunpack.c.h.bf16 %v2624
    %v2848 = vunpack.c.l.bf16 %v2625
    %v2849 = vunpack.c.h.bf16 %v2625
    %v2850 = vunpack.c.l.bf16 %v2630
    %v2851 = vunpack.c.h.bf16 %v2630
    %v2852 = vunpack.c.l.bf16 %v2631
    %v2853 = vunpack.c.h.bf16 %v2631
    %v2854 = vunpack.c.l.bf16 %v2632
    %v2855 = vunpack.c.h.bf16 %v2632
    %v2856 = vunpack.c.l.bf16 %v2633
    %v2857 = vunpack.c.h.bf16 %v2633
    %v2858 = vunpack.c.l.bf16 %v2638
    %v2859 = vunpack.c.h.bf16 %v2638
    %v2860 = vunpack.c.l.bf16 %v2639
    %v2861 = vunpack.c.h.bf16 %v2639
    %v2862 = vunpack.c.l.bf16 %v2640
    %v2863 = vunpack.c.h.bf16 %v2640
    %v2864 = vunpack.c.l.bf16 %v2641
    %v2865 = vunpack.c.h.bf16 %v2641
    %v2866 = vmax.f32 %v2642, %v2754
    %v2867 = vmax.f32 %v2643, %v2755
    %v2868 = vmax.f32 %v2644, %v2756
    %v2869 = vmax.f32 %v2645, %v2757
    %v2870 = vmax.f32 %v2646, %v2758
    %v2871 = vmax.f32 %v2647, %v2759
    %v2872 = vmax.f32 %v2648, %v2760
    %v2873 = vmax.f32 %v2649, %v2761
    %v2874 = vmax.f32 %v2650, %v2762
    %v2875 = vmax.f32 %v2651, %v2763
    %v2876 = vmax.f32 %v2652, %v2764
    %v2877 = vmax.f32 %v2653, %v2765
    %v2878 = vmax.f32 %v2654, %v2766
    %v2879 = vmax.f32 %v2655, %v2767
    %v2880 = vmax.f32 %v2656, %v2768
    %v2881 = vmax.f32 %v2657, %v2769
    %v2882 = vmax.f32 %v2658, %v2770
    %v2883 = vmax.f32 %v2659, %v2771
    %v2884 = vmax.f32 %v2660, %v2772
    %v2885 = vmax.f32 %v2661, %v2773
    %v2886 = vmax.f32 %v2662, %v2774
    %v2887 = vmax.f32 %v2663, %v2775
    %v2888 = vmax.f32 %v2664, %v2776
    %v2889 = vmax.f32 %v2665, %v2777
    %v2890 = vmax.f32 %v2666, %v2778
    %v2891 = vmax.f32 %v2667, %v2779
    %v2892 = vmax.f32 %v2668, %v2780
    %v2893 = vmax.f32 %v2669, %v2781
    %v2894 = vmax.f32 %v2670, %v2782
    %v2895 = vmax.f32 %v2671, %v2783
    %v2896 = vmax.f32 %v2672, %v2784
    %v2897 = vmax.f32 %v2673, %v2785
    %v2898 = vmax.f32 %v2674, %v2786
    %v2899 = vmax.f32 %v2675, %v2787
    %v2900 = vmax.f32 %v2676, %v2788
    %v2901 = vmax.f32 %v2677, %v2789
    %v2902 = vmax.f32 %v2678, %v2790
    %v2903 = vmax.f32 %v2679, %v2791
    %v2904 = vmax.f32 %v2680, %v2792
    %v2905 = vmax.f32 %v2681, %v2793
    %v2906 = vmax.f32 %v2682, %v2794
    %v2907 = vmax.f32 %v2683, %v2795
    %v2908 = vmax.f32 %v2684, %v2796
    %v2909 = vmax.f32 %v2685, %v2797
    %v2910 = vmax.f32 %v2686, %v2798
    %v2911 = vmax.f32 %v2687, %v2799
    %v2912 = vmax.f32 %v2688, %v2800
    %v2913 = vmax.f32 %v2689, %v2801
    %v2914 = vmax.f32 %v2690, %v2802
    %v2915 = vmax.f32 %v2691, %v2803
    %v2916 = vmax.f32 %v2692, %v2804
    %v2917 = vmax.f32 %v2693, %v2805
    %v2918 = vmax.f32 %v2694, %v2806
    %v2919 = vmax.f32 %v2695, %v2807
    %v2920 = vmax.f32 %v2696, %v2808
    %v2921 = vmax.f32 %v2697, %v2809
    %v2922 = vmax.f32 %v2698, %v2810
    %v2923 = vmax.f32 %v2699, %v2811
    %v2924 = vmax.f32 %v2700, %v2812
    %v2925 = vmax.f32 %v2701, %v2813
    %v2926 = vmax.f32 %v2702, %v2814
    %v2927 = vmax.f32 %v2703, %v2815
    %v2928 = vmax.f32 %v2704, %v2816
    %v2929 = vmax.f32 %v2705, %v2817
    %v2930 = vmax.f32 %v2706, %v2818
    %v2931 = vmax.f32 %v2707, %v2819
    %v2932 = vmax.f32 %v2708, %v2820
    %v2933 = vmax.f32 %v2709, %v2821
    %v2934 = vmax.f32 %v2710, %v2822
    %v2935 = vmax.f32 %v2711, %v2823
    %v2936 = vmax.f32 %v2712, %v2824
    %v2937 = vmax.f32 %v2713, %v2825
    %v2938 = vmax.f32 %v2714, %v2826
    %v2939 = vmax.f32 %v2715, %v2827
    %v2940 = vmax.f32 %v2716, %v2828
    %v2941 = vmax.f32 %v2717, %v2829
    %v2942 = vmax.f32 %v2718, %v2830
    %v2943 = vmax.f32 %v2719, %v2831
    %v2944 = vmax.f32 %v2720, %v2832
    %v2945 = vmax.f32 %v2721, %v2833
    %v2946 = vmax.f32 %v2722, %v2834
    %v2947 = vmax.f32 %v2723, %v2835
    %v2948 = vmax.f32 %v2724, %v2836
    %v2949 = vmax.f32 %v2725, %v2837
    %v2950 = vmax.f32 %v2726, %v2838
    %v2951 = vmax.f32 %v2727, %v2839
    %v2952 = vmax.f32 %v2728, %v2840
    %v2953 = vmax.f32 %v2729, %v2841
    %v2954 = vmax.f32 %v2730, %v2842
    %v2955 = vmax.f32 %v2731, %v2843
    %v2956 = vmax.f32 %v2732, %v2844
    %v2957 = vmax.f32 %v2733, %v2845
    %v2958 = vmax.f32 %v2734, %v2846
    %v2959 = vmax.f32 %v2735, %v2847
    %v2960 = vmax.f32 %v2736, %v2848
    %v2961 = vmax.f32 %v2737, %v2849
    %v2962 = vmax.f32 %v2738, %v2850
    %v2963 = vmax.f32 %v2739, %v2851
    %v2964 = vmax.f32 %v2740, %v2852
    %v2965 = vmax.f32 %v2741, %v2853
    %v2966 = vmax.f32 %v2742, %v2854
    %v2967 = vmax.f32 %v2743, %v2855
    %v2968 = vmax.f32 %v2744, %v2856
    %v2969 = vmax.f32 %v2745, %v2857
    %v2970 = vmax.f32 %v2746, %v2858
    %v2971 = vmax.f32 %v2747, %v2859
    %v2972 = vmax.f32 %v2748, %v2860
    %v2973 = vmax.f32 %v2749, %v2861
    %v2974 = vmax.f32 %v2750, %v2862
    %v2975 = vmax.f32 %v2751, %v2863
    %v2976 = vmax.f32 %v2752, %v2864
    %v2977 = vmax.f32 %v2753, %v2865
    %v2978 = vpack.c.bf16 %v2867, %v2866
    %v2979 = vpack.c.bf16 %v2869, %v2868
    %v2980 = vpack.c.bf16 %v2871, %v2870
    %v2981 = vpack.c.bf16 %v2873, %v2872
    %v2982 = vpack.c.bf16 %v2875, %v2874
    %v2983 = vpack.c.bf16 %v2877, %v2876
    %v2984 = vpack.c.bf16 %v2879, %v2878
    %v2985 = vpack.c.bf16 %v2881, %v2880
    %v2986 = vpack.c.bf16 %v2883, %v2882
    %v2987 = vpack.c.bf16 %v2885, %v2884
    %v2988 = vpack.c.bf16 %v2887, %v2886
    %v2989 = vpack.c.bf16 %v2889, %v2888
    %v2990 = vpack.c.bf16 %v2891, %v2890
    %v2991 = vpack.c.bf16 %v2893, %v2892
    %v2992 = vpack.c.bf16 %v2895, %v2894
    %v2993 = vpack.c.bf16 %v2897, %v2896
    %v2994 = vpack.c.bf16 %v2899, %v2898
    %v2995 = vpack.c.bf16 %v2901, %v2900
    %v2996 = vpack.c.bf16 %v2903, %v2902
    %v2997 = vpack.c.bf16 %v2905, %v2904
    %v2998 = vpack.c.bf16 %v2907, %v2906
    %v2999 = vpack.c.bf16 %v2909, %v2908
    %v3000 = vpack.c.bf16 %v2911, %v2910
    %v3001 = vpack.c.bf16 %v2913, %v2912
    %v3002 = vpack.c.bf16 %v2915, %v2914
    %v3003 = vpack.c.bf16 %v2917, %v2916
    %v3004 = vpack.c.bf16 %v2919, %v2918
    %v3005 = vpack.c.bf16 %v2921, %v2920
    %v3006 = vpack.c.bf16 %v2923, %v2922
    %v3007 = vpack.c.bf16 %v2925, %v2924
    %v3008 = vpack.c.bf16 %v2927, %v2926
    %v3009 = vpack.c.bf16 %v2929, %v2928
    %v3010 = vpack.c.bf16 %v2931, %v2930
    %v3011 = vpack.c.bf16 %v2933, %v2932
    %v3012 = vpack.c.bf16 %v2935, %v2934
    %v3013 = vpack.c.bf16 %v2937, %v2936
    %v3014 = vpack.c.bf16 %v2939, %v2938
    %v3015 = vpack.c.bf16 %v2941, %v2940
    %v3016 = vpack.c.bf16 %v2943, %v2942
    %v3017 = vpack.c.bf16 %v2945, %v2944
    %v3018 = vpack.c.bf16 %v2947, %v2946
    %v3019 = vpack.c.bf16 %v2949, %v2948
    %v3020 = vpack.c.bf16 %v2951, %v2950
    %v3021 = vpack.c.bf16 %v2953, %v2952
    %v3022 = vpack.c.bf16 %v2955, %v2954
    %v3023 = vpack.c.bf16 %v2957, %v2956
    %v3024 = vpack.c.bf16 %v2959, %v2958
    %v3025 = vpack.c.bf16 %v2961, %v2960
    %v3026 = vpack.c.bf16 %v2963, %v2962
    %v3027 = vpack.c.bf16 %v2965, %v2964
    %v3028 = vpack.c.bf16 %v2967, %v2966
    %v3029 = vpack.c.bf16 %v2969, %v2968
    %v3030 = vpack.c.bf16 %v2971, %v2970
    %v3031 = vpack.c.bf16 %v2973, %v2972
    %v3032 = vpack.c.bf16 %v2975, %v2974
    %v3033 = vpack.c.bf16 %v2977, %v2976
    %v3034 = vunpack.c.l.bf16 %v2978
    %v3035 = vunpack.c.h.bf16 %v2978
    %v3036 = vunpack.c.l.bf16 %v2980
    %v3037 = vunpack.c.h.bf16 %v2980
    %v3038 = vunpack.c.l.bf16 %v2982
    %v3039 = vunpack.c.h.bf16 %v2982
    %v3040 = vunpack.c.l.bf16 %v2984
    %v3041 = vunpack.c.h.bf16 %v2984
    %v3042 = vunpack.c.l.bf16 %v2986
    %v3043 = vunpack.c.h.bf16 %v2986
    %v3044 = vunpack.c.l.bf16 %v2988
    %v3045 = vunpack.c.h.bf16 %v2988
    %v3046 = vunpack.c.l.bf16 %v2990
    %v3047 = vunpack.c.h.bf16 %v2990
    %v3048 = vunpack.c.l.bf16 %v2992
    %v3049 = vunpack.c.h.bf16 %v2992
    %v3050 = vunpack.c.l.bf16 %v2994
    %v3051 = vunpack.c.h.bf16 %v2994
    %v3052 = vunpack.c.l.bf16 %v2996
    %v3053 = vunpack.c.h.bf16 %v2996
    %v3054 = vunpack.c.l.bf16 %v2998
    %v3055 = vunpack.c.h.bf16 %v2998
    %v3056 = vunpack.c.l.bf16 %v3000
    %v3057 = vunpack.c.h.bf16 %v3000
    %v3058 = vunpack.c.l.bf16 %v3002
    %v3059 = vunpack.c.h.bf16 %v3002
    %v3060 = vunpack.c.l.bf16 %v3004
    %v3061 = vunpack.c.h.bf16 %v3004
    %v3062 = vunpack.c.l.bf16 %v3006
    %v3063 = vunpack.c.h.bf16 %v3006
    %v3064 = vunpack.c.l.bf16 %v3008
    %v3065 = vunpack.c.h.bf16 %v3008
    %v3066 = vunpack.c.l.bf16 %v3010
    %v3067 = vunpack.c.h.bf16 %v3010
    %v3068 = vunpack.c.l.bf16 %v3012
    %v3069 = vunpack.c.h.bf16 %v3012
    %v3070 = vunpack.c.l.bf16 %v3014
    %v3071 = vunpack.c.h.bf16 %v3014
    %v3072 = vunpack.c.l.bf16 %v3016
    %v3073 = vunpack.c.h.bf16 %v3016
    %v3074 = vunpack.c.l.bf16 %v3018
    %v3075 = vunpack.c.h.bf16 %v3018
    %v3076 = vunpack.c.l.bf16 %v3020
    %v3077 = vunpack.c.h.bf16 %v3020
    %v3078 = vunpack.c.l.bf16 %v3022
    %v3079 = vunpack.c.h.bf16 %v3022
    %v3080 = vunpack.c.l.bf16 %v3024
    %v3081 = vunpack.c.h.bf16 %v3024
    %v3082 = vunpack.c.l.bf16 %v3026
    %v3083 = vunpack.c.h.bf16 %v3026
    %v3084 = vunpack.c.l.bf16 %v3028
    %v3085 = vunpack.c.h.bf16 %v3028
    %v3086 = vunpack.c.l.bf16 %v3030
    %v3087 = vunpack.c.h.bf16 %v3030
    %v3088 = vunpack.c.l.bf16 %v3032
    %v3089 = vunpack.c.h.bf16 %v3032
    %3146 = vrot.lane.b32.xlu0 %v2978, 32
    %v3147 = vpop.permute.xlu0 %3146
    %3148 = vrot.lane.b32.xlu0 %v2979, 32
    %v3149 = vpop.permute.xlu0 %3148
    %3150 = vrot.lane.b32.xlu0 %v2980, 32
    %v3151 = vpop.permute.xlu0 %3150
    %3152 = vrot.lane.b32.xlu0 %v2981, 32
    %v3153 = vpop.permute.xlu0 %3152
    %3154 = vrot.lane.b32.xlu0 %v2982, 32
    %v3155 = vpop.permute.xlu0 %3154
    %3156 = vrot.lane.b32.xlu0 %v2983, 32
    %v3157 = vpop.permute.xlu0 %3156
    %3158 = vrot.lane.b32.xlu0 %v2984, 32
    %v3159 = vpop.permute.xlu0 %3158
    %3160 = vrot.lane.b32.xlu0 %v2985, 32
    %v3161 = vpop.permute.xlu0 %3160
    %3162 = vrot.lane.b32.xlu0 %v2986, 32
    %v3163 = vpop.permute.xlu0 %3162
    %3164 = vrot.lane.b32.xlu0 %v2987, 32
    %v3165 = vpop.permute.xlu0 %3164
    %3166 = vrot.lane.b32.xlu0 %v2988, 32
    %v3167 = vpop.permute.xlu0 %3166
    %3168 = vrot.lane.b32.xlu0 %v2989, 32
    %v3169 = vpop.permute.xlu0 %3168
    %3170 = vrot.lane.b32.xlu0 %v2990, 32
    %v3171 = vpop.permute.xlu0 %3170
    %3172 = vrot.lane.b32.xlu0 %v2991, 32
    %v3173 = vpop.permute.xlu0 %3172
    %3174 = vrot.lane.b32.xlu0 %v2992, 32
    %v3175 = vpop.permute.xlu0 %3174
    %3176 = vrot.lane.b32.xlu0 %v2993, 32
    %v3177 = vpop.permute.xlu0 %3176
    %3178 = vrot.lane.b32.xlu0 %v2994, 32
    %v3179 = vpop.permute.xlu0 %3178
    %3180 = vrot.lane.b32.xlu0 %v2995, 32
    %v3181 = vpop.permute.xlu0 %3180
    %3182 = vrot.lane.b32.xlu0 %v2996, 32
    %v3183 = vpop.permute.xlu0 %3182
    %3184 = vrot.lane.b32.xlu0 %v2997, 32
    %v3185 = vpop.permute.xlu0 %3184
    %3186 = vrot.lane.b32.xlu0 %v2998, 32
    %v3187 = vpop.permute.xlu0 %3186
    %3188 = vrot.lane.b32.xlu0 %v2999, 32
    %v3189 = vpop.permute.xlu0 %3188
    %3190 = vrot.lane.b32.xlu0 %v3000, 32
    %v3191 = vpop.permute.xlu0 %3190
    %3192 = vrot.lane.b32.xlu0 %v3001, 32
    %v3193 = vpop.permute.xlu0 %3192
    %3194 = vrot.lane.b32.xlu0 %v3002, 32
    %v3195 = vpop.permute.xlu0 %3194
    %3196 = vrot.lane.b32.xlu0 %v3003, 32
    %v3197 = vpop.permute.xlu0 %3196
    %3198 = vrot.lane.b32.xlu0 %v3004, 32
    %v3199 = vpop.permute.xlu0 %3198
    %3200 = vrot.lane.b32.xlu0 %v3005, 32
    %v3201 = vpop.permute.xlu0 %3200
    %3202 = vrot.lane.b32.xlu0 %v3006, 32
    %v3203 = vpop.permute.xlu0 %3202
    %3204 = vrot.lane.b32.xlu0 %v3007, 32
    %v3205 = vpop.permute.xlu0 %3204
    %3206 = vrot.lane.b32.xlu0 %v3008, 32
    %v3207 = vpop.permute.xlu0 %3206
    %3208 = vrot.lane.b32.xlu0 %v3009, 32
    %v3209 = vpop.permute.xlu0 %3208
    %3210 = vrot.lane.b32.xlu0 %v3010, 32
    %v3211 = vpop.permute.xlu0 %3210
    %3212 = vrot.lane.b32.xlu0 %v3011, 32
    %v3213 = vpop.permute.xlu0 %3212
    %3214 = vrot.lane.b32.xlu0 %v3012, 32
    %v3215 = vpop.permute.xlu0 %3214
    %3216 = vrot.lane.b32.xlu0 %v3013, 32
    %v3217 = vpop.permute.xlu0 %3216
    %3218 = vrot.lane.b32.xlu0 %v3014, 32
    %v3219 = vpop.permute.xlu0 %3218
    %3220 = vrot.lane.b32.xlu0 %v3015, 32
    %v3221 = vpop.permute.xlu0 %3220
    %3222 = vrot.lane.b32.xlu0 %v3016, 32
    %v3223 = vpop.permute.xlu0 %3222
    %3224 = vrot.lane.b32.xlu0 %v3017, 32
    %v3225 = vpop.permute.xlu0 %3224
    %3226 = vrot.lane.b32.xlu0 %v3018, 32
    %v3227 = vpop.permute.xlu0 %3226
    %3228 = vrot.lane.b32.xlu0 %v3019, 32
    %v3229 = vpop.permute.xlu0 %3228
    %3230 = vrot.lane.b32.xlu0 %v3020, 32
    %v3231 = vpop.permute.xlu0 %3230
    %3232 = vrot.lane.b32.xlu0 %v3021, 32
    %v3233 = vpop.permute.xlu0 %3232
    %3234 = vrot.lane.b32.xlu0 %v3022, 32
    %v3235 = vpop.permute.xlu0 %3234
    %3236 = vrot.lane.b32.xlu0 %v3023, 32
    %v3237 = vpop.permute.xlu0 %3236
    %3238 = vrot.lane.b32.xlu0 %v3024, 32
    %v3239 = vpop.permute.xlu0 %3238
    %3240 = vrot.lane.b32.xlu0 %v3025, 32
    %v3241 = vpop.permute.xlu0 %3240
    %3242 = vrot.lane.b32.xlu0 %v3026, 32
    %v3243 = vpop.permute.xlu0 %3242
    %3244 = vrot.lane.b32.xlu0 %v3027, 32
    %v3245 = vpop.permute.xlu0 %3244
    %3246 = vrot.lane.b32.xlu0 %v3028, 32
    %v3247 = vpop.permute.xlu0 %3246
    %3248 = vrot.lane.b32.xlu0 %v3029, 32
    %v3249 = vpop.permute.xlu0 %3248
    %3250 = vrot.lane.b32.xlu0 %v3030, 32
    %v3251 = vpop.permute.xlu0 %3250
    %3252 = vrot.lane.b32.xlu0 %v3031, 32
    %v3253 = vpop.permute.xlu0 %3252
    %3254 = vrot.lane.b32.xlu0 %v3032, 32
    %v3255 = vpop.permute.xlu0 %3254
    %3256 = vrot.lane.b32.xlu0 %v3033, 32
    %v3257 = vpop.permute.xlu0 %3256
    %v3258 = vrot.slane %v3147, 4
    %v3259 = vrot.slane %v3149, 4
    %v3260 = vrot.slane %v3151, 4
    %v3261 = vrot.slane %v3153, 4
    %v3262 = vrot.slane %v3155, 4
    %v3263 = vrot.slane %v3157, 4
    %v3264 = vrot.slane %v3159, 4
    %v3265 = vrot.slane %v3161, 4
    %v3266 = vrot.slane %v3163, 4
    %v3267 = vrot.slane %v3165, 4
    %v3268 = vrot.slane %v3167, 4
    %v3269 = vrot.slane %v3169, 4
    %v3270 = vrot.slane %v3171, 4
    %v3271 = vrot.slane %v3173, 4
    %v3272 = vrot.slane %v3175, 4
    %v3273 = vrot.slane %v3177, 4
    %v3274 = vrot.slane %v3179, 4
    %v3275 = vrot.slane %v3181, 4
    %v3276 = vrot.slane %v3183, 4
    %v3277 = vrot.slane %v3185, 4
    %v3278 = vrot.slane %v3187, 4
    %v3279 = vrot.slane %v3189, 4
    %v3280 = vrot.slane %v3191, 4
    %v3281 = vrot.slane %v3193, 4
    %v3282 = vrot.slane %v3195, 4
    %v3283 = vrot.slane %v3197, 4
    %v3284 = vrot.slane %v3199, 4
    %v3285 = vrot.slane %v3201, 4
    %v3286 = vrot.slane %v3203, 4
    %v3287 = vrot.slane %v3205, 4
    %v3288 = vrot.slane %v3207, 4
    %v3289 = vrot.slane %v3209, 4
    %v3290 = vrot.slane %v3211, 4
    %v3291 = vrot.slane %v3213, 4
    %v3292 = vrot.slane %v3215, 4
    %v3293 = vrot.slane %v3217, 4
    %v3294 = vrot.slane %v3219, 4
    %v3295 = vrot.slane %v3221, 4
    %v3296 = vrot.slane %v3223, 4
    %v3297 = vrot.slane %v3225, 4
    %v3298 = vrot.slane %v3227, 4
    %v3299 = vrot.slane %v3229, 4
    %v3300 = vrot.slane %v3231, 4
    %v3301 = vrot.slane %v3233, 4
    %v3302 = vrot.slane %v3235, 4
    %v3303 = vrot.slane %v3237, 4
    %v3304 = vrot.slane %v3239, 4
    %v3305 = vrot.slane %v3241, 4
    %v3306 = vrot.slane %v3243, 4
    %v3307 = vrot.slane %v3245, 4
    %v3308 = vrot.slane %v3247, 4
    %v3309 = vrot.slane %v3249, 4
    %v3310 = vrot.slane %v3251, 4
    %v3311 = vrot.slane %v3253, 4
    %v3312 = vrot.slane %v3255, 4
    %v3313 = vrot.slane %v3257, 4
    %vm3314 = vcmask 1043456
    %v3315 = vsel %vm3314, %v3258, %v3259
    %vm3316 = vcmask 261120
    %v3317 = vsel %vm3316, %v3315, %v3149
    %v3318 = vsel %vm3314, %v3260, %v3261
    %v3319 = vsel %vm3316, %v3318, %v3153
    %v3320 = vsel %vm3314, %v3262, %v3263
    %v3321 = vsel %vm3316, %v3320, %v3157
    %v3322 = vsel %vm3314, %v3264, %v3265
    %v3323 = vsel %vm3316, %v3322, %v3161
    %v3324 = vsel %vm3314, %v3266, %v3267
    %v3325 = vsel %vm3316, %v3324, %v3165
    %v3326 = vsel %vm3314, %v3268, %v3269
    %v3327 = vsel %vm3316, %v3326, %v3169
    %v3328 = vsel %vm3314, %v3270, %v3271
    %v3329 = vsel %vm3316, %v3328, %v3173
    %v3330 = vsel %vm3314, %v3272, %v3273
    %v3331 = vsel %vm3316, %v3330, %v3177
    %v3332 = vsel %vm3314, %v3274, %v3275
    %v3333 = vsel %vm3316, %v3332, %v3181
    %v3334 = vsel %vm3314, %v3276, %v3277
    %v3335 = vsel %vm3316, %v3334, %v3185
    %v3336 = vsel %vm3314, %v3278, %v3279
    %v3337 = vsel %vm3316, %v3336, %v3189
    %v3338 = vsel %vm3314, %v3280, %v3281
    %v3339 = vsel %vm3316, %v3338, %v3193
    %v3340 = vsel %vm3314, %v3282, %v3283
    %v3341 = vsel %vm3316, %v3340, %v3197
    %v3342 = vsel %vm3314, %v3284, %v3285
    %v3343 = vsel %vm3316, %v3342, %v3201
    %v3344 = vsel %vm3314, %v3286, %v3287
    %v3345 = vsel %vm3316, %v3344, %v3205
    %v3346 = vsel %vm3314, %v3288, %v3289
    %v3347 = vsel %vm3316, %v3346, %v3209
    %v3348 = vsel %vm3314, %v3290, %v3291
    %v3349 = vsel %vm3316, %v3348, %v3213
    %v3350 = vsel %vm3314, %v3292, %v3293
    %v3351 = vsel %vm3316, %v3350, %v3217
    %v3352 = vsel %vm3314, %v3294, %v3295
    %v3353 = vsel %vm3316, %v3352, %v3221
    %v3354 = vsel %vm3314, %v3296, %v3297
    %v3355 = vsel %vm3316, %v3354, %v3225
    %v3356 = vsel %vm3314, %v3298, %v3299
    %v3357 = vsel %vm3316, %v3356, %v3229
    %v3358 = vsel %vm3314, %v3300, %v3301
    %v3359 = vsel %vm3316, %v3358, %v3233
    %v3360 = vsel %vm3314, %v3302, %v3303
    %v3361 = vsel %vm3316, %v3360, %v3237
    %v3362 = vsel %vm3314, %v3304, %v3305
    %v3363 = vsel %vm3316, %v3362, %v3241
    %v3364 = vsel %vm3314, %v3306, %v3307
    %v3365 = vsel %vm3316, %v3364, %v3245
    %v3366 = vsel %vm3314, %v3308, %v3309
    %v3367 = vsel %vm3316, %v3366, %v3249
    %v3368 = vsel %vm3314, %v3310, %v3311
    %v3369 = vsel %vm3316, %v3368, %v3253
    %v3370 = vsel %vm3314, %v3312, %v3313
    %v3371 = vsel %vm3316, %v3370, %v3257
    %v3400 = vunpack.c.l.bf16 %v3317
    %v3401 = vunpack.c.h.bf16 %v3317
    %v3402 = vunpack.c.l.bf16 %v3319
    %v3403 = vunpack.c.h.bf16 %v3319
    %v3404 = vunpack.c.l.bf16 %v3321
    %v3405 = vunpack.c.h.bf16 %v3321
    %v3406 = vunpack.c.l.bf16 %v3323
    %v3407 = vunpack.c.h.bf16 %v3323
    %v3408 = vunpack.c.l.bf16 %v3325
    %v3409 = vunpack.c.h.bf16 %v3325
    %v3410 = vunpack.c.l.bf16 %v3327
    %v3411 = vunpack.c.h.bf16 %v3327
    %v3412 = vunpack.c.l.bf16 %v3329
    %v3413 = vunpack.c.h.bf16 %v3329
    %v3414 = vunpack.c.l.bf16 %v3331
    %v3415 = vunpack.c.h.bf16 %v3331
    %v3416 = vunpack.c.l.bf16 %v3333
    %v3417 = vunpack.c.h.bf16 %v3333
    %v3418 = vunpack.c.l.bf16 %v3335
    %v3419 = vunpack.c.h.bf16 %v3335
    %v3420 = vunpack.c.l.bf16 %v3337
    %v3421 = vunpack.c.h.bf16 %v3337
    %v3422 = vunpack.c.l.bf16 %v3339
    %v3423 = vunpack.c.h.bf16 %v3339
    %v3424 = vunpack.c.l.bf16 %v3341
    %v3425 = vunpack.c.h.bf16 %v3341
    %v3426 = vunpack.c.l.bf16 %v3343
    %v3427 = vunpack.c.h.bf16 %v3343
    %v3428 = vunpack.c.l.bf16 %v3345
    %v3429 = vunpack.c.h.bf16 %v3345
    %v3430 = vunpack.c.l.bf16 %v3347
    %v3431 = vunpack.c.h.bf16 %v3347
    %v3432 = vunpack.c.l.bf16 %v3349
    %v3433 = vunpack.c.h.bf16 %v3349
    %v3434 = vunpack.c.l.bf16 %v3351
    %v3435 = vunpack.c.h.bf16 %v3351
    %v3436 = vunpack.c.l.bf16 %v3353
    %v3437 = vunpack.c.h.bf16 %v3353
    %v3438 = vunpack.c.l.bf16 %v3355
    %v3439 = vunpack.c.h.bf16 %v3355
    %v3440 = vunpack.c.l.bf16 %v3357
    %v3441 = vunpack.c.h.bf16 %v3357
    %v3442 = vunpack.c.l.bf16 %v3359
    %v3443 = vunpack.c.h.bf16 %v3359
    %v3444 = vunpack.c.l.bf16 %v3361
    %v3445 = vunpack.c.h.bf16 %v3361
    %v3446 = vunpack.c.l.bf16 %v3363
    %v3447 = vunpack.c.h.bf16 %v3363
    %v3448 = vunpack.c.l.bf16 %v3365
    %v3449 = vunpack.c.h.bf16 %v3365
    %v3450 = vunpack.c.l.bf16 %v3367
    %v3451 = vunpack.c.h.bf16 %v3367
    %v3452 = vunpack.c.l.bf16 %v3369
    %v3453 = vunpack.c.h.bf16 %v3369
    %v3454 = vunpack.c.l.bf16 %v3371
    %v3455 = vunpack.c.h.bf16 %v3371
    %v3456 = vmax.f32 %v3034, %v3400
    %v3457 = vmax.f32 %v3035, %v3401
    %v3458 = vmax.f32 %v3036, %v3402
    %v3459 = vmax.f32 %v3037, %v3403
    %v3460 = vmax.f32 %v3038, %v3404
    %v3461 = vmax.f32 %v3039, %v3405
    %v3462 = vmax.f32 %v3040, %v3406
    %v3463 = vmax.f32 %v3041, %v3407
    %v3464 = vmax.f32 %v3042, %v3408
    %v3465 = vmax.f32 %v3043, %v3409
    %v3466 = vmax.f32 %v3044, %v3410
    %v3467 = vmax.f32 %v3045, %v3411
    %v3468 = vmax.f32 %v3046, %v3412
    %v3469 = vmax.f32 %v3047, %v3413
    %v3470 = vmax.f32 %v3048, %v3414
    %v3471 = vmax.f32 %v3049, %v3415
    %v3472 = vmax.f32 %v3050, %v3416
    %v3473 = vmax.f32 %v3051, %v3417
    %v3474 = vmax.f32 %v3052, %v3418
    %v3475 = vmax.f32 %v3053, %v3419
    %v3476 = vmax.f32 %v3054, %v3420
    %v3477 = vmax.f32 %v3055, %v3421
    %v3478 = vmax.f32 %v3056, %v3422
    %v3479 = vmax.f32 %v3057, %v3423
    %v3480 = vmax.f32 %v3058, %v3424
    %v3481 = vmax.f32 %v3059, %v3425
    %v3482 = vmax.f32 %v3060, %v3426
    %v3483 = vmax.f32 %v3061, %v3427
    %v3484 = vmax.f32 %v3062, %v3428
    %v3485 = vmax.f32 %v3063, %v3429
    %v3486 = vmax.f32 %v3064, %v3430
    %v3487 = vmax.f32 %v3065, %v3431
    %v3488 = vmax.f32 %v3066, %v3432
    %v3489 = vmax.f32 %v3067, %v3433
    %v3490 = vmax.f32 %v3068, %v3434
    %v3491 = vmax.f32 %v3069, %v3435
    %v3492 = vmax.f32 %v3070, %v3436
    %v3493 = vmax.f32 %v3071, %v3437
    %v3494 = vmax.f32 %v3072, %v3438
    %v3495 = vmax.f32 %v3073, %v3439
    %v3496 = vmax.f32 %v3074, %v3440
    %v3497 = vmax.f32 %v3075, %v3441
    %v3498 = vmax.f32 %v3076, %v3442
    %v3499 = vmax.f32 %v3077, %v3443
    %v3500 = vmax.f32 %v3078, %v3444
    %v3501 = vmax.f32 %v3079, %v3445
    %v3502 = vmax.f32 %v3080, %v3446
    %v3503 = vmax.f32 %v3081, %v3447
    %v3504 = vmax.f32 %v3082, %v3448
    %v3505 = vmax.f32 %v3083, %v3449
    %v3506 = vmax.f32 %v3084, %v3450
    %v3507 = vmax.f32 %v3085, %v3451
    %v3508 = vmax.f32 %v3086, %v3452
    %v3509 = vmax.f32 %v3087, %v3453
    %v3510 = vmax.f32 %v3088, %v3454
    %v3511 = vmax.f32 %v3089, %v3455
    %v3512 = vpack.c.bf16 %v3457, %v3456
    %v3513 = vpack.c.bf16 %v3459, %v3458
    %v3514 = vpack.c.bf16 %v3461, %v3460
    %v3515 = vpack.c.bf16 %v3463, %v3462
    %v3516 = vpack.c.bf16 %v3465, %v3464
    %v3517 = vpack.c.bf16 %v3467, %v3466
    %v3518 = vpack.c.bf16 %v3469, %v3468
    %v3519 = vpack.c.bf16 %v3471, %v3470
    %v3520 = vpack.c.bf16 %v3473, %v3472
    %v3521 = vpack.c.bf16 %v3475, %v3474
    %v3522 = vpack.c.bf16 %v3477, %v3476
    %v3523 = vpack.c.bf16 %v3479, %v3478
    %v3524 = vpack.c.bf16 %v3481, %v3480
    %v3525 = vpack.c.bf16 %v3483, %v3482
    %v3526 = vpack.c.bf16 %v3485, %v3484
    %v3527 = vpack.c.bf16 %v3487, %v3486
    %v3528 = vpack.c.bf16 %v3489, %v3488
    %v3529 = vpack.c.bf16 %v3491, %v3490
    %v3530 = vpack.c.bf16 %v3493, %v3492
    %v3531 = vpack.c.bf16 %v3495, %v3494
    %v3532 = vpack.c.bf16 %v3497, %v3496
    %v3533 = vpack.c.bf16 %v3499, %v3498
    %v3534 = vpack.c.bf16 %v3501, %v3500
    %v3535 = vpack.c.bf16 %v3503, %v3502
    %v3536 = vpack.c.bf16 %v3505, %v3504
    %v3537 = vpack.c.bf16 %v3507, %v3506
    %v3538 = vpack.c.bf16 %v3509, %v3508
    %v3539 = vpack.c.bf16 %v3511, %v3510
    %s3540 = scalar_lea.vmem [#allocation7], 896
    %v3541 = vld [vmem:[%s3540] sm:$0xff]
    %v3542 = vld [vmem:[%s3540 + $0x8] sm:$0xff]
    %v3543 = vld [vmem:[%s3540 + $0x10] sm:$0xff]
    %v3544 = vld [vmem:[%s3540 + $0x18] sm:$0xff]
    %v3545 = vld [vmem:[%s3540 + $0x20] sm:$0xff]
    %v3546 = vld [vmem:[%s3540 + $0x28] sm:$0xff]
    %v3547 = vld [vmem:[%s3540 + $0x30] sm:$0xff]
    %v3548 = vld [vmem:[%s3540 + $0x38] sm:$0xff]
    %v3549 = vld [vmem:[%s3540 + $0x40] sm:$0xff]
    %v3550 = vld [vmem:[%s3540 + $0x48] sm:$0xff]
    %v3551 = vld [vmem:[%s3540 + $0x50] sm:$0xff]
    %v3552 = vld [vmem:[%s3540 + $0x58] sm:$0xff]
    %v3553 = vld [vmem:[%s3540 + $0x60] sm:$0xff]
    %v3554 = vld [vmem:[%s3540 + $0x68] sm:$0xff]
    %v3555 = vld [vmem:[%s3540 + $0x70] sm:$0xff]
    %v3556 = vld [vmem:[%s3540 + $0x78] sm:$0xff]
    %v3557 = vld [vmem:[%s3540 + $0x80] sm:$0xff]
    %v3558 = vld [vmem:[%s3540 + $0x88] sm:$0xff]
    %v3559 = vld [vmem:[%s3540 + $0x90] sm:$0xff]
    %v3560 = vld [vmem:[%s3540 + $0x98] sm:$0xff]
    %v3561 = vld [vmem:[%s3540 + $0xa0] sm:$0xff]
    %v3562 = vld [vmem:[%s3540 + $0xa8] sm:$0xff]
    %v3563 = vld [vmem:[%s3540 + $0xb0] sm:$0xff]
    %v3564 = vld [vmem:[%s3540 + $0xb8] sm:$0xff]
    %v3565 = vld [vmem:[%s3540 + $0xc0] sm:$0xff]
    %v3566 = vld [vmem:[%s3540 + $0xc8] sm:$0xff]
    %v3567 = vld [vmem:[%s3540 + $0xd0] sm:$0xff]
    %v3568 = vld [vmem:[%s3540 + $0xd8] sm:$0xff]
    %v3569 = vld [vmem:[%s3540 + $0xe0] sm:$0xff]
    %v3570 = vld [vmem:[%s3540 + $0xe8] sm:$0xff]
    %v3571 = vld [vmem:[%s3540 + $0xf0] sm:$0xff]
    %v3572 = vld [vmem:[%s3540 + $0xf8] sm:$0xff]
    %v3573 = vld [vmem:[%s3540 + $0x100] sm:$0xff]
    %v3574 = vld [vmem:[%s3540 + $0x108] sm:$0xff]
    %v3575 = vld [vmem:[%s3540 + $0x110] sm:$0xff]
    %v3576 = vld [vmem:[%s3540 + $0x118] sm:$0xff]
    %v3577 = vld [vmem:[%s3540 + $0x120] sm:$0xff]
    %v3578 = vld [vmem:[%s3540 + $0x128] sm:$0xff]
    %v3579 = vld [vmem:[%s3540 + $0x130] sm:$0xff]
    %v3580 = vld [vmem:[%s3540 + $0x138] sm:$0xff]
    %v3581 = vld [vmem:[%s3540 + $0x140] sm:$0xff]
    %v3582 = vld [vmem:[%s3540 + $0x148] sm:$0xff]
    %v3583 = vld [vmem:[%s3540 + $0x150] sm:$0xff]
    %v3584 = vld [vmem:[%s3540 + $0x158] sm:$0xff]
    %v3585 = vld [vmem:[%s3540 + $0x160] sm:$0xff]
    %v3586 = vld [vmem:[%s3540 + $0x168] sm:$0xff]
    %v3587 = vld [vmem:[%s3540 + $0x170] sm:$0xff]
    %v3588 = vld [vmem:[%s3540 + $0x178] sm:$0xff]
    %v3589 = vld [vmem:[%s3540 + $0x180] sm:$0xff]
    %v3590 = vld [vmem:[%s3540 + $0x188] sm:$0xff]
    %v3591 = vld [vmem:[%s3540 + $0x190] sm:$0xff]
    %v3592 = vld [vmem:[%s3540 + $0x198] sm:$0xff]
    %v3593 = vld [vmem:[%s3540 + $0x1a0] sm:$0xff]
    %v3594 = vld [vmem:[%s3540 + $0x1a8] sm:$0xff]
    %v3595 = vld [vmem:[%s3540 + $0x1b0] sm:$0xff]
    %v3596 = vld [vmem:[%s3540 + $0x1b8] sm:$0xff]
    %v3625 = vunpack.c.l.b16 %v3512
    %v3626 = vunpack.c.h.b16 %v3512
    %v3627 = vunpack.c.l.b16 %v3513
    %v3628 = vunpack.c.h.b16 %v3513
    %v3629 = vunpack.c.l.b16 %v3514
    %v3630 = vunpack.c.h.b16 %v3514
    %v3631 = vunpack.c.l.b16 %v3515
    %v3632 = vunpack.c.h.b16 %v3515
    %v3633 = vunpack.c.l.b16 %v3516
    %v3634 = vunpack.c.h.b16 %v3516
    %v3635 = vunpack.c.l.b16 %v3517
    %v3636 = vunpack.c.h.b16 %v3517
    %v3637 = vunpack.c.l.b16 %v3518
    %v3638 = vunpack.c.h.b16 %v3518
    %v3639 = vunpack.c.l.b16 %v3519
    %v3640 = vunpack.c.h.b16 %v3519
    %v3641 = vunpack.c.l.b16 %v3520
    %v3642 = vunpack.c.h.b16 %v3520
    %v3643 = vunpack.c.l.b16 %v3521
    %v3644 = vunpack.c.h.b16 %v3521
    %v3645 = vunpack.c.l.b16 %v3522
    %v3646 = vunpack.c.h.b16 %v3522
    %v3647 = vunpack.c.l.b16 %v3523
    %v3648 = vunpack.c.h.b16 %v3523
    %v3649 = vunpack.c.l.b16 %v3524
    %v3650 = vunpack.c.h.b16 %v3524
    %v3651 = vunpack.c.l.b16 %v3525
    %v3652 = vunpack.c.h.b16 %v3525
    %v3653 = vunpack.c.l.b16 %v3526
    %v3654 = vunpack.c.h.b16 %v3526
    %v3655 = vunpack.c.l.b16 %v3527
    %v3656 = vunpack.c.h.b16 %v3527
    %v3657 = vunpack.c.l.b16 %v3528
    %v3658 = vunpack.c.h.b16 %v3528
    %v3659 = vunpack.c.l.b16 %v3529
    %v3660 = vunpack.c.h.b16 %v3529
    %v3661 = vunpack.c.l.b16 %v3530
    %v3662 = vunpack.c.h.b16 %v3530
    %v3663 = vunpack.c.l.b16 %v3531
    %v3664 = vunpack.c.h.b16 %v3531
    %v3665 = vunpack.c.l.b16 %v3532
    %v3666 = vunpack.c.h.b16 %v3532
    %v3667 = vunpack.c.l.b16 %v3533
    %v3668 = vunpack.c.h.b16 %v3533
    %v3669 = vunpack.c.l.b16 %v3534
    %v3670 = vunpack.c.h.b16 %v3534
    %v3671 = vunpack.c.l.b16 %v3535
    %v3672 = vunpack.c.h.b16 %v3535
    %v3673 = vunpack.c.l.b16 %v3536
    %v3674 = vunpack.c.h.b16 %v3536
    %v3675 = vunpack.c.l.b16 %v3537
    %v3676 = vunpack.c.h.b16 %v3537
    %v3677 = vunpack.c.l.b16 %v3538
    %v3678 = vunpack.c.h.b16 %v3538
    %v3679 = vunpack.c.l.b16 %v3539
    %v3680 = vunpack.c.h.b16 %v3539
    %v3681 = vpack.c.b16 %v3627, %v3625
    %v3682 = vpack.c.b16 %v3628, %v3626
    %v3683 = vpack.c.b16 %v3631, %v3629
    %v3684 = vpack.c.b16 %v3632, %v3630
    %v3685 = vpack.c.b16 %v3635, %v3633
    %v3686 = vpack.c.b16 %v3636, %v3634
    %v3687 = vpack.c.b16 %v3639, %v3637
    %v3688 = vpack.c.b16 %v3640, %v3638
    %v3689 = vpack.c.b16 %v3643, %v3641
    %v3690 = vpack.c.b16 %v3644, %v3642
    %v3691 = vpack.c.b16 %v3647, %v3645
    %v3692 = vpack.c.b16 %v3648, %v3646
    %v3693 = vpack.c.b16 %v3651, %v3649
    %v3694 = vpack.c.b16 %v3652, %v3650
    %v3695 = vpack.c.b16 %v3655, %v3653
    %v3696 = vpack.c.b16 %v3656, %v3654
    %v3697 = vpack.c.b16 %v3659, %v3657
    %v3698 = vpack.c.b16 %v3660, %v3658
    %v3699 = vpack.c.b16 %v3663, %v3661
    %v3700 = vpack.c.b16 %v3664, %v3662
    %v3701 = vpack.c.b16 %v3667, %v3665
    %v3702 = vpack.c.b16 %v3668, %v3666
    %v3703 = vpack.c.b16 %v3671, %v3669
    %v3704 = vpack.c.b16 %v3672, %v3670
    %v3705 = vpack.c.b16 %v3675, %v3673
    %v3706 = vpack.c.b16 %v3676, %v3674
    %v3707 = vpack.c.b16 %v3679, %v3677
    %v3708 = vpack.c.b16 %v3680, %v3678
    %v3779 = vunpack.c.l.b16 %v3541
    %v3780 = vunpack.c.h.b16 %v3541
    %v3781 = vunpack.c.l.b16 %v3542
    %v3782 = vunpack.c.h.b16 %v3542
    %v3783 = vunpack.c.l.b16 %v3543
    %v3784 = vunpack.c.h.b16 %v3543
    %v3785 = vunpack.c.l.b16 %v3544
    %v3786 = vunpack.c.h.b16 %v3544
    %v3787 = vunpack.c.l.b16 %v3545
    %v3788 = vunpack.c.h.b16 %v3545
    %v3789 = vunpack.c.l.b16 %v3546
    %v3790 = vunpack.c.h.b16 %v3546
    %v3791 = vunpack.c.l.b16 %v3547
    %v3792 = vunpack.c.h.b16 %v3547
    %v3793 = vunpack.c.l.b16 %v3548
    %v3794 = vunpack.c.h.b16 %v3548
    %v3795 = vunpack.c.l.b16 %v3549
    %v3796 = vunpack.c.h.b16 %v3549
    %v3797 = vunpack.c.l.b16 %v3550
    %v3798 = vunpack.c.h.b16 %v3550
    %v3799 = vunpack.c.l.b16 %v3551
    %v3800 = vunpack.c.h.b16 %v3551
    %v3801 = vunpack.c.l.b16 %v3552
    %v3802 = vunpack.c.h.b16 %v3552
    %v3803 = vunpack.c.l.b16 %v3553
    %v3804 = vunpack.c.h.b16 %v3553
    %v3805 = vunpack.c.l.b16 %v3554
    %v3806 = vunpack.c.h.b16 %v3554
    %v3807 = vunpack.c.l.b16 %v3555
    %v3808 = vunpack.c.h.b16 %v3555
    %v3809 = vunpack.c.l.b16 %v3556
    %v3810 = vunpack.c.h.b16 %v3556
    %v3811 = vunpack.c.l.b16 %v3557
    %v3812 = vunpack.c.h.b16 %v3557
    %v3813 = vunpack.c.l.b16 %v3558
    %v3814 = vunpack.c.h.b16 %v3558
    %v3815 = vunpack.c.l.b16 %v3559
    %v3816 = vunpack.c.h.b16 %v3559
    %v3817 = vunpack.c.l.b16 %v3560
    %v3818 = vunpack.c.h.b16 %v3560
    %v3819 = vunpack.c.l.b16 %v3561
    %v3820 = vunpack.c.h.b16 %v3561
    %v3821 = vunpack.c.l.b16 %v3562
    %v3822 = vunpack.c.h.b16 %v3562
    %v3823 = vunpack.c.l.b16 %v3563
    %v3824 = vunpack.c.h.b16 %v3563
    %v3825 = vunpack.c.l.b16 %v3564
    %v3826 = vunpack.c.h.b16 %v3564
    %v3827 = vunpack.c.l.b16 %v3565
    %v3828 = vunpack.c.h.b16 %v3565
    %v3829 = vunpack.c.l.b16 %v3566
    %v3830 = vunpack.c.h.b16 %v3566
    %v3831 = vunpack.c.l.b16 %v3567
    %v3832 = vunpack.c.h.b16 %v3567
    %v3833 = vunpack.c.l.b16 %v3568
    %v3834 = vunpack.c.h.b16 %v3568
    %v3835 = vunpack.c.l.b16 %v3569
    %v3836 = vunpack.c.h.b16 %v3569
    %v3837 = vunpack.c.l.b16 %v3570
    %v3838 = vunpack.c.h.b16 %v3570
    %v3839 = vunpack.c.l.b16 %v3571
    %v3840 = vunpack.c.h.b16 %v3571
    %v3841 = vunpack.c.l.b16 %v3572
    %v3842 = vunpack.c.h.b16 %v3572
    %v3843 = vunpack.c.l.b16 %v3573
    %v3844 = vunpack.c.h.b16 %v3573
    %v3845 = vunpack.c.l.b16 %v3574
    %v3846 = vunpack.c.h.b16 %v3574
    %v3847 = vunpack.c.l.b16 %v3575
    %v3848 = vunpack.c.h.b16 %v3575
    %v3849 = vunpack.c.l.b16 %v3576
    %v3850 = vunpack.c.h.b16 %v3576
    %v3851 = vunpack.c.l.b16 %v3577
    %v3852 = vunpack.c.h.b16 %v3577
    %v3853 = vunpack.c.l.b16 %v3578
    %v3854 = vunpack.c.h.b16 %v3578
    %v3855 = vunpack.c.l.b16 %v3579
    %v3856 = vunpack.c.h.b16 %v3579
    %v3857 = vunpack.c.l.b16 %v3580
    %v3858 = vunpack.c.h.b16 %v3580
    %v3859 = vunpack.c.l.b16 %v3581
    %v3860 = vunpack.c.h.b16 %v3581
    %v3861 = vunpack.c.l.b16 %v3582
    %v3862 = vunpack.c.h.b16 %v3582
    %v3863 = vunpack.c.l.b16 %v3583
    %v3864 = vunpack.c.h.b16 %v3583
    %v3865 = vunpack.c.l.b16 %v3584
    %v3866 = vunpack.c.h.b16 %v3584
    %v3867 = vunpack.c.l.b16 %v3585
    %v3868 = vunpack.c.h.b16 %v3585
    %v3869 = vunpack.c.l.b16 %v3586
    %v3870 = vunpack.c.h.b16 %v3586
    %v3871 = vunpack.c.l.b16 %v3587
    %v3872 = vunpack.c.h.b16 %v3587
    %v3873 = vunpack.c.l.b16 %v3588
    %v3874 = vunpack.c.h.b16 %v3588
    %v3875 = vunpack.c.l.b16 %v3589
    %v3876 = vunpack.c.h.b16 %v3589
    %v3877 = vunpack.c.l.b16 %v3590
    %v3878 = vunpack.c.h.b16 %v3590
    %v3879 = vunpack.c.l.b16 %v3591
    %v3880 = vunpack.c.h.b16 %v3591
    %v3881 = vunpack.c.l.b16 %v3592
    %v3882 = vunpack.c.h.b16 %v3592
    %v3883 = vunpack.c.l.b16 %v3593
    %v3884 = vunpack.c.h.b16 %v3593
    %v3885 = vunpack.c.l.b16 %v3594
    %v3886 = vunpack.c.h.b16 %v3594
    %v3887 = vunpack.c.l.b16 %v3595
    %v3888 = vunpack.c.h.b16 %v3595
    %v3889 = vunpack.c.l.b16 %v3596
    %v3890 = vunpack.c.h.b16 %v3596
    %v3891 = vpack.c.b16 %v3783, %v3779
    %v3892 = vpack.c.b16 %v3784, %v3780
    %v3893 = vpack.c.b16 %v3785, %v3781
    %v3894 = vpack.c.b16 %v3786, %v3782
    %v3895 = vpack.c.b16 %v3791, %v3787
    %v3896 = vpack.c.b16 %v3792, %v3788
    %v3897 = vpack.c.b16 %v3793, %v3789
    %v3898 = vpack.c.b16 %v3794, %v3790
    %v3899 = vpack.c.b16 %v3799, %v3795
    %v3900 = vpack.c.b16 %v3800, %v3796
    %v3901 = vpack.c.b16 %v3801, %v3797
    %v3902 = vpack.c.b16 %v3802, %v3798
    %v3903 = vpack.c.b16 %v3807, %v3803
    %v3904 = vpack.c.b16 %v3808, %v3804
    %v3905 = vpack.c.b16 %v3809, %v3805
    %v3906 = vpack.c.b16 %v3810, %v3806
    %v3907 = vpack.c.b16 %v3815, %v3811
    %v3908 = vpack.c.b16 %v3816, %v3812
    %v3909 = vpack.c.b16 %v3817, %v3813
    %v3910 = vpack.c.b16 %v3818, %v3814
    %v3911 = vpack.c.b16 %v3823, %v3819
    %v3912 = vpack.c.b16 %v3824, %v3820
    %v3913 = vpack.c.b16 %v3825, %v3821
    %v3914 = vpack.c.b16 %v3826, %v3822
    %v3915 = vpack.c.b16 %v3831, %v3827
    %v3916 = vpack.c.b16 %v3832, %v3828
    %v3917 = vpack.c.b16 %v3833, %v3829
    %v3918 = vpack.c.b16 %v3834, %v3830
    %v3919 = vpack.c.b16 %v3839, %v3835
    %v3920 = vpack.c.b16 %v3840, %v3836
    %v3921 = vpack.c.b16 %v3841, %v3837
    %v3922 = vpack.c.b16 %v3842, %v3838
    %v3923 = vpack.c.b16 %v3847, %v3843
    %v3924 = vpack.c.b16 %v3848, %v3844
    %v3925 = vpack.c.b16 %v3849, %v3845
    %v3926 = vpack.c.b16 %v3850, %v3846
    %v3927 = vpack.c.b16 %v3855, %v3851
    %v3928 = vpack.c.b16 %v3856, %v3852
    %v3929 = vpack.c.b16 %v3857, %v3853
    %v3930 = vpack.c.b16 %v3858, %v3854
    %v3931 = vpack.c.b16 %v3863, %v3859
    %v3932 = vpack.c.b16 %v3864, %v3860
    %v3933 = vpack.c.b16 %v3865, %v3861
    %v3934 = vpack.c.b16 %v3866, %v3862
    %v3935 = vpack.c.b16 %v3871, %v3867
    %v3936 = vpack.c.b16 %v3872, %v3868
    %v3937 = vpack.c.b16 %v3873, %v3869
    %v3938 = vpack.c.b16 %v3874, %v3870
    %v3939 = vpack.c.b16 %v3879, %v3875
    %v3940 = vpack.c.b16 %v3880, %v3876
    %v3941 = vpack.c.b16 %v3881, %v3877
    %v3942 = vpack.c.b16 %v3882, %v3878
    %v3943 = vpack.c.b16 %v3887, %v3883
    %v3944 = vpack.c.b16 %v3888, %v3884
    %v3945 = vpack.c.b16 %v3889, %v3885
    %v3946 = vpack.c.b16 %v3890, %v3886
    %v4004 = vsel %vm719, %v3682, 0
    %v4007 = vsel %vm719, %v3684, 0
    %v4010 = vsel %vm719, %v3686, 0
    %v4013 = vsel %vm719, %v3688, 0
    %v4016 = vsel %vm719, %v3690, 0
    %v4019 = vsel %vm719, %v3692, 0
    %v4022 = vsel %vm719, %v3694, 0
    %v4025 = vsel %vm719, %v3696, 0
    %v4028 = vsel %vm719, %v3698, 0
    %v4031 = vsel %vm719, %v3700, 0
    %v4034 = vsel %vm719, %v3702, 0
    %v4037 = vsel %vm719, %v3704, 0
    %v4040 = vsel %vm719, %v3706, 0
    %v4043 = vsel %vm719, %v3708, 0
    %4045 = vmatpush.bf16.msra.mxu0 %v3919
    %4046 = vmatpush.bf16.msra.mxu0 %v3915
    %4047 = vmatpush.bf16.msra.mxu0 %v3911
    %4048 = vmatpush.bf16.msra.mxu0 %v3907
    %4049 = vmatpush.bf16.msra.mxu0 %v3903
    %4050 = vmatpush.bf16.msra.mxu0 %v3899
    %4051 = vmatpush.bf16.msra.mxu0 %v3895
    %4052 = vmatpush.bf16.msra.mxu0 %v3891
    %4053 = vmatmul.bf16.gmra.mxu0 %v3681
    %v4054 = vpop.f32.mrf.mxu0
    %v4055 = vadd.f32 0.0, %v4054
    %v4056 = vpop.f32.mrf.mxu0
    %v4057 = vadd.f32 0.0, %v4056
    %4058 = vmatmul.bf16.gmra.mxu0 %v3683
    %v4059 = vpop.f32.mrf.mxu0
    %v4060 = vadd.f32 0.0, %v4059
    %v4061 = vpop.f32.mrf.mxu0
    %v4062 = vadd.f32 0.0, %v4061
    %4063 = vmatmul.bf16.gmra.mxu0 %v3685
    %v4064 = vpop.f32.mrf.mxu0
    %v4065 = vadd.f32 0.0, %v4064
    %v4066 = vpop.f32.mrf.mxu0
    %v4067 = vadd.f32 0.0, %v4066
    %4068 = vmatmul.bf16.gmra.mxu0 %v3687
    %v4069 = vpop.f32.mrf.mxu0
    %v4070 = vadd.f32 0.0, %v4069
    %v4071 = vpop.f32.mrf.mxu0
    %v4072 = vadd.f32 0.0, %v4071
    %4073 = vmatmul.bf16.gmra.mxu0 %v3689
    %v4074 = vpop.f32.mrf.mxu0
    %v4075 = vadd.f32 0.0, %v4074
    %v4076 = vpop.f32.mrf.mxu0
    %v4077 = vadd.f32 0.0, %v4076
    %4078 = vmatmul.bf16.gmra.mxu0 %v3691
    %v4079 = vpop.f32.mrf.mxu0
    %v4080 = vadd.f32 0.0, %v4079
    %v4081 = vpop.f32.mrf.mxu0
    %v4082 = vadd.f32 0.0, %v4081
    %4083 = vmatmul.bf16.gmra.mxu0 %v3693
    %v4084 = vpop.f32.mrf.mxu0
    %v4085 = vadd.f32 0.0, %v4084
    %v4086 = vpop.f32.mrf.mxu0
    %v4087 = vadd.f32 0.0, %v4086
    %4088 = vmatmul.bf16.gmra.mxu0 %v3695
    %v4089 = vpop.f32.mrf.mxu0
    %v4090 = vadd.f32 0.0, %v4089
    %v4091 = vpop.f32.mrf.mxu0
    %v4092 = vadd.f32 0.0, %v4091
    %4093 = vmatmul.bf16.gmra.mxu0 %v3697
    %v4094 = vpop.f32.mrf.mxu0
    %v4095 = vadd.f32 0.0, %v4094
    %v4096 = vpop.f32.mrf.mxu0
    %v4097 = vadd.f32 0.0, %v4096
    %4098 = vmatmul.bf16.gmra.mxu0 %v3699
    %v4099 = vpop.f32.mrf.mxu0
    %v4100 = vadd.f32 0.0, %v4099
    %v4101 = vpop.f32.mrf.mxu0
    %v4102 = vadd.f32 0.0, %v4101
    %4103 = vmatmul.bf16.gmra.mxu0 %v3701
    %v4104 = vpop.f32.mrf.mxu0
    %v4105 = vadd.f32 0.0, %v4104
    %v4106 = vpop.f32.mrf.mxu0
    %v4107 = vadd.f32 0.0, %v4106
    %4108 = vmatmul.bf16.gmra.mxu0 %v3703
    %v4109 = vpop.f32.mrf.mxu0
    %v4110 = vadd.f32 0.0, %v4109
    %v4111 = vpop.f32.mrf.mxu0
    %v4112 = vadd.f32 0.0, %v4111
    %4113 = vmatmul.bf16.gmra.mxu0 %v3705
    %v4114 = vpop.f32.mrf.mxu0
    %v4115 = vadd.f32 0.0, %v4114
    %v4116 = vpop.f32.mrf.mxu0
    %v4117 = vadd.f32 0.0, %v4116
    %4118 = vmatmul.bf16.gmra.mxu0 %v3707
    %v4119 = vpop.f32.mrf.mxu0
    %v4120 = vadd.f32 0.0, %v4119
    %v4121 = vpop.f32.mrf.mxu0
    %v4122 = vadd.f32 0.0, %v4121
    %4123 = vdwg.mxu0
    %4124 = vmatpush.bf16.msra.mxu0 0
    %4125 = vmatpush.bf16.msra.mxu0 0
    %4126 = vmatpush.bf16.msra.mxu0 %v3943
    %4127 = vmatpush.bf16.msra.mxu0 %v3939
    %4128 = vmatpush.bf16.msra.mxu0 %v3935
    %4129 = vmatpush.bf16.msra.mxu0 %v3931
    %4130 = vmatpush.bf16.msra.mxu0 %v3927
    %4131 = vmatpush.bf16.msra.mxu0 %v3923
    %4132 = vmatmul.bf16.gmra.mxu0 %v4004
    %v4133 = vpop.f32.mrf.mxu0
    %v4134 = vadd.f32 %v4055, %v4133
    %v4135 = vpop.f32.mrf.mxu0
    %v4136 = vadd.f32 %v4057, %v4135
    %4137 = vmatmul.bf16.gmra.mxu0 %v4007
    %v4138 = vpop.f32.mrf.mxu0
    %v4139 = vadd.f32 %v4060, %v4138
    %v4140 = vpop.f32.mrf.mxu0
    %v4141 = vadd.f32 %v4062, %v4140
    %4142 = vmatmul.bf16.gmra.mxu0 %v4010
    %v4143 = vpop.f32.mrf.mxu0
    %v4144 = vadd.f32 %v4065, %v4143
    %v4145 = vpop.f32.mrf.mxu0
    %v4146 = vadd.f32 %v4067, %v4145
    %4147 = vmatmul.bf16.gmra.mxu0 %v4013
    %v4148 = vpop.f32.mrf.mxu0
    %v4149 = vadd.f32 %v4070, %v4148
    %v4150 = vpop.f32.mrf.mxu0
    %v4151 = vadd.f32 %v4072, %v4150
    %4152 = vmatmul.bf16.gmra.mxu0 %v4016
    %v4153 = vpop.f32.mrf.mxu0
    %v4154 = vadd.f32 %v4075, %v4153
    %v4155 = vpop.f32.mrf.mxu0
    %v4156 = vadd.f32 %v4077, %v4155
    %4157 = vmatmul.bf16.gmra.mxu0 %v4019
    %v4158 = vpop.f32.mrf.mxu0
    %v4159 = vadd.f32 %v4080, %v4158
    %v4160 = vpop.f32.mrf.mxu0
    %v4161 = vadd.f32 %v4082, %v4160
    %4162 = vmatmul.bf16.gmra.mxu0 %v4022
    %v4163 = vpop.f32.mrf.mxu0
    %v4164 = vadd.f32 %v4085, %v4163
    %v4165 = vpop.f32.mrf.mxu0
    %v4166 = vadd.f32 %v4087, %v4165
    %4167 = vmatmul.bf16.gmra.mxu0 %v4025
    %v4168 = vpop.f32.mrf.mxu0
    %v4169 = vadd.f32 %v4090, %v4168
    %v4170 = vpop.f32.mrf.mxu0
    %v4171 = vadd.f32 %v4092, %v4170
    %4172 = vmatmul.bf16.gmra.mxu0 %v4028
    %v4173 = vpop.f32.mrf.mxu0
    %v4174 = vadd.f32 %v4095, %v4173
    %v4175 = vpop.f32.mrf.mxu0
    %v4176 = vadd.f32 %v4097, %v4175
    %4177 = vmatmul.bf16.gmra.mxu0 %v4031
    %v4178 = vpop.f32.mrf.mxu0
    %v4179 = vadd.f32 %v4100, %v4178
    %v4180 = vpop.f32.mrf.mxu0
    %v4181 = vadd.f32 %v4102, %v4180
    %4182 = vmatmul.bf16.gmra.mxu0 %v4034
    %v4183 = vpop.f32.mrf.mxu0
    %v4184 = vadd.f32 %v4105, %v4183
    %v4185 = vpop.f32.mrf.mxu0
    %v4186 = vadd.f32 %v4107, %v4185
    %4187 = vmatmul.bf16.gmra.mxu0 %v4037
    %v4188 = vpop.f32.mrf.mxu0
    %v4189 = vadd.f32 %v4110, %v4188
    %v4190 = vpop.f32.mrf.mxu0
    %v4191 = vadd.f32 %v4112, %v4190
    %4192 = vmatmul.bf16.gmra.mxu0 %v4040
    %v4193 = vpop.f32.mrf.mxu0
    %v4194 = vadd.f32 %v4115, %v4193
    %v4195 = vpop.f32.mrf.mxu0
    %v4196 = vadd.f32 %v4117, %v4195
    %4197 = vmatmul.bf16.gmra.mxu0 %v4043
    %v4198 = vpop.f32.mrf.mxu0
    %v4199 = vadd.f32 %v4120, %v4198
    %v4200 = vpop.f32.mrf.mxu0
    %v4201 = vadd.f32 %v4122, %v4200
    %4202 = vdwg.mxu0
    %4203 = vmatpush.bf16.msra.mxu0 %v3920
    %4204 = vmatpush.bf16.msra.mxu0 %v3916
    %4205 = vmatpush.bf16.msra.mxu0 %v3912
    %4206 = vmatpush.bf16.msra.mxu0 %v3908
    %4207 = vmatpush.bf16.msra.mxu0 %v3904
    %4208 = vmatpush.bf16.msra.mxu0 %v3900
    %4209 = vmatpush.bf16.msra.mxu0 %v3896
    %4210 = vmatpush.bf16.msra.mxu0 %v3892
    %4211 = vmatmul.bf16.gmra.mxu0 %v3681
    %v4212 = vpop.f32.mrf.mxu0
    %v4213 = vadd.f32 0.0, %v4212
    %v4214 = vpop.f32.mrf.mxu0
    %v4215 = vadd.f32 0.0, %v4214
    %4216 = vmatmul.bf16.gmra.mxu0 %v3683
    %v4217 = vpop.f32.mrf.mxu0
    %v4218 = vadd.f32 0.0, %v4217
    %v4219 = vpop.f32.mrf.mxu0
    %v4220 = vadd.f32 0.0, %v4219
    %4221 = vmatmul.bf16.gmra.mxu0 %v3685
    %v4222 = vpop.f32.mrf.mxu0
    %v4223 = vadd.f32 0.0, %v4222
    %v4224 = vpop.f32.mrf.mxu0
    %v4225 = vadd.f32 0.0, %v4224
    %4226 = vmatmul.bf16.gmra.mxu0 %v3687
    %v4227 = vpop.f32.mrf.mxu0
    %v4228 = vadd.f32 0.0, %v4227
    %v4229 = vpop.f32.mrf.mxu0
    %v4230 = vadd.f32 0.0, %v4229
    %4231 = vmatmul.bf16.gmra.mxu0 %v3689
    %v4232 = vpop.f32.mrf.mxu0
    %v4233 = vadd.f32 0.0, %v4232
    %v4234 = vpop.f32.mrf.mxu0
    %v4235 = vadd.f32 0.0, %v4234
    %4236 = vmatmul.bf16.gmra.mxu0 %v3691
    %v4237 = vpop.f32.mrf.mxu0
    %v4238 = vadd.f32 0.0, %v4237
    %v4239 = vpop.f32.mrf.mxu0
    %v4240 = vadd.f32 0.0, %v4239
    %4241 = vmatmul.bf16.gmra.mxu0 %v3693
    %v4242 = vpop.f32.mrf.mxu0
    %v4243 = vadd.f32 0.0, %v4242
    %v4244 = vpop.f32.mrf.mxu0
    %v4245 = vadd.f32 0.0, %v4244
    %4246 = vmatmul.bf16.gmra.mxu0 %v3695
    %v4247 = vpop.f32.mrf.mxu0
    %v4248 = vadd.f32 0.0, %v4247
    %v4249 = vpop.f32.mrf.mxu0
    %v4250 = vadd.f32 0.0, %v4249
    %4251 = vmatmul.bf16.gmra.mxu0 %v3697
    %v4252 = vpop.f32.mrf.mxu0
    %v4253 = vadd.f32 0.0, %v4252
    %v4254 = vpop.f32.mrf.mxu0
    %v4255 = vadd.f32 0.0, %v4254
    %4256 = vmatmul.bf16.gmra.mxu0 %v3699
    %v4257 = vpop.f32.mrf.mxu0
    %v4258 = vadd.f32 0.0, %v4257
    %v4259 = vpop.f32.mrf.mxu0
    %v4260 = vadd.f32 0.0, %v4259
    %4261 = vmatmul.bf16.gmra.mxu0 %v3701
    %v4262 = vpop.f32.mrf.mxu0
    %v4263 = vadd.f32 0.0, %v4262
    %v4264 = vpop.f32.mrf.mxu0
    %v4265 = vadd.f32 0.0, %v4264
    %4266 = vmatmul.bf16.gmra.mxu0 %v3703
    %v4267 = vpop.f32.mrf.mxu0
    %v4268 = vadd.f32 0.0, %v4267
    %v4269 = vpop.f32.mrf.mxu0
    %v4270 = vadd.f32 0.0, %v4269
    %4271 = vmatmul.bf16.gmra.mxu0 %v3705
    %v4272 = vpop.f32.mrf.mxu0
    %v4273 = vadd.f32 0.0, %v4272
    %v4274 = vpop.f32.mrf.mxu0
    %v4275 = vadd.f32 0.0, %v4274
    %4276 = vmatmul.bf16.gmra.mxu0 %v3707
    %v4277 = vpop.f32.mrf.mxu0
    %v4278 = vadd.f32 0.0, %v4277
    %v4279 = vpop.f32.mrf.mxu0
    %v4280 = vadd.f32 0.0, %v4279
    %4281 = vdwg.mxu0
    %4282 = vmatpush.bf16.msra.mxu0 0
    %4283 = vmatpush.bf16.msra.mxu0 0
    %4284 = vmatpush.bf16.msra.mxu0 %v3944
    %4285 = vmatpush.bf16.msra.mxu0 %v3940
    %4286 = vmatpush.bf16.msra.mxu0 %v3936
    %4287 = vmatpush.bf16.msra.mxu0 %v3932
    %4288 = vmatpush.bf16.msra.mxu0 %v3928
    %4289 = vmatpush.bf16.msra.mxu0 %v3924
    %4290 = vmatmul.bf16.gmra.mxu0 %v4004
    %v4291 = vpop.f32.mrf.mxu0
    %v4292 = vadd.f32 %v4213, %v4291
    %v4293 = vpop.f32.mrf.mxu0
    %v4294 = vadd.f32 %v4215, %v4293
    %4295 = vmatmul.bf16.gmra.mxu0 %v4007
    %v4296 = vpop.f32.mrf.mxu0
    %v4297 = vadd.f32 %v4218, %v4296
    %v4298 = vpop.f32.mrf.mxu0
    %v4299 = vadd.f32 %v4220, %v4298
    %4300 = vmatmul.bf16.gmra.mxu0 %v4010
    %v4301 = vpop.f32.mrf.mxu0
    %v4302 = vadd.f32 %v4223, %v4301
    %v4303 = vpop.f32.mrf.mxu0
    %v4304 = vadd.f32 %v4225, %v4303
    %4305 = vmatmul.bf16.gmra.mxu0 %v4013
    %v4306 = vpop.f32.mrf.mxu0
    %v4307 = vadd.f32 %v4228, %v4306
    %v4308 = vpop.f32.mrf.mxu0
    %v4309 = vadd.f32 %v4230, %v4308
    %4310 = vmatmul.bf16.gmra.mxu0 %v4016
    %v4311 = vpop.f32.mrf.mxu0
    %v4312 = vadd.f32 %v4233, %v4311
    %v4313 = vpop.f32.mrf.mxu0
    %v4314 = vadd.f32 %v4235, %v4313
    %4315 = vmatmul.bf16.gmra.mxu0 %v4019
    %v4316 = vpop.f32.mrf.mxu0
    %v4317 = vadd.f32 %v4238, %v4316
    %v4318 = vpop.f32.mrf.mxu0
    %v4319 = vadd.f32 %v4240, %v4318
    %4320 = vmatmul.bf16.gmra.mxu0 %v4022
    %v4321 = vpop.f32.mrf.mxu0
    %v4322 = vadd.f32 %v4243, %v4321
    %v4323 = vpop.f32.mrf.mxu0
    %v4324 = vadd.f32 %v4245, %v4323
    %4325 = vmatmul.bf16.gmra.mxu0 %v4025
    %v4326 = vpop.f32.mrf.mxu0
    %v4327 = vadd.f32 %v4248, %v4326
    %v4328 = vpop.f32.mrf.mxu0
    %v4329 = vadd.f32 %v4250, %v4328
    %4330 = vmatmul.bf16.gmra.mxu0 %v4028
    %v4331 = vpop.f32.mrf.mxu0
    %v4332 = vadd.f32 %v4253, %v4331
    %v4333 = vpop.f32.mrf.mxu0
    %v4334 = vadd.f32 %v4255, %v4333
    %4335 = vmatmul.bf16.gmra.mxu0 %v4031
    %v4336 = vpop.f32.mrf.mxu0
    %v4337 = vadd.f32 %v4258, %v4336
    %v4338 = vpop.f32.mrf.mxu0
    %v4339 = vadd.f32 %v4260, %v4338
    %4340 = vmatmul.bf16.gmra.mxu0 %v4034
    %v4341 = vpop.f32.mrf.mxu0
    %v4342 = vadd.f32 %v4263, %v4341
    %v4343 = vpop.f32.mrf.mxu0
    %v4344 = vadd.f32 %v4265, %v4343
    %4345 = vmatmul.bf16.gmra.mxu0 %v4037
    %v4346 = vpop.f32.mrf.mxu0
    %v4347 = vadd.f32 %v4268, %v4346
    %v4348 = vpop.f32.mrf.mxu0
    %v4349 = vadd.f32 %v4270, %v4348
    %4350 = vmatmul.bf16.gmra.mxu0 %v4040
    %v4351 = vpop.f32.mrf.mxu0
    %v4352 = vadd.f32 %v4273, %v4351
    %v4353 = vpop.f32.mrf.mxu0
    %v4354 = vadd.f32 %v4275, %v4353
    %4355 = vmatmul.bf16.gmra.mxu0 %v4043
    %v4356 = vpop.f32.mrf.mxu0
    %v4357 = vadd.f32 %v4278, %v4356
    %v4358 = vpop.f32.mrf.mxu0
    %v4359 = vadd.f32 %v4280, %v4358
    %4360 = vdwg.mxu0
    %4361 = vmatpush.bf16.msra.mxu0 %v3921
    %4362 = vmatpush.bf16.msra.mxu0 %v3917
    %4363 = vmatpush.bf16.msra.mxu0 %v3913
    %4364 = vmatpush.bf16.msra.mxu0 %v3909
    %4365 = vmatpush.bf16.msra.mxu0 %v3905
    %4366 = vmatpush.bf16.msra.mxu0 %v3901
    %4367 = vmatpush.bf16.msra.mxu0 %v3897
    %4368 = vmatpush.bf16.msra.mxu0 %v3893
    %4369 = vmatmul.bf16.gmra.mxu0 %v3681
    %v4370 = vpop.f32.mrf.mxu0
    %v4371 = vadd.f32 0.0, %v4370
    %v4372 = vpop.f32.mrf.mxu0
    %v4373 = vadd.f32 0.0, %v4372
    %4374 = vmatmul.bf16.gmra.mxu0 %v3683
    %v4375 = vpop.f32.mrf.mxu0
    %v4376 = vadd.f32 0.0, %v4375
    %v4377 = vpop.f32.mrf.mxu0
    %v4378 = vadd.f32 0.0, %v4377
    %4379 = vmatmul.bf16.gmra.mxu0 %v3685
    %v4380 = vpop.f32.mrf.mxu0
    %v4381 = vadd.f32 0.0, %v4380
    %v4382 = vpop.f32.mrf.mxu0
    %v4383 = vadd.f32 0.0, %v4382
    %4384 = vmatmul.bf16.gmra.mxu0 %v3687
    %v4385 = vpop.f32.mrf.mxu0
    %v4386 = vadd.f32 0.0, %v4385
    %v4387 = vpop.f32.mrf.mxu0
    %v4388 = vadd.f32 0.0, %v4387
    %4389 = vmatmul.bf16.gmra.mxu0 %v3689
    %v4390 = vpop.f32.mrf.mxu0
    %v4391 = vadd.f32 0.0, %v4390
    %v4392 = vpop.f32.mrf.mxu0
    %v4393 = vadd.f32 0.0, %v4392
    %4394 = vmatmul.bf16.gmra.mxu0 %v3691
    %v4395 = vpop.f32.mrf.mxu0
    %v4396 = vadd.f32 0.0, %v4395
    %v4397 = vpop.f32.mrf.mxu0
    %v4398 = vadd.f32 0.0, %v4397
    %4399 = vmatmul.bf16.gmra.mxu0 %v3693
    %v4400 = vpop.f32.mrf.mxu0
    %v4401 = vadd.f32 0.0, %v4400
    %v4402 = vpop.f32.mrf.mxu0
    %v4403 = vadd.f32 0.0, %v4402
    %4404 = vmatmul.bf16.gmra.mxu0 %v3695
    %v4405 = vpop.f32.mrf.mxu0
    %v4406 = vadd.f32 0.0, %v4405
    %v4407 = vpop.f32.mrf.mxu0
    %v4408 = vadd.f32 0.0, %v4407
    %4409 = vmatmul.bf16.gmra.mxu0 %v3697
    %v4410 = vpop.f32.mrf.mxu0
    %v4411 = vadd.f32 0.0, %v4410
    %v4412 = vpop.f32.mrf.mxu0
    %v4413 = vadd.f32 0.0, %v4412
    %4414 = vmatmul.bf16.gmra.mxu0 %v3699
    %v4415 = vpop.f32.mrf.mxu0
    %v4416 = vadd.f32 0.0, %v4415
    %v4417 = vpop.f32.mrf.mxu0
    %v4418 = vadd.f32 0.0, %v4417
    %4419 = vmatmul.bf16.gmra.mxu0 %v3701
    %v4420 = vpop.f32.mrf.mxu0
    %v4421 = vadd.f32 0.0, %v4420
    %v4422 = vpop.f32.mrf.mxu0
    %v4423 = vadd.f32 0.0, %v4422
    %4424 = vmatmul.bf16.gmra.mxu0 %v3703
    %v4425 = vpop.f32.mrf.mxu0
    %v4426 = vadd.f32 0.0, %v4425
    %v4427 = vpop.f32.mrf.mxu0
    %v4428 = vadd.f32 0.0, %v4427
    %4429 = vmatmul.bf16.gmra.mxu0 %v3705
    %v4430 = vpop.f32.mrf.mxu0
    %v4431 = vadd.f32 0.0, %v4430
    %v4432 = vpop.f32.mrf.mxu0
    %v4433 = vadd.f32 0.0, %v4432
    %4434 = vmatmul.bf16.gmra.mxu0 %v3707
    %v4435 = vpop.f32.mrf.mxu0
    %v4436 = vadd.f32 0.0, %v4435
    %v4437 = vpop.f32.mrf.mxu0
    %v4438 = vadd.f32 0.0, %v4437
    %4439 = vdwg.mxu0
    %4440 = vmatpush.bf16.msra.mxu0 0
    %4441 = vmatpush.bf16.msra.mxu0 0
    %4442 = vmatpush.bf16.msra.mxu0 %v3945
    %4443 = vmatpush.bf16.msra.mxu0 %v3941
    %4444 = vmatpush.bf16.msra.mxu0 %v3937
    %4445 = vmatpush.bf16.msra.mxu0 %v3933
    %4446 = vmatpush.bf16.msra.mxu0 %v3929
    %4447 = vmatpush.bf16.msra.mxu0 %v3925
    %4448 = vmatmul.bf16.gmra.mxu0 %v4004
    %v4449 = vpop.f32.mrf.mxu0
    %v4450 = vadd.f32 %v4371, %v4449
    %v4451 = vpop.f32.mrf.mxu0
    %v4452 = vadd.f32 %v4373, %v4451
    %4453 = vmatmul.bf16.gmra.mxu0 %v4007
    %v4454 = vpop.f32.mrf.mxu0
    %v4455 = vadd.f32 %v4376, %v4454
    %v4456 = vpop.f32.mrf.mxu0
    %v4457 = vadd.f32 %v4378, %v4456
    %4458 = vmatmul.bf16.gmra.mxu0 %v4010
    %v4459 = vpop.f32.mrf.mxu0
    %v4460 = vadd.f32 %v4381, %v4459
    %v4461 = vpop.f32.mrf.mxu0
    %v4462 = vadd.f32 %v4383, %v4461
    %4463 = vmatmul.bf16.gmra.mxu0 %v4013
    %v4464 = vpop.f32.mrf.mxu0
    %v4465 = vadd.f32 %v4386, %v4464
    %v4466 = vpop.f32.mrf.mxu0
    %v4467 = vadd.f32 %v4388, %v4466
    %4468 = vmatmul.bf16.gmra.mxu0 %v4016
    %v4469 = vpop.f32.mrf.mxu0
    %v4470 = vadd.f32 %v4391, %v4469
    %v4471 = vpop.f32.mrf.mxu0
    %v4472 = vadd.f32 %v4393, %v4471
    %4473 = vmatmul.bf16.gmra.mxu0 %v4019
    %v4474 = vpop.f32.mrf.mxu0
    %v4475 = vadd.f32 %v4396, %v4474
    %v4476 = vpop.f32.mrf.mxu0
    %v4477 = vadd.f32 %v4398, %v4476
    %4478 = vmatmul.bf16.gmra.mxu0 %v4022
    %v4479 = vpop.f32.mrf.mxu0
    %v4480 = vadd.f32 %v4401, %v4479
    %v4481 = vpop.f32.mrf.mxu0
    %v4482 = vadd.f32 %v4403, %v4481
    %4483 = vmatmul.bf16.gmra.mxu0 %v4025
    %v4484 = vpop.f32.mrf.mxu0
    %v4485 = vadd.f32 %v4406, %v4484
    %v4486 = vpop.f32.mrf.mxu0
    %v4487 = vadd.f32 %v4408, %v4486
    %4488 = vmatmul.bf16.gmra.mxu0 %v4028
    %v4489 = vpop.f32.mrf.mxu0
    %v4490 = vadd.f32 %v4411, %v4489
    %v4491 = vpop.f32.mrf.mxu0
    %v4492 = vadd.f32 %v4413, %v4491
    %4493 = vmatmul.bf16.gmra.mxu0 %v4031
    %v4494 = vpop.f32.mrf.mxu0
    %v4495 = vadd.f32 %v4416, %v4494
    %v4496 = vpop.f32.mrf.mxu0
    %v4497 = vadd.f32 %v4418, %v4496
    %4498 = vmatmul.bf16.gmra.mxu0 %v4034
    %v4499 = vpop.f32.mrf.mxu0
    %v4500 = vadd.f32 %v4421, %v4499
    %v4501 = vpop.f32.mrf.mxu0
    %v4502 = vadd.f32 %v4423, %v4501
    %4503 = vmatmul.bf16.gmra.mxu0 %v4037
    %v4504 = vpop.f32.mrf.mxu0
    %v4505 = vadd.f32 %v4426, %v4504
    %v4506 = vpop.f32.mrf.mxu0
    %v4507 = vadd.f32 %v4428, %v4506
    %4508 = vmatmul.bf16.gmra.mxu0 %v4040
    %v4509 = vpop.f32.mrf.mxu0
    %v4510 = vadd.f32 %v4431, %v4509
    %v4511 = vpop.f32.mrf.mxu0
    %v4512 = vadd.f32 %v4433, %v4511
    %4513 = vmatmul.bf16.gmra.mxu0 %v4043
    %v4514 = vpop.f32.mrf.mxu0
    %v4515 = vadd.f32 %v4436, %v4514
    %v4516 = vpop.f32.mrf.mxu0
    %v4517 = vadd.f32 %v4438, %v4516
    %4518 = vdwg.mxu0
    %4519 = vmatpush.bf16.msra.mxu0 %v3922
    %4520 = vmatpush.bf16.msra.mxu0 %v3918
    %4521 = vmatpush.bf16.msra.mxu0 %v3914
    %4522 = vmatpush.bf16.msra.mxu0 %v3910
    %4523 = vmatpush.bf16.msra.mxu0 %v3906
    %4524 = vmatpush.bf16.msra.mxu0 %v3902
    %4525 = vmatpush.bf16.msra.mxu0 %v3898
    %4526 = vmatpush.bf16.msra.mxu0 %v3894
    %4527 = vmatmul.bf16.gmra.mxu0 %v3681
    %v4528 = vpop.f32.mrf.mxu0
    %v4529 = vadd.f32 0.0, %v4528
    %v4530 = vpop.f32.mrf.mxu0
    %v4531 = vadd.f32 0.0, %v4530
    %4532 = vmatmul.bf16.gmra.mxu0 %v3683
    %v4533 = vpop.f32.mrf.mxu0
    %v4534 = vadd.f32 0.0, %v4533
    %v4535 = vpop.f32.mrf.mxu0
    %v4536 = vadd.f32 0.0, %v4535
    %4537 = vmatmul.bf16.gmra.mxu0 %v3685
    %v4538 = vpop.f32.mrf.mxu0
    %v4539 = vadd.f32 0.0, %v4538
    %v4540 = vpop.f32.mrf.mxu0
    %v4541 = vadd.f32 0.0, %v4540
    %4542 = vmatmul.bf16.gmra.mxu0 %v3687
    %v4543 = vpop.f32.mrf.mxu0
    %v4544 = vadd.f32 0.0, %v4543
    %v4545 = vpop.f32.mrf.mxu0
    %v4546 = vadd.f32 0.0, %v4545
    %4547 = vmatmul.bf16.gmra.mxu0 %v3689
    %v4548 = vpop.f32.mrf.mxu0
    %v4549 = vadd.f32 0.0, %v4548
    %v4550 = vpop.f32.mrf.mxu0
    %v4551 = vadd.f32 0.0, %v4550
    %4552 = vmatmul.bf16.gmra.mxu0 %v3691
    %v4553 = vpop.f32.mrf.mxu0
    %v4554 = vadd.f32 0.0, %v4553
    %v4555 = vpop.f32.mrf.mxu0
    %v4556 = vadd.f32 0.0, %v4555
    %4557 = vmatmul.bf16.gmra.mxu0 %v3693
    %v4558 = vpop.f32.mrf.mxu0
    %v4559 = vadd.f32 0.0, %v4558
    %v4560 = vpop.f32.mrf.mxu0
    %v4561 = vadd.f32 0.0, %v4560
    %4562 = vmatmul.bf16.gmra.mxu0 %v3695
    %v4563 = vpop.f32.mrf.mxu0
    %v4564 = vadd.f32 0.0, %v4563
    %v4565 = vpop.f32.mrf.mxu0
    %v4566 = vadd.f32 0.0, %v4565
    %4567 = vmatmul.bf16.gmra.mxu0 %v3697
    %v4568 = vpop.f32.mrf.mxu0
    %v4569 = vadd.f32 0.0, %v4568
    %v4570 = vpop.f32.mrf.mxu0
    %v4571 = vadd.f32 0.0, %v4570
    %4572 = vmatmul.bf16.gmra.mxu0 %v3699
    %v4573 = vpop.f32.mrf.mxu0
    %v4574 = vadd.f32 0.0, %v4573
    %v4575 = vpop.f32.mrf.mxu0
    %v4576 = vadd.f32 0.0, %v4575
    %4577 = vmatmul.bf16.gmra.mxu0 %v3701
    %v4578 = vpop.f32.mrf.mxu0
    %v4579 = vadd.f32 0.0, %v4578
    %v4580 = vpop.f32.mrf.mxu0
    %v4581 = vadd.f32 0.0, %v4580
    %4582 = vmatmul.bf16.gmra.mxu0 %v3703
    %v4583 = vpop.f32.mrf.mxu0
    %v4584 = vadd.f32 0.0, %v4583
    %v4585 = vpop.f32.mrf.mxu0
    %v4586 = vadd.f32 0.0, %v4585
    %4587 = vmatmul.bf16.gmra.mxu0 %v3705
    %v4588 = vpop.f32.mrf.mxu0
    %v4589 = vadd.f32 0.0, %v4588
    %v4590 = vpop.f32.mrf.mxu0
    %v4591 = vadd.f32 0.0, %v4590
    %4592 = vmatmul.bf16.gmra.mxu0 %v3707
    %v4593 = vpop.f32.mrf.mxu0
    %v4594 = vadd.f32 0.0, %v4593
    %v4595 = vpop.f32.mrf.mxu0
    %v4596 = vadd.f32 0.0, %v4595
    %4597 = vdwg.mxu0
    %4598 = vmatpush.bf16.msra.mxu0 0
    %4599 = vmatpush.bf16.msra.mxu0 0
    %4600 = vmatpush.bf16.msra.mxu0 %v3946
    %4601 = vmatpush.bf16.msra.mxu0 %v3942
    %4602 = vmatpush.bf16.msra.mxu0 %v3938
    %4603 = vmatpush.bf16.msra.mxu0 %v3934
    %4604 = vmatpush.bf16.msra.mxu0 %v3930
    %4605 = vmatpush.bf16.msra.mxu0 %v3926
    %4606 = vmatmul.bf16.gmra.mxu0 %v4004
    %v4607 = vpop.f32.mrf.mxu0
    %v4608 = vadd.f32 %v4529, %v4607
    %v4609 = vpop.f32.mrf.mxu0
    %v4610 = vadd.f32 %v4531, %v4609
    %4611 = vmatmul.bf16.gmra.mxu0 %v4007
    %v4612 = vpop.f32.mrf.mxu0
    %v4613 = vadd.f32 %v4534, %v4612
    %v4614 = vpop.f32.mrf.mxu0
    %v4615 = vadd.f32 %v4536, %v4614
    %4616 = vmatmul.bf16.gmra.mxu0 %v4010
    %v4617 = vpop.f32.mrf.mxu0
    %v4618 = vadd.f32 %v4539, %v4617
    %v4619 = vpop.f32.mrf.mxu0
    %v4620 = vadd.f32 %v4541, %v4619
    %4621 = vmatmul.bf16.gmra.mxu0 %v4013
    %v4622 = vpop.f32.mrf.mxu0
    %v4623 = vadd.f32 %v4544, %v4622
    %v4624 = vpop.f32.mrf.mxu0
    %v4625 = vadd.f32 %v4546, %v4624
    %4626 = vmatmul.bf16.gmra.mxu0 %v4016
    %v4627 = vpop.f32.mrf.mxu0
    %v4628 = vadd.f32 %v4549, %v4627
    %v4629 = vpop.f32.mrf.mxu0
    %v4630 = vadd.f32 %v4551, %v4629
    %4631 = vmatmul.bf16.gmra.mxu0 %v4019
    %v4632 = vpop.f32.mrf.mxu0
    %v4633 = vadd.f32 %v4554, %v4632
    %v4634 = vpop.f32.mrf.mxu0
    %v4635 = vadd.f32 %v4556, %v4634
    %4636 = vmatmul.bf16.gmra.mxu0 %v4022
    %v4637 = vpop.f32.mrf.mxu0
    %v4638 = vadd.f32 %v4559, %v4637
    %v4639 = vpop.f32.mrf.mxu0
    %v4640 = vadd.f32 %v4561, %v4639
    %4641 = vmatmul.bf16.gmra.mxu0 %v4025
    %v4642 = vpop.f32.mrf.mxu0
    %v4643 = vadd.f32 %v4564, %v4642
    %v4644 = vpop.f32.mrf.mxu0
    %v4645 = vadd.f32 %v4566, %v4644
    %4646 = vmatmul.bf16.gmra.mxu0 %v4028
    %v4647 = vpop.f32.mrf.mxu0
    %v4648 = vadd.f32 %v4569, %v4647
    %v4649 = vpop.f32.mrf.mxu0
    %v4650 = vadd.f32 %v4571, %v4649
    %4651 = vmatmul.bf16.gmra.mxu0 %v4031
    %v4652 = vpop.f32.mrf.mxu0
    %v4653 = vadd.f32 %v4574, %v4652
    %v4654 = vpop.f32.mrf.mxu0
    %v4655 = vadd.f32 %v4576, %v4654
    %4656 = vmatmul.bf16.gmra.mxu0 %v4034
    %v4657 = vpop.f32.mrf.mxu0
    %v4658 = vadd.f32 %v4579, %v4657
    %v4659 = vpop.f32.mrf.mxu0
    %v4660 = vadd.f32 %v4581, %v4659
    %4661 = vmatmul.bf16.gmra.mxu0 %v4037
    %v4662 = vpop.f32.mrf.mxu0
    %v4663 = vadd.f32 %v4584, %v4662
    %v4664 = vpop.f32.mrf.mxu0
    %v4665 = vadd.f32 %v4586, %v4664
    %4666 = vmatmul.bf16.gmra.mxu0 %v4040
    %v4667 = vpop.f32.mrf.mxu0
    %v4668 = vadd.f32 %v4589, %v4667
    %v4669 = vpop.f32.mrf.mxu0
    %v4670 = vadd.f32 %v4591, %v4669
    %4671 = vmatmul.bf16.gmra.mxu0 %v4043
    %v4672 = vpop.f32.mrf.mxu0
    %v4673 = vadd.f32 %v4594, %v4672
    %v4674 = vpop.f32.mrf.mxu0
    %v4675 = vadd.f32 %v4596, %v4674
    %4676 = vdwg.mxu0
    %4677 = vst [vmem:[#allocation2] sm:$0xff] %v4134
    %4678 = vst [vmem:[#allocation2 + $0x8] sm:$0xff] %v4292
    %4679 = vst [vmem:[#allocation2 + $0x10] sm:$0xff] %v4450
    %4680 = vst.msk [vmem:[#allocation2 + $0x18] sm:$0xff] %vm662, %v4608
    %4681 = vst [vmem:[#allocation2 + $0x20] sm:$0xff] %v4136
    %4682 = vst [vmem:[#allocation2 + $0x28] sm:$0xff] %v4294
    %4683 = vst [vmem:[#allocation2 + $0x30] sm:$0xff] %v4452
    %4684 = vst.msk [vmem:[#allocation2 + $0x38] sm:$0xff] %vm662, %v4610
    %4685 = vst [vmem:[#allocation2 + $0x40] sm:$0xff] %v4139
    %4686 = vst [vmem:[#allocation2 + $0x48] sm:$0xff] %v4297
    %4687 = vst [vmem:[#allocation2 + $0x50] sm:$0xff] %v4455
    %4688 = vst.msk [vmem:[#allocation2 + $0x58] sm:$0xff] %vm662, %v4613
    %4689 = vst [vmem:[#allocation2 + $0x60] sm:$0xff] %v4141
    %4690 = vst [vmem:[#allocation2 + $0x68] sm:$0xff] %v4299
    %4691 = vst [vmem:[#allocation2 + $0x70] sm:$0xff] %v4457
    %4692 = vst.msk [vmem:[#allocation2 + $0x78] sm:$0xff] %vm662, %v4615
    %4693 = vst [vmem:[#allocation2 + $0x80] sm:$0xff] %v4144
    %4694 = vst [vmem:[#allocation2 + $0x88] sm:$0xff] %v4302
    %4695 = vst [vmem:[#allocation2 + $0x90] sm:$0xff] %v4460
    %4696 = vst.msk [vmem:[#allocation2 + $0x98] sm:$0xff] %vm662, %v4618
    %4697 = vst [vmem:[#allocation2 + $0xa0] sm:$0xff] %v4146
    %4698 = vst [vmem:[#allocation2 + $0xa8] sm:$0xff] %v4304
    %4699 = vst [vmem:[#allocation2 + $0xb0] sm:$0xff] %v4462
    %4700 = vst.msk [vmem:[#allocation2 + $0xb8] sm:$0xff] %vm662, %v4620
    %4701 = vst [vmem:[#allocation2 + $0xc0] sm:$0xff] %v4149
    %4702 = vst [vmem:[#allocation2 + $0xc8] sm:$0xff] %v4307
    %4703 = vst [vmem:[#allocation2 + $0xd0] sm:$0xff] %v4465
    %4704 = vst.msk [vmem:[#allocation2 + $0xd8] sm:$0xff] %vm662, %v4623
    %4705 = vst [vmem:[#allocation2 + $0xe0] sm:$0xff] %v4151
    %4706 = vst [vmem:[#allocation2 + $0xe8] sm:$0xff] %v4309
    %4707 = vst [vmem:[#allocation2 + $0xf0] sm:$0xff] %v4467
    %4708 = vst.msk [vmem:[#allocation2 + $0xf8] sm:$0xff] %vm662, %v4625
    %4709 = vst [vmem:[#allocation2 + $0x100] sm:$0xff] %v4154
    %4710 = vst [vmem:[#allocation2 + $0x108] sm:$0xff] %v4312
    %4711 = vst [vmem:[#allocation2 + $0x110] sm:$0xff] %v4470
    %4712 = vst.msk [vmem:[#allocation2 + $0x118] sm:$0xff] %vm662, %v4628
    %4713 = vst [vmem:[#allocation2 + $0x120] sm:$0xff] %v4156
    %4714 = vst [vmem:[#allocation2 + $0x128] sm:$0xff] %v4314
    %4715 = vst [vmem:[#allocation2 + $0x130] sm:$0xff] %v4472
    %4716 = vst.msk [vmem:[#allocation2 + $0x138] sm:$0xff] %vm662, %v4630
    %4717 = vst [vmem:[#allocation2 + $0x140] sm:$0xff] %v4159
    %4718 = vst [vmem:[#allocation2 + $0x148] sm:$0xff] %v4317
    %4719 = vst [vmem:[#allocation2 + $0x150] sm:$0xff] %v4475
    %4720 = vst.msk [vmem:[#allocation2 + $0x158] sm:$0xff] %vm662, %v4633
    %4721 = vst [vmem:[#allocation2 + $0x160] sm:$0xff] %v4161
    %4722 = vst [vmem:[#allocation2 + $0x168] sm:$0xff] %v4319
    %4723 = vst [vmem:[#allocation2 + $0x170] sm:$0xff] %v4477
    %4724 = vst.msk [vmem:[#allocation2 + $0x178] sm:$0xff] %vm662, %v4635
    %4725 = vst [vmem:[#allocation2 + $0x180] sm:$0xff] %v4164
    %4726 = vst [vmem:[#allocation2 + $0x188] sm:$0xff] %v4322
    %4727 = vst [vmem:[#allocation2 + $0x190] sm:$0xff] %v4480
    %4728 = vst.msk [vmem:[#allocation2 + $0x198] sm:$0xff] %vm662, %v4638
    %4729 = vst [vmem:[#allocation2 + $0x1a0] sm:$0xff] %v4166
    %4730 = vst [vmem:[#allocation2 + $0x1a8] sm:$0xff] %v4324
    %4731 = vst [vmem:[#allocation2 + $0x1b0] sm:$0xff] %v4482
    %4732 = vst.msk [vmem:[#allocation2 + $0x1b8] sm:$0xff] %vm662, %v4640
    %4733 = vst [vmem:[#allocation2 + $0x1c0] sm:$0xff] %v4169
    %4734 = vst [vmem:[#allocation2 + $0x1c8] sm:$0xff] %v4327
    %4735 = vst [vmem:[#allocation2 + $0x1d0] sm:$0xff] %v4485
    %4736 = vst.msk [vmem:[#allocation2 + $0x1d8] sm:$0xff] %vm662, %v4643
    %4737 = vst [vmem:[#allocation2 + $0x1e0] sm:$0xff] %v4171
    %4738 = vst [vmem:[#allocation2 + $0x1e8] sm:$0xff] %v4329
    %4739 = vst [vmem:[#allocation2 + $0x1f0] sm:$0xff] %v4487
    %4740 = vst.msk [vmem:[#allocation2 + $0x1f8] sm:$0xff] %vm662, %v4645
    %4741 = vst [vmem:[#allocation2 + $0x200] sm:$0xff] %v4174
    %4742 = vst [vmem:[#allocation2 + $0x208] sm:$0xff] %v4332
    %4743 = vst [vmem:[#allocation2 + $0x210] sm:$0xff] %v4490
    %4744 = vst.msk [vmem:[#allocation2 + $0x218] sm:$0xff] %vm662, %v4648
    %4745 = vst [vmem:[#allocation2 + $0x220] sm:$0xff] %v4176
    %4746 = vst [vmem:[#allocation2 + $0x228] sm:$0xff] %v4334
    %4747 = vst [vmem:[#allocation2 + $0x230] sm:$0xff] %v4492
    %4748 = vst.msk [vmem:[#allocation2 + $0x238] sm:$0xff] %vm662, %v4650
    %4749 = vst [vmem:[#allocation2 + $0x240] sm:$0xff] %v4179
    %4750 = vst [vmem:[#allocation2 + $0x248] sm:$0xff] %v4337
    %4751 = vst [vmem:[#allocation2 + $0x250] sm:$0xff] %v4495
    %4752 = vst.msk [vmem:[#allocation2 + $0x258] sm:$0xff] %vm662, %v4653
    %4753 = vst [vmem:[#allocation2 + $0x260] sm:$0xff] %v4181
    %4754 = vst [vmem:[#allocation2 + $0x268] sm:$0xff] %v4339
    %4755 = vst [vmem:[#allocation2 + $0x270] sm:$0xff] %v4497
    %4756 = vst.msk [vmem:[#allocation2 + $0x278] sm:$0xff] %vm662, %v4655
    %4757 = vst [vmem:[#allocation2 + $0x280] sm:$0xff] %v4184
    %4758 = vst [vmem:[#allocation2 + $0x288] sm:$0xff] %v4342
    %4759 = vst [vmem:[#allocation2 + $0x290] sm:$0xff] %v4500
    %4760 = vst.msk [vmem:[#allocation2 + $0x298] sm:$0xff] %vm662, %v4658
    %4761 = vst [vmem:[#allocation2 + $0x2a0] sm:$0xff] %v4186
    %4762 = vst [vmem:[#allocation2 + $0x2a8] sm:$0xff] %v4344
    %4763 = vst [vmem:[#allocation2 + $0x2b0] sm:$0xff] %v4502
    %4764 = vst.msk [vmem:[#allocation2 + $0x2b8] sm:$0xff] %vm662, %v4660
    %4765 = vst [vmem:[#allocation2 + $0x2c0] sm:$0xff] %v4189
    %4766 = vst [vmem:[#allocation2 + $0x2c8] sm:$0xff] %v4347
    %4767 = vst [vmem:[#allocation2 + $0x2d0] sm:$0xff] %v4505
    %4768 = vst.msk [vmem:[#allocation2 + $0x2d8] sm:$0xff] %vm662, %v4663
    %4769 = vst [vmem:[#allocation2 + $0x2e0] sm:$0xff] %v4191
    %4770 = vst [vmem:[#allocation2 + $0x2e8] sm:$0xff] %v4349
    %4771 = vst [vmem:[#allocation2 + $0x2f0] sm:$0xff] %v4507
    %4772 = vst.msk [vmem:[#allocation2 + $0x2f8] sm:$0xff] %vm662, %v4665
    %4773 = vst [vmem:[#allocation2 + $0x300] sm:$0xff] %v4194
    %4774 = vst [vmem:[#allocation2 + $0x308] sm:$0xff] %v4352
    %4775 = vst [vmem:[#allocation2 + $0x310] sm:$0xff] %v4510
    %4776 = vst.msk [vmem:[#allocation2 + $0x318] sm:$0xff] %vm662, %v4668
    %4777 = vst [vmem:[#allocation2 + $0x320] sm:$0xff] %v4196
    %4778 = vst [vmem:[#allocation2 + $0x328] sm:$0xff] %v4354
    %4779 = vst [vmem:[#allocation2 + $0x330] sm:$0xff] %v4512
    %4780 = vst.msk [vmem:[#allocation2 + $0x338] sm:$0xff] %vm662, %v4670
    %4781 = vst [vmem:[#allocation2 + $0x340] sm:$0xff] %v4199
    %4782 = vst [vmem:[#allocation2 + $0x348] sm:$0xff] %v4357
    %4783 = vst [vmem:[#allocation2 + $0x350] sm:$0xff] %v4515
    %4784 = vst.msk [vmem:[#allocation2 + $0x358] sm:$0xff] %vm662, %v4673
    %4785 = vst [vmem:[#allocation2 + $0x360] sm:$0xff] %v4201
    %4786 = vst [vmem:[#allocation2 + $0x368] sm:$0xff] %v4359
    %4787 = vst [vmem:[#allocation2 + $0x370] sm:$0xff] %v4517
    %4788 = vst.msk [vmem:[#allocation2 + $0x378] sm:$0xff] %vm662, %v4675
    %v4789 = vld [vmem:[#allocation2 + $0x80] sm:$0xff]
    %v4790 = vld [vmem:[#allocation2 + $0x88] sm:$0xff]
    %v4791 = vld [vmem:[#allocation2 + $0x90] sm:$0xff]
    %v4792 = vld [vmem:[#allocation2 + $0x98] sm:$0xff]
    %v4793 = vld [vmem:[#allocation2 + $0xa0] sm:$0xff]
    %v4794 = vld [vmem:[#allocation2 + $0xa8] sm:$0xff]
    %v4795 = vld [vmem:[#allocation2 + $0xb0] sm:$0xff]
    %v4796 = vld [vmem:[#allocation2 + $0xb8] sm:$0xff]
    %v4797 = vld [vmem:[#allocation2 + $0xc0] sm:$0xff]
    %v4798 = vld [vmem:[#allocation2 + $0xc8] sm:$0xff]
    %v4799 = vld [vmem:[#allocation2 + $0xd0] sm:$0xff]
    %v4800 = vld [vmem:[#allocation2 + $0xd8] sm:$0xff]
    %v4801 = vld [vmem:[#allocation2 + $0xe0] sm:$0xff]
    %v4802 = vld [vmem:[#allocation2 + $0xe8] sm:$0xff]
    %v4803 = vld [vmem:[#allocation2 + $0xf0] sm:$0xff]
    %v4804 = vld [vmem:[#allocation2 + $0xf8] sm:$0xff]
    %v4805 = vld [vmem:[#allocation2 + $0x100] sm:$0xff]
    %v4806 = vld [vmem:[#allocation2 + $0x108] sm:$0xff]
    %v4807 = vld [vmem:[#allocation2 + $0x110] sm:$0xff]
    %v4808 = vld [vmem:[#allocation2 + $0x118] sm:$0xff]
    %v4809 = vld [vmem:[#allocation2 + $0x120] sm:$0xff]
    %v4810 = vld [vmem:[#allocation2 + $0x128] sm:$0xff]
    %v4811 = vld [vmem:[#allocation2 + $0x130] sm:$0xff]
    %v4812 = vld [vmem:[#allocation2 + $0x138] sm:$0xff]
    %v4813 = vld [vmem:[#allocation2 + $0x140] sm:$0xff]
    %v4814 = vld [vmem:[#allocation2 + $0x148] sm:$0xff]
    %v4815 = vld [vmem:[#allocation2 + $0x150] sm:$0xff]
    %v4816 = vld [vmem:[#allocation2 + $0x158] sm:$0xff]
    %v4817 = vld [vmem:[#allocation2 + $0x160] sm:$0xff]
    %v4818 = vld [vmem:[#allocation2 + $0x168] sm:$0xff]
    %v4819 = vld [vmem:[#allocation2 + $0x170] sm:$0xff]
    %v4820 = vld [vmem:[#allocation2 + $0x178] sm:$0xff]
    %v4821 = vld [vmem:[#allocation2 + $0x180] sm:$0xff]
    %v4822 = vld [vmem:[#allocation2 + $0x188] sm:$0xff]
    %v4823 = vld [vmem:[#allocation2 + $0x190] sm:$0xff]
    %v4824 = vld [vmem:[#allocation2 + $0x198] sm:$0xff]
    %v4825 = vld [vmem:[#allocation2 + $0x1a0] sm:$0xff]
    %v4826 = vld [vmem:[#allocation2 + $0x1a8] sm:$0xff]
    %v4827 = vld [vmem:[#allocation2 + $0x1b0] sm:$0xff]
    %v4828 = vld [vmem:[#allocation2 + $0x1b8] sm:$0xff]
    %v4829 = vld [vmem:[#allocation2 + $0x1c0] sm:$0xff]
    %v4830 = vld [vmem:[#allocation2 + $0x1c8] sm:$0xff]
    %v4831 = vld [vmem:[#allocation2 + $0x1d0] sm:$0xff]
    %v4832 = vld [vmem:[#allocation2 + $0x1d8] sm:$0xff]
    %v4833 = vld [vmem:[#allocation2 + $0x1e0] sm:$0xff]
    %v4834 = vld [vmem:[#allocation2 + $0x1e8] sm:$0xff]
    %v4835 = vld [vmem:[#allocation2 + $0x1f0] sm:$0xff]
    %v4836 = vld [vmem:[#allocation2 + $0x1f8] sm:$0xff]
    %v4837 = vld [vmem:[#allocation2 + $0x200] sm:$0xff]
    %v4838 = vld [vmem:[#allocation2 + $0x208] sm:$0xff]
    %v4839 = vld [vmem:[#allocation2 + $0x210] sm:$0xff]
    %v4840 = vld [vmem:[#allocation2 + $0x218] sm:$0xff]
    %v4841 = vld [vmem:[#allocation2 + $0x220] sm:$0xff]
    %v4842 = vld [vmem:[#allocation2 + $0x228] sm:$0xff]
    %v4843 = vld [vmem:[#allocation2 + $0x230] sm:$0xff]
    %v4844 = vld [vmem:[#allocation2 + $0x238] sm:$0xff]
    %v4845 = vld [vmem:[#allocation2 + $0x240] sm:$0xff]
    %v4846 = vld [vmem:[#allocation2 + $0x248] sm:$0xff]
    %v4847 = vld [vmem:[#allocation2 + $0x250] sm:$0xff]
    %v4848 = vld [vmem:[#allocation2 + $0x258] sm:$0xff]
    %v4849 = vld [vmem:[#allocation2 + $0x260] sm:$0xff]
    %v4850 = vld [vmem:[#allocation2 + $0x268] sm:$0xff]
    %v4851 = vld [vmem:[#allocation2 + $0x270] sm:$0xff]
    %v4852 = vld [vmem:[#allocation2 + $0x278] sm:$0xff]
    %v4853 = vld [vmem:[#allocation2 + $0x280] sm:$0xff]
    %v4854 = vld [vmem:[#allocation2 + $0x288] sm:$0xff]
    %v4855 = vld [vmem:[#allocation2 + $0x290] sm:$0xff]
    %v4856 = vld [vmem:[#allocation2 + $0x298] sm:$0xff]
    %v4857 = vld [vmem:[#allocation2 + $0x2a0] sm:$0xff]
    %v4858 = vld [vmem:[#allocation2 + $0x2a8] sm:$0xff]
    %v4859 = vld [vmem:[#allocation2 + $0x2b0] sm:$0xff]
    %v4860 = vld [vmem:[#allocation2 + $0x2b8] sm:$0xff]
    %v4861 = vld [vmem:[#allocation2 + $0x2c0] sm:$0xff]
    %v4862 = vld [vmem:[#allocation2 + $0x2c8] sm:$0xff]
    %v4863 = vld [vmem:[#allocation2 + $0x2d0] sm:$0xff]
    %v4864 = vld [vmem:[#allocation2 + $0x2d8] sm:$0xff]
    %v4865 = vld [vmem:[#allocation2 + $0x2e0] sm:$0xff]
    %v4866 = vld [vmem:[#allocation2 + $0x2e8] sm:$0xff]
    %v4867 = vld [vmem:[#allocation2 + $0x2f0] sm:$0xff]
    %v4868 = vld [vmem:[#allocation2 + $0x2f8] sm:$0xff]
    %v4869 = vld [vmem:[#allocation2 + $0x300] sm:$0xff]
    %v4870 = vld [vmem:[#allocation2 + $0x308] sm:$0xff]
    %v4871 = vld [vmem:[#allocation2 + $0x310] sm:$0xff]
    %v4872 = vld [vmem:[#allocation2 + $0x318] sm:$0xff]
    %v4873 = vld [vmem:[#allocation2 + $0x320] sm:$0xff]
    %v4874 = vld [vmem:[#allocation2 + $0x328] sm:$0xff]
    %v4875 = vld [vmem:[#allocation2 + $0x330] sm:$0xff]
    %v4876 = vld [vmem:[#allocation2 + $0x338] sm:$0xff]
    %v4877 = vld [vmem:[#allocation2 + $0x340] sm:$0xff]
    %v4878 = vld [vmem:[#allocation2 + $0x348] sm:$0xff]
    %v4879 = vld [vmem:[#allocation2 + $0x350] sm:$0xff]
    %v4880 = vld [vmem:[#allocation2 + $0x358] sm:$0xff]
    %v4881 = vld [vmem:[#allocation2 + $0x360] sm:$0xff]
    %v4882 = vld [vmem:[#allocation2 + $0x368] sm:$0xff]
    %v4883 = vld [vmem:[#allocation2 + $0x370] sm:$0xff]
    %v4884 = vld [vmem:[#allocation2 + $0x378] sm:$0xff]
    %v4885 = vld [vmem:[#allocation7] sm:$0xff]
    %v4886 = vld [vmem:[#allocation7 + $0x8] sm:$0xff]
    %v4887 = vld [vmem:[#allocation7 + $0x10] sm:$0xff]
    %v4888 = vld [vmem:[#allocation7 + $0x18] sm:$0xff]
    %v4889 = vld [vmem:[#allocation7 + $0x20] sm:$0xff]
    %v4890 = vld [vmem:[#allocation7 + $0x28] sm:$0xff]
    %v4891 = vld [vmem:[#allocation7 + $0x30] sm:$0xff]
    %v4892 = vld [vmem:[#allocation7 + $0x38] sm:$0xff]
    %v4893 = vld [vmem:[#allocation7 + $0x40] sm:$0xff]
    %v4894 = vld [vmem:[#allocation7 + $0x48] sm:$0xff]
    %v4895 = vld [vmem:[#allocation7 + $0x50] sm:$0xff]
    %v4896 = vld [vmem:[#allocation7 + $0x58] sm:$0xff]
    %v4897 = vld [vmem:[#allocation7 + $0x60] sm:$0xff]
    %v4898 = vld [vmem:[#allocation7 + $0x68] sm:$0xff]
    %v4899 = vld [vmem:[#allocation7 + $0x70] sm:$0xff]
    %v4900 = vld [vmem:[#allocation7 + $0x78] sm:$0xff]
    %v4901 = vld [vmem:[#allocation7 + $0x80] sm:$0xff]
    %v4902 = vld [vmem:[#allocation7 + $0x88] sm:$0xff]
    %v4903 = vld [vmem:[#allocation7 + $0x90] sm:$0xff]
    %v4904 = vld [vmem:[#allocation7 + $0x98] sm:$0xff]
    %v4905 = vld [vmem:[#allocation7 + $0xa0] sm:$0xff]
    %v4906 = vld [vmem:[#allocation7 + $0xa8] sm:$0xff]
    %v4907 = vld [vmem:[#allocation7 + $0xb0] sm:$0xff]
    %v4908 = vld [vmem:[#allocation7 + $0xb8] sm:$0xff]
    %v4909 = vld [vmem:[#allocation7 + $0xc0] sm:$0xff]
    %v4910 = vld [vmem:[#allocation7 + $0xc8] sm:$0xff]
    %v4911 = vld [vmem:[#allocation7 + $0xd0] sm:$0xff]
    %v4912 = vld [vmem:[#allocation7 + $0xd8] sm:$0xff]
    %v4913 = vld [vmem:[#allocation7 + $0xe0] sm:$0xff]
    %v4914 = vld [vmem:[#allocation7 + $0xe8] sm:$0xff]
    %v4915 = vld [vmem:[#allocation7 + $0xf0] sm:$0xff]
    %v4916 = vld [vmem:[#allocation7 + $0xf8] sm:$0xff]
    %v4917 = vld [vmem:[#allocation7 + $0x100] sm:$0xff]
    %v4918 = vld [vmem:[#allocation7 + $0x108] sm:$0xff]
    %v4919 = vld [vmem:[#allocation7 + $0x110] sm:$0xff]
    %v4920 = vld [vmem:[#allocation7 + $0x118] sm:$0xff]
    %v4921 = vld [vmem:[#allocation7 + $0x120] sm:$0xff]
    %v4922 = vld [vmem:[#allocation7 + $0x128] sm:$0xff]
    %v4923 = vld [vmem:[#allocation7 + $0x130] sm:$0xff]
    %v4924 = vld [vmem:[#allocation7 + $0x138] sm:$0xff]
    %v4925 = vld [vmem:[#allocation7 + $0x140] sm:$0xff]
    %v4926 = vld [vmem:[#allocation7 + $0x148] sm:$0xff]
    %v4927 = vld [vmem:[#allocation7 + $0x150] sm:$0xff]
    %v4928 = vld [vmem:[#allocation7 + $0x158] sm:$0xff]
    %v4929 = vld [vmem:[#allocation7 + $0x160] sm:$0xff]
    %v4930 = vld [vmem:[#allocation7 + $0x168] sm:$0xff]
    %v4931 = vld [vmem:[#allocation7 + $0x170] sm:$0xff]
    %v4932 = vld [vmem:[#allocation7 + $0x178] sm:$0xff]
    %v4933 = vld [vmem:[#allocation7 + $0x180] sm:$0xff]
    %v4934 = vld [vmem:[#allocation7 + $0x188] sm:$0xff]
    %v4935 = vld [vmem:[#allocation7 + $0x190] sm:$0xff]
    %v4936 = vld [vmem:[#allocation7 + $0x198] sm:$0xff]
    %v4937 = vld [vmem:[#allocation7 + $0x1a0] sm:$0xff]
    %v4938 = vld [vmem:[#allocation7 + $0x1a8] sm:$0xff]
    %v4939 = vld [vmem:[#allocation7 + $0x1b0] sm:$0xff]
    %v4940 = vld [vmem:[#allocation7 + $0x1b8] sm:$0xff]
    %v4997 = vunpack.c.l.b16 %v4885
    %v4998 = vunpack.c.h.b16 %v4885
    %v4999 = vunpack.c.l.b16 %v4886
    %v5000 = vunpack.c.h.b16 %v4886
    %v5001 = vunpack.c.l.b16 %v4887
    %v5002 = vunpack.c.h.b16 %v4887
    %v5003 = vunpack.c.l.b16 %v4888
    %v5004 = vunpack.c.h.b16 %v4888
    %v5005 = vunpack.c.l.b16 %v4889
    %v5006 = vunpack.c.h.b16 %v4889
    %v5007 = vunpack.c.l.b16 %v4890
    %v5008 = vunpack.c.h.b16 %v4890
    %v5009 = vunpack.c.l.b16 %v4891
    %v5010 = vunpack.c.h.b16 %v4891
    %v5011 = vunpack.c.l.b16 %v4892
    %v5012 = vunpack.c.h.b16 %v4892
    %v5013 = vunpack.c.l.b16 %v4893
    %v5014 = vunpack.c.h.b16 %v4893
    %v5015 = vunpack.c.l.b16 %v4894
    %v5016 = vunpack.c.h.b16 %v4894
    %v5017 = vunpack.c.l.b16 %v4895
    %v5018 = vunpack.c.h.b16 %v4895
    %v5019 = vunpack.c.l.b16 %v4896
    %v5020 = vunpack.c.h.b16 %v4896
    %v5021 = vunpack.c.l.b16 %v4897
    %v5022 = vunpack.c.h.b16 %v4897
    %v5023 = vunpack.c.l.b16 %v4898
    %v5024 = vunpack.c.h.b16 %v4898
    %v5025 = vunpack.c.l.b16 %v4899
    %v5026 = vunpack.c.h.b16 %v4899
    %v5027 = vunpack.c.l.b16 %v4900
    %v5028 = vunpack.c.h.b16 %v4900
    %v5029 = vunpack.c.l.b16 %v4901
    %v5030 = vunpack.c.h.b16 %v4901
    %v5031 = vunpack.c.l.b16 %v4902
    %v5032 = vunpack.c.h.b16 %v4902
    %v5033 = vunpack.c.l.b16 %v4903
    %v5034 = vunpack.c.h.b16 %v4903
    %v5035 = vunpack.c.l.b16 %v4904
    %v5036 = vunpack.c.h.b16 %v4904
    %v5037 = vunpack.c.l.b16 %v4905
    %v5038 = vunpack.c.h.b16 %v4905
    %v5039 = vunpack.c.l.b16 %v4906
    %v5040 = vunpack.c.h.b16 %v4906
    %v5041 = vunpack.c.l.b16 %v4907
    %v5042 = vunpack.c.h.b16 %v4907
    %v5043 = vunpack.c.l.b16 %v4908
    %v5044 = vunpack.c.h.b16 %v4908
    %v5045 = vunpack.c.l.b16 %v4909
    %v5046 = vunpack.c.h.b16 %v4909
    %v5047 = vunpack.c.l.b16 %v4910
    %v5048 = vunpack.c.h.b16 %v4910
    %v5049 = vunpack.c.l.b16 %v4911
    %v5050 = vunpack.c.h.b16 %v4911
    %v5051 = vunpack.c.l.b16 %v4912
    %v5052 = vunpack.c.h.b16 %v4912
    %v5053 = vunpack.c.l.b16 %v4913
    %v5054 = vunpack.c.h.b16 %v4913
    %v5055 = vunpack.c.l.b16 %v4914
    %v5056 = vunpack.c.h.b16 %v4914
    %v5057 = vunpack.c.l.b16 %v4915
    %v5058 = vunpack.c.h.b16 %v4915
    %v5059 = vunpack.c.l.b16 %v4916
    %v5060 = vunpack.c.h.b16 %v4916
    %v5061 = vunpack.c.l.b16 %v4917
    %v5062 = vunpack.c.h.b16 %v4917
    %v5063 = vunpack.c.l.b16 %v4918
    %v5064 = vunpack.c.h.b16 %v4918
    %v5065 = vunpack.c.l.b16 %v4919
    %v5066 = vunpack.c.h.b16 %v4919
    %v5067 = vunpack.c.l.b16 %v4920
    %v5068 = vunpack.c.h.b16 %v4920
    %v5069 = vunpack.c.l.b16 %v4921
    %v5070 = vunpack.c.h.b16 %v4921
    %v5071 = vunpack.c.l.b16 %v4922
    %v5072 = vunpack.c.h.b16 %v4922
    %v5073 = vunpack.c.l.b16 %v4923
    %v5074 = vunpack.c.h.b16 %v4923
    %v5075 = vunpack.c.l.b16 %v4924
    %v5076 = vunpack.c.h.b16 %v4924
    %v5077 = vunpack.c.l.b16 %v4925
    %v5078 = vunpack.c.h.b16 %v4925
    %v5079 = vunpack.c.l.b16 %v4926
    %v5080 = vunpack.c.h.b16 %v4926
    %v5081 = vunpack.c.l.b16 %v4927
    %v5082 = vunpack.c.h.b16 %v4927
    %v5083 = vunpack.c.l.b16 %v4928
    %v5084 = vunpack.c.h.b16 %v4928
    %v5085 = vunpack.c.l.b16 %v4929
    %v5086 = vunpack.c.h.b16 %v4929
    %v5087 = vunpack.c.l.b16 %v4930
    %v5088 = vunpack.c.h.b16 %v4930
    %v5089 = vunpack.c.l.b16 %v4931
    %v5090 = vunpack.c.h.b16 %v4931
    %v5091 = vunpack.c.l.b16 %v4932
    %v5092 = vunpack.c.h.b16 %v4932
    %v5093 = vunpack.c.l.b16 %v4933
    %v5094 = vunpack.c.h.b16 %v4933
    %v5095 = vunpack.c.l.b16 %v4934
    %v5096 = vunpack.c.h.b16 %v4934
    %v5097 = vunpack.c.l.b16 %v4935
    %v5098 = vunpack.c.h.b16 %v4935
    %v5099 = vunpack.c.l.b16 %v4936
    %v5100 = vunpack.c.h.b16 %v4936
    %v5101 = vunpack.c.l.b16 %v4937
    %v5102 = vunpack.c.h.b16 %v4937
    %v5103 = vunpack.c.l.b16 %v4938
    %v5104 = vunpack.c.h.b16 %v4938
    %v5105 = vunpack.c.l.b16 %v4939
    %v5106 = vunpack.c.h.b16 %v4939
    %v5107 = vunpack.c.l.b16 %v4940
    %v5108 = vunpack.c.h.b16 %v4940
    %v5109 = vpack.c.b16 %v5001, %v4997
    %v5110 = vpack.c.b16 %v5002, %v4998
    %v5111 = vpack.c.b16 %v5003, %v4999
    %v5112 = vpack.c.b16 %v5004, %v5000
    %v5113 = vpack.c.b16 %v5009, %v5005
    %v5114 = vpack.c.b16 %v5010, %v5006
    %v5115 = vpack.c.b16 %v5011, %v5007
    %v5116 = vpack.c.b16 %v5012, %v5008
    %v5117 = vpack.c.b16 %v5017, %v5013
    %v5118 = vpack.c.b16 %v5018, %v5014
    %v5119 = vpack.c.b16 %v5019, %v5015
    %v5120 = vpack.c.b16 %v5020, %v5016
    %v5121 = vpack.c.b16 %v5025, %v5021
    %v5122 = vpack.c.b16 %v5026, %v5022
    %v5123 = vpack.c.b16 %v5027, %v5023
    %v5124 = vpack.c.b16 %v5028, %v5024
    %v5125 = vpack.c.b16 %v5033, %v5029
    %v5126 = vpack.c.b16 %v5034, %v5030
    %v5127 = vpack.c.b16 %v5035, %v5031
    %v5128 = vpack.c.b16 %v5036, %v5032
    %v5129 = vpack.c.b16 %v5041, %v5037
    %v5130 = vpack.c.b16 %v5042, %v5038
    %v5131 = vpack.c.b16 %v5043, %v5039
    %v5132 = vpack.c.b16 %v5044, %v5040
    %v5133 = vpack.c.b16 %v5049, %v5045
    %v5134 = vpack.c.b16 %v5050, %v5046
    %v5135 = vpack.c.b16 %v5051, %v5047
    %v5136 = vpack.c.b16 %v5052, %v5048
    %v5137 = vpack.c.b16 %v5057, %v5053
    %v5138 = vpack.c.b16 %v5058, %v5054
    %v5139 = vpack.c.b16 %v5059, %v5055
    %v5140 = vpack.c.b16 %v5060, %v5056
    %v5141 = vpack.c.b16 %v5065, %v5061
    %v5142 = vpack.c.b16 %v5066, %v5062
    %v5143 = vpack.c.b16 %v5067, %v5063
    %v5144 = vpack.c.b16 %v5068, %v5064
    %v5145 = vpack.c.b16 %v5073, %v5069
    %v5146 = vpack.c.b16 %v5074, %v5070
    %v5147 = vpack.c.b16 %v5075, %v5071
    %v5148 = vpack.c.b16 %v5076, %v5072
    %v5149 = vpack.c.b16 %v5081, %v5077
    %v5150 = vpack.c.b16 %v5082, %v5078
    %v5151 = vpack.c.b16 %v5083, %v5079
    %v5152 = vpack.c.b16 %v5084, %v5080
    %v5153 = vpack.c.b16 %v5089, %v5085
    %v5154 = vpack.c.b16 %v5090, %v5086
    %v5155 = vpack.c.b16 %v5091, %v5087
    %v5156 = vpack.c.b16 %v5092, %v5088
    %v5157 = vpack.c.b16 %v5097, %v5093
    %v5158 = vpack.c.b16 %v5098, %v5094
    %v5159 = vpack.c.b16 %v5099, %v5095
    %v5160 = vpack.c.b16 %v5100, %v5096
    %v5161 = vpack.c.b16 %v5105, %v5101
    %v5162 = vpack.c.b16 %v5106, %v5102
    %v5163 = vpack.c.b16 %v5107, %v5103
    %v5164 = vpack.c.b16 %v5108, %v5104
    %5221 = vmatpush.bf16.msra.mxu0 %v5137
    %5222 = vmatpush.bf16.msra.mxu0 %v5133
    %5223 = vmatpush.bf16.msra.mxu0 %v5129
    %5224 = vmatpush.bf16.msra.mxu0 %v5125
    %5225 = vmatpush.bf16.msra.mxu0 %v5121
    %5226 = vmatpush.bf16.msra.mxu0 %v5117
    %5227 = vmatpush.bf16.msra.mxu0 %v5113
    %5228 = vmatpush.bf16.msra.mxu0 %v5109
    %5229 = vmatmul.bf16.gmra.mxu0 %v3681
    %v5230 = vpop.f32.mrf.mxu0
    %v5231 = vadd.f32 0.0, %v5230
    %v5232 = vpop.f32.mrf.mxu0
    %v5233 = vadd.f32 0.0, %v5232
    %5234 = vmatmul.bf16.gmra.mxu0 %v3683
    %v5235 = vpop.f32.mrf.mxu0
    %v5236 = vadd.f32 0.0, %v5235
    %v5237 = vpop.f32.mrf.mxu0
    %v5238 = vadd.f32 0.0, %v5237
    %5239 = vmatmul.bf16.gmra.mxu0 %v3685
    %v5240 = vpop.f32.mrf.mxu0
    %v5241 = vadd.f32 0.0, %v5240
    %v5242 = vpop.f32.mrf.mxu0
    %v5243 = vadd.f32 0.0, %v5242
    %5244 = vmatmul.bf16.gmra.mxu0 %v3687
    %v5245 = vpop.f32.mrf.mxu0
    %v5246 = vadd.f32 0.0, %v5245
    %v5247 = vpop.f32.mrf.mxu0
    %v5248 = vadd.f32 0.0, %v5247
    %5249 = vmatmul.bf16.gmra.mxu0 %v3689
    %v5250 = vpop.f32.mrf.mxu0
    %v5251 = vadd.f32 0.0, %v5250
    %v5252 = vpop.f32.mrf.mxu0
    %v5253 = vadd.f32 0.0, %v5252
    %5254 = vmatmul.bf16.gmra.mxu0 %v3691
    %v5255 = vpop.f32.mrf.mxu0
    %v5256 = vadd.f32 0.0, %v5255
    %v5257 = vpop.f32.mrf.mxu0
    %v5258 = vadd.f32 0.0, %v5257
    %5259 = vmatmul.bf16.gmra.mxu0 %v3693
    %v5260 = vpop.f32.mrf.mxu0
    %v5261 = vadd.f32 0.0, %v5260
    %v5262 = vpop.f32.mrf.mxu0
    %v5263 = vadd.f32 0.0, %v5262
    %5264 = vmatmul.bf16.gmra.mxu0 %v3695
    %v5265 = vpop.f32.mrf.mxu0
    %v5266 = vadd.f32 0.0, %v5265
    %v5267 = vpop.f32.mrf.mxu0
    %v5268 = vadd.f32 0.0, %v5267
    %5269 = vmatmul.bf16.gmra.mxu0 %v3697
    %v5270 = vpop.f32.mrf.mxu0
    %v5271 = vadd.f32 0.0, %v5270
    %v5272 = vpop.f32.mrf.mxu0
    %v5273 = vadd.f32 0.0, %v5272
    %5274 = vmatmul.bf16.gmra.mxu0 %v3699
    %v5275 = vpop.f32.mrf.mxu0
    %v5276 = vadd.f32 0.0, %v5275
    %v5277 = vpop.f32.mrf.mxu0
    %v5278 = vadd.f32 0.0, %v5277
    %5279 = vmatmul.bf16.gmra.mxu0 %v3701
    %v5280 = vpop.f32.mrf.mxu0
    %v5281 = vadd.f32 0.0, %v5280
    %v5282 = vpop.f32.mrf.mxu0
    %v5283 = vadd.f32 0.0, %v5282
    %5284 = vmatmul.bf16.gmra.mxu0 %v3703
    %v5285 = vpop.f32.mrf.mxu0
    %v5286 = vadd.f32 0.0, %v5285
    %v5287 = vpop.f32.mrf.mxu0
    %v5288 = vadd.f32 0.0, %v5287
    %5289 = vdwg.mxu0
    %5290 = vmatpush.bf16.msra.mxu0 0
    %5291 = vmatpush.bf16.msra.mxu0 0
    %5292 = vmatpush.bf16.msra.mxu0 %v5161
    %5293 = vmatpush.bf16.msra.mxu0 %v5157
    %5294 = vmatpush.bf16.msra.mxu0 %v5153
    %5295 = vmatpush.bf16.msra.mxu0 %v5149
    %5296 = vmatpush.bf16.msra.mxu0 %v5145
    %5297 = vmatpush.bf16.msra.mxu0 %v5141
    %5298 = vmatmul.bf16.gmra.mxu0 %v4004
    %v5299 = vpop.f32.mrf.mxu0
    %v5300 = vadd.f32 %v5231, %v5299
    %v5301 = vpop.f32.mrf.mxu0
    %v5302 = vadd.f32 %v5233, %v5301
    %5303 = vmatmul.bf16.gmra.mxu0 %v4007
    %v5304 = vpop.f32.mrf.mxu0
    %v5305 = vadd.f32 %v5236, %v5304
    %v5306 = vpop.f32.mrf.mxu0
    %v5307 = vadd.f32 %v5238, %v5306
    %5308 = vmatmul.bf16.gmra.mxu0 %v4010
    %v5309 = vpop.f32.mrf.mxu0
    %v5310 = vadd.f32 %v5241, %v5309
    %v5311 = vpop.f32.mrf.mxu0
    %v5312 = vadd.f32 %v5243, %v5311
    %5313 = vmatmul.bf16.gmra.mxu0 %v4013
    %v5314 = vpop.f32.mrf.mxu0
    %v5315 = vadd.f32 %v5246, %v5314
    %v5316 = vpop.f32.mrf.mxu0
    %v5317 = vadd.f32 %v5248, %v5316
    %5318 = vmatmul.bf16.gmra.mxu0 %v4016
    %v5319 = vpop.f32.mrf.mxu0
    %v5320 = vadd.f32 %v5251, %v5319
    %v5321 = vpop.f32.mrf.mxu0
    %v5322 = vadd.f32 %v5253, %v5321
    %5323 = vmatmul.bf16.gmra.mxu0 %v4019
    %v5324 = vpop.f32.mrf.mxu0
    %v5325 = vadd.f32 %v5256, %v5324
    %v5326 = vpop.f32.mrf.mxu0
    %v5327 = vadd.f32 %v5258, %v5326
    %5328 = vmatmul.bf16.gmra.mxu0 %v4022
    %v5329 = vpop.f32.mrf.mxu0
    %v5330 = vadd.f32 %v5261, %v5329
    %v5331 = vpop.f32.mrf.mxu0
    %v5332 = vadd.f32 %v5263, %v5331
    %5333 = vmatmul.bf16.gmra.mxu0 %v4025
    %v5334 = vpop.f32.mrf.mxu0
    %v5335 = vadd.f32 %v5266, %v5334
    %v5336 = vpop.f32.mrf.mxu0
    %v5337 = vadd.f32 %v5268, %v5336
    %5338 = vmatmul.bf16.gmra.mxu0 %v4028
    %v5339 = vpop.f32.mrf.mxu0
    %v5340 = vadd.f32 %v5271, %v5339
    %v5341 = vpop.f32.mrf.mxu0
    %v5342 = vadd.f32 %v5273, %v5341
    %5343 = vmatmul.bf16.gmra.mxu0 %v4031
    %v5344 = vpop.f32.mrf.mxu0
    %v5345 = vadd.f32 %v5276, %v5344
    %v5346 = vpop.f32.mrf.mxu0
    %v5347 = vadd.f32 %v5278, %v5346
    %5348 = vmatmul.bf16.gmra.mxu0 %v4034
    %v5349 = vpop.f32.mrf.mxu0
    %v5350 = vadd.f32 %v5281, %v5349
    %v5351 = vpop.f32.mrf.mxu0
    %v5352 = vadd.f32 %v5283, %v5351
    %5353 = vmatmul.bf16.gmra.mxu0 %v4037
    %v5354 = vpop.f32.mrf.mxu0
    %v5355 = vadd.f32 %v5286, %v5354
    %v5356 = vpop.f32.mrf.mxu0
    %v5357 = vadd.f32 %v5288, %v5356
    %5358 = vdwg.mxu0
    %5359 = vmatpush.bf16.msra.mxu0 %v5138
    %5360 = vmatpush.bf16.msra.mxu0 %v5134
    %5361 = vmatpush.bf16.msra.mxu0 %v5130
    %5362 = vmatpush.bf16.msra.mxu0 %v5126
    %5363 = vmatpush.bf16.msra.mxu0 %v5122
    %5364 = vmatpush.bf16.msra.mxu0 %v5118
    %5365 = vmatpush.bf16.msra.mxu0 %v5114
    %5366 = vmatpush.bf16.msra.mxu0 %v5110
    %5367 = vmatmul.bf16.gmra.mxu0 %v3681
    %v5368 = vpop.f32.mrf.mxu0
    %v5369 = vadd.f32 0.0, %v5368
    %v5370 = vpop.f32.mrf.mxu0
    %v5371 = vadd.f32 0.0, %v5370
    %5372 = vmatmul.bf16.gmra.mxu0 %v3683
    %v5373 = vpop.f32.mrf.mxu0
    %v5374 = vadd.f32 0.0, %v5373
    %v5375 = vpop.f32.mrf.mxu0
    %v5376 = vadd.f32 0.0, %v5375
    %5377 = vmatmul.bf16.gmra.mxu0 %v3685
    %v5378 = vpop.f32.mrf.mxu0
    %v5379 = vadd.f32 0.0, %v5378
    %v5380 = vpop.f32.mrf.mxu0
    %v5381 = vadd.f32 0.0, %v5380
    %5382 = vmatmul.bf16.gmra.mxu0 %v3687
    %v5383 = vpop.f32.mrf.mxu0
    %v5384 = vadd.f32 0.0, %v5383
    %v5385 = vpop.f32.mrf.mxu0
    %v5386 = vadd.f32 0.0, %v5385
    %5387 = vmatmul.bf16.gmra.mxu0 %v3689
    %v5388 = vpop.f32.mrf.mxu0
    %v5389 = vadd.f32 0.0, %v5388
    %v5390 = vpop.f32.mrf.mxu0
    %v5391 = vadd.f32 0.0, %v5390
    %5392 = vmatmul.bf16.gmra.mxu0 %v3691
    %v5393 = vpop.f32.mrf.mxu0
    %v5394 = vadd.f32 0.0, %v5393
    %v5395 = vpop.f32.mrf.mxu0
    %v5396 = vadd.f32 0.0, %v5395
    %5397 = vmatmul.bf16.gmra.mxu0 %v3693
    %v5398 = vpop.f32.mrf.mxu0
    %v5399 = vadd.f32 0.0, %v5398
    %v5400 = vpop.f32.mrf.mxu0
    %v5401 = vadd.f32 0.0, %v5400
    %5402 = vmatmul.bf16.gmra.mxu0 %v3695
    %v5403 = vpop.f32.mrf.mxu0
    %v5404 = vadd.f32 0.0, %v5403
    %v5405 = vpop.f32.mrf.mxu0
    %v5406 = vadd.f32 0.0, %v5405
    %5407 = vmatmul.bf16.gmra.mxu0 %v3697
    %v5408 = vpop.f32.mrf.mxu0
    %v5409 = vadd.f32 0.0, %v5408
    %v5410 = vpop.f32.mrf.mxu0
    %v5411 = vadd.f32 0.0, %v5410
    %5412 = vmatmul.bf16.gmra.mxu0 %v3699
    %v5413 = vpop.f32.mrf.mxu0
    %v5414 = vadd.f32 0.0, %v5413
    %v5415 = vpop.f32.mrf.mxu0
    %v5416 = vadd.f32 0.0, %v5415
    %5417 = vmatmul.bf16.gmra.mxu0 %v3701
    %v5418 = vpop.f32.mrf.mxu0
    %v5419 = vadd.f32 0.0, %v5418
    %v5420 = vpop.f32.mrf.mxu0
    %v5421 = vadd.f32 0.0, %v5420
    %5422 = vmatmul.bf16.gmra.mxu0 %v3703
    %v5423 = vpop.f32.mrf.mxu0
    %v5424 = vadd.f32 0.0, %v5423
    %v5425 = vpop.f32.mrf.mxu0
    %v5426 = vadd.f32 0.0, %v5425
    %5427 = vdwg.mxu0
    %5428 = vmatpush.bf16.msra.mxu0 0
    %5429 = vmatpush.bf16.msra.mxu0 0
    %5430 = vmatpush.bf16.msra.mxu0 %v5162
    %5431 = vmatpush.bf16.msra.mxu0 %v5158
    %5432 = vmatpush.bf16.msra.mxu0 %v5154
    %5433 = vmatpush.bf16.msra.mxu0 %v5150
    %5434 = vmatpush.bf16.msra.mxu0 %v5146
    %5435 = vmatpush.bf16.msra.mxu0 %v5142
    %5436 = vmatmul.bf16.gmra.mxu0 %v4004
    %v5437 = vpop.f32.mrf.mxu0
    %v5438 = vadd.f32 %v5369, %v5437
    %v5439 = vpop.f32.mrf.mxu0
    %v5440 = vadd.f32 %v5371, %v5439
    %5441 = vmatmul.bf16.gmra.mxu0 %v4007
    %v5442 = vpop.f32.mrf.mxu0
    %v5443 = vadd.f32 %v5374, %v5442
    %v5444 = vpop.f32.mrf.mxu0
    %v5445 = vadd.f32 %v5376, %v5444
    %5446 = vmatmul.bf16.gmra.mxu0 %v4010
    %v5447 = vpop.f32.mrf.mxu0
    %v5448 = vadd.f32 %v5379, %v5447
    %v5449 = vpop.f32.mrf.mxu0
    %v5450 = vadd.f32 %v5381, %v5449
    %5451 = vmatmul.bf16.gmra.mxu0 %v4013
    %v5452 = vpop.f32.mrf.mxu0
    %v5453 = vadd.f32 %v5384, %v5452
    %v5454 = vpop.f32.mrf.mxu0
    %v5455 = vadd.f32 %v5386, %v5454
    %5456 = vmatmul.bf16.gmra.mxu0 %v4016
    %v5457 = vpop.f32.mrf.mxu0
    %v5458 = vadd.f32 %v5389, %v5457
    %v5459 = vpop.f32.mrf.mxu0
    %v5460 = vadd.f32 %v5391, %v5459
    %5461 = vmatmul.bf16.gmra.mxu0 %v4019
    %v5462 = vpop.f32.mrf.mxu0
    %v5463 = vadd.f32 %v5394, %v5462
    %v5464 = vpop.f32.mrf.mxu0
    %v5465 = vadd.f32 %v5396, %v5464
    %5466 = vmatmul.bf16.gmra.mxu0 %v4022
    %v5467 = vpop.f32.mrf.mxu0
    %v5468 = vadd.f32 %v5399, %v5467
    %v5469 = vpop.f32.mrf.mxu0
    %v5470 = vadd.f32 %v5401, %v5469
    %5471 = vmatmul.bf16.gmra.mxu0 %v4025
    %v5472 = vpop.f32.mrf.mxu0
    %v5473 = vadd.f32 %v5404, %v5472
    %v5474 = vpop.f32.mrf.mxu0
    %v5475 = vadd.f32 %v5406, %v5474
    %5476 = vmatmul.bf16.gmra.mxu0 %v4028
    %v5477 = vpop.f32.mrf.mxu0
    %v5478 = vadd.f32 %v5409, %v5477
    %v5479 = vpop.f32.mrf.mxu0
    %v5480 = vadd.f32 %v5411, %v5479
    %5481 = vmatmul.bf16.gmra.mxu0 %v4031
    %v5482 = vpop.f32.mrf.mxu0
    %v5483 = vadd.f32 %v5414, %v5482
    %v5484 = vpop.f32.mrf.mxu0
    %v5485 = vadd.f32 %v5416, %v5484
    %5486 = vmatmul.bf16.gmra.mxu0 %v4034
    %v5487 = vpop.f32.mrf.mxu0
    %v5488 = vadd.f32 %v5419, %v5487
    %v5489 = vpop.f32.mrf.mxu0
    %v5490 = vadd.f32 %v5421, %v5489
    %5491 = vmatmul.bf16.gmra.mxu0 %v4037
    %v5492 = vpop.f32.mrf.mxu0
    %v5493 = vadd.f32 %v5424, %v5492
    %v5494 = vpop.f32.mrf.mxu0
    %v5495 = vadd.f32 %v5426, %v5494
    %5496 = vdwg.mxu0
    %5497 = vmatpush.bf16.msra.mxu0 %v5139
    %5498 = vmatpush.bf16.msra.mxu0 %v5135
    %5499 = vmatpush.bf16.msra.mxu0 %v5131
    %5500 = vmatpush.bf16.msra.mxu0 %v5127
    %5501 = vmatpush.bf16.msra.mxu0 %v5123
    %5502 = vmatpush.bf16.msra.mxu0 %v5119
    %5503 = vmatpush.bf16.msra.mxu0 %v5115
    %5504 = vmatpush.bf16.msra.mxu0 %v5111
    %5505 = vmatmul.bf16.gmra.mxu0 %v3681
    %v5506 = vpop.f32.mrf.mxu0
    %v5507 = vadd.f32 0.0, %v5506
    %v5508 = vpop.f32.mrf.mxu0
    %v5509 = vadd.f32 0.0, %v5508
    %5510 = vmatmul.bf16.gmra.mxu0 %v3683
    %v5511 = vpop.f32.mrf.mxu0
    %v5512 = vadd.f32 0.0, %v5511
    %v5513 = vpop.f32.mrf.mxu0
    %v5514 = vadd.f32 0.0, %v5513
    %5515 = vmatmul.bf16.gmra.mxu0 %v3685
    %v5516 = vpop.f32.mrf.mxu0
    %v5517 = vadd.f32 0.0, %v5516
    %v5518 = vpop.f32.mrf.mxu0
    %v5519 = vadd.f32 0.0, %v5518
    %5520 = vmatmul.bf16.gmra.mxu0 %v3687
    %v5521 = vpop.f32.mrf.mxu0
    %v5522 = vadd.f32 0.0, %v5521
    %v5523 = vpop.f32.mrf.mxu0
    %v5524 = vadd.f32 0.0, %v5523
    %5525 = vmatmul.bf16.gmra.mxu0 %v3689
    %v5526 = vpop.f32.mrf.mxu0
    %v5527 = vadd.f32 0.0, %v5526
    %v5528 = vpop.f32.mrf.mxu0
    %v5529 = vadd.f32 0.0, %v5528
    %5530 = vmatmul.bf16.gmra.mxu0 %v3691
    %v5531 = vpop.f32.mrf.mxu0
    %v5532 = vadd.f32 0.0, %v5531
    %v5533 = vpop.f32.mrf.mxu0
    %v5534 = vadd.f32 0.0, %v5533
    %5535 = vmatmul.bf16.gmra.mxu0 %v3693
    %v5536 = vpop.f32.mrf.mxu0
    %v5537 = vadd.f32 0.0, %v5536
    %v5538 = vpop.f32.mrf.mxu0
    %v5539 = vadd.f32 0.0, %v5538
    %5540 = vmatmul.bf16.gmra.mxu0 %v3695
    %v5541 = vpop.f32.mrf.mxu0
    %v5542 = vadd.f32 0.0, %v5541
    %v5543 = vpop.f32.mrf.mxu0
    %v5544 = vadd.f32 0.0, %v5543
    %5545 = vmatmul.bf16.gmra.mxu0 %v3697
    %v5546 = vpop.f32.mrf.mxu0
    %v5547 = vadd.f32 0.0, %v5546
    %v5548 = vpop.f32.mrf.mxu0
    %v5549 = vadd.f32 0.0, %v5548
    %5550 = vmatmul.bf16.gmra.mxu0 %v3699
    %v5551 = vpop.f32.mrf.mxu0
    %v5552 = vadd.f32 0.0, %v5551
    %v5553 = vpop.f32.mrf.mxu0
    %v5554 = vadd.f32 0.0, %v5553
    %5555 = vmatmul.bf16.gmra.mxu0 %v3701
    %v5556 = vpop.f32.mrf.mxu0
    %v5557 = vadd.f32 0.0, %v5556
    %v5558 = vpop.f32.mrf.mxu0
    %v5559 = vadd.f32 0.0, %v5558
    %5560 = vmatmul.bf16.gmra.mxu0 %v3703
    %v5561 = vpop.f32.mrf.mxu0
    %v5562 = vadd.f32 0.0, %v5561
    %v5563 = vpop.f32.mrf.mxu0
    %v5564 = vadd.f32 0.0, %v5563
    %5565 = vdwg.mxu0
    %5566 = vmatpush.bf16.msra.mxu0 0
    %5567 = vmatpush.bf16.msra.mxu0 0
    %5568 = vmatpush.bf16.msra.mxu0 %v5163
    %5569 = vmatpush.bf16.msra.mxu0 %v5159
    %5570 = vmatpush.bf16.msra.mxu0 %v5155
    %5571 = vmatpush.bf16.msra.mxu0 %v5151
    %5572 = vmatpush.bf16.msra.mxu0 %v5147
    %5573 = vmatpush.bf16.msra.mxu0 %v5143
    %5574 = vmatmul.bf16.gmra.mxu0 %v4004
    %v5575 = vpop.f32.mrf.mxu0
    %v5576 = vadd.f32 %v5507, %v5575
    %v5577 = vpop.f32.mrf.mxu0
    %v5578 = vadd.f32 %v5509, %v5577
    %5579 = vmatmul.bf16.gmra.mxu0 %v4007
    %v5580 = vpop.f32.mrf.mxu0
    %v5581 = vadd.f32 %v5512, %v5580
    %v5582 = vpop.f32.mrf.mxu0
    %v5583 = vadd.f32 %v5514, %v5582
    %5584 = vmatmul.bf16.gmra.mxu0 %v4010
    %v5585 = vpop.f32.mrf.mxu0
    %v5586 = vadd.f32 %v5517, %v5585
    %v5587 = vpop.f32.mrf.mxu0
    %v5588 = vadd.f32 %v5519, %v5587
    %5589 = vmatmul.bf16.gmra.mxu0 %v4013
    %v5590 = vpop.f32.mrf.mxu0
    %v5591 = vadd.f32 %v5522, %v5590
    %v5592 = vpop.f32.mrf.mxu0
    %v5593 = vadd.f32 %v5524, %v5592
    %5594 = vmatmul.bf16.gmra.mxu0 %v4016
    %v5595 = vpop.f32.mrf.mxu0
    %v5596 = vadd.f32 %v5527, %v5595
    %v5597 = vpop.f32.mrf.mxu0
    %v5598 = vadd.f32 %v5529, %v5597
    %5599 = vmatmul.bf16.gmra.mxu0 %v4019
    %v5600 = vpop.f32.mrf.mxu0
    %v5601 = vadd.f32 %v5532, %v5600
    %v5602 = vpop.f32.mrf.mxu0
    %v5603 = vadd.f32 %v5534, %v5602
    %5604 = vmatmul.bf16.gmra.mxu0 %v4022
    %v5605 = vpop.f32.mrf.mxu0
    %v5606 = vadd.f32 %v5537, %v5605
    %v5607 = vpop.f32.mrf.mxu0
    %v5608 = vadd.f32 %v5539, %v5607
    %5609 = vmatmul.bf16.gmra.mxu0 %v4025
    %v5610 = vpop.f32.mrf.mxu0
    %v5611 = vadd.f32 %v5542, %v5610
    %v5612 = vpop.f32.mrf.mxu0
    %v5613 = vadd.f32 %v5544, %v5612
    %5614 = vmatmul.bf16.gmra.mxu0 %v4028
    %v5615 = vpop.f32.mrf.mxu0
    %v5616 = vadd.f32 %v5547, %v5615
    %v5617 = vpop.f32.mrf.mxu0
    %v5618 = vadd.f32 %v5549, %v5617
    %5619 = vmatmul.bf16.gmra.mxu0 %v4031
    %v5620 = vpop.f32.mrf.mxu0
    %v5621 = vadd.f32 %v5552, %v5620
    %v5622 = vpop.f32.mrf.mxu0
    %v5623 = vadd.f32 %v5554, %v5622
    %5624 = vmatmul.bf16.gmra.mxu0 %v4034
    %v5625 = vpop.f32.mrf.mxu0
    %v5626 = vadd.f32 %v5557, %v5625
    %v5627 = vpop.f32.mrf.mxu0
    %v5628 = vadd.f32 %v5559, %v5627
    %5629 = vmatmul.bf16.gmra.mxu0 %v4037
    %v5630 = vpop.f32.mrf.mxu0
    %v5631 = vadd.f32 %v5562, %v5630
    %v5632 = vpop.f32.mrf.mxu0
    %v5633 = vadd.f32 %v5564, %v5632
    %5634 = vdwg.mxu0
    %5635 = vmatpush.bf16.msra.mxu0 %v5140
    %5636 = vmatpush.bf16.msra.mxu0 %v5136
    %5637 = vmatpush.bf16.msra.mxu0 %v5132
    %5638 = vmatpush.bf16.msra.mxu0 %v5128
    %5639 = vmatpush.bf16.msra.mxu0 %v5124
    %5640 = vmatpush.bf16.msra.mxu0 %v5120
    %5641 = vmatpush.bf16.msra.mxu0 %v5116
    %5642 = vmatpush.bf16.msra.mxu0 %v5112
    %5643 = vmatmul.bf16.gmra.mxu0 %v3681
    %v5644 = vpop.f32.mrf.mxu0
    %v5645 = vadd.f32 0.0, %v5644
    %v5646 = vpop.f32.mrf.mxu0
    %v5647 = vadd.f32 0.0, %v5646
    %5648 = vmatmul.bf16.gmra.mxu0 %v3683
    %v5649 = vpop.f32.mrf.mxu0
    %v5650 = vadd.f32 0.0, %v5649
    %v5651 = vpop.f32.mrf.mxu0
    %v5652 = vadd.f32 0.0, %v5651
    %5653 = vmatmul.bf16.gmra.mxu0 %v3685
    %v5654 = vpop.f32.mrf.mxu0
    %v5655 = vadd.f32 0.0, %v5654
    %v5656 = vpop.f32.mrf.mxu0
    %v5657 = vadd.f32 0.0, %v5656
    %5658 = vmatmul.bf16.gmra.mxu0 %v3687
    %v5659 = vpop.f32.mrf.mxu0
    %v5660 = vadd.f32 0.0, %v5659
    %v5661 = vpop.f32.mrf.mxu0
    %v5662 = vadd.f32 0.0, %v5661
    %5663 = vmatmul.bf16.gmra.mxu0 %v3689
    %v5664 = vpop.f32.mrf.mxu0
    %v5665 = vadd.f32 0.0, %v5664
    %v5666 = vpop.f32.mrf.mxu0
    %v5667 = vadd.f32 0.0, %v5666
    %5668 = vmatmul.bf16.gmra.mxu0 %v3691
    %v5669 = vpop.f32.mrf.mxu0
    %v5670 = vadd.f32 0.0, %v5669
    %v5671 = vpop.f32.mrf.mxu0
    %v5672 = vadd.f32 0.0, %v5671
    %5673 = vmatmul.bf16.gmra.mxu0 %v3693
    %v5674 = vpop.f32.mrf.mxu0
    %v5675 = vadd.f32 0.0, %v5674
    %v5676 = vpop.f32.mrf.mxu0
    %v5677 = vadd.f32 0.0, %v5676
    %5678 = vmatmul.bf16.gmra.mxu0 %v3695
    %v5679 = vpop.f32.mrf.mxu0
    %v5680 = vadd.f32 0.0, %v5679
    %v5681 = vpop.f32.mrf.mxu0
    %v5682 = vadd.f32 0.0, %v5681
    %5683 = vmatmul.bf16.gmra.mxu0 %v3697
    %v5684 = vpop.f32.mrf.mxu0
    %v5685 = vadd.f32 0.0, %v5684
    %v5686 = vpop.f32.mrf.mxu0
    %v5687 = vadd.f32 0.0, %v5686
    %5688 = vmatmul.bf16.gmra.mxu0 %v3699
    %v5689 = vpop.f32.mrf.mxu0
    %v5690 = vadd.f32 0.0, %v5689
    %v5691 = vpop.f32.mrf.mxu0
    %v5692 = vadd.f32 0.0, %v5691
    %5693 = vmatmul.bf16.gmra.mxu0 %v3701
    %v5694 = vpop.f32.mrf.mxu0
    %v5695 = vadd.f32 0.0, %v5694
    %v5696 = vpop.f32.mrf.mxu0
    %v5697 = vadd.f32 0.0, %v5696
    %5698 = vmatmul.bf16.gmra.mxu0 %v3703
    %v5699 = vpop.f32.mrf.mxu0
    %v5700 = vadd.f32 0.0, %v5699
    %v5701 = vpop.f32.mrf.mxu0
    %v5702 = vadd.f32 0.0, %v5701
    %5703 = vdwg.mxu0
    %5704 = vmatpush.bf16.msra.mxu0 0
    %5705 = vmatpush.bf16.msra.mxu0 0
    %5706 = vmatpush.bf16.msra.mxu0 %v5164
    %5707 = vmatpush.bf16.msra.mxu0 %v5160
    %5708 = vmatpush.bf16.msra.mxu0 %v5156
    %5709 = vmatpush.bf16.msra.mxu0 %v5152
    %5710 = vmatpush.bf16.msra.mxu0 %v5148
    %5711 = vmatpush.bf16.msra.mxu0 %v5144
    %5712 = vmatmul.bf16.gmra.mxu0 %v4004
    %v5713 = vpop.f32.mrf.mxu0
    %v5714 = vadd.f32 %v5645, %v5713
    %v5715 = vpop.f32.mrf.mxu0
    %v5716 = vadd.f32 %v5647, %v5715
    %5717 = vmatmul.bf16.gmra.mxu0 %v4007
    %v5718 = vpop.f32.mrf.mxu0
    %v5719 = vadd.f32 %v5650, %v5718
    %v5720 = vpop.f32.mrf.mxu0
    %v5721 = vadd.f32 %v5652, %v5720
    %5722 = vmatmul.bf16.gmra.mxu0 %v4010
    %v5723 = vpop.f32.mrf.mxu0
    %v5724 = vadd.f32 %v5655, %v5723
    %v5725 = vpop.f32.mrf.mxu0
    %v5726 = vadd.f32 %v5657, %v5725
    %5727 = vmatmul.bf16.gmra.mxu0 %v4013
    %v5728 = vpop.f32.mrf.mxu0
    %v5729 = vadd.f32 %v5660, %v5728
    %v5730 = vpop.f32.mrf.mxu0
    %v5731 = vadd.f32 %v5662, %v5730
    %5732 = vmatmul.bf16.gmra.mxu0 %v4016
    %v5733 = vpop.f32.mrf.mxu0
    %v5734 = vadd.f32 %v5665, %v5733
    %v5735 = vpop.f32.mrf.mxu0
    %v5736 = vadd.f32 %v5667, %v5735
    %5737 = vmatmul.bf16.gmra.mxu0 %v4019
    %v5738 = vpop.f32.mrf.mxu0
    %v5739 = vadd.f32 %v5670, %v5738
    %v5740 = vpop.f32.mrf.mxu0
    %v5741 = vadd.f32 %v5672, %v5740
    %5742 = vmatmul.bf16.gmra.mxu0 %v4022
    %v5743 = vpop.f32.mrf.mxu0
    %v5744 = vadd.f32 %v5675, %v5743
    %v5745 = vpop.f32.mrf.mxu0
    %v5746 = vadd.f32 %v5677, %v5745
    %5747 = vmatmul.bf16.gmra.mxu0 %v4025
    %v5748 = vpop.f32.mrf.mxu0
    %v5749 = vadd.f32 %v5680, %v5748
    %v5750 = vpop.f32.mrf.mxu0
    %v5751 = vadd.f32 %v5682, %v5750
    %5752 = vmatmul.bf16.gmra.mxu0 %v4028
    %v5753 = vpop.f32.mrf.mxu0
    %v5754 = vadd.f32 %v5685, %v5753
    %v5755 = vpop.f32.mrf.mxu0
    %v5756 = vadd.f32 %v5687, %v5755
    %5757 = vmatmul.bf16.gmra.mxu0 %v4031
    %v5758 = vpop.f32.mrf.mxu0
    %v5759 = vadd.f32 %v5690, %v5758
    %v5760 = vpop.f32.mrf.mxu0
    %v5761 = vadd.f32 %v5692, %v5760
    %5762 = vmatmul.bf16.gmra.mxu0 %v4034
    %v5763 = vpop.f32.mrf.mxu0
    %v5764 = vadd.f32 %v5695, %v5763
    %v5765 = vpop.f32.mrf.mxu0
    %v5766 = vadd.f32 %v5697, %v5765
    %5767 = vmatmul.bf16.gmra.mxu0 %v4037
    %v5768 = vpop.f32.mrf.mxu0
    %v5769 = vadd.f32 %v5700, %v5768
    %v5770 = vpop.f32.mrf.mxu0
    %v5771 = vadd.f32 %v5702, %v5770
    %5772 = vdwg.mxu0
    %v5773 = vadd.f32 %v4789, %v5300
    %v5774 = vadd.f32 %v4790, %v5438
    %v5775 = vadd.f32 %v4791, %v5576
    %v5776 = vadd.f32 %v4792, %v5714
    %v5777 = vadd.f32 %v4793, %v5302
    %v5778 = vadd.f32 %v4794, %v5440
    %v5779 = vadd.f32 %v4795, %v5578
    %v5780 = vadd.f32 %v4796, %v5716
    %v5781 = vadd.f32 %v4797, %v5305
    %v5782 = vadd.f32 %v4798, %v5443
    %v5783 = vadd.f32 %v4799, %v5581
    %v5784 = vadd.f32 %v4800, %v5719
    %v5785 = vadd.f32 %v4801, %v5307
    %v5786 = vadd.f32 %v4802, %v5445
    %v5787 = vadd.f32 %v4803, %v5583
    %v5788 = vadd.f32 %v4804, %v5721
    %v5789 = vadd.f32 %v4805, %v5310
    %v5790 = vadd.f32 %v4806, %v5448
    %v5791 = vadd.f32 %v4807, %v5586
    %v5792 = vadd.f32 %v4808, %v5724
    %v5793 = vadd.f32 %v4809, %v5312
    %v5794 = vadd.f32 %v4810, %v5450
    %v5795 = vadd.f32 %v4811, %v5588
    %v5796 = vadd.f32 %v4812, %v5726
    %v5797 = vadd.f32 %v4813, %v5315
    %v5798 = vadd.f32 %v4814, %v5453
    %v5799 = vadd.f32 %v4815, %v5591
    %v5800 = vadd.f32 %v4816, %v5729
    %v5801 = vadd.f32 %v4817, %v5317
    %v5802 = vadd.f32 %v4818, %v5455
    %v5803 = vadd.f32 %v4819, %v5593
    %v5804 = vadd.f32 %v4820, %v5731
    %v5805 = vadd.f32 %v4821, %v5320
    %v5806 = vadd.f32 %v4822, %v5458
    %v5807 = vadd.f32 %v4823, %v5596
    %v5808 = vadd.f32 %v4824, %v5734
    %v5809 = vadd.f32 %v4825, %v5322
    %v5810 = vadd.f32 %v4826, %v5460
    %v5811 = vadd.f32 %v4827, %v5598
    %v5812 = vadd.f32 %v4828, %v5736
    %v5813 = vadd.f32 %v4829, %v5325
    %v5814 = vadd.f32 %v4830, %v5463
    %v5815 = vadd.f32 %v4831, %v5601
    %v5816 = vadd.f32 %v4832, %v5739
    %v5817 = vadd.f32 %v4833, %v5327
    %v5818 = vadd.f32 %v4834, %v5465
    %v5819 = vadd.f32 %v4835, %v5603
    %v5820 = vadd.f32 %v4836, %v5741
    %v5821 = vadd.f32 %v4837, %v5330
    %v5822 = vadd.f32 %v4838, %v5468
    %v5823 = vadd.f32 %v4839, %v5606
    %v5824 = vadd.f32 %v4840, %v5744
    %v5825 = vadd.f32 %v4841, %v5332
    %v5826 = vadd.f32 %v4842, %v5470
    %v5827 = vadd.f32 %v4843, %v5608
    %v5828 = vadd.f32 %v4844, %v5746
    %v5829 = vadd.f32 %v4845, %v5335
    %v5830 = vadd.f32 %v4846, %v5473
    %v5831 = vadd.f32 %v4847, %v5611
    %v5832 = vadd.f32 %v4848, %v5749
    %v5833 = vadd.f32 %v4849, %v5337
    %v5834 = vadd.f32 %v4850, %v5475
    %v5835 = vadd.f32 %v4851, %v5613
    %v5836 = vadd.f32 %v4852, %v5751
    %v5837 = vadd.f32 %v4853, %v5340
    %v5838 = vadd.f32 %v4854, %v5478
    %v5839 = vadd.f32 %v4855, %v5616
    %v5840 = vadd.f32 %v4856, %v5754
    %v5841 = vadd.f32 %v4857, %v5342
    %v5842 = vadd.f32 %v4858, %v5480
    %v5843 = vadd.f32 %v4859, %v5618
    %v5844 = vadd.f32 %v4860, %v5756
    %v5845 = vadd.f32 %v4861, %v5345
    %v5846 = vadd.f32 %v4862, %v5483
    %v5847 = vadd.f32 %v4863, %v5621
    %v5848 = vadd.f32 %v4864, %v5759
    %v5849 = vadd.f32 %v4865, %v5347
    %v5850 = vadd.f32 %v4866, %v5485
    %v5851 = vadd.f32 %v4867, %v5623
    %v5852 = vadd.f32 %v4868, %v5761
    %v5853 = vadd.f32 %v4869, %v5350
    %v5854 = vadd.f32 %v4870, %v5488
    %v5855 = vadd.f32 %v4871, %v5626
    %v5856 = vadd.f32 %v4872, %v5764
    %v5857 = vadd.f32 %v4873, %v5352
    %v5858 = vadd.f32 %v4874, %v5490
    %v5859 = vadd.f32 %v4875, %v5628
    %v5860 = vadd.f32 %v4876, %v5766
    %v5861 = vadd.f32 %v4877, %v5355
    %v5862 = vadd.f32 %v4878, %v5493
    %v5863 = vadd.f32 %v4879, %v5631
    %v5864 = vadd.f32 %v4880, %v5769
    %v5865 = vadd.f32 %v4881, %v5357
    %v5866 = vadd.f32 %v4882, %v5495
    %v5867 = vadd.f32 %v4883, %v5633
    %v5868 = vadd.f32 %v4884, %v5771
    %5869 = vst [vmem:[#allocation2 + $0x80] sm:$0xff] %v5773
    %5870 = vst [vmem:[#allocation2 + $0x88] sm:$0xff] %v5774
    %5871 = vst [vmem:[#allocation2 + $0x90] sm:$0xff] %v5775
    %5872 = vst.msk [vmem:[#allocation2 + $0x98] sm:$0xff] %vm662, %v5776
    %5873 = vst [vmem:[#allocation2 + $0xa0] sm:$0xff] %v5777
    %5874 = vst [vmem:[#allocation2 + $0xa8] sm:$0xff] %v5778
    %5875 = vst [vmem:[#allocation2 + $0xb0] sm:$0xff] %v5779
    %5876 = vst.msk [vmem:[#allocation2 + $0xb8] sm:$0xff] %vm662, %v5780
    %5877 = vst [vmem:[#allocation2 + $0xc0] sm:$0xff] %v5781
    %5878 = vst [vmem:[#allocation2 + $0xc8] sm:$0xff] %v5782
    %5879 = vst [vmem:[#allocation2 + $0xd0] sm:$0xff] %v5783
    %5880 = vst.msk [vmem:[#allocation2 + $0xd8] sm:$0xff] %vm662, %v5784
    %5881 = vst [vmem:[#allocation2 + $0xe0] sm:$0xff] %v5785
    %5882 = vst [vmem:[#allocation2 + $0xe8] sm:$0xff] %v5786
    %5883 = vst [vmem:[#allocation2 + $0xf0] sm:$0xff] %v5787
    %5884 = vst.msk [vmem:[#allocation2 + $0xf8] sm:$0xff] %vm662, %v5788
    %5885 = vst [vmem:[#allocation2 + $0x100] sm:$0xff] %v5789
    %5886 = vst [vmem:[#allocation2 + $0x108] sm:$0xff] %v5790
    %5887 = vst [vmem:[#allocation2 + $0x110] sm:$0xff] %v5791
    %5888 = vst.msk [vmem:[#allocation2 + $0x118] sm:$0xff] %vm662, %v5792
    %5889 = vst [vmem:[#allocation2 + $0x120] sm:$0xff] %v5793
    %5890 = vst [vmem:[#allocation2 + $0x128] sm:$0xff] %v5794
    %5891 = vst [vmem:[#allocation2 + $0x130] sm:$0xff] %v5795
    %5892 = vst.msk [vmem:[#allocation2 + $0x138] sm:$0xff] %vm662, %v5796
    %5893 = vst [vmem:[#allocation2 + $0x140] sm:$0xff] %v5797
    %5894 = vst [vmem:[#allocation2 + $0x148] sm:$0xff] %v5798
    %5895 = vst [vmem:[#allocation2 + $0x150] sm:$0xff] %v5799
    %5896 = vst.msk [vmem:[#allocation2 + $0x158] sm:$0xff] %vm662, %v5800
    %5897 = vst [vmem:[#allocation2 + $0x160] sm:$0xff] %v5801
    %5898 = vst [vmem:[#allocation2 + $0x168] sm:$0xff] %v5802
    %5899 = vst [vmem:[#allocation2 + $0x170] sm:$0xff] %v5803
    %5900 = vst.msk [vmem:[#allocation2 + $0x178] sm:$0xff] %vm662, %v5804
    %5901 = vst [vmem:[#allocation2 + $0x180] sm:$0xff] %v5805
    %5902 = vst [vmem:[#allocation2 + $0x188] sm:$0xff] %v5806
    %5903 = vst [vmem:[#allocation2 + $0x190] sm:$0xff] %v5807
    %5904 = vst.msk [vmem:[#allocation2 + $0x198] sm:$0xff] %vm662, %v5808
    %5905 = vst [vmem:[#allocation2 + $0x1a0] sm:$0xff] %v5809
    %5906 = vst [vmem:[#allocation2 + $0x1a8] sm:$0xff] %v5810
    %5907 = vst [vmem:[#allocation2 + $0x1b0] sm:$0xff] %v5811
    %5908 = vst.msk [vmem:[#allocation2 + $0x1b8] sm:$0xff] %vm662, %v5812
    %5909 = vst [vmem:[#allocation2 + $0x1c0] sm:$0xff] %v5813
    %5910 = vst [vmem:[#allocation2 + $0x1c8] sm:$0xff] %v5814
    %5911 = vst [vmem:[#allocation2 + $0x1d0] sm:$0xff] %v5815
    %5912 = vst.msk [vmem:[#allocation2 + $0x1d8] sm:$0xff] %vm662, %v5816
    %5913 = vst [vmem:[#allocation2 + $0x1e0] sm:$0xff] %v5817
    %5914 = vst [vmem:[#allocation2 + $0x1e8] sm:$0xff] %v5818
    %5915 = vst [vmem:[#allocation2 + $0x1f0] sm:$0xff] %v5819
    %5916 = vst.msk [vmem:[#allocation2 + $0x1f8] sm:$0xff] %vm662, %v5820
    %5917 = vst [vmem:[#allocation2 + $0x200] sm:$0xff] %v5821
    %5918 = vst [vmem:[#allocation2 + $0x208] sm:$0xff] %v5822
    %5919 = vst [vmem:[#allocation2 + $0x210] sm:$0xff] %v5823
    %5920 = vst.msk [vmem:[#allocation2 + $0x218] sm:$0xff] %vm662, %v5824
    %5921 = vst [vmem:[#allocation2 + $0x220] sm:$0xff] %v5825
    %5922 = vst [vmem:[#allocation2 + $0x228] sm:$0xff] %v5826
    %5923 = vst [vmem:[#allocation2 + $0x230] sm:$0xff] %v5827
    %5924 = vst.msk [vmem:[#allocation2 + $0x238] sm:$0xff] %vm662, %v5828
    %5925 = vst [vmem:[#allocation2 + $0x240] sm:$0xff] %v5829
    %5926 = vst [vmem:[#allocation2 + $0x248] sm:$0xff] %v5830
    %5927 = vst [vmem:[#allocation2 + $0x250] sm:$0xff] %v5831
    %5928 = vst.msk [vmem:[#allocation2 + $0x258] sm:$0xff] %vm662, %v5832
    %5929 = vst [vmem:[#allocation2 + $0x260] sm:$0xff] %v5833
    %5930 = vst [vmem:[#allocation2 + $0x268] sm:$0xff] %v5834
    %5931 = vst [vmem:[#allocation2 + $0x270] sm:$0xff] %v5835
    %5932 = vst.msk [vmem:[#allocation2 + $0x278] sm:$0xff] %vm662, %v5836
    %5933 = vst [vmem:[#allocation2 + $0x280] sm:$0xff] %v5837
    %5934 = vst [vmem:[#allocation2 + $0x288] sm:$0xff] %v5838
    %5935 = vst [vmem:[#allocation2 + $0x290] sm:$0xff] %v5839
    %5936 = vst.msk [vmem:[#allocation2 + $0x298] sm:$0xff] %vm662, %v5840
    %5937 = vst [vmem:[#allocation2 + $0x2a0] sm:$0xff] %v5841
    %5938 = vst [vmem:[#allocation2 + $0x2a8] sm:$0xff] %v5842
    %5939 = vst [vmem:[#allocation2 + $0x2b0] sm:$0xff] %v5843
    %5940 = vst.msk [vmem:[#allocation2 + $0x2b8] sm:$0xff] %vm662, %v5844
    %5941 = vst [vmem:[#allocation2 + $0x2c0] sm:$0xff] %v5845
    %5942 = vst [vmem:[#allocation2 + $0x2c8] sm:$0xff] %v5846
    %5943 = vst [vmem:[#allocation2 + $0x2d0] sm:$0xff] %v5847
    %5944 = vst.msk [vmem:[#allocation2 + $0x2d8] sm:$0xff] %vm662, %v5848
    %5945 = vst [vmem:[#allocation2 + $0x2e0] sm:$0xff] %v5849
    %5946 = vst [vmem:[#allocation2 + $0x2e8] sm:$0xff] %v5850
    %5947 = vst [vmem:[#allocation2 + $0x2f0] sm:$0xff] %v5851
    %5948 = vst.msk [vmem:[#allocation2 + $0x2f8] sm:$0xff] %vm662, %v5852
    %5949 = vst [vmem:[#allocation2 + $0x300] sm:$0xff] %v5853
    %5950 = vst [vmem:[#allocation2 + $0x308] sm:$0xff] %v5854
    %5951 = vst [vmem:[#allocation2 + $0x310] sm:$0xff] %v5855
    %5952 = vst.msk [vmem:[#allocation2 + $0x318] sm:$0xff] %vm662, %v5856
    %5953 = vst [vmem:[#allocation2 + $0x320] sm:$0xff] %v5857
    %5954 = vst [vmem:[#allocation2 + $0x328] sm:$0xff] %v5858
    %5955 = vst [vmem:[#allocation2 + $0x330] sm:$0xff] %v5859
    %5956 = vst.msk [vmem:[#allocation2 + $0x338] sm:$0xff] %vm662, %v5860
    %5957 = vst [vmem:[#allocation2 + $0x340] sm:$0xff] %v5861
    %5958 = vst [vmem:[#allocation2 + $0x348] sm:$0xff] %v5862
    %5959 = vst [vmem:[#allocation2 + $0x350] sm:$0xff] %v5863
    %5960 = vst.msk [vmem:[#allocation2 + $0x358] sm:$0xff] %vm662, %v5864
    %5961 = vst [vmem:[#allocation2 + $0x360] sm:$0xff] %v5865
    %5962 = vst [vmem:[#allocation2 + $0x368] sm:$0xff] %v5866
    %5963 = vst [vmem:[#allocation2 + $0x370] sm:$0xff] %v5867
    %5964 = vst.msk [vmem:[#allocation2 + $0x378] sm:$0xff] %vm662, %v5868
    %v5965 = vld [vmem:[#allocation2 + $0x40] sm:$0xff]
    %v5966 = vld [vmem:[#allocation2 + $0x48] sm:$0xff]
    %v5967 = vld [vmem:[#allocation2 + $0x50] sm:$0xff]
    %v5968 = vld [vmem:[#allocation2 + $0x58] sm:$0xff]
    %v5969 = vld [vmem:[#allocation2 + $0x60] sm:$0xff]
    %v5970 = vld [vmem:[#allocation2 + $0x68] sm:$0xff]
    %v5971 = vld [vmem:[#allocation2 + $0x70] sm:$0xff]
    %v5972 = vld [vmem:[#allocation2 + $0x78] sm:$0xff]
    %v5973 = vld [vmem:[#allocation2 + $0x80] sm:$0xff]
    %v5974 = vld [vmem:[#allocation2 + $0x88] sm:$0xff]
    %v5975 = vld [vmem:[#allocation2 + $0x90] sm:$0xff]
    %v5976 = vld [vmem:[#allocation2 + $0x98] sm:$0xff]
    %v5977 = vld [vmem:[#allocation2 + $0xa0] sm:$0xff]
    %v5978 = vld [vmem:[#allocation2 + $0xa8] sm:$0xff]
    %v5979 = vld [vmem:[#allocation2 + $0xb0] sm:$0xff]
    %v5980 = vld [vmem:[#allocation2 + $0xb8] sm:$0xff]
    %v5981 = vld [vmem:[#allocation2 + $0xc0] sm:$0xff]
    %v5982 = vld [vmem:[#allocation2 + $0xc8] sm:$0xff]
    %v5983 = vld [vmem:[#allocation2 + $0xd0] sm:$0xff]
    %v5984 = vld [vmem:[#allocation2 + $0xd8] sm:$0xff]
    %v5985 = vld [vmem:[#allocation2 + $0xe0] sm:$0xff]
    %v5986 = vld [vmem:[#allocation2 + $0xe8] sm:$0xff]
    %v5987 = vld [vmem:[#allocation2 + $0xf0] sm:$0xff]
    %v5988 = vld [vmem:[#allocation2 + $0xf8] sm:$0xff]
    %v5989 = vld [vmem:[#allocation2 + $0x100] sm:$0xff]
    %v5990 = vld [vmem:[#allocation2 + $0x108] sm:$0xff]
    %v5991 = vld [vmem:[#allocation2 + $0x110] sm:$0xff]
    %v5992 = vld [vmem:[#allocation2 + $0x118] sm:$0xff]
    %v5993 = vld [vmem:[#allocation2 + $0x120] sm:$0xff]
    %v5994 = vld [vmem:[#allocation2 + $0x128] sm:$0xff]
    %v5995 = vld [vmem:[#allocation2 + $0x130] sm:$0xff]
    %v5996 = vld [vmem:[#allocation2 + $0x138] sm:$0xff]
    %v5997 = vld [vmem:[#allocation2 + $0x140] sm:$0xff]
    %v5998 = vld [vmem:[#allocation2 + $0x148] sm:$0xff]
    %v5999 = vld [vmem:[#allocation2 + $0x150] sm:$0xff]
    %v6000 = vld [vmem:[#allocation2 + $0x158] sm:$0xff]
    %v6001 = vld [vmem:[#allocation2 + $0x160] sm:$0xff]
    %v6002 = vld [vmem:[#allocation2 + $0x168] sm:$0xff]
    %v6003 = vld [vmem:[#allocation2 + $0x170] sm:$0xff]
    %v6004 = vld [vmem:[#allocation2 + $0x178] sm:$0xff]
    %v6005 = vld [vmem:[#allocation2 + $0x180] sm:$0xff]
    %v6006 = vld [vmem:[#allocation2 + $0x188] sm:$0xff]
    %v6007 = vld [vmem:[#allocation2 + $0x190] sm:$0xff]
    %v6008 = vld [vmem:[#allocation2 + $0x198] sm:$0xff]
    %v6009 = vld [vmem:[#allocation2 + $0x1a0] sm:$0xff]
    %v6010 = vld [vmem:[#allocation2 + $0x1a8] sm:$0xff]
    %v6011 = vld [vmem:[#allocation2 + $0x1b0] sm:$0xff]
    %v6012 = vld [vmem:[#allocation2 + $0x1b8] sm:$0xff]
    %v6013 = vld [vmem:[#allocation2 + $0x1c0] sm:$0xff]
    %v6014 = vld [vmem:[#allocation2 + $0x1c8] sm:$0xff]
    %v6015 = vld [vmem:[#allocation2 + $0x1d0] sm:$0xff]
    %v6016 = vld [vmem:[#allocation2 + $0x1d8] sm:$0xff]
    %v6017 = vld [vmem:[#allocation2 + $0x1e0] sm:$0xff]
    %v6018 = vld [vmem:[#allocation2 + $0x1e8] sm:$0xff]
    %v6019 = vld [vmem:[#allocation2 + $0x1f0] sm:$0xff]
    %v6020 = vld [vmem:[#allocation2 + $0x1f8] sm:$0xff]
    %v6021 = vld [vmem:[#allocation2 + $0x200] sm:$0xff]
    %v6022 = vld [vmem:[#allocation2 + $0x208] sm:$0xff]
    %v6023 = vld [vmem:[#allocation2 + $0x210] sm:$0xff]
    %v6024 = vld [vmem:[#allocation2 + $0x218] sm:$0xff]
    %v6025 = vld [vmem:[#allocation2 + $0x220] sm:$0xff]
    %v6026 = vld [vmem:[#allocation2 + $0x228] sm:$0xff]
    %v6027 = vld [vmem:[#allocation2 + $0x230] sm:$0xff]
    %v6028 = vld [vmem:[#allocation2 + $0x238] sm:$0xff]
    %v6029 = vld [vmem:[#allocation2 + $0x240] sm:$0xff]
    %v6030 = vld [vmem:[#allocation2 + $0x248] sm:$0xff]
    %v6031 = vld [vmem:[#allocation2 + $0x250] sm:$0xff]
    %v6032 = vld [vmem:[#allocation2 + $0x258] sm:$0xff]
    %v6033 = vld [vmem:[#allocation2 + $0x260] sm:$0xff]
    %v6034 = vld [vmem:[#allocation2 + $0x268] sm:$0xff]
    %v6035 = vld [vmem:[#allocation2 + $0x270] sm:$0xff]
    %v6036 = vld [vmem:[#allocation2 + $0x278] sm:$0xff]
    %v6037 = vld [vmem:[#allocation2 + $0x280] sm:$0xff]
    %v6038 = vld [vmem:[#allocation2 + $0x288] sm:$0xff]
    %v6039 = vld [vmem:[#allocation2 + $0x290] sm:$0xff]
    %v6040 = vld [vmem:[#allocation2 + $0x298] sm:$0xff]
    %v6041 = vld [vmem:[#allocation2 + $0x2a0] sm:$0xff]
    %v6042 = vld [vmem:[#allocation2 + $0x2a8] sm:$0xff]
    %v6043 = vld [vmem:[#allocation2 + $0x2b0] sm:$0xff]
    %v6044 = vld [vmem:[#allocation2 + $0x2b8] sm:$0xff]
    %v6045 = vld [vmem:[#allocation2 + $0x2c0] sm:$0xff]
    %v6046 = vld [vmem:[#allocation2 + $0x2c8] sm:$0xff]
    %v6047 = vld [vmem:[#allocation2 + $0x2d0] sm:$0xff]
    %v6048 = vld [vmem:[#allocation2 + $0x2d8] sm:$0xff]
    %v6049 = vld [vmem:[#allocation2 + $0x2e0] sm:$0xff]
    %v6050 = vld [vmem:[#allocation2 + $0x2e8] sm:$0xff]
    %v6051 = vld [vmem:[#allocation2 + $0x2f0] sm:$0xff]
    %v6052 = vld [vmem:[#allocation2 + $0x2f8] sm:$0xff]
    %v6053 = vld [vmem:[#allocation2 + $0x300] sm:$0xff]
    %v6054 = vld [vmem:[#allocation2 + $0x308] sm:$0xff]
    %v6055 = vld [vmem:[#allocation2 + $0x310] sm:$0xff]
    %v6056 = vld [vmem:[#allocation2 + $0x318] sm:$0xff]
    %v6057 = vld [vmem:[#allocation2 + $0x320] sm:$0xff]
    %v6058 = vld [vmem:[#allocation2 + $0x328] sm:$0xff]
    %v6059 = vld [vmem:[#allocation2 + $0x330] sm:$0xff]
    %v6060 = vld [vmem:[#allocation2 + $0x338] sm:$0xff]
    %v6061 = vld [vmem:[#allocation2 + $0x340] sm:$0xff]
    %v6062 = vld [vmem:[#allocation2 + $0x348] sm:$0xff]
    %v6063 = vld [vmem:[#allocation2 + $0x350] sm:$0xff]
    %v6064 = vld [vmem:[#allocation2 + $0x358] sm:$0xff]
    %v6065 = vld [vmem:[#allocation2 + $0x360] sm:$0xff]
    %v6066 = vld [vmem:[#allocation2 + $0x368] sm:$0xff]
    %v6067 = vld [vmem:[#allocation2 + $0x370] sm:$0xff]
    %v6068 = vld [vmem:[#allocation2 + $0x378] sm:$0xff]
    %s6069 = scalar_lea.vmem [#allocation7], 448
    %v6070 = vld [vmem:[%s6069] sm:$0xff]
    %v6071 = vld [vmem:[%s6069 + $0x8] sm:$0xff]
    %v6072 = vld [vmem:[%s6069 + $0x10] sm:$0xff]
    %v6073 = vld [vmem:[%s6069 + $0x18] sm:$0xff]
    %v6074 = vld [vmem:[%s6069 + $0x20] sm:$0xff]
    %v6075 = vld [vmem:[%s6069 + $0x28] sm:$0xff]
    %v6076 = vld [vmem:[%s6069 + $0x30] sm:$0xff]
    %v6077 = vld [vmem:[%s6069 + $0x38] sm:$0xff]
    %v6078 = vld [vmem:[%s6069 + $0x40] sm:$0xff]
    %v6079 = vld [vmem:[%s6069 + $0x48] sm:$0xff]
    %v6080 = vld [vmem:[%s6069 + $0x50] sm:$0xff]
    %v6081 = vld [vmem:[%s6069 + $0x58] sm:$0xff]
    %v6082 = vld [vmem:[%s6069 + $0x60] sm:$0xff]
    %v6083 = vld [vmem:[%s6069 + $0x68] sm:$0xff]
    %v6084 = vld [vmem:[%s6069 + $0x70] sm:$0xff]
    %v6085 = vld [vmem:[%s6069 + $0x78] sm:$0xff]
    %v6086 = vld [vmem:[%s6069 + $0x80] sm:$0xff]
    %v6087 = vld [vmem:[%s6069 + $0x88] sm:$0xff]
    %v6088 = vld [vmem:[%s6069 + $0x90] sm:$0xff]
    %v6089 = vld [vmem:[%s6069 + $0x98] sm:$0xff]
    %v6090 = vld [vmem:[%s6069 + $0xa0] sm:$0xff]
    %v6091 = vld [vmem:[%s6069 + $0xa8] sm:$0xff]
    %v6092 = vld [vmem:[%s6069 + $0xb0] sm:$0xff]
    %v6093 = vld [vmem:[%s6069 + $0xb8] sm:$0xff]
    %v6094 = vld [vmem:[%s6069 + $0xc0] sm:$0xff]
    %v6095 = vld [vmem:[%s6069 + $0xc8] sm:$0xff]
    %v6096 = vld [vmem:[%s6069 + $0xd0] sm:$0xff]
    %v6097 = vld [vmem:[%s6069 + $0xd8] sm:$0xff]
    %v6098 = vld [vmem:[%s6069 + $0xe0] sm:$0xff]
    %v6099 = vld [vmem:[%s6069 + $0xe8] sm:$0xff]
    %v6100 = vld [vmem:[%s6069 + $0xf0] sm:$0xff]
    %v6101 = vld [vmem:[%s6069 + $0xf8] sm:$0xff]
    %v6102 = vld [vmem:[%s6069 + $0x100] sm:$0xff]
    %v6103 = vld [vmem:[%s6069 + $0x108] sm:$0xff]
    %v6104 = vld [vmem:[%s6069 + $0x110] sm:$0xff]
    %v6105 = vld [vmem:[%s6069 + $0x118] sm:$0xff]
    %v6106 = vld [vmem:[%s6069 + $0x120] sm:$0xff]
    %v6107 = vld [vmem:[%s6069 + $0x128] sm:$0xff]
    %v6108 = vld [vmem:[%s6069 + $0x130] sm:$0xff]
    %v6109 = vld [vmem:[%s6069 + $0x138] sm:$0xff]
    %v6110 = vld [vmem:[%s6069 + $0x140] sm:$0xff]
    %v6111 = vld [vmem:[%s6069 + $0x148] sm:$0xff]
    %v6112 = vld [vmem:[%s6069 + $0x150] sm:$0xff]
    %v6113 = vld [vmem:[%s6069 + $0x158] sm:$0xff]
    %v6114 = vld [vmem:[%s6069 + $0x160] sm:$0xff]
    %v6115 = vld [vmem:[%s6069 + $0x168] sm:$0xff]
    %v6116 = vld [vmem:[%s6069 + $0x170] sm:$0xff]
    %v6117 = vld [vmem:[%s6069 + $0x178] sm:$0xff]
    %v6118 = vld [vmem:[%s6069 + $0x180] sm:$0xff]
    %v6119 = vld [vmem:[%s6069 + $0x188] sm:$0xff]
    %v6120 = vld [vmem:[%s6069 + $0x190] sm:$0xff]
    %v6121 = vld [vmem:[%s6069 + $0x198] sm:$0xff]
    %v6122 = vld [vmem:[%s6069 + $0x1a0] sm:$0xff]
    %v6123 = vld [vmem:[%s6069 + $0x1a8] sm:$0xff]
    %v6124 = vld [vmem:[%s6069 + $0x1b0] sm:$0xff]
    %v6125 = vld [vmem:[%s6069 + $0x1b8] sm:$0xff]
    %v6182 = vunpack.c.l.b16 %v6070
    %v6183 = vunpack.c.h.b16 %v6070
    %v6184 = vunpack.c.l.b16 %v6071
    %v6185 = vunpack.c.h.b16 %v6071
    %v6186 = vunpack.c.l.b16 %v6072
    %v6187 = vunpack.c.h.b16 %v6072
    %v6188 = vunpack.c.l.b16 %v6073
    %v6189 = vunpack.c.h.b16 %v6073
    %v6190 = vunpack.c.l.b16 %v6074
    %v6191 = vunpack.c.h.b16 %v6074
    %v6192 = vunpack.c.l.b16 %v6075
    %v6193 = vunpack.c.h.b16 %v6075
    %v6194 = vunpack.c.l.b16 %v6076
    %v6195 = vunpack.c.h.b16 %v6076
    %v6196 = vunpack.c.l.b16 %v6077
    %v6197 = vunpack.c.h.b16 %v6077
    %v6198 = vunpack.c.l.b16 %v6078
    %v6199 = vunpack.c.h.b16 %v6078
    %v6200 = vunpack.c.l.b16 %v6079
    %v6201 = vunpack.c.h.b16 %v6079
    %v6202 = vunpack.c.l.b16 %v6080
    %v6203 = vunpack.c.h.b16 %v6080
    %v6204 = vunpack.c.l.b16 %v6081
    %v6205 = vunpack.c.h.b16 %v6081
    %v6206 = vunpack.c.l.b16 %v6082
    %v6207 = vunpack.c.h.b16 %v6082
    %v6208 = vunpack.c.l.b16 %v6083
    %v6209 = vunpack.c.h.b16 %v6083
    %v6210 = vunpack.c.l.b16 %v6084
    %v6211 = vunpack.c.h.b16 %v6084
    %v6212 = vunpack.c.l.b16 %v6085
    %v6213 = vunpack.c.h.b16 %v6085
    %v6214 = vunpack.c.l.b16 %v6086
    %v6215 = vunpack.c.h.b16 %v6086
    %v6216 = vunpack.c.l.b16 %v6087
    %v6217 = vunpack.c.h.b16 %v6087
    %v6218 = vunpack.c.l.b16 %v6088
    %v6219 = vunpack.c.h.b16 %v6088
    %v6220 = vunpack.c.l.b16 %v6089
    %v6221 = vunpack.c.h.b16 %v6089
    %v6222 = vunpack.c.l.b16 %v6090
    %v6223 = vunpack.c.h.b16 %v6090
    %v6224 = vunpack.c.l.b16 %v6091
    %v6225 = vunpack.c.h.b16 %v6091
    %v6226 = vunpack.c.l.b16 %v6092
    %v6227 = vunpack.c.h.b16 %v6092
    %v6228 = vunpack.c.l.b16 %v6093
    %v6229 = vunpack.c.h.b16 %v6093
    %v6230 = vunpack.c.l.b16 %v6094
    %v6231 = vunpack.c.h.b16 %v6094
    %v6232 = vunpack.c.l.b16 %v6095
    %v6233 = vunpack.c.h.b16 %v6095
    %v6234 = vunpack.c.l.b16 %v6096
    %v6235 = vunpack.c.h.b16 %v6096
    %v6236 = vunpack.c.l.b16 %v6097
    %v6237 = vunpack.c.h.b16 %v6097
    %v6238 = vunpack.c.l.b16 %v6098
    %v6239 = vunpack.c.h.b16 %v6098
    %v6240 = vunpack.c.l.b16 %v6099
    %v6241 = vunpack.c.h.b16 %v6099
    %v6242 = vunpack.c.l.b16 %v6100
    %v6243 = vunpack.c.h.b16 %v6100
    %v6244 = vunpack.c.l.b16 %v6101
    %v6245 = vunpack.c.h.b16 %v6101
    %v6246 = vunpack.c.l.b16 %v6102
    %v6247 = vunpack.c.h.b16 %v6102
    %v6248 = vunpack.c.l.b16 %v6103
    %v6249 = vunpack.c.h.b16 %v6103
    %v6250 = vunpack.c.l.b16 %v6104
    %v6251 = vunpack.c.h.b16 %v6104
    %v6252 = vunpack.c.l.b16 %v6105
    %v6253 = vunpack.c.h.b16 %v6105
    %v6254 = vunpack.c.l.b16 %v6106
    %v6255 = vunpack.c.h.b16 %v6106
    %v6256 = vunpack.c.l.b16 %v6107
    %v6257 = vunpack.c.h.b16 %v6107
    %v6258 = vunpack.c.l.b16 %v6108
    %v6259 = vunpack.c.h.b16 %v6108
    %v6260 = vunpack.c.l.b16 %v6109
    %v6261 = vunpack.c.h.b16 %v6109
    %v6262 = vunpack.c.l.b16 %v6110
    %v6263 = vunpack.c.h.b16 %v6110
    %v6264 = vunpack.c.l.b16 %v6111
    %v6265 = vunpack.c.h.b16 %v6111
    %v6266 = vunpack.c.l.b16 %v6112
    %v6267 = vunpack.c.h.b16 %v6112
    %v6268 = vunpack.c.l.b16 %v6113
    %v6269 = vunpack.c.h.b16 %v6113
    %v6270 = vunpack.c.l.b16 %v6114
    %v6271 = vunpack.c.h.b16 %v6114
    %v6272 = vunpack.c.l.b16 %v6115
    %v6273 = vunpack.c.h.b16 %v6115
    %v6274 = vunpack.c.l.b16 %v6116
    %v6275 = vunpack.c.h.b16 %v6116
    %v6276 = vunpack.c.l.b16 %v6117
    %v6277 = vunpack.c.h.b16 %v6117
    %v6278 = vunpack.c.l.b16 %v6118
    %v6279 = vunpack.c.h.b16 %v6118
    %v6280 = vunpack.c.l.b16 %v6119
    %v6281 = vunpack.c.h.b16 %v6119
    %v6282 = vunpack.c.l.b16 %v6120
    %v6283 = vunpack.c.h.b16 %v6120
    %v6284 = vunpack.c.l.b16 %v6121
    %v6285 = vunpack.c.h.b16 %v6121
    %v6286 = vunpack.c.l.b16 %v6122
    %v6287 = vunpack.c.h.b16 %v6122
    %v6288 = vunpack.c.l.b16 %v6123
    %v6289 = vunpack.c.h.b16 %v6123
    %v6290 = vunpack.c.l.b16 %v6124
    %v6291 = vunpack.c.h.b16 %v6124
    %v6292 = vunpack.c.l.b16 %v6125
    %v6293 = vunpack.c.h.b16 %v6125
    %v6294 = vpack.c.b16 %v6186, %v6182
    %v6295 = vpack.c.b16 %v6187, %v6183
    %v6296 = vpack.c.b16 %v6188, %v6184
    %v6297 = vpack.c.b16 %v6189, %v6185
    %v6298 = vpack.c.b16 %v6194, %v6190
    %v6299 = vpack.c.b16 %v6195, %v6191
    %v6300 = vpack.c.b16 %v6196, %v6192
    %v6301 = vpack.c.b16 %v6197, %v6193
    %v6302 = vpack.c.b16 %v6202, %v6198
    %v6303 = vpack.c.b16 %v6203, %v6199
    %v6304 = vpack.c.b16 %v6204, %v6200
    %v6305 = vpack.c.b16 %v6205, %v6201
    %v6306 = vpack.c.b16 %v6210, %v6206
    %v6307 = vpack.c.b16 %v6211, %v6207
    %v6308 = vpack.c.b16 %v6212, %v6208
    %v6309 = vpack.c.b16 %v6213, %v6209
    %v6310 = vpack.c.b16 %v6218, %v6214
    %v6311 = vpack.c.b16 %v6219, %v6215
    %v6312 = vpack.c.b16 %v6220, %v6216
    %v6313 = vpack.c.b16 %v6221, %v6217
    %v6314 = vpack.c.b16 %v6226, %v6222
    %v6315 = vpack.c.b16 %v6227, %v6223
    %v6316 = vpack.c.b16 %v6228, %v6224
    %v6317 = vpack.c.b16 %v6229, %v6225
    %v6318 = vpack.c.b16 %v6234, %v6230
    %v6319 = vpack.c.b16 %v6235, %v6231
    %v6320 = vpack.c.b16 %v6236, %v6232
    %v6321 = vpack.c.b16 %v6237, %v6233
    %v6322 = vpack.c.b16 %v6242, %v6238
    %v6323 = vpack.c.b16 %v6243, %v6239
    %v6324 = vpack.c.b16 %v6244, %v6240
    %v6325 = vpack.c.b16 %v6245, %v6241
    %v6326 = vpack.c.b16 %v6250, %v6246
    %v6327 = vpack.c.b16 %v6251, %v6247
    %v6328 = vpack.c.b16 %v6252, %v6248
    %v6329 = vpack.c.b16 %v6253, %v6249
    %v6330 = vpack.c.b16 %v6258, %v6254
    %v6331 = vpack.c.b16 %v6259, %v6255
    %v6332 = vpack.c.b16 %v6260, %v6256
    %v6333 = vpack.c.b16 %v6261, %v6257
    %v6334 = vpack.c.b16 %v6266, %v6262
    %v6335 = vpack.c.b16 %v6267, %v6263
    %v6336 = vpack.c.b16 %v6268, %v6264
    %v6337 = vpack.c.b16 %v6269, %v6265
    %v6338 = vpack.c.b16 %v6274, %v6270
    %v6339 = vpack.c.b16 %v6275, %v6271
    %v6340 = vpack.c.b16 %v6276, %v6272
    %v6341 = vpack.c.b16 %v6277, %v6273
    %v6342 = vpack.c.b16 %v6282, %v6278
    %v6343 = vpack.c.b16 %v6283, %v6279
    %v6344 = vpack.c.b16 %v6284, %v6280
    %v6345 = vpack.c.b16 %v6285, %v6281
    %v6346 = vpack.c.b16 %v6290, %v6286
    %v6347 = vpack.c.b16 %v6291, %v6287
    %v6348 = vpack.c.b16 %v6292, %v6288
    %v6349 = vpack.c.b16 %v6293, %v6289
    %6406 = vmatpush.bf16.msra.mxu0 %v6322
    %6407 = vmatpush.bf16.msra.mxu0 %v6318
    %6408 = vmatpush.bf16.msra.mxu0 %v6314
    %6409 = vmatpush.bf16.msra.mxu0 %v6310
    %6410 = vmatpush.bf16.msra.mxu0 %v6306
    %6411 = vmatpush.bf16.msra.mxu0 %v6302
    %6412 = vmatpush.bf16.msra.mxu0 %v6298
    %6413 = vmatpush.bf16.msra.mxu0 %v6294
    %6414 = vmatmul.bf16.gmra.mxu0 %v3681
    %v6415 = vpop.f32.mrf.mxu0
    %v6416 = vadd.f32 0.0, %v6415
    %v6417 = vpop.f32.mrf.mxu0
    %v6418 = vadd.f32 0.0, %v6417
    %6419 = vmatmul.bf16.gmra.mxu0 %v3683
    %v6420 = vpop.f32.mrf.mxu0
    %v6421 = vadd.f32 0.0, %v6420
    %v6422 = vpop.f32.mrf.mxu0
    %v6423 = vadd.f32 0.0, %v6422
    %6424 = vmatmul.bf16.gmra.mxu0 %v3685
    %v6425 = vpop.f32.mrf.mxu0
    %v6426 = vadd.f32 0.0, %v6425
    %v6427 = vpop.f32.mrf.mxu0
    %v6428 = vadd.f32 0.0, %v6427
    %6429 = vmatmul.bf16.gmra.mxu0 %v3687
    %v6430 = vpop.f32.mrf.mxu0
    %v6431 = vadd.f32 0.0, %v6430
    %v6432 = vpop.f32.mrf.mxu0
    %v6433 = vadd.f32 0.0, %v6432
    %6434 = vmatmul.bf16.gmra.mxu0 %v3689
    %v6435 = vpop.f32.mrf.mxu0
    %v6436 = vadd.f32 0.0, %v6435
    %v6437 = vpop.f32.mrf.mxu0
    %v6438 = vadd.f32 0.0, %v6437
    %6439 = vmatmul.bf16.gmra.mxu0 %v3691
    %v6440 = vpop.f32.mrf.mxu0
    %v6441 = vadd.f32 0.0, %v6440
    %v6442 = vpop.f32.mrf.mxu0
    %v6443 = vadd.f32 0.0, %v6442
    %6444 = vmatmul.bf16.gmra.mxu0 %v3693
    %v6445 = vpop.f32.mrf.mxu0
    %v6446 = vadd.f32 0.0, %v6445
    %v6447 = vpop.f32.mrf.mxu0
    %v6448 = vadd.f32 0.0, %v6447
    %6449 = vmatmul.bf16.gmra.mxu0 %v3695
    %v6450 = vpop.f32.mrf.mxu0
    %v6451 = vadd.f32 0.0, %v6450
    %v6452 = vpop.f32.mrf.mxu0
    %v6453 = vadd.f32 0.0, %v6452
    %6454 = vmatmul.bf16.gmra.mxu0 %v3697
    %v6455 = vpop.f32.mrf.mxu0
    %v6456 = vadd.f32 0.0, %v6455
    %v6457 = vpop.f32.mrf.mxu0
    %v6458 = vadd.f32 0.0, %v6457
    %6459 = vmatmul.bf16.gmra.mxu0 %v3699
    %v6460 = vpop.f32.mrf.mxu0
    %v6461 = vadd.f32 0.0, %v6460
    %v6462 = vpop.f32.mrf.mxu0
    %v6463 = vadd.f32 0.0, %v6462
    %6464 = vmatmul.bf16.gmra.mxu0 %v3701
    %v6465 = vpop.f32.mrf.mxu0
    %v6466 = vadd.f32 0.0, %v6465
    %v6467 = vpop.f32.mrf.mxu0
    %v6468 = vadd.f32 0.0, %v6467
    %6469 = vmatmul.bf16.gmra.mxu0 %v3703
    %v6470 = vpop.f32.mrf.mxu0
    %v6471 = vadd.f32 0.0, %v6470
    %v6472 = vpop.f32.mrf.mxu0
    %v6473 = vadd.f32 0.0, %v6472
    %6474 = vmatmul.bf16.gmra.mxu0 %v3705
    %v6475 = vpop.f32.mrf.mxu0
    %v6476 = vadd.f32 0.0, %v6475
    %v6477 = vpop.f32.mrf.mxu0
    %v6478 = vadd.f32 0.0, %v6477
    %6479 = vdwg.mxu0
    %6480 = vmatpush.bf16.msra.mxu0 0
    %6481 = vmatpush.bf16.msra.mxu0 0
    %6482 = vmatpush.bf16.msra.mxu0 %v6346
    %6483 = vmatpush.bf16.msra.mxu0 %v6342
    %6484 = vmatpush.bf16.msra.mxu0 %v6338
    %6485 = vmatpush.bf16.msra.mxu0 %v6334
    %6486 = vmatpush.bf16.msra.mxu0 %v6330
    %6487 = vmatpush.bf16.msra.mxu0 %v6326
    %6488 = vmatmul.bf16.gmra.mxu0 %v4004
    %v6489 = vpop.f32.mrf.mxu0
    %v6490 = vadd.f32 %v6416, %v6489
    %v6491 = vpop.f32.mrf.mxu0
    %v6492 = vadd.f32 %v6418, %v6491
    %6493 = vmatmul.bf16.gmra.mxu0 %v4007
    %v6494 = vpop.f32.mrf.mxu0
    %v6495 = vadd.f32 %v6421, %v6494
    %v6496 = vpop.f32.mrf.mxu0
    %v6497 = vadd.f32 %v6423, %v6496
    %6498 = vmatmul.bf16.gmra.mxu0 %v4010
    %v6499 = vpop.f32.mrf.mxu0
    %v6500 = vadd.f32 %v6426, %v6499
    %v6501 = vpop.f32.mrf.mxu0
    %v6502 = vadd.f32 %v6428, %v6501
    %6503 = vmatmul.bf16.gmra.mxu0 %v4013
    %v6504 = vpop.f32.mrf.mxu0
    %v6505 = vadd.f32 %v6431, %v6504
    %v6506 = vpop.f32.mrf.mxu0
    %v6507 = vadd.f32 %v6433, %v6506
    %6508 = vmatmul.bf16.gmra.mxu0 %v4016
    %v6509 = vpop.f32.mrf.mxu0
    %v6510 = vadd.f32 %v6436, %v6509
    %v6511 = vpop.f32.mrf.mxu0
    %v6512 = vadd.f32 %v6438, %v6511
    %6513 = vmatmul.bf16.gmra.mxu0 %v4019
    %v6514 = vpop.f32.mrf.mxu0
    %v6515 = vadd.f32 %v6441, %v6514
    %v6516 = vpop.f32.mrf.mxu0
    %v6517 = vadd.f32 %v6443, %v6516
    %6518 = vmatmul.bf16.gmra.mxu0 %v4022
    %v6519 = vpop.f32.mrf.mxu0
    %v6520 = vadd.f32 %v6446, %v6519
    %v6521 = vpop.f32.mrf.mxu0
    %v6522 = vadd.f32 %v6448, %v6521
    %6523 = vmatmul.bf16.gmra.mxu0 %v4025
    %v6524 = vpop.f32.mrf.mxu0
    %v6525 = vadd.f32 %v6451, %v6524
    %v6526 = vpop.f32.mrf.mxu0
    %v6527 = vadd.f32 %v6453, %v6526
    %6528 = vmatmul.bf16.gmra.mxu0 %v4028
    %v6529 = vpop.f32.mrf.mxu0
    %v6530 = vadd.f32 %v6456, %v6529
    %v6531 = vpop.f32.mrf.mxu0
    %v6532 = vadd.f32 %v6458, %v6531
    %6533 = vmatmul.bf16.gmra.mxu0 %v4031
    %v6534 = vpop.f32.mrf.mxu0
    %v6535 = vadd.f32 %v6461, %v6534
    %v6536 = vpop.f32.mrf.mxu0
    %v6537 = vadd.f32 %v6463, %v6536
    %6538 = vmatmul.bf16.gmra.mxu0 %v4034
    %v6539 = vpop.f32.mrf.mxu0
    %v6540 = vadd.f32 %v6466, %v6539
    %v6541 = vpop.f32.mrf.mxu0
    %v6542 = vadd.f32 %v6468, %v6541
    %6543 = vmatmul.bf16.gmra.mxu0 %v4037
    %v6544 = vpop.f32.mrf.mxu0
    %v6545 = vadd.f32 %v6471, %v6544
    %v6546 = vpop.f32.mrf.mxu0
    %v6547 = vadd.f32 %v6473, %v6546
    %6548 = vmatmul.bf16.gmra.mxu0 %v4040
    %v6549 = vpop.f32.mrf.mxu0
    %v6550 = vadd.f32 %v6476, %v6549
    %v6551 = vpop.f32.mrf.mxu0
    %v6552 = vadd.f32 %v6478, %v6551
    %6553 = vdwg.mxu0
    %6554 = vmatpush.bf16.msra.mxu0 %v6323
    %6555 = vmatpush.bf16.msra.mxu0 %v6319
    %6556 = vmatpush.bf16.msra.mxu0 %v6315
    %6557 = vmatpush.bf16.msra.mxu0 %v6311
    %6558 = vmatpush.bf16.msra.mxu0 %v6307
    %6559 = vmatpush.bf16.msra.mxu0 %v6303
    %6560 = vmatpush.bf16.msra.mxu0 %v6299
    %6561 = vmatpush.bf16.msra.mxu0 %v6295
    %6562 = vmatmul.bf16.gmra.mxu0 %v3681
    %v6563 = vpop.f32.mrf.mxu0
    %v6564 = vadd.f32 0.0, %v6563
    %v6565 = vpop.f32.mrf.mxu0
    %v6566 = vadd.f32 0.0, %v6565
    %6567 = vmatmul.bf16.gmra.mxu0 %v3683
    %v6568 = vpop.f32.mrf.mxu0
    %v6569 = vadd.f32 0.0, %v6568
    %v6570 = vpop.f32.mrf.mxu0
    %v6571 = vadd.f32 0.0, %v6570
    %6572 = vmatmul.bf16.gmra.mxu0 %v3685
    %v6573 = vpop.f32.mrf.mxu0
    %v6574 = vadd.f32 0.0, %v6573
    %v6575 = vpop.f32.mrf.mxu0
    %v6576 = vadd.f32 0.0, %v6575
    %6577 = vmatmul.bf16.gmra.mxu0 %v3687
    %v6578 = vpop.f32.mrf.mxu0
    %v6579 = vadd.f32 0.0, %v6578
    %v6580 = vpop.f32.mrf.mxu0
    %v6581 = vadd.f32 0.0, %v6580
    %6582 = vmatmul.bf16.gmra.mxu0 %v3689
    %v6583 = vpop.f32.mrf.mxu0
    %v6584 = vadd.f32 0.0, %v6583
    %v6585 = vpop.f32.mrf.mxu0
    %v6586 = vadd.f32 0.0, %v6585
    %6587 = vmatmul.bf16.gmra.mxu0 %v3691
    %v6588 = vpop.f32.mrf.mxu0
    %v6589 = vadd.f32 0.0, %v6588
    %v6590 = vpop.f32.mrf.mxu0
    %v6591 = vadd.f32 0.0, %v6590
    %6592 = vmatmul.bf16.gmra.mxu0 %v3693
    %v6593 = vpop.f32.mrf.mxu0
    %v6594 = vadd.f32 0.0, %v6593
    %v6595 = vpop.f32.mrf.mxu0
    %v6596 = vadd.f32 0.0, %v6595
    %6597 = vmatmul.bf16.gmra.mxu0 %v3695
    %v6598 = vpop.f32.mrf.mxu0
    %v6599 = vadd.f32 0.0, %v6598
    %v6600 = vpop.f32.mrf.mxu0
    %v6601 = vadd.f32 0.0, %v6600
    %6602 = vmatmul.bf16.gmra.mxu0 %v3697
    %v6603 = vpop.f32.mrf.mxu0
    %v6604 = vadd.f32 0.0, %v6603
    %v6605 = vpop.f32.mrf.mxu0
    %v6606 = vadd.f32 0.0, %v6605
    %6607 = vmatmul.bf16.gmra.mxu0 %v3699
    %v6608 = vpop.f32.mrf.mxu0
    %v6609 = vadd.f32 0.0, %v6608
    %v6610 = vpop.f32.mrf.mxu0
    %v6611 = vadd.f32 0.0, %v6610
    %6612 = vmatmul.bf16.gmra.mxu0 %v3701
    %v6613 = vpop.f32.mrf.mxu0
    %v6614 = vadd.f32 0.0, %v6613
    %v6615 = vpop.f32.mrf.mxu0
    %v6616 = vadd.f32 0.0, %v6615
    %6617 = vmatmul.bf16.gmra.mxu0 %v3703
    %v6618 = vpop.f32.mrf.mxu0
    %v6619 = vadd.f32 0.0, %v6618
    %v6620 = vpop.f32.mrf.mxu0
    %v6621 = vadd.f32 0.0, %v6620
    %6622 = vmatmul.bf16.gmra.mxu0 %v3705
    %v6623 = vpop.f32.mrf.mxu0
    %v6624 = vadd.f32 0.0, %v6623
    %v6625 = vpop.f32.mrf.mxu0
    %v6626 = vadd.f32 0.0, %v6625
    %6627 = vdwg.mxu0
    %6628 = vmatpush.bf16.msra.mxu0 0
    %6629 = vmatpush.bf16.msra.mxu0 0
    %6630 = vmatpush.bf16.msra.mxu0 %v6347
    %6631 = vmatpush.bf16.msra.mxu0 %v6343
    %6632 = vmatpush.bf16.msra.mxu0 %v6339
    %6633 = vmatpush.bf16.msra.mxu0 %v6335
    %6634 = vmatpush.bf16.msra.mxu0 %v6331
    %6635 = vmatpush.bf16.msra.mxu0 %v6327
    %6636 = vmatmul.bf16.gmra.mxu0 %v4004
    %v6637 = vpop.f32.mrf.mxu0
    %v6638 = vadd.f32 %v6564, %v6637
    %v6639 = vpop.f32.mrf.mxu0
    %v6640 = vadd.f32 %v6566, %v6639
    %6641 = vmatmul.bf16.gmra.mxu0 %v4007
    %v6642 = vpop.f32.mrf.mxu0
    %v6643 = vadd.f32 %v6569, %v6642
    %v6644 = vpop.f32.mrf.mxu0
    %v6645 = vadd.f32 %v6571, %v6644
    %6646 = vmatmul.bf16.gmra.mxu0 %v4010
    %v6647 = vpop.f32.mrf.mxu0
    %v6648 = vadd.f32 %v6574, %v6647
    %v6649 = vpop.f32.mrf.mxu0
    %v6650 = vadd.f32 %v6576, %v6649
    %6651 = vmatmul.bf16.gmra.mxu0 %v4013
    %v6652 = vpop.f32.mrf.mxu0
    %v6653 = vadd.f32 %v6579, %v6652
    %v6654 = vpop.f32.mrf.mxu0
    %v6655 = vadd.f32 %v6581, %v6654
    %6656 = vmatmul.bf16.gmra.mxu0 %v4016
    %v6657 = vpop.f32.mrf.mxu0
    %v6658 = vadd.f32 %v6584, %v6657
    %v6659 = vpop.f32.mrf.mxu0
    %v6660 = vadd.f32 %v6586, %v6659
    %6661 = vmatmul.bf16.gmra.mxu0 %v4019
    %v6662 = vpop.f32.mrf.mxu0
    %v6663 = vadd.f32 %v6589, %v6662
    %v6664 = vpop.f32.mrf.mxu0
    %v6665 = vadd.f32 %v6591, %v6664
    %6666 = vmatmul.bf16.gmra.mxu0 %v4022
    %v6667 = vpop.f32.mrf.mxu0
    %v6668 = vadd.f32 %v6594, %v6667
    %v6669 = vpop.f32.mrf.mxu0
    %v6670 = vadd.f32 %v6596, %v6669
    %6671 = vmatmul.bf16.gmra.mxu0 %v4025
    %v6672 = vpop.f32.mrf.mxu0
    %v6673 = vadd.f32 %v6599, %v6672
    %v6674 = vpop.f32.mrf.mxu0
    %v6675 = vadd.f32 %v6601, %v6674
    %6676 = vmatmul.bf16.gmra.mxu0 %v4028
    %v6677 = vpop.f32.mrf.mxu0
    %v6678 = vadd.f32 %v6604, %v6677
    %v6679 = vpop.f32.mrf.mxu0
    %v6680 = vadd.f32 %v6606, %v6679
    %6681 = vmatmul.bf16.gmra.mxu0 %v4031
    %v6682 = vpop.f32.mrf.mxu0
    %v6683 = vadd.f32 %v6609, %v6682
    %v6684 = vpop.f32.mrf.mxu0
    %v6685 = vadd.f32 %v6611, %v6684
    %6686 = vmatmul.bf16.gmra.mxu0 %v4034
    %v6687 = vpop.f32.mrf.mxu0
    %v6688 = vadd.f32 %v6614, %v6687
    %v6689 = vpop.f32.mrf.mxu0
    %v6690 = vadd.f32 %v6616, %v6689
    %6691 = vmatmul.bf16.gmra.mxu0 %v4037
    %v6692 = vpop.f32.mrf.mxu0
    %v6693 = vadd.f32 %v6619, %v6692
    %v6694 = vpop.f32.mrf.mxu0
    %v6695 = vadd.f32 %v6621, %v6694
    %6696 = vmatmul.bf16.gmra.mxu0 %v4040
    %v6697 = vpop.f32.mrf.mxu0
    %v6698 = vadd.f32 %v6624, %v6697
    %v6699 = vpop.f32.mrf.mxu0
    %v6700 = vadd.f32 %v6626, %v6699
    %6701 = vdwg.mxu0
    %6702 = vmatpush.bf16.msra.mxu0 %v6324
    %6703 = vmatpush.bf16.msra.mxu0 %v6320
    %6704 = vmatpush.bf16.msra.mxu0 %v6316
    %6705 = vmatpush.bf16.msra.mxu0 %v6312
    %6706 = vmatpush.bf16.msra.mxu0 %v6308
    %6707 = vmatpush.bf16.msra.mxu0 %v6304
    %6708 = vmatpush.bf16.msra.mxu0 %v6300
    %6709 = vmatpush.bf16.msra.mxu0 %v6296
    %6710 = vmatmul.bf16.gmra.mxu0 %v3681
    %v6711 = vpop.f32.mrf.mxu0
    %v6712 = vadd.f32 0.0, %v6711
    %v6713 = vpop.f32.mrf.mxu0
    %v6714 = vadd.f32 0.0, %v6713
    %6715 = vmatmul.bf16.gmra.mxu0 %v3683
    %v6716 = vpop.f32.mrf.mxu0
    %v6717 = vadd.f32 0.0, %v6716
    %v6718 = vpop.f32.mrf.mxu0
    %v6719 = vadd.f32 0.0, %v6718
    %6720 = vmatmul.bf16.gmra.mxu0 %v3685
    %v6721 = vpop.f32.mrf.mxu0
    %v6722 = vadd.f32 0.0, %v6721
    %v6723 = vpop.f32.mrf.mxu0
    %v6724 = vadd.f32 0.0, %v6723
    %6725 = vmatmul.bf16.gmra.mxu0 %v3687
    %v6726 = vpop.f32.mrf.mxu0
    %v6727 = vadd.f32 0.0, %v6726
    %v6728 = vpop.f32.mrf.mxu0
    %v6729 = vadd.f32 0.0, %v6728
    %6730 = vmatmul.bf16.gmra.mxu0 %v3689
    %v6731 = vpop.f32.mrf.mxu0
    %v6732 = vadd.f32 0.0, %v6731
    %v6733 = vpop.f32.mrf.mxu0
    %v6734 = vadd.f32 0.0, %v6733
    %6735 = vmatmul.bf16.gmra.mxu0 %v3691
    %v6736 = vpop.f32.mrf.mxu0
    %v6737 = vadd.f32 0.0, %v6736
    %v6738 = vpop.f32.mrf.mxu0
    %v6739 = vadd.f32 0.0, %v6738
    %6740 = vmatmul.bf16.gmra.mxu0 %v3693
    %v6741 = vpop.f32.mrf.mxu0
    %v6742 = vadd.f32 0.0, %v6741
    %v6743 = vpop.f32.mrf.mxu0
    %v6744 = vadd.f32 0.0, %v6743
    %6745 = vmatmul.bf16.gmra.mxu0 %v3695
    %v6746 = vpop.f32.mrf.mxu0
    %v6747 = vadd.f32 0.0, %v6746
    %v6748 = vpop.f32.mrf.mxu0
    %v6749 = vadd.f32 0.0, %v6748
    %6750 = vmatmul.bf16.gmra.mxu0 %v3697
    %v6751 = vpop.f32.mrf.mxu0
    %v6752 = vadd.f32 0.0, %v6751
    %v6753 = vpop.f32.mrf.mxu0
    %v6754 = vadd.f32 0.0, %v6753
    %6755 = vmatmul.bf16.gmra.mxu0 %v3699
    %v6756 = vpop.f32.mrf.mxu0
    %v6757 = vadd.f32 0.0, %v6756
    %v6758 = vpop.f32.mrf.mxu0
    %v6759 = vadd.f32 0.0, %v6758
    %6760 = vmatmul.bf16.gmra.mxu0 %v3701
    %v6761 = vpop.f32.mrf.mxu0
    %v6762 = vadd.f32 0.0, %v6761
    %v6763 = vpop.f32.mrf.mxu0
    %v6764 = vadd.f32 0.0, %v6763
    %6765 = vmatmul.bf16.gmra.mxu0 %v3703
    %v6766 = vpop.f32.mrf.mxu0
    %v6767 = vadd.f32 0.0, %v6766
    %v6768 = vpop.f32.mrf.mxu0
    %v6769 = vadd.f32 0.0, %v6768
    %6770 = vmatmul.bf16.gmra.mxu0 %v3705
    %v6771 = vpop.f32.mrf.mxu0
    %v6772 = vadd.f32 0.0, %v6771
    %v6773 = vpop.f32.mrf.mxu0
    %v6774 = vadd.f32 0.0, %v6773
    %6775 = vdwg.mxu0
    %6776 = vmatpush.bf16.msra.mxu0 0
    %6777 = vmatpush.bf16.msra.mxu0 0
    %6778 = vmatpush.bf16.msra.mxu0 %v6348
    %6779 = vmatpush.bf16.msra.mxu0 %v6344
    %6780 = vmatpush.bf16.msra.mxu0 %v6340
    %6781 = vmatpush.bf16.msra.mxu0 %v6336
    %6782 = vmatpush.bf16.msra.mxu0 %v6332
    %6783 = vmatpush.bf16.msra.mxu0 %v6328
    %6784 = vmatmul.bf16.gmra.mxu0 %v4004
    %v6785 = vpop.f32.mrf.mxu0
    %v6786 = vadd.f32 %v6712, %v6785
    %v6787 = vpop.f32.mrf.mxu0
    %v6788 = vadd.f32 %v6714, %v6787
    %6789 = vmatmul.bf16.gmra.mxu0 %v4007
    %v6790 = vpop.f32.mrf.mxu0
    %v6791 = vadd.f32 %v6717, %v6790
    %v6792 = vpop.f32.mrf.mxu0
    %v6793 = vadd.f32 %v6719, %v6792
    %6794 = vmatmul.bf16.gmra.mxu0 %v4010
    %v6795 = vpop.f32.mrf.mxu0
    %v6796 = vadd.f32 %v6722, %v6795
    %v6797 = vpop.f32.mrf.mxu0
    %v6798 = vadd.f32 %v6724, %v6797
    %6799 = vmatmul.bf16.gmra.mxu0 %v4013
    %v6800 = vpop.f32.mrf.mxu0
    %v6801 = vadd.f32 %v6727, %v6800
    %v6802 = vpop.f32.mrf.mxu0
    %v6803 = vadd.f32 %v6729, %v6802
    %6804 = vmatmul.bf16.gmra.mxu0 %v4016
    %v6805 = vpop.f32.mrf.mxu0
    %v6806 = vadd.f32 %v6732, %v6805
    %v6807 = vpop.f32.mrf.mxu0
    %v6808 = vadd.f32 %v6734, %v6807
    %6809 = vmatmul.bf16.gmra.mxu0 %v4019
    %v6810 = vpop.f32.mrf.mxu0
    %v6811 = vadd.f32 %v6737, %v6810
    %v6812 = vpop.f32.mrf.mxu0
    %v6813 = vadd.f32 %v6739, %v6812
    %6814 = vmatmul.bf16.gmra.mxu0 %v4022
    %v6815 = vpop.f32.mrf.mxu0
    %v6816 = vadd.f32 %v6742, %v6815
    %v6817 = vpop.f32.mrf.mxu0
    %v6818 = vadd.f32 %v6744, %v6817
    %6819 = vmatmul.bf16.gmra.mxu0 %v4025
    %v6820 = vpop.f32.mrf.mxu0
    %v6821 = vadd.f32 %v6747, %v6820
    %v6822 = vpop.f32.mrf.mxu0
    %v6823 = vadd.f32 %v6749, %v6822
    %6824 = vmatmul.bf16.gmra.mxu0 %v4028
    %v6825 = vpop.f32.mrf.mxu0
    %v6826 = vadd.f32 %v6752, %v6825
    %v6827 = vpop.f32.mrf.mxu0
    %v6828 = vadd.f32 %v6754, %v6827
    %6829 = vmatmul.bf16.gmra.mxu0 %v4031
    %v6830 = vpop.f32.mrf.mxu0
    %v6831 = vadd.f32 %v6757, %v6830
    %v6832 = vpop.f32.mrf.mxu0
    %v6833 = vadd.f32 %v6759, %v6832
    %6834 = vmatmul.bf16.gmra.mxu0 %v4034
    %v6835 = vpop.f32.mrf.mxu0
    %v6836 = vadd.f32 %v6762, %v6835
    %v6837 = vpop.f32.mrf.mxu0
    %v6838 = vadd.f32 %v6764, %v6837
    %6839 = vmatmul.bf16.gmra.mxu0 %v4037
    %v6840 = vpop.f32.mrf.mxu0
    %v6841 = vadd.f32 %v6767, %v6840
    %v6842 = vpop.f32.mrf.mxu0
    %v6843 = vadd.f32 %v6769, %v6842
    %6844 = vmatmul.bf16.gmra.mxu0 %v4040
    %v6845 = vpop.f32.mrf.mxu0
    %v6846 = vadd.f32 %v6772, %v6845
    %v6847 = vpop.f32.mrf.mxu0
    %v6848 = vadd.f32 %v6774, %v6847
    %6849 = vdwg.mxu0
    %6850 = vmatpush.bf16.msra.mxu0 %v6325
    %6851 = vmatpush.bf16.msra.mxu0 %v6321
    %6852 = vmatpush.bf16.msra.mxu0 %v6317
    %6853 = vmatpush.bf16.msra.mxu0 %v6313
    %6854 = vmatpush.bf16.msra.mxu0 %v6309
    %6855 = vmatpush.bf16.msra.mxu0 %v6305
    %6856 = vmatpush.bf16.msra.mxu0 %v6301
    %6857 = vmatpush.bf16.msra.mxu0 %v6297
    %6858 = vmatmul.bf16.gmra.mxu0 %v3681
    %v6859 = vpop.f32.mrf.mxu0
    %v6860 = vadd.f32 0.0, %v6859
    %v6861 = vpop.f32.mrf.mxu0
    %v6862 = vadd.f32 0.0, %v6861
    %6863 = vmatmul.bf16.gmra.mxu0 %v3683
    %v6864 = vpop.f32.mrf.mxu0
    %v6865 = vadd.f32 0.0, %v6864
    %v6866 = vpop.f32.mrf.mxu0
    %v6867 = vadd.f32 0.0, %v6866
    %6868 = vmatmul.bf16.gmra.mxu0 %v3685
    %v6869 = vpop.f32.mrf.mxu0
    %v6870 = vadd.f32 0.0, %v6869
    %v6871 = vpop.f32.mrf.mxu0
    %v6872 = vadd.f32 0.0, %v6871
    %6873 = vmatmul.bf16.gmra.mxu0 %v3687
    %v6874 = vpop.f32.mrf.mxu0
    %v6875 = vadd.f32 0.0, %v6874
    %v6876 = vpop.f32.mrf.mxu0
    %v6877 = vadd.f32 0.0, %v6876
    %6878 = vmatmul.bf16.gmra.mxu0 %v3689
    %v6879 = vpop.f32.mrf.mxu0
    %v6880 = vadd.f32 0.0, %v6879
    %v6881 = vpop.f32.mrf.mxu0
    %v6882 = vadd.f32 0.0, %v6881
    %6883 = vmatmul.bf16.gmra.mxu0 %v3691
    %v6884 = vpop.f32.mrf.mxu0
    %v6885 = vadd.f32 0.0, %v6884
    %v6886 = vpop.f32.mrf.mxu0
    %v6887 = vadd.f32 0.0, %v6886
    %6888 = vmatmul.bf16.gmra.mxu0 %v3693
    %v6889 = vpop.f32.mrf.mxu0
    %v6890 = vadd.f32 0.0, %v6889
    %v6891 = vpop.f32.mrf.mxu0
    %v6892 = vadd.f32 0.0, %v6891
    %6893 = vmatmul.bf16.gmra.mxu0 %v3695
    %v6894 = vpop.f32.mrf.mxu0
    %v6895 = vadd.f32 0.0, %v6894
    %v6896 = vpop.f32.mrf.mxu0
    %v6897 = vadd.f32 0.0, %v6896
    %6898 = vmatmul.bf16.gmra.mxu0 %v3697
    %v6899 = vpop.f32.mrf.mxu0
    %v6900 = vadd.f32 0.0, %v6899
    %v6901 = vpop.f32.mrf.mxu0
    %v6902 = vadd.f32 0.0, %v6901
    %6903 = vmatmul.bf16.gmra.mxu0 %v3699
    %v6904 = vpop.f32.mrf.mxu0
    %v6905 = vadd.f32 0.0, %v6904
    %v6906 = vpop.f32.mrf.mxu0
    %v6907 = vadd.f32 0.0, %v6906
    %6908 = vmatmul.bf16.gmra.mxu0 %v3701
    %v6909 = vpop.f32.mrf.mxu0
    %v6910 = vadd.f32 0.0, %v6909
    %v6911 = vpop.f32.mrf.mxu0
    %v6912 = vadd.f32 0.0, %v6911
    %6913 = vmatmul.bf16.gmra.mxu0 %v3703
    %v6914 = vpop.f32.mrf.mxu0
    %v6915 = vadd.f32 0.0, %v6914
    %v6916 = vpop.f32.mrf.mxu0
    %v6917 = vadd.f32 0.0, %v6916
    %6918 = vmatmul.bf16.gmra.mxu0 %v3705
    %v6919 = vpop.f32.mrf.mxu0
    %v6920 = vadd.f32 0.0, %v6919
    %v6921 = vpop.f32.mrf.mxu0
    %v6922 = vadd.f32 0.0, %v6921
    %6923 = vdwg.mxu0
    %6924 = vmatpush.bf16.msra.mxu0 0
    %6925 = vmatpush.bf16.msra.mxu0 0
    %6926 = vmatpush.bf16.msra.mxu0 %v6349
    %6927 = vmatpush.bf16.msra.mxu0 %v6345
    %6928 = vmatpush.bf16.msra.mxu0 %v6341
    %6929 = vmatpush.bf16.msra.mxu0 %v6337
    %6930 = vmatpush.bf16.msra.mxu0 %v6333
    %6931 = vmatpush.bf16.msra.mxu0 %v6329
    %6932 = vmatmul.bf16.gmra.mxu0 %v4004
    %v6933 = vpop.f32.mrf.mxu0
    %v6934 = vadd.f32 %v6860, %v6933
    %v6935 = vpop.f32.mrf.mxu0
    %v6936 = vadd.f32 %v6862, %v6935
    %6937 = vmatmul.bf16.gmra.mxu0 %v4007
    %v6938 = vpop.f32.mrf.mxu0
    %v6939 = vadd.f32 %v6865, %v6938
    %v6940 = vpop.f32.mrf.mxu0
    %v6941 = vadd.f32 %v6867, %v6940
    %6942 = vmatmul.bf16.gmra.mxu0 %v4010
    %v6943 = vpop.f32.mrf.mxu0
    %v6944 = vadd.f32 %v6870, %v6943
    %v6945 = vpop.f32.mrf.mxu0
    %v6946 = vadd.f32 %v6872, %v6945
    %6947 = vmatmul.bf16.gmra.mxu0 %v4013
    %v6948 = vpop.f32.mrf.mxu0
    %v6949 = vadd.f32 %v6875, %v6948
    %v6950 = vpop.f32.mrf.mxu0
    %v6951 = vadd.f32 %v6877, %v6950
    %6952 = vmatmul.bf16.gmra.mxu0 %v4016
    %v6953 = vpop.f32.mrf.mxu0
    %v6954 = vadd.f32 %v6880, %v6953
    %v6955 = vpop.f32.mrf.mxu0
    %v6956 = vadd.f32 %v6882, %v6955
    %6957 = vmatmul.bf16.gmra.mxu0 %v4019
    %v6958 = vpop.f32.mrf.mxu0
    %v6959 = vadd.f32 %v6885, %v6958
    %v6960 = vpop.f32.mrf.mxu0
    %v6961 = vadd.f32 %v6887, %v6960
    %6962 = vmatmul.bf16.gmra.mxu0 %v4022
    %v6963 = vpop.f32.mrf.mxu0
    %v6964 = vadd.f32 %v6890, %v6963
    %v6965 = vpop.f32.mrf.mxu0
    %v6966 = vadd.f32 %v6892, %v6965
    %6967 = vmatmul.bf16.gmra.mxu0 %v4025
    %v6968 = vpop.f32.mrf.mxu0
    %v6969 = vadd.f32 %v6895, %v6968
    %v6970 = vpop.f32.mrf.mxu0
    %v6971 = vadd.f32 %v6897, %v6970
    %6972 = vmatmul.bf16.gmra.mxu0 %v4028
    %v6973 = vpop.f32.mrf.mxu0
    %v6974 = vadd.f32 %v6900, %v6973
    %v6975 = vpop.f32.mrf.mxu0
    %v6976 = vadd.f32 %v6902, %v6975
    %6977 = vmatmul.bf16.gmra.mxu0 %v4031
    %v6978 = vpop.f32.mrf.mxu0
    %v6979 = vadd.f32 %v6905, %v6978
    %v6980 = vpop.f32.mrf.mxu0
    %v6981 = vadd.f32 %v6907, %v6980
    %6982 = vmatmul.bf16.gmra.mxu0 %v4034
    %v6983 = vpop.f32.mrf.mxu0
    %v6984 = vadd.f32 %v6910, %v6983
    %v6985 = vpop.f32.mrf.mxu0
    %v6986 = vadd.f32 %v6912, %v6985
    %6987 = vmatmul.bf16.gmra.mxu0 %v4037
    %v6988 = vpop.f32.mrf.mxu0
    %v6989 = vadd.f32 %v6915, %v6988
    %v6990 = vpop.f32.mrf.mxu0
    %v6991 = vadd.f32 %v6917, %v6990
    %6992 = vmatmul.bf16.gmra.mxu0 %v4040
    %v6993 = vpop.f32.mrf.mxu0
    %v6994 = vadd.f32 %v6920, %v6993
    %v6995 = vpop.f32.mrf.mxu0
    %v6996 = vadd.f32 %v6922, %v6995
    %6997 = vdwg.mxu0
    %v6998 = vadd.f32 %v5965, %v6490
    %v6999 = vadd.f32 %v5966, %v6638
    %v7000 = vadd.f32 %v5967, %v6786
    %v7001 = vadd.f32 %v5968, %v6934
    %v7002 = vadd.f32 %v5969, %v6492
    %v7003 = vadd.f32 %v5970, %v6640
    %v7004 = vadd.f32 %v5971, %v6788
    %v7005 = vadd.f32 %v5972, %v6936
    %v7006 = vadd.f32 %v5973, %v6495
    %v7007 = vadd.f32 %v5974, %v6643
    %v7008 = vadd.f32 %v5975, %v6791
    %v7009 = vadd.f32 %v5976, %v6939
    %v7010 = vadd.f32 %v5977, %v6497
    %v7011 = vadd.f32 %v5978, %v6645
    %v7012 = vadd.f32 %v5979, %v6793
    %v7013 = vadd.f32 %v5980, %v6941
    %v7014 = vadd.f32 %v5981, %v6500
    %v7015 = vadd.f32 %v5982, %v6648
    %v7016 = vadd.f32 %v5983, %v6796
    %v7017 = vadd.f32 %v5984, %v6944
    %v7018 = vadd.f32 %v5985, %v6502
    %v7019 = vadd.f32 %v5986, %v6650
    %v7020 = vadd.f32 %v5987, %v6798
    %v7021 = vadd.f32 %v5988, %v6946
    %v7022 = vadd.f32 %v5989, %v6505
    %v7023 = vadd.f32 %v5990, %v6653
    %v7024 = vadd.f32 %v5991, %v6801
    %v7025 = vadd.f32 %v5992, %v6949
    %v7026 = vadd.f32 %v5993, %v6507
    %v7027 = vadd.f32 %v5994, %v6655
    %v7028 = vadd.f32 %v5995, %v6803
    %v7029 = vadd.f32 %v5996, %v6951
    %v7030 = vadd.f32 %v5997, %v6510
    %v7031 = vadd.f32 %v5998, %v6658
    %v7032 = vadd.f32 %v5999, %v6806
    %v7033 = vadd.f32 %v6000, %v6954
    %v7034 = vadd.f32 %v6001, %v6512
    %v7035 = vadd.f32 %v6002, %v6660
    %v7036 = vadd.f32 %v6003, %v6808
    %v7037 = vadd.f32 %v6004, %v6956
    %v7038 = vadd.f32 %v6005, %v6515
    %v7039 = vadd.f32 %v6006, %v6663
    %v7040 = vadd.f32 %v6007, %v6811
    %v7041 = vadd.f32 %v6008, %v6959
    %v7042 = vadd.f32 %v6009, %v6517
    %v7043 = vadd.f32 %v6010, %v6665
    %v7044 = vadd.f32 %v6011, %v6813
    %v7045 = vadd.f32 %v6012, %v6961
    %v7046 = vadd.f32 %v6013, %v6520
    %v7047 = vadd.f32 %v6014, %v6668
    %v7048 = vadd.f32 %v6015, %v6816
    %v7049 = vadd.f32 %v6016, %v6964
    %v7050 = vadd.f32 %v6017, %v6522
    %v7051 = vadd.f32 %v6018, %v6670
    %v7052 = vadd.f32 %v6019, %v6818
    %v7053 = vadd.f32 %v6020, %v6966
    %v7054 = vadd.f32 %v6021, %v6525
    %v7055 = vadd.f32 %v6022, %v6673
    %v7056 = vadd.f32 %v6023, %v6821
    %v7057 = vadd.f32 %v6024, %v6969
    %v7058 = vadd.f32 %v6025, %v6527
    %v7059 = vadd.f32 %v6026, %v6675
    %v7060 = vadd.f32 %v6027, %v6823
    %v7061 = vadd.f32 %v6028, %v6971
    %v7062 = vadd.f32 %v6029, %v6530
    %v7063 = vadd.f32 %v6030, %v6678
    %v7064 = vadd.f32 %v6031, %v6826
    %v7065 = vadd.f32 %v6032, %v6974
    %v7066 = vadd.f32 %v6033, %v6532
    %v7067 = vadd.f32 %v6034, %v6680
    %v7068 = vadd.f32 %v6035, %v6828
    %v7069 = vadd.f32 %v6036, %v6976
    %v7070 = vadd.f32 %v6037, %v6535
    %v7071 = vadd.f32 %v6038, %v6683
    %v7072 = vadd.f32 %v6039, %v6831
    %v7073 = vadd.f32 %v6040, %v6979
    %v7074 = vadd.f32 %v6041, %v6537
    %v7075 = vadd.f32 %v6042, %v6685
    %v7076 = vadd.f32 %v6043, %v6833
    %v7077 = vadd.f32 %v6044, %v6981
    %v7078 = vadd.f32 %v6045, %v6540
    %v7079 = vadd.f32 %v6046, %v6688
    %v7080 = vadd.f32 %v6047, %v6836
    %v7081 = vadd.f32 %v6048, %v6984
    %v7082 = vadd.f32 %v6049, %v6542
    %v7083 = vadd.f32 %v6050, %v6690
    %v7084 = vadd.f32 %v6051, %v6838
    %v7085 = vadd.f32 %v6052, %v6986
    %v7086 = vadd.f32 %v6053, %v6545
    %v7087 = vadd.f32 %v6054, %v6693
    %v7088 = vadd.f32 %v6055, %v6841
    %v7089 = vadd.f32 %v6056, %v6989
    %v7090 = vadd.f32 %v6057, %v6547
    %v7091 = vadd.f32 %v6058, %v6695
    %v7092 = vadd.f32 %v6059, %v6843
    %v7093 = vadd.f32 %v6060, %v6991
    %v7094 = vadd.f32 %v6061, %v6550
    %v7095 = vadd.f32 %v6062, %v6698
    %v7096 = vadd.f32 %v6063, %v6846
    %v7097 = vadd.f32 %v6064, %v6994
    %v7098 = vadd.f32 %v6065, %v6552
    %v7099 = vadd.f32 %v6066, %v6700
    %v7100 = vadd.f32 %v6067, %v6848
    %v7101 = vadd.f32 %v6068, %v6996
    %7102 = vst [vmem:[#allocation2 + $0x40] sm:$0xff] %v6998
    %7103 = vst [vmem:[#allocation2 + $0x48] sm:$0xff] %v6999
    %7104 = vst [vmem:[#allocation2 + $0x50] sm:$0xff] %v7000
    %7105 = vst.msk [vmem:[#allocation2 + $0x58] sm:$0xff] %vm662, %v7001
    %7106 = vst [vmem:[#allocation2 + $0x60] sm:$0xff] %v7002
    %7107 = vst [vmem:[#allocation2 + $0x68] sm:$0xff] %v7003
    %7108 = vst [vmem:[#allocation2 + $0x70] sm:$0xff] %v7004
    %7109 = vst.msk [vmem:[#allocation2 + $0x78] sm:$0xff] %vm662, %v7005
    %7110 = vst [vmem:[#allocation2 + $0x80] sm:$0xff] %v7006
    %7111 = vst [vmem:[#allocation2 + $0x88] sm:$0xff] %v7007
    %7112 = vst [vmem:[#allocation2 + $0x90] sm:$0xff] %v7008
    %7113 = vst.msk [vmem:[#allocation2 + $0x98] sm:$0xff] %vm662, %v7009
    %7114 = vst [vmem:[#allocation2 + $0xa0] sm:$0xff] %v7010
    %7115 = vst [vmem:[#allocation2 + $0xa8] sm:$0xff] %v7011
    %7116 = vst [vmem:[#allocation2 + $0xb0] sm:$0xff] %v7012
    %7117 = vst.msk [vmem:[#allocation2 + $0xb8] sm:$0xff] %vm662, %v7013
    %7118 = vst [vmem:[#allocation2 + $0xc0] sm:$0xff] %v7014
    %7119 = vst [vmem:[#allocation2 + $0xc8] sm:$0xff] %v7015
    %7120 = vst [vmem:[#allocation2 + $0xd0] sm:$0xff] %v7016
    %7121 = vst.msk [vmem:[#allocation2 + $0xd8] sm:$0xff] %vm662, %v7017
    %7122 = vst [vmem:[#allocation2 + $0xe0] sm:$0xff] %v7018
    %7123 = vst [vmem:[#allocation2 + $0xe8] sm:$0xff] %v7019
    %7124 = vst [vmem:[#allocation2 + $0xf0] sm:$0xff] %v7020
    %7125 = vst.msk [vmem:[#allocation2 + $0xf8] sm:$0xff] %vm662, %v7021
    %7126 = vst [vmem:[#allocation2 + $0x100] sm:$0xff] %v7022
    %7127 = vst [vmem:[#allocation2 + $0x108] sm:$0xff] %v7023
    %7128 = vst [vmem:[#allocation2 + $0x110] sm:$0xff] %v7024
    %7129 = vst.msk [vmem:[#allocation2 + $0x118] sm:$0xff] %vm662, %v7025
    %7130 = vst [vmem:[#allocation2 + $0x120] sm:$0xff] %v7026
    %7131 = vst [vmem:[#allocation2 + $0x128] sm:$0xff] %v7027
    %7132 = vst [vmem:[#allocation2 + $0x130] sm:$0xff] %v7028
    %7133 = vst.msk [vmem:[#allocation2 + $0x138] sm:$0xff] %vm662, %v7029
    %7134 = vst [vmem:[#allocation2 + $0x140] sm:$0xff] %v7030
    %7135 = vst [vmem:[#allocation2 + $0x148] sm:$0xff] %v7031
    %7136 = vst [vmem:[#allocation2 + $0x150] sm:$0xff] %v7032
    %7137 = vst.msk [vmem:[#allocation2 + $0x158] sm:$0xff] %vm662, %v7033
    %7138 = vst [vmem:[#allocation2 + $0x160] sm:$0xff] %v7034
    %7139 = vst [vmem:[#allocation2 + $0x168] sm:$0xff] %v7035
    %7140 = vst [vmem:[#allocation2 + $0x170] sm:$0xff] %v7036
    %7141 = vst.msk [vmem:[#allocation2 + $0x178] sm:$0xff] %vm662, %v7037
    %7142 = vst [vmem:[#allocation2 + $0x180] sm:$0xff] %v7038
    %7143 = vst [vmem:[#allocation2 + $0x188] sm:$0xff] %v7039
    %7144 = vst [vmem:[#allocation2 + $0x190] sm:$0xff] %v7040
    %7145 = vst.msk [vmem:[#allocation2 + $0x198] sm:$0xff] %vm662, %v7041
    %7146 = vst [vmem:[#allocation2 + $0x1a0] sm:$0xff] %v7042
    %7147 = vst [vmem:[#allocation2 + $0x1a8] sm:$0xff] %v7043
    %7148 = vst [vmem:[#allocation2 + $0x1b0] sm:$0xff] %v7044
    %7149 = vst.msk [vmem:[#allocation2 + $0x1b8] sm:$0xff] %vm662, %v7045
    %7150 = vst [vmem:[#allocation2 + $0x1c0] sm:$0xff] %v7046
    %7151 = vst [vmem:[#allocation2 + $0x1c8] sm:$0xff] %v7047
    %7152 = vst [vmem:[#allocation2 + $0x1d0] sm:$0xff] %v7048
    %7153 = vst.msk [vmem:[#allocation2 + $0x1d8] sm:$0xff] %vm662, %v7049
    %7154 = vst [vmem:[#allocation2 + $0x1e0] sm:$0xff] %v7050
    %7155 = vst [vmem:[#allocation2 + $0x1e8] sm:$0xff] %v7051
    %7156 = vst [vmem:[#allocation2 + $0x1f0] sm:$0xff] %v7052
    %7157 = vst.msk [vmem:[#allocation2 + $0x1f8] sm:$0xff] %vm662, %v7053
    %7158 = vst [vmem:[#allocation2 + $0x200] sm:$0xff] %v7054
    %7159 = vst [vmem:[#allocation2 + $0x208] sm:$0xff] %v7055
    %7160 = vst [vmem:[#allocation2 + $0x210] sm:$0xff] %v7056
    %7161 = vst.msk [vmem:[#allocation2 + $0x218] sm:$0xff] %vm662, %v7057
    %7162 = vst [vmem:[#allocation2 + $0x220] sm:$0xff] %v7058
    %7163 = vst [vmem:[#allocation2 + $0x228] sm:$0xff] %v7059
    %7164 = vst [vmem:[#allocation2 + $0x230] sm:$0xff] %v7060
    %7165 = vst.msk [vmem:[#allocation2 + $0x238] sm:$0xff] %vm662, %v7061
    %7166 = vst [vmem:[#allocation2 + $0x240] sm:$0xff] %v7062
    %7167 = vst [vmem:[#allocation2 + $0x248] sm:$0xff] %v7063
    %7168 = vst [vmem:[#allocation2 + $0x250] sm:$0xff] %v7064
    %7169 = vst.msk [vmem:[#allocation2 + $0x258] sm:$0xff] %vm662, %v7065
    %7170 = vst [vmem:[#allocation2 + $0x260] sm:$0xff] %v7066
    %7171 = vst [vmem:[#allocation2 + $0x268] sm:$0xff] %v7067
    %7172 = vst [vmem:[#allocation2 + $0x270] sm:$0xff] %v7068
    %7173 = vst.msk [vmem:[#allocation2 + $0x278] sm:$0xff] %vm662, %v7069
    %7174 = vst [vmem:[#allocation2 + $0x280] sm:$0xff] %v7070
    %7175 = vst [vmem:[#allocation2 + $0x288] sm:$0xff] %v7071
    %7176 = vst [vmem:[#allocation2 + $0x290] sm:$0xff] %v7072
    %7177 = vst.msk [vmem:[#allocation2 + $0x298] sm:$0xff] %vm662, %v7073
    %7178 = vst [vmem:[#allocation2 + $0x2a0] sm:$0xff] %v7074
    %7179 = vst [vmem:[#allocation2 + $0x2a8] sm:$0xff] %v7075
    %7180 = vst [vmem:[#allocation2 + $0x2b0] sm:$0xff] %v7076
    %7181 = vst.msk [vmem:[#allocation2 + $0x2b8] sm:$0xff] %vm662, %v7077
    %7182 = vst [vmem:[#allocation2 + $0x2c0] sm:$0xff] %v7078
    %7183 = vst [vmem:[#allocation2 + $0x2c8] sm:$0xff] %v7079
    %7184 = vst [vmem:[#allocation2 + $0x2d0] sm:$0xff] %v7080
    %7185 = vst.msk [vmem:[#allocation2 + $0x2d8] sm:$0xff] %vm662, %v7081
    %7186 = vst [vmem:[#allocation2 + $0x2e0] sm:$0xff] %v7082
    %7187 = vst [vmem:[#allocation2 + $0x2e8] sm:$0xff] %v7083
    %7188 = vst [vmem:[#allocation2 + $0x2f0] sm:$0xff] %v7084
    %7189 = vst.msk [vmem:[#allocation2 + $0x2f8] sm:$0xff] %vm662, %v7085
    %7190 = vst [vmem:[#allocation2 + $0x300] sm:$0xff] %v7086
    %7191 = vst [vmem:[#allocation2 + $0x308] sm:$0xff] %v7087
    %7192 = vst [vmem:[#allocation2 + $0x310] sm:$0xff] %v7088
    %7193 = vst.msk [vmem:[#allocation2 + $0x318] sm:$0xff] %vm662, %v7089
    %7194 = vst [vmem:[#allocation2 + $0x320] sm:$0xff] %v7090
    %7195 = vst [vmem:[#allocation2 + $0x328] sm:$0xff] %v7091
    %7196 = vst [vmem:[#allocation2 + $0x330] sm:$0xff] %v7092
    %7197 = vst.msk [vmem:[#allocation2 + $0x338] sm:$0xff] %vm662, %v7093
    %7198 = vst [vmem:[#allocation2 + $0x340] sm:$0xff] %v7094
    %7199 = vst [vmem:[#allocation2 + $0x348] sm:$0xff] %v7095
    %7200 = vst [vmem:[#allocation2 + $0x350] sm:$0xff] %v7096
    %7201 = vst.msk [vmem:[#allocation2 + $0x358] sm:$0xff] %vm662, %v7097
    %7202 = vst [vmem:[#allocation2 + $0x360] sm:$0xff] %v7098
    %7203 = vst [vmem:[#allocation2 + $0x368] sm:$0xff] %v7099
    %7204 = vst [vmem:[#allocation2 + $0x370] sm:$0xff] %v7100
    %7205 = vst.msk [vmem:[#allocation2 + $0x378] sm:$0xff] %vm662, %v7101
    %v7206 = vld [vmem:[#allocation2] sm:$0xff]
    %v7207 = vld [vmem:[#allocation2 + $0x8] sm:$0xff]
    %v7208 = vld [vmem:[#allocation2 + $0x10] sm:$0xff]
    %v7209 = vld [vmem:[#allocation2 + $0x18] sm:$0xff]
    %v7210 = vld [vmem:[#allocation2 + $0x20] sm:$0xff]
    %v7211 = vld [vmem:[#allocation2 + $0x28] sm:$0xff]
    %v7212 = vld [vmem:[#allocation2 + $0x30] sm:$0xff]
    %v7213 = vld [vmem:[#allocation2 + $0x38] sm:$0xff]
    %v7214 = vld [vmem:[#allocation2 + $0x40] sm:$0xff]
    %v7215 = vld [vmem:[#allocation2 + $0x48] sm:$0xff]
    %v7216 = vld [vmem:[#allocation2 + $0x50] sm:$0xff]
    %v7217 = vld [vmem:[#allocation2 + $0x58] sm:$0xff]
    %v7218 = vld [vmem:[#allocation2 + $0x60] sm:$0xff]
    %v7219 = vld [vmem:[#allocation2 + $0x68] sm:$0xff]
    %v7220 = vld [vmem:[#allocation2 + $0x70] sm:$0xff]
    %v7221 = vld [vmem:[#allocation2 + $0x78] sm:$0xff]
    %v7222 = vld [vmem:[#allocation2 + $0x80] sm:$0xff]
    %v7223 = vld [vmem:[#allocation2 + $0x88] sm:$0xff]
    %v7224 = vld [vmem:[#allocation2 + $0x90] sm:$0xff]
    %v7225 = vld [vmem:[#allocation2 + $0x98] sm:$0xff]
    %v7226 = vld [vmem:[#allocation2 + $0xa0] sm:$0xff]
    %v7227 = vld [vmem:[#allocation2 + $0xa8] sm:$0xff]
    %v7228 = vld [vmem:[#allocation2 + $0xb0] sm:$0xff]
    %v7229 = vld [vmem:[#allocation2 + $0xb8] sm:$0xff]
    %v7230 = vld [vmem:[#allocation2 + $0xc0] sm:$0xff]
    %v7231 = vld [vmem:[#allocation2 + $0xc8] sm:$0xff]
    %v7232 = vld [vmem:[#allocation2 + $0xd0] sm:$0xff]
    %v7233 = vld [vmem:[#allocation2 + $0xd8] sm:$0xff]
    %v7234 = vld [vmem:[#allocation2 + $0xe0] sm:$0xff]
    %v7235 = vld [vmem:[#allocation2 + $0xe8] sm:$0xff]
    %v7236 = vld [vmem:[#allocation2 + $0xf0] sm:$0xff]
    %v7237 = vld [vmem:[#allocation2 + $0xf8] sm:$0xff]
    %v7238 = vld [vmem:[#allocation2 + $0x100] sm:$0xff]
    %v7239 = vld [vmem:[#allocation2 + $0x108] sm:$0xff]
    %v7240 = vld [vmem:[#allocation2 + $0x110] sm:$0xff]
    %v7241 = vld [vmem:[#allocation2 + $0x118] sm:$0xff]
    %v7242 = vld [vmem:[#allocation2 + $0x120] sm:$0xff]
    %v7243 = vld [vmem:[#allocation2 + $0x128] sm:$0xff]
    %v7244 = vld [vmem:[#allocation2 + $0x130] sm:$0xff]
    %v7245 = vld [vmem:[#allocation2 + $0x138] sm:$0xff]
    %v7246 = vld [vmem:[#allocation2 + $0x140] sm:$0xff]
    %v7247 = vld [vmem:[#allocation2 + $0x148] sm:$0xff]
    %v7248 = vld [vmem:[#allocation2 + $0x150] sm:$0xff]
    %v7249 = vld [vmem:[#allocation2 + $0x158] sm:$0xff]
    %v7250 = vld [vmem:[#allocation2 + $0x160] sm:$0xff]
    %v7251 = vld [vmem:[#allocation2 + $0x168] sm:$0xff]
    %v7252 = vld [vmem:[#allocation2 + $0x170] sm:$0xff]
    %v7253 = vld [vmem:[#allocation2 + $0x178] sm:$0xff]
    %v7254 = vld [vmem:[#allocation2 + $0x180] sm:$0xff]
    %v7255 = vld [vmem:[#allocation2 + $0x188] sm:$0xff]
    %v7256 = vld [vmem:[#allocation2 + $0x190] sm:$0xff]
    %v7257 = vld [vmem:[#allocation2 + $0x198] sm:$0xff]
    %v7258 = vld [vmem:[#allocation2 + $0x1a0] sm:$0xff]
    %v7259 = vld [vmem:[#allocation2 + $0x1a8] sm:$0xff]
    %v7260 = vld [vmem:[#allocation2 + $0x1b0] sm:$0xff]
    %v7261 = vld [vmem:[#allocation2 + $0x1b8] sm:$0xff]
    %v7262 = vld [vmem:[#allocation2 + $0x1c0] sm:$0xff]
    %v7263 = vld [vmem:[#allocation2 + $0x1c8] sm:$0xff]
    %v7264 = vld [vmem:[#allocation2 + $0x1d0] sm:$0xff]
    %v7265 = vld [vmem:[#allocation2 + $0x1d8] sm:$0xff]
    %v7266 = vld [vmem:[#allocation2 + $0x1e0] sm:$0xff]
    %v7267 = vld [vmem:[#allocation2 + $0x1e8] sm:$0xff]
    %v7268 = vld [vmem:[#allocation2 + $0x1f0] sm:$0xff]
    %v7269 = vld [vmem:[#allocation2 + $0x1f8] sm:$0xff]
    %v7270 = vld [vmem:[#allocation2 + $0x200] sm:$0xff]
    %v7271 = vld [vmem:[#allocation2 + $0x208] sm:$0xff]
    %v7272 = vld [vmem:[#allocation2 + $0x210] sm:$0xff]
    %v7273 = vld [vmem:[#allocation2 + $0x218] sm:$0xff]
    %v7274 = vld [vmem:[#allocation2 + $0x220] sm:$0xff]
    %v7275 = vld [vmem:[#allocation2 + $0x228] sm:$0xff]
    %v7276 = vld [vmem:[#allocation2 + $0x230] sm:$0xff]
    %v7277 = vld [vmem:[#allocation2 + $0x238] sm:$0xff]
    %v7278 = vld [vmem:[#allocation2 + $0x240] sm:$0xff]
    %v7279 = vld [vmem:[#allocation2 + $0x248] sm:$0xff]
    %v7280 = vld [vmem:[#allocation2 + $0x250] sm:$0xff]
    %v7281 = vld [vmem:[#allocation2 + $0x258] sm:$0xff]
    %v7282 = vld [vmem:[#allocation2 + $0x260] sm:$0xff]
    %v7283 = vld [vmem:[#allocation2 + $0x268] sm:$0xff]
    %v7284 = vld [vmem:[#allocation2 + $0x270] sm:$0xff]
    %v7285 = vld [vmem:[#allocation2 + $0x278] sm:$0xff]
    %v7286 = vld [vmem:[#allocation2 + $0x280] sm:$0xff]
    %v7287 = vld [vmem:[#allocation2 + $0x288] sm:$0xff]
    %v7288 = vld [vmem:[#allocation2 + $0x290] sm:$0xff]
    %v7289 = vld [vmem:[#allocation2 + $0x298] sm:$0xff]
    %v7290 = vld [vmem:[#allocation2 + $0x2a0] sm:$0xff]
    %v7291 = vld [vmem:[#allocation2 + $0x2a8] sm:$0xff]
    %v7292 = vld [vmem:[#allocation2 + $0x2b0] sm:$0xff]
    %v7293 = vld [vmem:[#allocation2 + $0x2b8] sm:$0xff]
    %v7294 = vld [vmem:[#allocation2 + $0x2c0] sm:$0xff]
    %v7295 = vld [vmem:[#allocation2 + $0x2c8] sm:$0xff]
    %v7296 = vld [vmem:[#allocation2 + $0x2d0] sm:$0xff]
    %v7297 = vld [vmem:[#allocation2 + $0x2d8] sm:$0xff]
    %v7298 = vld [vmem:[#allocation2 + $0x2e0] sm:$0xff]
    %v7299 = vld [vmem:[#allocation2 + $0x2e8] sm:$0xff]
    %v7300 = vld [vmem:[#allocation2 + $0x2f0] sm:$0xff]
    %v7301 = vld [vmem:[#allocation2 + $0x2f8] sm:$0xff]
    %v7302 = vld [vmem:[#allocation2 + $0x300] sm:$0xff]
    %v7303 = vld [vmem:[#allocation2 + $0x308] sm:$0xff]
    %v7304 = vld [vmem:[#allocation2 + $0x310] sm:$0xff]
    %v7305 = vld [vmem:[#allocation2 + $0x318] sm:$0xff]
    %v7306 = vld [vmem:[#allocation2 + $0x320] sm:$0xff]
    %v7307 = vld [vmem:[#allocation2 + $0x328] sm:$0xff]
    %v7308 = vld [vmem:[#allocation2 + $0x330] sm:$0xff]
    %v7309 = vld [vmem:[#allocation2 + $0x338] sm:$0xff]
    %s7310 = scalar_lea.vmem [#allocation7], 1344
    %v7311 = vld [vmem:[%s7310] sm:$0xff]
    %v7312 = vld [vmem:[%s7310 + $0x8] sm:$0xff]
    %v7313 = vld [vmem:[%s7310 + $0x10] sm:$0xff]
    %v7314 = vld [vmem:[%s7310 + $0x18] sm:$0xff]
    %v7315 = vld [vmem:[%s7310 + $0x20] sm:$0xff]
    %v7316 = vld [vmem:[%s7310 + $0x28] sm:$0xff]
    %v7317 = vld [vmem:[%s7310 + $0x30] sm:$0xff]
    %v7318 = vld [vmem:[%s7310 + $0x38] sm:$0xff]
    %v7319 = vld [vmem:[%s7310 + $0x40] sm:$0xff]
    %v7320 = vld [vmem:[%s7310 + $0x48] sm:$0xff]
    %v7321 = vld [vmem:[%s7310 + $0x50] sm:$0xff]
    %v7322 = vld [vmem:[%s7310 + $0x58] sm:$0xff]
    %v7323 = vld [vmem:[%s7310 + $0x60] sm:$0xff]
    %v7324 = vld [vmem:[%s7310 + $0x68] sm:$0xff]
    %v7325 = vld [vmem:[%s7310 + $0x70] sm:$0xff]
    %v7326 = vld [vmem:[%s7310 + $0x78] sm:$0xff]
    %v7327 = vld [vmem:[%s7310 + $0x80] sm:$0xff]
    %v7328 = vld [vmem:[%s7310 + $0x88] sm:$0xff]
    %v7329 = vld [vmem:[%s7310 + $0x90] sm:$0xff]
    %v7330 = vld [vmem:[%s7310 + $0x98] sm:$0xff]
    %v7331 = vld [vmem:[%s7310 + $0xa0] sm:$0xff]
    %v7332 = vld [vmem:[%s7310 + $0xa8] sm:$0xff]
    %v7333 = vld [vmem:[%s7310 + $0xb0] sm:$0xff]
    %v7334 = vld [vmem:[%s7310 + $0xb8] sm:$0xff]
    %v7335 = vld [vmem:[%s7310 + $0xc0] sm:$0xff]
    %v7336 = vld [vmem:[%s7310 + $0xc8] sm:$0xff]
    %v7337 = vld [vmem:[%s7310 + $0xd0] sm:$0xff]
    %v7338 = vld [vmem:[%s7310 + $0xd8] sm:$0xff]
    %v7339 = vld [vmem:[%s7310 + $0xe0] sm:$0xff]
    %v7340 = vld [vmem:[%s7310 + $0xe8] sm:$0xff]
    %v7341 = vld [vmem:[%s7310 + $0xf0] sm:$0xff]
    %v7342 = vld [vmem:[%s7310 + $0xf8] sm:$0xff]
    %v7343 = vld [vmem:[%s7310 + $0x100] sm:$0xff]
    %v7344 = vld [vmem:[%s7310 + $0x108] sm:$0xff]
    %v7345 = vld [vmem:[%s7310 + $0x110] sm:$0xff]
    %v7346 = vld [vmem:[%s7310 + $0x118] sm:$0xff]
    %v7347 = vld [vmem:[%s7310 + $0x120] sm:$0xff]
    %v7348 = vld [vmem:[%s7310 + $0x128] sm:$0xff]
    %v7349 = vld [vmem:[%s7310 + $0x130] sm:$0xff]
    %v7350 = vld [vmem:[%s7310 + $0x138] sm:$0xff]
    %v7351 = vld [vmem:[%s7310 + $0x140] sm:$0xff]
    %v7352 = vld [vmem:[%s7310 + $0x148] sm:$0xff]
    %v7353 = vld [vmem:[%s7310 + $0x150] sm:$0xff]
    %v7354 = vld [vmem:[%s7310 + $0x158] sm:$0xff]
    %v7355 = vld [vmem:[%s7310 + $0x160] sm:$0xff]
    %v7356 = vld [vmem:[%s7310 + $0x168] sm:$0xff]
    %v7357 = vld [vmem:[%s7310 + $0x170] sm:$0xff]
    %v7358 = vld [vmem:[%s7310 + $0x178] sm:$0xff]
    %v7359 = vld [vmem:[%s7310 + $0x180] sm:$0xff]
    %v7360 = vld [vmem:[%s7310 + $0x188] sm:$0xff]
    %v7361 = vld [vmem:[%s7310 + $0x190] sm:$0xff]
    %v7362 = vld [vmem:[%s7310 + $0x198] sm:$0xff]
    %v7363 = vld [vmem:[%s7310 + $0x1a0] sm:$0xff]
    %v7364 = vld [vmem:[%s7310 + $0x1a8] sm:$0xff]
    %v7365 = vld [vmem:[%s7310 + $0x1b0] sm:$0xff]
    %v7366 = vld [vmem:[%s7310 + $0x1b8] sm:$0xff]
    %v7423 = vunpack.c.l.b16 %v7311
    %v7424 = vunpack.c.h.b16 %v7311
    %v7425 = vunpack.c.l.b16 %v7312
    %v7426 = vunpack.c.h.b16 %v7312
    %v7427 = vunpack.c.l.b16 %v7313
    %v7428 = vunpack.c.h.b16 %v7313
    %v7429 = vunpack.c.l.b16 %v7314
    %v7430 = vunpack.c.h.b16 %v7314
    %v7431 = vunpack.c.l.b16 %v7315
    %v7432 = vunpack.c.h.b16 %v7315
    %v7433 = vunpack.c.l.b16 %v7316
    %v7434 = vunpack.c.h.b16 %v7316
    %v7435 = vunpack.c.l.b16 %v7317
    %v7436 = vunpack.c.h.b16 %v7317
    %v7437 = vunpack.c.l.b16 %v7318
    %v7438 = vunpack.c.h.b16 %v7318
    %v7439 = vunpack.c.l.b16 %v7319
    %v7440 = vunpack.c.h.b16 %v7319
    %v7441 = vunpack.c.l.b16 %v7320
    %v7442 = vunpack.c.h.b16 %v7320
    %v7443 = vunpack.c.l.b16 %v7321
    %v7444 = vunpack.c.h.b16 %v7321
    %v7445 = vunpack.c.l.b16 %v7322
    %v7446 = vunpack.c.h.b16 %v7322
    %v7447 = vunpack.c.l.b16 %v7323
    %v7448 = vunpack.c.h.b16 %v7323
    %v7449 = vunpack.c.l.b16 %v7324
    %v7450 = vunpack.c.h.b16 %v7324
    %v7451 = vunpack.c.l.b16 %v7325
    %v7452 = vunpack.c.h.b16 %v7325
    %v7453 = vunpack.c.l.b16 %v7326
    %v7454 = vunpack.c.h.b16 %v7326
    %v7455 = vunpack.c.l.b16 %v7327
    %v7456 = vunpack.c.h.b16 %v7327
    %v7457 = vunpack.c.l.b16 %v7328
    %v7458 = vunpack.c.h.b16 %v7328
    %v7459 = vunpack.c.l.b16 %v7329
    %v7460 = vunpack.c.h.b16 %v7329
    %v7461 = vunpack.c.l.b16 %v7330
    %v7462 = vunpack.c.h.b16 %v7330
    %v7463 = vunpack.c.l.b16 %v7331
    %v7464 = vunpack.c.h.b16 %v7331
    %v7465 = vunpack.c.l.b16 %v7332
    %v7466 = vunpack.c.h.b16 %v7332
    %v7467 = vunpack.c.l.b16 %v7333
    %v7468 = vunpack.c.h.b16 %v7333
    %v7469 = vunpack.c.l.b16 %v7334
    %v7470 = vunpack.c.h.b16 %v7334
    %v7471 = vunpack.c.l.b16 %v7335
    %v7472 = vunpack.c.h.b16 %v7335
    %v7473 = vunpack.c.l.b16 %v7336
    %v7474 = vunpack.c.h.b16 %v7336
    %v7475 = vunpack.c.l.b16 %v7337
    %v7476 = vunpack.c.h.b16 %v7337
    %v7477 = vunpack.c.l.b16 %v7338
    %v7478 = vunpack.c.h.b16 %v7338
    %v7479 = vunpack.c.l.b16 %v7339
    %v7480 = vunpack.c.h.b16 %v7339
    %v7481 = vunpack.c.l.b16 %v7340
    %v7482 = vunpack.c.h.b16 %v7340
    %v7483 = vunpack.c.l.b16 %v7341
    %v7484 = vunpack.c.h.b16 %v7341
    %v7485 = vunpack.c.l.b16 %v7342
    %v7486 = vunpack.c.h.b16 %v7342
    %v7487 = vunpack.c.l.b16 %v7343
    %v7488 = vunpack.c.h.b16 %v7343
    %v7489 = vunpack.c.l.b16 %v7344
    %v7490 = vunpack.c.h.b16 %v7344
    %v7491 = vunpack.c.l.b16 %v7345
    %v7492 = vunpack.c.h.b16 %v7345
    %v7493 = vunpack.c.l.b16 %v7346
    %v7494 = vunpack.c.h.b16 %v7346
    %v7495 = vunpack.c.l.b16 %v7347
    %v7496 = vunpack.c.h.b16 %v7347
    %v7497 = vunpack.c.l.b16 %v7348
    %v7498 = vunpack.c.h.b16 %v7348
    %v7499 = vunpack.c.l.b16 %v7349
    %v7500 = vunpack.c.h.b16 %v7349
    %v7501 = vunpack.c.l.b16 %v7350
    %v7502 = vunpack.c.h.b16 %v7350
    %v7503 = vunpack.c.l.b16 %v7351
    %v7504 = vunpack.c.h.b16 %v7351
    %v7505 = vunpack.c.l.b16 %v7352
    %v7506 = vunpack.c.h.b16 %v7352
    %v7507 = vunpack.c.l.b16 %v7353
    %v7508 = vunpack.c.h.b16 %v7353
    %v7509 = vunpack.c.l.b16 %v7354
    %v7510 = vunpack.c.h.b16 %v7354
    %v7511 = vunpack.c.l.b16 %v7355
    %v7512 = vunpack.c.h.b16 %v7355
    %v7513 = vunpack.c.l.b16 %v7356
    %v7514 = vunpack.c.h.b16 %v7356
    %v7515 = vunpack.c.l.b16 %v7357
    %v7516 = vunpack.c.h.b16 %v7357
    %v7517 = vunpack.c.l.b16 %v7358
    %v7518 = vunpack.c.h.b16 %v7358
    %v7519 = vunpack.c.l.b16 %v7359
    %v7520 = vunpack.c.h.b16 %v7359
    %v7521 = vunpack.c.l.b16 %v7360
    %v7522 = vunpack.c.h.b16 %v7360
    %v7523 = vunpack.c.l.b16 %v7361
    %v7524 = vunpack.c.h.b16 %v7361
    %v7525 = vunpack.c.l.b16 %v7362
    %v7526 = vunpack.c.h.b16 %v7362
    %v7527 = vunpack.c.l.b16 %v7363
    %v7528 = vunpack.c.h.b16 %v7363
    %v7529 = vunpack.c.l.b16 %v7364
    %v7530 = vunpack.c.h.b16 %v7364
    %v7531 = vunpack.c.l.b16 %v7365
    %v7532 = vunpack.c.h.b16 %v7365
    %v7533 = vunpack.c.l.b16 %v7366
    %v7534 = vunpack.c.h.b16 %v7366
    %v7535 = vpack.c.b16 %v7427, %v7423
    %v7536 = vpack.c.b16 %v7428, %v7424
    %v7537 = vpack.c.b16 %v7429, %v7425
    %v7538 = vpack.c.b16 %v7430, %v7426
    %v7539 = vpack.c.b16 %v7435, %v7431
    %v7540 = vpack.c.b16 %v7436, %v7432
    %v7541 = vpack.c.b16 %v7437, %v7433
    %v7542 = vpack.c.b16 %v7438, %v7434
    %v7543 = vpack.c.b16 %v7443, %v7439
    %v7544 = vpack.c.b16 %v7444, %v7440
    %v7545 = vpack.c.b16 %v7445, %v7441
    %v7546 = vpack.c.b16 %v7446, %v7442
    %v7547 = vpack.c.b16 %v7451, %v7447
    %v7548 = vpack.c.b16 %v7452, %v7448
    %v7549 = vpack.c.b16 %v7453, %v7449
    %v7550 = vpack.c.b16 %v7454, %v7450
    %v7551 = vpack.c.b16 %v7459, %v7455
    %v7552 = vpack.c.b16 %v7460, %v7456
    %v7553 = vpack.c.b16 %v7461, %v7457
    %v7554 = vpack.c.b16 %v7462, %v7458
    %v7555 = vpack.c.b16 %v7467, %v7463
    %v7556 = vpack.c.b16 %v7468, %v7464
    %v7557 = vpack.c.b16 %v7469, %v7465
    %v7558 = vpack.c.b16 %v7470, %v7466
    %v7559 = vpack.c.b16 %v7475, %v7471
    %v7560 = vpack.c.b16 %v7476, %v7472
    %v7561 = vpack.c.b16 %v7477, %v7473
    %v7562 = vpack.c.b16 %v7478, %v7474
    %v7563 = vpack.c.b16 %v7483, %v7479
    %v7564 = vpack.c.b16 %v7484, %v7480
    %v7565 = vpack.c.b16 %v7485, %v7481
    %v7566 = vpack.c.b16 %v7486, %v7482
    %v7567 = vpack.c.b16 %v7491, %v7487
    %v7568 = vpack.c.b16 %v7492, %v7488
    %v7569 = vpack.c.b16 %v7493, %v7489
    %v7570 = vpack.c.b16 %v7494, %v7490
    %v7571 = vpack.c.b16 %v7499, %v7495
    %v7572 = vpack.c.b16 %v7500, %v7496
    %v7573 = vpack.c.b16 %v7501, %v7497
    %v7574 = vpack.c.b16 %v7502, %v7498
    %v7575 = vpack.c.b16 %v7507, %v7503
    %v7576 = vpack.c.b16 %v7508, %v7504
    %v7577 = vpack.c.b16 %v7509, %v7505
    %v7578 = vpack.c.b16 %v7510, %v7506
    %v7579 = vpack.c.b16 %v7515, %v7511
    %v7580 = vpack.c.b16 %v7516, %v7512
    %v7581 = vpack.c.b16 %v7517, %v7513
    %v7582 = vpack.c.b16 %v7518, %v7514
    %v7583 = vpack.c.b16 %v7523, %v7519
    %v7584 = vpack.c.b16 %v7524, %v7520
    %v7585 = vpack.c.b16 %v7525, %v7521
    %v7586 = vpack.c.b16 %v7526, %v7522
    %v7587 = vpack.c.b16 %v7531, %v7527
    %v7588 = vpack.c.b16 %v7532, %v7528
    %v7589 = vpack.c.b16 %v7533, %v7529
    %v7590 = vpack.c.b16 %v7534, %v7530
    %7647 = vmatpush.bf16.msra.mxu0 %v7563
    %7648 = vmatpush.bf16.msra.mxu0 %v7559
    %7649 = vmatpush.bf16.msra.mxu0 %v7555
    %7650 = vmatpush.bf16.msra.mxu0 %v7551
    %7651 = vmatpush.bf16.msra.mxu0 %v7547
    %7652 = vmatpush.bf16.msra.mxu0 %v7543
    %7653 = vmatpush.bf16.msra.mxu0 %v7539
    %7654 = vmatpush.bf16.msra.mxu0 %v7535
    %7655 = vmatmul.bf16.gmra.mxu0 %v3683
    %v7656 = vpop.f32.mrf.mxu0
    %v7657 = vadd.f32 0.0, %v7656
    %v7658 = vpop.f32.mrf.mxu0
    %v7659 = vadd.f32 0.0, %v7658
    %7660 = vmatmul.bf16.gmra.mxu0 %v3685
    %v7661 = vpop.f32.mrf.mxu0
    %v7662 = vadd.f32 0.0, %v7661
    %v7663 = vpop.f32.mrf.mxu0
    %v7664 = vadd.f32 0.0, %v7663
    %7665 = vmatmul.bf16.gmra.mxu0 %v3687
    %v7666 = vpop.f32.mrf.mxu0
    %v7667 = vadd.f32 0.0, %v7666
    %v7668 = vpop.f32.mrf.mxu0
    %v7669 = vadd.f32 0.0, %v7668
    %7670 = vmatmul.bf16.gmra.mxu0 %v3689
    %v7671 = vpop.f32.mrf.mxu0
    %v7672 = vadd.f32 0.0, %v7671
    %v7673 = vpop.f32.mrf.mxu0
    %v7674 = vadd.f32 0.0, %v7673
    %7675 = vmatmul.bf16.gmra.mxu0 %v3691
    %v7676 = vpop.f32.mrf.mxu0
    %v7677 = vadd.f32 0.0, %v7676
    %v7678 = vpop.f32.mrf.mxu0
    %v7679 = vadd.f32 0.0, %v7678
    %7680 = vmatmul.bf16.gmra.mxu0 %v3693
    %v7681 = vpop.f32.mrf.mxu0
    %v7682 = vadd.f32 0.0, %v7681
    %v7683 = vpop.f32.mrf.mxu0
    %v7684 = vadd.f32 0.0, %v7683
    %7685 = vmatmul.bf16.gmra.mxu0 %v3695
    %v7686 = vpop.f32.mrf.mxu0
    %v7687 = vadd.f32 0.0, %v7686
    %v7688 = vpop.f32.mrf.mxu0
    %v7689 = vadd.f32 0.0, %v7688
    %7690 = vmatmul.bf16.gmra.mxu0 %v3697
    %v7691 = vpop.f32.mrf.mxu0
    %v7692 = vadd.f32 0.0, %v7691
    %v7693 = vpop.f32.mrf.mxu0
    %v7694 = vadd.f32 0.0, %v7693
    %7695 = vmatmul.bf16.gmra.mxu0 %v3699
    %v7696 = vpop.f32.mrf.mxu0
    %v7697 = vadd.f32 0.0, %v7696
    %v7698 = vpop.f32.mrf.mxu0
    %v7699 = vadd.f32 0.0, %v7698
    %7700 = vmatmul.bf16.gmra.mxu0 %v3701
    %v7701 = vpop.f32.mrf.mxu0
    %v7702 = vadd.f32 0.0, %v7701
    %v7703 = vpop.f32.mrf.mxu0
    %v7704 = vadd.f32 0.0, %v7703
    %7705 = vmatmul.bf16.gmra.mxu0 %v3703
    %v7706 = vpop.f32.mrf.mxu0
    %v7707 = vadd.f32 0.0, %v7706
    %v7708 = vpop.f32.mrf.mxu0
    %v7709 = vadd.f32 0.0, %v7708
    %7710 = vmatmul.bf16.gmra.mxu0 %v3705
    %v7711 = vpop.f32.mrf.mxu0
    %v7712 = vadd.f32 0.0, %v7711
    %v7713 = vpop.f32.mrf.mxu0
    %v7714 = vadd.f32 0.0, %v7713
    %7715 = vmatmul.bf16.gmra.mxu0 %v3707
    %v7716 = vpop.f32.mrf.mxu0
    %v7717 = vadd.f32 0.0, %v7716
    %v7718 = vpop.f32.mrf.mxu0
    %v7719 = vadd.f32 0.0, %v7718
    %7720 = vdwg.mxu0
    %7721 = vmatpush.bf16.msra.mxu0 0
    %7722 = vmatpush.bf16.msra.mxu0 0
    %7723 = vmatpush.bf16.msra.mxu0 %v7587
    %7724 = vmatpush.bf16.msra.mxu0 %v7583
    %7725 = vmatpush.bf16.msra.mxu0 %v7579
    %7726 = vmatpush.bf16.msra.mxu0 %v7575
    %7727 = vmatpush.bf16.msra.mxu0 %v7571
    %7728 = vmatpush.bf16.msra.mxu0 %v7567
    %7729 = vmatmul.bf16.gmra.mxu0 %v4007
    %v7730 = vpop.f32.mrf.mxu0
    %v7731 = vadd.f32 %v7657, %v7730
    %v7732 = vpop.f32.mrf.mxu0
    %v7733 = vadd.f32 %v7659, %v7732
    %7734 = vmatmul.bf16.gmra.mxu0 %v4010
    %v7735 = vpop.f32.mrf.mxu0
    %v7736 = vadd.f32 %v7662, %v7735
    %v7737 = vpop.f32.mrf.mxu0
    %v7738 = vadd.f32 %v7664, %v7737
    %7739 = vmatmul.bf16.gmra.mxu0 %v4013
    %v7740 = vpop.f32.mrf.mxu0
    %v7741 = vadd.f32 %v7667, %v7740
    %v7742 = vpop.f32.mrf.mxu0
    %v7743 = vadd.f32 %v7669, %v7742
    %7744 = vmatmul.bf16.gmra.mxu0 %v4016
    %v7745 = vpop.f32.mrf.mxu0
    %v7746 = vadd.f32 %v7672, %v7745
    %v7747 = vpop.f32.mrf.mxu0
    %v7748 = vadd.f32 %v7674, %v7747
    %7749 = vmatmul.bf16.gmra.mxu0 %v4019
    %v7750 = vpop.f32.mrf.mxu0
    %v7751 = vadd.f32 %v7677, %v7750
    %v7752 = vpop.f32.mrf.mxu0
    %v7753 = vadd.f32 %v7679, %v7752
    %7754 = vmatmul.bf16.gmra.mxu0 %v4022
    %v7755 = vpop.f32.mrf.mxu0
    %v7756 = vadd.f32 %v7682, %v7755
    %v7757 = vpop.f32.mrf.mxu0
    %v7758 = vadd.f32 %v7684, %v7757
    %7759 = vmatmul.bf16.gmra.mxu0 %v4025
    %v7760 = vpop.f32.mrf.mxu0
    %v7761 = vadd.f32 %v7687, %v7760
    %v7762 = vpop.f32.mrf.mxu0
    %v7763 = vadd.f32 %v7689, %v7762
    %7764 = vmatmul.bf16.gmra.mxu0 %v4028
    %v7765 = vpop.f32.mrf.mxu0
    %v7766 = vadd.f32 %v7692, %v7765
    %v7767 = vpop.f32.mrf.mxu0
    %v7768 = vadd.f32 %v7694, %v7767
    %7769 = vmatmul.bf16.gmra.mxu0 %v4031
    %v7770 = vpop.f32.mrf.mxu0
    %v7771 = vadd.f32 %v7697, %v7770
    %v7772 = vpop.f32.mrf.mxu0
    %v7773 = vadd.f32 %v7699, %v7772
    %7774 = vmatmul.bf16.gmra.mxu0 %v4034
    %v7775 = vpop.f32.mrf.mxu0
    %v7776 = vadd.f32 %v7702, %v7775
    %v7777 = vpop.f32.mrf.mxu0
    %v7778 = vadd.f32 %v7704, %v7777
    %7779 = vmatmul.bf16.gmra.mxu0 %v4037
    %v7780 = vpop.f32.mrf.mxu0
    %v7781 = vadd.f32 %v7707, %v7780
    %v7782 = vpop.f32.mrf.mxu0
    %v7783 = vadd.f32 %v7709, %v7782
    %7784 = vmatmul.bf16.gmra.mxu0 %v4040
    %v7785 = vpop.f32.mrf.mxu0
    %v7786 = vadd.f32 %v7712, %v7785
    %v7787 = vpop.f32.mrf.mxu0
    %v7788 = vadd.f32 %v7714, %v7787
    %7789 = vmatmul.bf16.gmra.mxu0 %v4043
    %v7790 = vpop.f32.mrf.mxu0
    %v7791 = vadd.f32 %v7717, %v7790
    %v7792 = vpop.f32.mrf.mxu0
    %v7793 = vadd.f32 %v7719, %v7792
    %7794 = vdwg.mxu0
    %7795 = vmatpush.bf16.msra.mxu0 %v7564
    %7796 = vmatpush.bf16.msra.mxu0 %v7560
    %7797 = vmatpush.bf16.msra.mxu0 %v7556
    %7798 = vmatpush.bf16.msra.mxu0 %v7552
    %7799 = vmatpush.bf16.msra.mxu0 %v7548
    %7800 = vmatpush.bf16.msra.mxu0 %v7544
    %7801 = vmatpush.bf16.msra.mxu0 %v7540
    %7802 = vmatpush.bf16.msra.mxu0 %v7536
    %7803 = vmatmul.bf16.gmra.mxu0 %v3683
    %v7804 = vpop.f32.mrf.mxu0
    %v7805 = vadd.f32 0.0, %v7804
    %v7806 = vpop.f32.mrf.mxu0
    %v7807 = vadd.f32 0.0, %v7806
    %7808 = vmatmul.bf16.gmra.mxu0 %v3685
    %v7809 = vpop.f32.mrf.mxu0
    %v7810 = vadd.f32 0.0, %v7809
    %v7811 = vpop.f32.mrf.mxu0
    %v7812 = vadd.f32 0.0, %v7811
    %7813 = vmatmul.bf16.gmra.mxu0 %v3687
    %v7814 = vpop.f32.mrf.mxu0
    %v7815 = vadd.f32 0.0, %v7814
    %v7816 = vpop.f32.mrf.mxu0
    %v7817 = vadd.f32 0.0, %v7816
    %7818 = vmatmul.bf16.gmra.mxu0 %v3689
    %v7819 = vpop.f32.mrf.mxu0
    %v7820 = vadd.f32 0.0, %v7819
    %v7821 = vpop.f32.mrf.mxu0
    %v7822 = vadd.f32 0.0, %v7821
    %7823 = vmatmul.bf16.gmra.mxu0 %v3691
    %v7824 = vpop.f32.mrf.mxu0
    %v7825 = vadd.f32 0.0, %v7824
    %v7826 = vpop.f32.mrf.mxu0
    %v7827 = vadd.f32 0.0, %v7826
    %7828 = vmatmul.bf16.gmra.mxu0 %v3693
    %v7829 = vpop.f32.mrf.mxu0
    %v7830 = vadd.f32 0.0, %v7829
    %v7831 = vpop.f32.mrf.mxu0
    %v7832 = vadd.f32 0.0, %v7831
    %7833 = vmatmul.bf16.gmra.mxu0 %v3695
    %v7834 = vpop.f32.mrf.mxu0
    %v7835 = vadd.f32 0.0, %v7834
    %v7836 = vpop.f32.mrf.mxu0
    %v7837 = vadd.f32 0.0, %v7836
    %7838 = vmatmul.bf16.gmra.mxu0 %v3697
    %v7839 = vpop.f32.mrf.mxu0
    %v7840 = vadd.f32 0.0, %v7839
    %v7841 = vpop.f32.mrf.mxu0
    %v7842 = vadd.f32 0.0, %v7841
    %7843 = vmatmul.bf16.gmra.mxu0 %v3699
    %v7844 = vpop.f32.mrf.mxu0
    %v7845 = vadd.f32 0.0, %v7844
    %v7846 = vpop.f32.mrf.mxu0
    %v7847 = vadd.f32 0.0, %v7846
    %7848 = vmatmul.bf16.gmra.mxu0 %v3701
    %v7849 = vpop.f32.mrf.mxu0
    %v7850 = vadd.f32 0.0, %v7849
    %v7851 = vpop.f32.mrf.mxu0
    %v7852 = vadd.f32 0.0, %v7851
    %7853 = vmatmul.bf16.gmra.mxu0 %v3703
    %v7854 = vpop.f32.mrf.mxu0
    %v7855 = vadd.f32 0.0, %v7854
    %v7856 = vpop.f32.mrf.mxu0
    %v7857 = vadd.f32 0.0, %v7856
    %7858 = vmatmul.bf16.gmra.mxu0 %v3705
    %v7859 = vpop.f32.mrf.mxu0
    %v7860 = vadd.f32 0.0, %v7859
    %v7861 = vpop.f32.mrf.mxu0
    %v7862 = vadd.f32 0.0, %v7861
    %7863 = vmatmul.bf16.gmra.mxu0 %v3707
    %v7864 = vpop.f32.mrf.mxu0
    %v7865 = vadd.f32 0.0, %v7864
    %v7866 = vpop.f32.mrf.mxu0
    %v7867 = vadd.f32 0.0, %v7866
    %7868 = vdwg.mxu0
    %7869 = vmatpush.bf16.msra.mxu0 0
    %7870 = vmatpush.bf16.msra.mxu0 0
    %7871 = vmatpush.bf16.msra.mxu0 %v7588
    %7872 = vmatpush.bf16.msra.mxu0 %v7584
    %7873 = vmatpush.bf16.msra.mxu0 %v7580
    %7874 = vmatpush.bf16.msra.mxu0 %v7576
    %7875 = vmatpush.bf16.msra.mxu0 %v7572
    %7876 = vmatpush.bf16.msra.mxu0 %v7568
    %7877 = vmatmul.bf16.gmra.mxu0 %v4007
    %v7878 = vpop.f32.mrf.mxu0
    %v7879 = vadd.f32 %v7805, %v7878
    %v7880 = vpop.f32.mrf.mxu0
    %v7881 = vadd.f32 %v7807, %v7880
    %7882 = vmatmul.bf16.gmra.mxu0 %v4010
    %v7883 = vpop.f32.mrf.mxu0
    %v7884 = vadd.f32 %v7810, %v7883
    %v7885 = vpop.f32.mrf.mxu0
    %v7886 = vadd.f32 %v7812, %v7885
    %7887 = vmatmul.bf16.gmra.mxu0 %v4013
    %v7888 = vpop.f32.mrf.mxu0
    %v7889 = vadd.f32 %v7815, %v7888
    %v7890 = vpop.f32.mrf.mxu0
    %v7891 = vadd.f32 %v7817, %v7890
    %7892 = vmatmul.bf16.gmra.mxu0 %v4016
    %v7893 = vpop.f32.mrf.mxu0
    %v7894 = vadd.f32 %v7820, %v7893
    %v7895 = vpop.f32.mrf.mxu0
    %v7896 = vadd.f32 %v7822, %v7895
    %7897 = vmatmul.bf16.gmra.mxu0 %v4019
    %v7898 = vpop.f32.mrf.mxu0
    %v7899 = vadd.f32 %v7825, %v7898
    %v7900 = vpop.f32.mrf.mxu0
    %v7901 = vadd.f32 %v7827, %v7900
    %7902 = vmatmul.bf16.gmra.mxu0 %v4022
    %v7903 = vpop.f32.mrf.mxu0
    %v7904 = vadd.f32 %v7830, %v7903
    %v7905 = vpop.f32.mrf.mxu0
    %v7906 = vadd.f32 %v7832, %v7905
    %7907 = vmatmul.bf16.gmra.mxu0 %v4025
    %v7908 = vpop.f32.mrf.mxu0
    %v7909 = vadd.f32 %v7835, %v7908
    %v7910 = vpop.f32.mrf.mxu0
    %v7911 = vadd.f32 %v7837, %v7910
    %7912 = vmatmul.bf16.gmra.mxu0 %v4028
    %v7913 = vpop.f32.mrf.mxu0
    %v7914 = vadd.f32 %v7840, %v7913
    %v7915 = vpop.f32.mrf.mxu0
    %v7916 = vadd.f32 %v7842, %v7915
    %7917 = vmatmul.bf16.gmra.mxu0 %v4031
    %v7918 = vpop.f32.mrf.mxu0
    %v7919 = vadd.f32 %v7845, %v7918
    %v7920 = vpop.f32.mrf.mxu0
    %v7921 = vadd.f32 %v7847, %v7920
    %7922 = vmatmul.bf16.gmra.mxu0 %v4034
    %v7923 = vpop.f32.mrf.mxu0
    %v7924 = vadd.f32 %v7850, %v7923
    %v7925 = vpop.f32.mrf.mxu0
    %v7926 = vadd.f32 %v7852, %v7925
    %7927 = vmatmul.bf16.gmra.mxu0 %v4037
    %v7928 = vpop.f32.mrf.mxu0
    %v7929 = vadd.f32 %v7855, %v7928
    %v7930 = vpop.f32.mrf.mxu0
    %v7931 = vadd.f32 %v7857, %v7930
    %7932 = vmatmul.bf16.gmra.mxu0 %v4040
    %v7933 = vpop.f32.mrf.mxu0
    %v7934 = vadd.f32 %v7860, %v7933
    %v7935 = vpop.f32.mrf.mxu0
    %v7936 = vadd.f32 %v7862, %v7935
    %7937 = vmatmul.bf16.gmra.mxu0 %v4043
    %v7938 = vpop.f32.mrf.mxu0
    %v7939 = vadd.f32 %v7865, %v7938
    %v7940 = vpop.f32.mrf.mxu0
    %v7941 = vadd.f32 %v7867, %v7940
    %7942 = vdwg.mxu0
    %7943 = vmatpush.bf16.msra.mxu0 %v7565
    %7944 = vmatpush.bf16.msra.mxu0 %v7561
    %7945 = vmatpush.bf16.msra.mxu0 %v7557
    %7946 = vmatpush.bf16.msra.mxu0 %v7553
    %7947 = vmatpush.bf16.msra.mxu0 %v7549
    %7948 = vmatpush.bf16.msra.mxu0 %v7545
    %7949 = vmatpush.bf16.msra.mxu0 %v7541
    %7950 = vmatpush.bf16.msra.mxu0 %v7537
    %7951 = vmatmul.bf16.gmra.mxu0 %v3683
    %v7952 = vpop.f32.mrf.mxu0
    %v7953 = vadd.f32 0.0, %v7952
    %v7954 = vpop.f32.mrf.mxu0
    %v7955 = vadd.f32 0.0, %v7954
    %7956 = vmatmul.bf16.gmra.mxu0 %v3685
    %v7957 = vpop.f32.mrf.mxu0
    %v7958 = vadd.f32 0.0, %v7957
    %v7959 = vpop.f32.mrf.mxu0
    %v7960 = vadd.f32 0.0, %v7959
    %7961 = vmatmul.bf16.gmra.mxu0 %v3687
    %v7962 = vpop.f32.mrf.mxu0
    %v7963 = vadd.f32 0.0, %v7962
    %v7964 = vpop.f32.mrf.mxu0
    %v7965 = vadd.f32 0.0, %v7964
    %7966 = vmatmul.bf16.gmra.mxu0 %v3689
    %v7967 = vpop.f32.mrf.mxu0
    %v7968 = vadd.f32 0.0, %v7967
    %v7969 = vpop.f32.mrf.mxu0
    %v7970 = vadd.f32 0.0, %v7969
    %7971 = vmatmul.bf16.gmra.mxu0 %v3691
    %v7972 = vpop.f32.mrf.mxu0
    %v7973 = vadd.f32 0.0, %v7972
    %v7974 = vpop.f32.mrf.mxu0
    %v7975 = vadd.f32 0.0, %v7974
    %7976 = vmatmul.bf16.gmra.mxu0 %v3693
    %v7977 = vpop.f32.mrf.mxu0
    %v7978 = vadd.f32 0.0, %v7977
    %v7979 = vpop.f32.mrf.mxu0
    %v7980 = vadd.f32 0.0, %v7979
    %7981 = vmatmul.bf16.gmra.mxu0 %v3695
    %v7982 = vpop.f32.mrf.mxu0
    %v7983 = vadd.f32 0.0, %v7982
    %v7984 = vpop.f32.mrf.mxu0
    %v7985 = vadd.f32 0.0, %v7984
    %7986 = vmatmul.bf16.gmra.mxu0 %v3697
    %v7987 = vpop.f32.mrf.mxu0
    %v7988 = vadd.f32 0.0, %v7987
    %v7989 = vpop.f32.mrf.mxu0
    %v7990 = vadd.f32 0.0, %v7989
    %7991 = vmatmul.bf16.gmra.mxu0 %v3699
    %v7992 = vpop.f32.mrf.mxu0
    %v7993 = vadd.f32 0.0, %v7992
    %v7994 = vpop.f32.mrf.mxu0
    %v7995 = vadd.f32 0.0, %v7994
    %7996 = vmatmul.bf16.gmra.mxu0 %v3701
    %v7997 = vpop.f32.mrf.mxu0
    %v7998 = vadd.f32 0.0, %v7997
    %v7999 = vpop.f32.mrf.mxu0
    %v8000 = vadd.f32 0.0, %v7999
    %8001 = vmatmul.bf16.gmra.mxu0 %v3703
    %v8002 = vpop.f32.mrf.mxu0
    %v8003 = vadd.f32 0.0, %v8002
    %v8004 = vpop.f32.mrf.mxu0
    %v8005 = vadd.f32 0.0, %v8004
    %8006 = vmatmul.bf16.gmra.mxu0 %v3705
    %v8007 = vpop.f32.mrf.mxu0
    %v8008 = vadd.f32 0.0, %v8007
    %v8009 = vpop.f32.mrf.mxu0
    %v8010 = vadd.f32 0.0, %v8009
    %8011 = vmatmul.bf16.gmra.mxu0 %v3707
    %v8012 = vpop.f32.mrf.mxu0
    %v8013 = vadd.f32 0.0, %v8012
    %v8014 = vpop.f32.mrf.mxu0
    %v8015 = vadd.f32 0.0, %v8014
    %8016 = vdwg.mxu0
    %8017 = vmatpush.bf16.msra.mxu0 0
    %8018 = vmatpush.bf16.msra.mxu0 0
    %8019 = vmatpush.bf16.msra.mxu0 %v7589
    %8020 = vmatpush.bf16.msra.mxu0 %v7585
    %8021 = vmatpush.bf16.msra.mxu0 %v7581
    %8022 = vmatpush.bf16.msra.mxu0 %v7577
    %8023 = vmatpush.bf16.msra.mxu0 %v7573
    %8024 = vmatpush.bf16.msra.mxu0 %v7569
    %8025 = vmatmul.bf16.gmra.mxu0 %v4007
    %v8026 = vpop.f32.mrf.mxu0
    %v8027 = vadd.f32 %v7953, %v8026
    %v8028 = vpop.f32.mrf.mxu0
    %v8029 = vadd.f32 %v7955, %v8028
    %8030 = vmatmul.bf16.gmra.mxu0 %v4010
    %v8031 = vpop.f32.mrf.mxu0
    %v8032 = vadd.f32 %v7958, %v8031
    %v8033 = vpop.f32.mrf.mxu0
    %v8034 = vadd.f32 %v7960, %v8033
    %8035 = vmatmul.bf16.gmra.mxu0 %v4013
    %v8036 = vpop.f32.mrf.mxu0
    %v8037 = vadd.f32 %v7963, %v8036
    %v8038 = vpop.f32.mrf.mxu0
    %v8039 = vadd.f32 %v7965, %v8038
    %8040 = vmatmul.bf16.gmra.mxu0 %v4016
    %v8041 = vpop.f32.mrf.mxu0
    %v8042 = vadd.f32 %v7968, %v8041
    %v8043 = vpop.f32.mrf.mxu0
    %v8044 = vadd.f32 %v7970, %v8043
    %8045 = vmatmul.bf16.gmra.mxu0 %v4019
    %v8046 = vpop.f32.mrf.mxu0
    %v8047 = vadd.f32 %v7973, %v8046
    %v8048 = vpop.f32.mrf.mxu0
    %v8049 = vadd.f32 %v7975, %v8048
    %8050 = vmatmul.bf16.gmra.mxu0 %v4022
    %v8051 = vpop.f32.mrf.mxu0
    %v8052 = vadd.f32 %v7978, %v8051
    %v8053 = vpop.f32.mrf.mxu0
    %v8054 = vadd.f32 %v7980, %v8053
    %8055 = vmatmul.bf16.gmra.mxu0 %v4025
    %v8056 = vpop.f32.mrf.mxu0
    %v8057 = vadd.f32 %v7983, %v8056
    %v8058 = vpop.f32.mrf.mxu0
    %v8059 = vadd.f32 %v7985, %v8058
    %8060 = vmatmul.bf16.gmra.mxu0 %v4028
    %v8061 = vpop.f32.mrf.mxu0
    %v8062 = vadd.f32 %v7988, %v8061
    %v8063 = vpop.f32.mrf.mxu0
    %v8064 = vadd.f32 %v7990, %v8063
    %8065 = vmatmul.bf16.gmra.mxu0 %v4031
    %v8066 = vpop.f32.mrf.mxu0
    %v8067 = vadd.f32 %v7993, %v8066
    %v8068 = vpop.f32.mrf.mxu0
    %v8069 = vadd.f32 %v7995, %v8068
    %8070 = vmatmul.bf16.gmra.mxu0 %v4034
    %v8071 = vpop.f32.mrf.mxu0
    %v8072 = vadd.f32 %v7998, %v8071
    %v8073 = vpop.f32.mrf.mxu0
    %v8074 = vadd.f32 %v8000, %v8073
    %8075 = vmatmul.bf16.gmra.mxu0 %v4037
    %v8076 = vpop.f32.mrf.mxu0
    %v8077 = vadd.f32 %v8003, %v8076
    %v8078 = vpop.f32.mrf.mxu0
    %v8079 = vadd.f32 %v8005, %v8078
    %8080 = vmatmul.bf16.gmra.mxu0 %v4040
    %v8081 = vpop.f32.mrf.mxu0
    %v8082 = vadd.f32 %v8008, %v8081
    %v8083 = vpop.f32.mrf.mxu0
    %v8084 = vadd.f32 %v8010, %v8083
    %8085 = vmatmul.bf16.gmra.mxu0 %v4043
    %v8086 = vpop.f32.mrf.mxu0
    %v8087 = vadd.f32 %v8013, %v8086
    %v8088 = vpop.f32.mrf.mxu0
    %v8089 = vadd.f32 %v8015, %v8088
    %8090 = vdwg.mxu0
    %8091 = vmatpush.bf16.msra.mxu0 %v7566
    %8092 = vmatpush.bf16.msra.mxu0 %v7562
    %8093 = vmatpush.bf16.msra.mxu0 %v7558
    %8094 = vmatpush.bf16.msra.mxu0 %v7554
    %8095 = vmatpush.bf16.msra.mxu0 %v7550
    %8096 = vmatpush.bf16.msra.mxu0 %v7546
    %8097 = vmatpush.bf16.msra.mxu0 %v7542
    %8098 = vmatpush.bf16.msra.mxu0 %v7538
    %8099 = vmatmul.bf16.gmra.mxu0 %v3683
    %v8100 = vpop.f32.mrf.mxu0
    %v8101 = vadd.f32 0.0, %v8100
    %v8102 = vpop.f32.mrf.mxu0
    %v8103 = vadd.f32 0.0, %v8102
    %8104 = vmatmul.bf16.gmra.mxu0 %v3685
    %v8105 = vpop.f32.mrf.mxu0
    %v8106 = vadd.f32 0.0, %v8105
    %v8107 = vpop.f32.mrf.mxu0
    %v8108 = vadd.f32 0.0, %v8107
    %8109 = vmatmul.bf16.gmra.mxu0 %v3687
    %v8110 = vpop.f32.mrf.mxu0
    %v8111 = vadd.f32 0.0, %v8110
    %v8112 = vpop.f32.mrf.mxu0
    %v8113 = vadd.f32 0.0, %v8112
    %8114 = vmatmul.bf16.gmra.mxu0 %v3689
    %v8115 = vpop.f32.mrf.mxu0
    %v8116 = vadd.f32 0.0, %v8115
    %v8117 = vpop.f32.mrf.mxu0
    %v8118 = vadd.f32 0.0, %v8117
    %8119 = vmatmul.bf16.gmra.mxu0 %v3691
    %v8120 = vpop.f32.mrf.mxu0
    %v8121 = vadd.f32 0.0, %v8120
    %v8122 = vpop.f32.mrf.mxu0
    %v8123 = vadd.f32 0.0, %v8122
    %8124 = vmatmul.bf16.gmra.mxu0 %v3693
    %v8125 = vpop.f32.mrf.mxu0
    %v8126 = vadd.f32 0.0, %v8125
    %v8127 = vpop.f32.mrf.mxu0
    %v8128 = vadd.f32 0.0, %v8127
    %8129 = vmatmul.bf16.gmra.mxu0 %v3695
    %v8130 = vpop.f32.mrf.mxu0
    %v8131 = vadd.f32 0.0, %v8130
    %v8132 = vpop.f32.mrf.mxu0
    %v8133 = vadd.f32 0.0, %v8132
    %8134 = vmatmul.bf16.gmra.mxu0 %v3697
    %v8135 = vpop.f32.mrf.mxu0
    %v8136 = vadd.f32 0.0, %v8135
    %v8137 = vpop.f32.mrf.mxu0
    %v8138 = vadd.f32 0.0, %v8137
    %8139 = vmatmul.bf16.gmra.mxu0 %v3699
    %v8140 = vpop.f32.mrf.mxu0
    %v8141 = vadd.f32 0.0, %v8140
    %v8142 = vpop.f32.mrf.mxu0
    %v8143 = vadd.f32 0.0, %v8142
    %8144 = vmatmul.bf16.gmra.mxu0 %v3701
    %v8145 = vpop.f32.mrf.mxu0
    %v8146 = vadd.f32 0.0, %v8145
    %v8147 = vpop.f32.mrf.mxu0
    %v8148 = vadd.f32 0.0, %v8147
    %8149 = vmatmul.bf16.gmra.mxu0 %v3703
    %v8150 = vpop.f32.mrf.mxu0
    %v8151 = vadd.f32 0.0, %v8150
    %v8152 = vpop.f32.mrf.mxu0
    %v8153 = vadd.f32 0.0, %v8152
    %8154 = vmatmul.bf16.gmra.mxu0 %v3705
    %v8155 = vpop.f32.mrf.mxu0
    %v8156 = vadd.f32 0.0, %v8155
    %v8157 = vpop.f32.mrf.mxu0
    %v8158 = vadd.f32 0.0, %v8157
    %8159 = vmatmul.bf16.gmra.mxu0 %v3707
    %v8160 = vpop.f32.mrf.mxu0
    %v8161 = vadd.f32 0.0, %v8160
    %v8162 = vpop.f32.mrf.mxu0
    %v8163 = vadd.f32 0.0, %v8162
    %8164 = vdwg.mxu0
    %8165 = vmatpush.bf16.msra.mxu0 0
    %8166 = vmatpush.bf16.msra.mxu0 0
    %8167 = vmatpush.bf16.msra.mxu0 %v7590
    %8168 = vmatpush.bf16.msra.mxu0 %v7586
    %8169 = vmatpush.bf16.msra.mxu0 %v7582
    %8170 = vmatpush.bf16.msra.mxu0 %v7578
    %8171 = vmatpush.bf16.msra.mxu0 %v7574
    %8172 = vmatpush.bf16.msra.mxu0 %v7570
    %8173 = vmatmul.bf16.gmra.mxu0 %v4007
    %v8174 = vpop.f32.mrf.mxu0
    %v8175 = vadd.f32 %v8101, %v8174
    %v8176 = vpop.f32.mrf.mxu0
    %v8177 = vadd.f32 %v8103, %v8176
    %8178 = vmatmul.bf16.gmra.mxu0 %v4010
    %v8179 = vpop.f32.mrf.mxu0
    %v8180 = vadd.f32 %v8106, %v8179
    %v8181 = vpop.f32.mrf.mxu0
    %v8182 = vadd.f32 %v8108, %v8181
    %8183 = vmatmul.bf16.gmra.mxu0 %v4013
    %v8184 = vpop.f32.mrf.mxu0
    %v8185 = vadd.f32 %v8111, %v8184
    %v8186 = vpop.f32.mrf.mxu0
    %v8187 = vadd.f32 %v8113, %v8186
    %8188 = vmatmul.bf16.gmra.mxu0 %v4016
    %v8189 = vpop.f32.mrf.mxu0
    %v8190 = vadd.f32 %v8116, %v8189
    %v8191 = vpop.f32.mrf.mxu0
    %v8192 = vadd.f32 %v8118, %v8191
    %8193 = vmatmul.bf16.gmra.mxu0 %v4019
    %v8194 = vpop.f32.mrf.mxu0
    %v8195 = vadd.f32 %v8121, %v8194
    %v8196 = vpop.f32.mrf.mxu0
    %v8197 = vadd.f32 %v8123, %v8196
    %8198 = vmatmul.bf16.gmra.mxu0 %v4022
    %v8199 = vpop.f32.mrf.mxu0
    %v8200 = vadd.f32 %v8126, %v8199
    %v8201 = vpop.f32.mrf.mxu0
    %v8202 = vadd.f32 %v8128, %v8201
    %8203 = vmatmul.bf16.gmra.mxu0 %v4025
    %v8204 = vpop.f32.mrf.mxu0
    %v8205 = vadd.f32 %v8131, %v8204
    %v8206 = vpop.f32.mrf.mxu0
    %v8207 = vadd.f32 %v8133, %v8206
    %8208 = vmatmul.bf16.gmra.mxu0 %v4028
    %v8209 = vpop.f32.mrf.mxu0
    %v8210 = vadd.f32 %v8136, %v8209
    %v8211 = vpop.f32.mrf.mxu0
    %v8212 = vadd.f32 %v8138, %v8211
    %8213 = vmatmul.bf16.gmra.mxu0 %v4031
    %v8214 = vpop.f32.mrf.mxu0
    %v8215 = vadd.f32 %v8141, %v8214
    %v8216 = vpop.f32.mrf.mxu0
    %v8217 = vadd.f32 %v8143, %v8216
    %8218 = vmatmul.bf16.gmra.mxu0 %v4034
    %v8219 = vpop.f32.mrf.mxu0
    %v8220 = vadd.f32 %v8146, %v8219
    %v8221 = vpop.f32.mrf.mxu0
    %v8222 = vadd.f32 %v8148, %v8221
    %8223 = vmatmul.bf16.gmra.mxu0 %v4037
    %v8224 = vpop.f32.mrf.mxu0
    %v8225 = vadd.f32 %v8151, %v8224
    %v8226 = vpop.f32.mrf.mxu0
    %v8227 = vadd.f32 %v8153, %v8226
    %8228 = vmatmul.bf16.gmra.mxu0 %v4040
    %v8229 = vpop.f32.mrf.mxu0
    %v8230 = vadd.f32 %v8156, %v8229
    %v8231 = vpop.f32.mrf.mxu0
    %v8232 = vadd.f32 %v8158, %v8231
    %8233 = vmatmul.bf16.gmra.mxu0 %v4043
    %v8234 = vpop.f32.mrf.mxu0
    %v8235 = vadd.f32 %v8161, %v8234
    %v8236 = vpop.f32.mrf.mxu0
    %v8237 = vadd.f32 %v8163, %v8236
    %8238 = vdwg.mxu0
    %v8239 = vadd.f32 %v7206, %v7731
    %v8240 = vadd.f32 %v7207, %v7879
    %v8241 = vadd.f32 %v7208, %v8027
    %v8242 = vadd.f32 %v7209, %v8175
    %v8243 = vadd.f32 %v7210, %v7733
    %v8244 = vadd.f32 %v7211, %v7881
    %v8245 = vadd.f32 %v7212, %v8029
    %v8246 = vadd.f32 %v7213, %v8177
    %v8247 = vadd.f32 %v7214, %v7736
    %v8248 = vadd.f32 %v7215, %v7884
    %v8249 = vadd.f32 %v7216, %v8032
    %v8250 = vadd.f32 %v7217, %v8180
    %v8251 = vadd.f32 %v7218, %v7738
    %v8252 = vadd.f32 %v7219, %v7886
    %v8253 = vadd.f32 %v7220, %v8034
    %v8254 = vadd.f32 %v7221, %v8182
    %v8255 = vadd.f32 %v7222, %v7741
    %v8256 = vadd.f32 %v7223, %v7889
    %v8257 = vadd.f32 %v7224, %v8037
    %v8258 = vadd.f32 %v7225, %v8185
    %v8259 = vadd.f32 %v7226, %v7743
    %v8260 = vadd.f32 %v7227, %v7891
    %v8261 = vadd.f32 %v7228, %v8039
    %v8262 = vadd.f32 %v7229, %v8187
    %v8263 = vadd.f32 %v7230, %v7746
    %v8264 = vadd.f32 %v7231, %v7894
    %v8265 = vadd.f32 %v7232, %v8042
    %v8266 = vadd.f32 %v7233, %v8190
    %v8267 = vadd.f32 %v7234, %v7748
    %v8268 = vadd.f32 %v7235, %v7896
    %v8269 = vadd.f32 %v7236, %v8044
    %v8270 = vadd.f32 %v7237, %v8192
    %v8271 = vadd.f32 %v7238, %v7751
    %v8272 = vadd.f32 %v7239, %v7899
    %v8273 = vadd.f32 %v7240, %v8047
    %v8274 = vadd.f32 %v7241, %v8195
    %v8275 = vadd.f32 %v7242, %v7753
    %v8276 = vadd.f32 %v7243, %v7901
    %v8277 = vadd.f32 %v7244, %v8049
    %v8278 = vadd.f32 %v7245, %v8197
    %v8279 = vadd.f32 %v7246, %v7756
    %v8280 = vadd.f32 %v7247, %v7904
    %v8281 = vadd.f32 %v7248, %v8052
    %v8282 = vadd.f32 %v7249, %v8200
    %v8283 = vadd.f32 %v7250, %v7758
    %v8284 = vadd.f32 %v7251, %v7906
    %v8285 = vadd.f32 %v7252, %v8054
    %v8286 = vadd.f32 %v7253, %v8202
    %v8287 = vadd.f32 %v7254, %v7761
    %v8288 = vadd.f32 %v7255, %v7909
    %v8289 = vadd.f32 %v7256, %v8057
    %v8290 = vadd.f32 %v7257, %v8205
    %v8291 = vadd.f32 %v7258, %v7763
    %v8292 = vadd.f32 %v7259, %v7911
    %v8293 = vadd.f32 %v7260, %v8059
    %v8294 = vadd.f32 %v7261, %v8207
    %v8295 = vadd.f32 %v7262, %v7766
    %v8296 = vadd.f32 %v7263, %v7914
    %v8297 = vadd.f32 %v7264, %v8062
    %v8298 = vadd.f32 %v7265, %v8210
    %v8299 = vadd.f32 %v7266, %v7768
    %v8300 = vadd.f32 %v7267, %v7916
    %v8301 = vadd.f32 %v7268, %v8064
    %v8302 = vadd.f32 %v7269, %v8212
    %v8303 = vadd.f32 %v7270, %v7771
    %v8304 = vadd.f32 %v7271, %v7919
    %v8305 = vadd.f32 %v7272, %v8067
    %v8306 = vadd.f32 %v7273, %v8215
    %v8307 = vadd.f32 %v7274, %v7773
    %v8308 = vadd.f32 %v7275, %v7921
    %v8309 = vadd.f32 %v7276, %v8069
    %v8310 = vadd.f32 %v7277, %v8217
    %v8311 = vadd.f32 %v7278, %v7776
    %v8312 = vadd.f32 %v7279, %v7924
    %v8313 = vadd.f32 %v7280, %v8072
    %v8314 = vadd.f32 %v7281, %v8220
    %v8315 = vadd.f32 %v7282, %v7778
    %v8316 = vadd.f32 %v7283, %v7926
    %v8317 = vadd.f32 %v7284, %v8074
    %v8318 = vadd.f32 %v7285, %v8222
    %v8319 = vadd.f32 %v7286, %v7781
    %v8320 = vadd.f32 %v7287, %v7929
    %v8321 = vadd.f32 %v7288, %v8077
    %v8322 = vadd.f32 %v7289, %v8225
    %v8323 = vadd.f32 %v7290, %v7783
    %v8324 = vadd.f32 %v7291, %v7931
    %v8325 = vadd.f32 %v7292, %v8079
    %v8326 = vadd.f32 %v7293, %v8227
    %v8327 = vadd.f32 %v7294, %v7786
    %v8328 = vadd.f32 %v7295, %v7934
    %v8329 = vadd.f32 %v7296, %v8082
    %v8330 = vadd.f32 %v7297, %v8230
    %v8331 = vadd.f32 %v7298, %v7788
    %v8332 = vadd.f32 %v7299, %v7936
    %v8333 = vadd.f32 %v7300, %v8084
    %v8334 = vadd.f32 %v7301, %v8232
    %v8335 = vadd.f32 %v7302, %v7791
    %v8336 = vadd.f32 %v7303, %v7939
    %v8337 = vadd.f32 %v7304, %v8087
    %v8338 = vadd.f32 %v7305, %v8235
    %v8339 = vadd.f32 %v7306, %v7793
    %v8340 = vadd.f32 %v7307, %v7941
    %v8341 = vadd.f32 %v7308, %v8089
    %v8342 = vadd.f32 %v7309, %v8237
    %8343 = vst [vmem:[#allocation2] sm:$0xff] %v8239
    %8344 = vst [vmem:[#allocation2 + $0x8] sm:$0xff] %v8240
    %8345 = vst [vmem:[#allocation2 + $0x10] sm:$0xff] %v8241
    %8346 = vst.msk [vmem:[#allocation2 + $0x18] sm:$0xff] %vm662, %v8242
    %8347 = vst [vmem:[#allocation2 + $0x20] sm:$0xff] %v8243
    %8348 = vst [vmem:[#allocation2 + $0x28] sm:$0xff] %v8244
    %8349 = vst [vmem:[#allocation2 + $0x30] sm:$0xff] %v8245
    %8350 = vst.msk [vmem:[#allocation2 + $0x38] sm:$0xff] %vm662, %v8246
    %8351 = vst [vmem:[#allocation2 + $0x40] sm:$0xff] %v8247
    %8352 = vst [vmem:[#allocation2 + $0x48] sm:$0xff] %v8248
    %8353 = vst [vmem:[#allocation2 + $0x50] sm:$0xff] %v8249
    %8354 = vst.msk [vmem:[#allocation2 + $0x58] sm:$0xff] %vm662, %v8250
    %8355 = vst [vmem:[#allocation2 + $0x60] sm:$0xff] %v8251
    %8356 = vst [vmem:[#allocation2 + $0x68] sm:$0xff] %v8252
    %8357 = vst [vmem:[#allocation2 + $0x70] sm:$0xff] %v8253
    %8358 = vst.msk [vmem:[#allocation2 + $0x78] sm:$0xff] %vm662, %v8254
    %8359 = vst [vmem:[#allocation2 + $0x80] sm:$0xff] %v8255
    %8360 = vst [vmem:[#allocation2 + $0x88] sm:$0xff] %v8256
    %8361 = vst [vmem:[#allocation2 + $0x90] sm:$0xff] %v8257
    %8362 = vst.msk [vmem:[#allocation2 + $0x98] sm:$0xff] %vm662, %v8258
    %8363 = vst [vmem:[#allocation2 + $0xa0] sm:$0xff] %v8259
    %8364 = vst [vmem:[#allocation2 + $0xa8] sm:$0xff] %v8260
    %8365 = vst [vmem:[#allocation2 + $0xb0] sm:$0xff] %v8261
    %8366 = vst.msk [vmem:[#allocation2 + $0xb8] sm:$0xff] %vm662, %v8262
    %8367 = vst [vmem:[#allocation2 + $0xc0] sm:$0xff] %v8263
    %8368 = vst [vmem:[#allocation2 + $0xc8] sm:$0xff] %v8264
    %8369 = vst [vmem:[#allocation2 + $0xd0] sm:$0xff] %v8265
    %8370 = vst.msk [vmem:[#allocation2 + $0xd8] sm:$0xff] %vm662, %v8266
    %8371 = vst [vmem:[#allocation2 + $0xe0] sm:$0xff] %v8267
    %8372 = vst [vmem:[#allocation2 + $0xe8] sm:$0xff] %v8268
    %8373 = vst [vmem:[#allocation2 + $0xf0] sm:$0xff] %v8269
    %8374 = vst.msk [vmem:[#allocation2 + $0xf8] sm:$0xff] %vm662, %v8270
    %8375 = vst [vmem:[#allocation2 + $0x100] sm:$0xff] %v8271
    %8376 = vst [vmem:[#allocation2 + $0x108] sm:$0xff] %v8272
    %8377 = vst [vmem:[#allocation2 + $0x110] sm:$0xff] %v8273
    %8378 = vst.msk [vmem:[#allocation2 + $0x118] sm:$0xff] %vm662, %v8274
    %8379 = vst [vmem:[#allocation2 + $0x120] sm:$0xff] %v8275
    %8380 = vst [vmem:[#allocation2 + $0x128] sm:$0xff] %v8276
    %8381 = vst [vmem:[#allocation2 + $0x130] sm:$0xff] %v8277
    %8382 = vst.msk [vmem:[#allocation2 + $0x138] sm:$0xff] %vm662, %v8278
    %8383 = vst [vmem:[#allocation2 + $0x140] sm:$0xff] %v8279
    %8384 = vst [vmem:[#allocation2 + $0x148] sm:$0xff] %v8280
    %8385 = vst [vmem:[#allocation2 + $0x150] sm:$0xff] %v8281
    %8386 = vst.msk [vmem:[#allocation2 + $0x158] sm:$0xff] %vm662, %v8282
    %8387 = vst [vmem:[#allocation2 + $0x160] sm:$0xff] %v8283
    %8388 = vst [vmem:[#allocation2 + $0x168] sm:$0xff] %v8284
    %8389 = vst [vmem:[#allocation2 + $0x170] sm:$0xff] %v8285
    %8390 = vst.msk [vmem:[#allocation2 + $0x178] sm:$0xff] %vm662, %v8286
    %8391 = vst [vmem:[#allocation2 + $0x180] sm:$0xff] %v8287
    %8392 = vst [vmem:[#allocation2 + $0x188] sm:$0xff] %v8288
    %8393 = vst [vmem:[#allocation2 + $0x190] sm:$0xff] %v8289
    %8394 = vst.msk [vmem:[#allocation2 + $0x198] sm:$0xff] %vm662, %v8290
    %8395 = vst [vmem:[#allocation2 + $0x1a0] sm:$0xff] %v8291
    %8396 = vst [vmem:[#allocation2 + $0x1a8] sm:$0xff] %v8292
    %8397 = vst [vmem:[#allocation2 + $0x1b0] sm:$0xff] %v8293
    %8398 = vst.msk [vmem:[#allocation2 + $0x1b8] sm:$0xff] %vm662, %v8294
    %8399 = vst [vmem:[#allocation2 + $0x1c0] sm:$0xff] %v8295
    %8400 = vst [vmem:[#allocation2 + $0x1c8] sm:$0xff] %v8296
    %8401 = vst [vmem:[#allocation2 + $0x1d0] sm:$0xff] %v8297
    %8402 = vst.msk [vmem:[#allocation2 + $0x1d8] sm:$0xff] %vm662, %v8298
    %8403 = vst [vmem:[#allocation2 + $0x1e0] sm:$0xff] %v8299
    %8404 = vst [vmem:[#allocation2 + $0x1e8] sm:$0xff] %v8300
    %8405 = vst [vmem:[#allocation2 + $0x1f0] sm:$0xff] %v8301
    %8406 = vst.msk [vmem:[#allocation2 + $0x1f8] sm:$0xff] %vm662, %v8302
    %8407 = vst [vmem:[#allocation2 + $0x200] sm:$0xff] %v8303
    %8408 = vst [vmem:[#allocation2 + $0x208] sm:$0xff] %v8304
    %8409 = vst [vmem:[#allocation2 + $0x210] sm:$0xff] %v8305
    %8410 = vst.msk [vmem:[#allocation2 + $0x218] sm:$0xff] %vm662, %v8306
    %8411 = vst [vmem:[#allocation2 + $0x220] sm:$0xff] %v8307
    %8412 = vst [vmem:[#allocation2 + $0x228] sm:$0xff] %v8308
    %8413 = vst [vmem:[#allocation2 + $0x230] sm:$0xff] %v8309
    %8414 = vst.msk [vmem:[#allocation2 + $0x238] sm:$0xff] %vm662, %v8310
    %8415 = vst [vmem:[#allocation2 + $0x240] sm:$0xff] %v8311
    %8416 = vst [vmem:[#allocation2 + $0x248] sm:$0xff] %v8312
    %8417 = vst [vmem:[#allocation2 + $0x250] sm:$0xff] %v8313
    %8418 = vst.msk [vmem:[#allocation2 + $0x258] sm:$0xff] %vm662, %v8314
    %8419 = vst [vmem:[#allocation2 + $0x260] sm:$0xff] %v8315
    %8420 = vst [vmem:[#allocation2 + $0x268] sm:$0xff] %v8316
    %8421 = vst [vmem:[#allocation2 + $0x270] sm:$0xff] %v8317
    %8422 = vst.msk [vmem:[#allocation2 + $0x278] sm:$0xff] %vm662, %v8318
    %8423 = vst [vmem:[#allocation2 + $0x280] sm:$0xff] %v8319
    %8424 = vst [vmem:[#allocation2 + $0x288] sm:$0xff] %v8320
    %8425 = vst [vmem:[#allocation2 + $0x290] sm:$0xff] %v8321
    %8426 = vst.msk [vmem:[#allocation2 + $0x298] sm:$0xff] %vm662, %v8322
    %8427 = vst [vmem:[#allocation2 + $0x2a0] sm:$0xff] %v8323
    %8428 = vst [vmem:[#allocation2 + $0x2a8] sm:$0xff] %v8324
    %8429 = vst [vmem:[#allocation2 + $0x2b0] sm:$0xff] %v8325
    %8430 = vst.msk [vmem:[#allocation2 + $0x2b8] sm:$0xff] %vm662, %v8326
    %8431 = vst [vmem:[#allocation2 + $0x2c0] sm:$0xff] %v8327
    %8432 = vst [vmem:[#allocation2 + $0x2c8] sm:$0xff] %v8328
    %8433 = vst [vmem:[#allocation2 + $0x2d0] sm:$0xff] %v8329
    %8434 = vst.msk [vmem:[#allocation2 + $0x2d8] sm:$0xff] %vm662, %v8330
    %8435 = vst [vmem:[#allocation2 + $0x2e0] sm:$0xff] %v8331
    %8436 = vst [vmem:[#allocation2 + $0x2e8] sm:$0xff] %v8332
    %8437 = vst [vmem:[#allocation2 + $0x2f0] sm:$0xff] %v8333
    %8438 = vst.msk [vmem:[#allocation2 + $0x2f8] sm:$0xff] %vm662, %v8334
    %8439 = vst [vmem:[#allocation2 + $0x300] sm:$0xff] %v8335
    %8440 = vst [vmem:[#allocation2 + $0x308] sm:$0xff] %v8336
    %8441 = vst [vmem:[#allocation2 + $0x310] sm:$0xff] %v8337
    %8442 = vst.msk [vmem:[#allocation2 + $0x318] sm:$0xff] %vm662, %v8338
    %8443 = vst [vmem:[#allocation2 + $0x320] sm:$0xff] %v8339
    %8444 = vst [vmem:[#allocation2 + $0x328] sm:$0xff] %v8340
    %8445 = vst [vmem:[#allocation2 + $0x330] sm:$0xff] %v8341
    %8446 = vst.msk [vmem:[#allocation2 + $0x338] sm:$0xff] %vm662, %v8342
    %v8447 = vld [vmem:[#allocation2] sm:$0xff]
    %v8448 = vld [vmem:[#allocation2 + $0x8] sm:$0xff]
    %v8449 = vld [vmem:[#allocation2 + $0x10] sm:$0xff]
    %v8450 = vld [vmem:[#allocation2 + $0x18] sm:$0xff]
    %v8451 = vld [vmem:[#allocation2 + $0x20] sm:$0xff]
    %v8452 = vld [vmem:[#allocation2 + $0x28] sm:$0xff]
    %v8453 = vld [vmem:[#allocation2 + $0x30] sm:$0xff]
    %v8454 = vld [vmem:[#allocation2 + $0x38] sm:$0xff]
    %v8455 = vld [vmem:[#allocation2 + $0x40] sm:$0xff]
    %v8456 = vld [vmem:[#allocation2 + $0x48] sm:$0xff]
    %v8457 = vld [vmem:[#allocation2 + $0x50] sm:$0xff]
    %v8458 = vld [vmem:[#allocation2 + $0x58] sm:$0xff]
    %v8459 = vld [vmem:[#allocation2 + $0x60] sm:$0xff]
    %v8460 = vld [vmem:[#allocation2 + $0x68] sm:$0xff]
    %v8461 = vld [vmem:[#allocation2 + $0x70] sm:$0xff]
    %v8462 = vld [vmem:[#allocation2 + $0x78] sm:$0xff]
    %v8463 = vld [vmem:[#allocation2 + $0x80] sm:$0xff]
    %v8464 = vld [vmem:[#allocation2 + $0x88] sm:$0xff]
    %v8465 = vld [vmem:[#allocation2 + $0x90] sm:$0xff]
    %v8466 = vld [vmem:[#allocation2 + $0x98] sm:$0xff]
    %v8467 = vld [vmem:[#allocation2 + $0xa0] sm:$0xff]
    %v8468 = vld [vmem:[#allocation2 + $0xa8] sm:$0xff]
    %v8469 = vld [vmem:[#allocation2 + $0xb0] sm:$0xff]
    %v8470 = vld [vmem:[#allocation2 + $0xb8] sm:$0xff]
    %v8471 = vld [vmem:[#allocation2 + $0xc0] sm:$0xff]
    %v8472 = vld [vmem:[#allocation2 + $0xc8] sm:$0xff]
    %v8473 = vld [vmem:[#allocation2 + $0xd0] sm:$0xff]
    %v8474 = vld [vmem:[#allocation2 + $0xd8] sm:$0xff]
    %v8475 = vld [vmem:[#allocation2 + $0xe0] sm:$0xff]
    %v8476 = vld [vmem:[#allocation2 + $0xe8] sm:$0xff]
    %v8477 = vld [vmem:[#allocation2 + $0xf0] sm:$0xff]
    %v8478 = vld [vmem:[#allocation2 + $0xf8] sm:$0xff]
    %v8479 = vld [vmem:[#allocation2 + $0x100] sm:$0xff]
    %v8480 = vld [vmem:[#allocation2 + $0x108] sm:$0xff]
    %v8481 = vld [vmem:[#allocation2 + $0x110] sm:$0xff]
    %v8482 = vld [vmem:[#allocation2 + $0x118] sm:$0xff]
    %v8483 = vld [vmem:[#allocation2 + $0x120] sm:$0xff]
    %v8484 = vld [vmem:[#allocation2 + $0x128] sm:$0xff]
    %v8485 = vld [vmem:[#allocation2 + $0x130] sm:$0xff]
    %v8486 = vld [vmem:[#allocation2 + $0x138] sm:$0xff]
    %v8487 = vld [vmem:[#allocation2 + $0x140] sm:$0xff]
    %v8488 = vld [vmem:[#allocation2 + $0x148] sm:$0xff]
    %v8489 = vld [vmem:[#allocation2 + $0x150] sm:$0xff]
    %v8490 = vld [vmem:[#allocation2 + $0x158] sm:$0xff]
    %v8491 = vld [vmem:[#allocation2 + $0x160] sm:$0xff]
    %v8492 = vld [vmem:[#allocation2 + $0x168] sm:$0xff]
    %v8493 = vld [vmem:[#allocation2 + $0x170] sm:$0xff]
    %v8494 = vld [vmem:[#allocation2 + $0x178] sm:$0xff]
    %v8495 = vld [vmem:[#allocation2 + $0x180] sm:$0xff]
    %v8496 = vld [vmem:[#allocation2 + $0x188] sm:$0xff]
    %v8497 = vld [vmem:[#allocation2 + $0x190] sm:$0xff]
    %v8498 = vld [vmem:[#allocation2 + $0x198] sm:$0xff]
    %v8499 = vld [vmem:[#allocation2 + $0x1a0] sm:$0xff]
    %v8500 = vld [vmem:[#allocation2 + $0x1a8] sm:$0xff]
    %v8501 = vld [vmem:[#allocation2 + $0x1b0] sm:$0xff]
    %v8502 = vld [vmem:[#allocation2 + $0x1b8] sm:$0xff]
    %v8503 = vld [vmem:[#allocation2 + $0x1c0] sm:$0xff]
    %v8504 = vld [vmem:[#allocation2 + $0x1c8] sm:$0xff]
    %v8505 = vld [vmem:[#allocation2 + $0x1d0] sm:$0xff]
    %v8506 = vld [vmem:[#allocation2 + $0x1d8] sm:$0xff]
    %v8507 = vld [vmem:[#allocation2 + $0x1e0] sm:$0xff]
    %v8508 = vld [vmem:[#allocation2 + $0x1e8] sm:$0xff]
    %v8509 = vld [vmem:[#allocation2 + $0x1f0] sm:$0xff]
    %v8510 = vld [vmem:[#allocation2 + $0x1f8] sm:$0xff]
    %v8511 = vld [vmem:[#allocation2 + $0x200] sm:$0xff]
    %v8512 = vld [vmem:[#allocation2 + $0x208] sm:$0xff]
    %v8513 = vld [vmem:[#allocation2 + $0x210] sm:$0xff]
    %v8514 = vld [vmem:[#allocation2 + $0x218] sm:$0xff]
    %v8515 = vld [vmem:[#allocation2 + $0x220] sm:$0xff]
    %v8516 = vld [vmem:[#allocation2 + $0x228] sm:$0xff]
    %v8517 = vld [vmem:[#allocation2 + $0x230] sm:$0xff]
    %v8518 = vld [vmem:[#allocation2 + $0x238] sm:$0xff]
    %v8519 = vld [vmem:[#allocation2 + $0x240] sm:$0xff]
    %v8520 = vld [vmem:[#allocation2 + $0x248] sm:$0xff]
    %v8521 = vld [vmem:[#allocation2 + $0x250] sm:$0xff]
    %v8522 = vld [vmem:[#allocation2 + $0x258] sm:$0xff]
    %v8523 = vld [vmem:[#allocation2 + $0x260] sm:$0xff]
    %v8524 = vld [vmem:[#allocation2 + $0x268] sm:$0xff]
    %v8525 = vld [vmem:[#allocation2 + $0x270] sm:$0xff]
    %v8526 = vld [vmem:[#allocation2 + $0x278] sm:$0xff]
    %v8527 = vld [vmem:[#allocation2 + $0x280] sm:$0xff]
    %v8528 = vld [vmem:[#allocation2 + $0x288] sm:$0xff]
    %v8529 = vld [vmem:[#allocation2 + $0x290] sm:$0xff]
    %v8530 = vld [vmem:[#allocation2 + $0x298] sm:$0xff]
    %v8531 = vld [vmem:[#allocation2 + $0x2a0] sm:$0xff]
    %v8532 = vld [vmem:[#allocation2 + $0x2a8] sm:$0xff]
    %v8533 = vld [vmem:[#allocation2 + $0x2b0] sm:$0xff]
    %v8534 = vld [vmem:[#allocation2 + $0x2b8] sm:$0xff]
    %v8535 = vld [vmem:[#allocation2 + $0x2c0] sm:$0xff]
    %v8536 = vld [vmem:[#allocation2 + $0x2c8] sm:$0xff]
    %v8537 = vld [vmem:[#allocation2 + $0x2d0] sm:$0xff]
    %v8538 = vld [vmem:[#allocation2 + $0x2d8] sm:$0xff]
    %v8539 = vld [vmem:[#allocation2 + $0x2e0] sm:$0xff]
    %v8540 = vld [vmem:[#allocation2 + $0x2e8] sm:$0xff]
    %v8541 = vld [vmem:[#allocation2 + $0x2f0] sm:$0xff]
    %v8542 = vld [vmem:[#allocation2 + $0x2f8] sm:$0xff]
    %s8543 = scalar_lea.vmem [#allocation7], 1792
    %v8544 = vld [vmem:[%s8543] sm:$0xff]
    %v8545 = vld [vmem:[%s8543 + $0x8] sm:$0xff]
    %v8546 = vld [vmem:[%s8543 + $0x10] sm:$0xff]
    %v8547 = vld [vmem:[%s8543 + $0x18] sm:$0xff]
    %v8548 = vld [vmem:[%s8543 + $0x20] sm:$0xff]
    %v8549 = vld [vmem:[%s8543 + $0x28] sm:$0xff]
    %v8550 = vld [vmem:[%s8543 + $0x30] sm:$0xff]
    %v8551 = vld [vmem:[%s8543 + $0x38] sm:$0xff]
    %v8552 = vld [vmem:[%s8543 + $0x40] sm:$0xff]
    %v8553 = vld [vmem:[%s8543 + $0x48] sm:$0xff]
    %v8554 = vld [vmem:[%s8543 + $0x50] sm:$0xff]
    %v8555 = vld [vmem:[%s8543 + $0x58] sm:$0xff]
    %v8556 = vld [vmem:[%s8543 + $0x60] sm:$0xff]
    %v8557 = vld [vmem:[%s8543 + $0x68] sm:$0xff]
    %v8558 = vld [vmem:[%s8543 + $0x70] sm:$0xff]
    %v8559 = vld [vmem:[%s8543 + $0x78] sm:$0xff]
    %v8560 = vld [vmem:[%s8543 + $0x80] sm:$0xff]
    %v8561 = vld [vmem:[%s8543 + $0x88] sm:$0xff]
    %v8562 = vld [vmem:[%s8543 + $0x90] sm:$0xff]
    %v8563 = vld [vmem:[%s8543 + $0x98] sm:$0xff]
    %v8564 = vld [vmem:[%s8543 + $0xa0] sm:$0xff]
    %v8565 = vld [vmem:[%s8543 + $0xa8] sm:$0xff]
    %v8566 = vld [vmem:[%s8543 + $0xb0] sm:$0xff]
    %v8567 = vld [vmem:[%s8543 + $0xb8] sm:$0xff]
    %v8568 = vld [vmem:[%s8543 + $0xc0] sm:$0xff]
    %v8569 = vld [vmem:[%s8543 + $0xc8] sm:$0xff]
    %v8570 = vld [vmem:[%s8543 + $0xd0] sm:$0xff]
    %v8571 = vld [vmem:[%s8543 + $0xd8] sm:$0xff]
    %v8572 = vld [vmem:[%s8543 + $0xe0] sm:$0xff]
    %v8573 = vld [vmem:[%s8543 + $0xe8] sm:$0xff]
    %v8574 = vld [vmem:[%s8543 + $0xf0] sm:$0xff]
    %v8575 = vld [vmem:[%s8543 + $0xf8] sm:$0xff]
    %v8576 = vld [vmem:[%s8543 + $0x100] sm:$0xff]
    %v8577 = vld [vmem:[%s8543 + $0x108] sm:$0xff]
    %v8578 = vld [vmem:[%s8543 + $0x110] sm:$0xff]
    %v8579 = vld [vmem:[%s8543 + $0x118] sm:$0xff]
    %v8580 = vld [vmem:[%s8543 + $0x120] sm:$0xff]
    %v8581 = vld [vmem:[%s8543 + $0x128] sm:$0xff]
    %v8582 = vld [vmem:[%s8543 + $0x130] sm:$0xff]
    %v8583 = vld [vmem:[%s8543 + $0x138] sm:$0xff]
    %v8584 = vld [vmem:[%s8543 + $0x140] sm:$0xff]
    %v8585 = vld [vmem:[%s8543 + $0x148] sm:$0xff]
    %v8586 = vld [vmem:[%s8543 + $0x150] sm:$0xff]
    %v8587 = vld [vmem:[%s8543 + $0x158] sm:$0xff]
    %v8588 = vld [vmem:[%s8543 + $0x160] sm:$0xff]
    %v8589 = vld [vmem:[%s8543 + $0x168] sm:$0xff]
    %v8590 = vld [vmem:[%s8543 + $0x170] sm:$0xff]
    %v8591 = vld [vmem:[%s8543 + $0x178] sm:$0xff]
    %v8592 = vld [vmem:[%s8543 + $0x180] sm:$0xff]
    %v8593 = vld [vmem:[%s8543 + $0x188] sm:$0xff]
    %v8594 = vld [vmem:[%s8543 + $0x190] sm:$0xff]
    %v8595 = vld [vmem:[%s8543 + $0x198] sm:$0xff]
    %v8596 = vld [vmem:[%s8543 + $0x1a0] sm:$0xff]
    %v8597 = vld [vmem:[%s8543 + $0x1a8] sm:$0xff]
    %v8598 = vld [vmem:[%s8543 + $0x1b0] sm:$0xff]
    %v8599 = vld [vmem:[%s8543 + $0x1b8] sm:$0xff]
    %v8656 = vunpack.c.l.b16 %v8544
    %v8657 = vunpack.c.h.b16 %v8544
    %v8658 = vunpack.c.l.b16 %v8545
    %v8659 = vunpack.c.h.b16 %v8545
    %v8660 = vunpack.c.l.b16 %v8546
    %v8661 = vunpack.c.h.b16 %v8546
    %v8662 = vunpack.c.l.b16 %v8547
    %v8663 = vunpack.c.h.b16 %v8547
    %v8664 = vunpack.c.l.b16 %v8548
    %v8665 = vunpack.c.h.b16 %v8548
    %v8666 = vunpack.c.l.b16 %v8549
    %v8667 = vunpack.c.h.b16 %v8549
    %v8668 = vunpack.c.l.b16 %v8550
    %v8669 = vunpack.c.h.b16 %v8550
    %v8670 = vunpack.c.l.b16 %v8551
    %v8671 = vunpack.c.h.b16 %v8551
    %v8672 = vunpack.c.l.b16 %v8552
    %v8673 = vunpack.c.h.b16 %v8552
    %v8674 = vunpack.c.l.b16 %v8553
    %v8675 = vunpack.c.h.b16 %v8553
    %v8676 = vunpack.c.l.b16 %v8554
    %v8677 = vunpack.c.h.b16 %v8554
    %v8678 = vunpack.c.l.b16 %v8555
    %v8679 = vunpack.c.h.b16 %v8555
    %v8680 = vunpack.c.l.b16 %v8556
    %v8681 = vunpack.c.h.b16 %v8556
    %v8682 = vunpack.c.l.b16 %v8557
    %v8683 = vunpack.c.h.b16 %v8557
    %v8684 = vunpack.c.l.b16 %v8558
    %v8685 = vunpack.c.h.b16 %v8558
    %v8686 = vunpack.c.l.b16 %v8559
    %v8687 = vunpack.c.h.b16 %v8559
    %v8688 = vunpack.c.l.b16 %v8560
    %v8689 = vunpack.c.h.b16 %v8560
    %v8690 = vunpack.c.l.b16 %v8561
    %v8691 = vunpack.c.h.b16 %v8561
    %v8692 = vunpack.c.l.b16 %v8562
    %v8693 = vunpack.c.h.b16 %v8562
    %v8694 = vunpack.c.l.b16 %v8563
    %v8695 = vunpack.c.h.b16 %v8563
    %v8696 = vunpack.c.l.b16 %v8564
    %v8697 = vunpack.c.h.b16 %v8564
    %v8698 = vunpack.c.l.b16 %v8565
    %v8699 = vunpack.c.h.b16 %v8565
    %v8700 = vunpack.c.l.b16 %v8566
    %v8701 = vunpack.c.h.b16 %v8566
    %v8702 = vunpack.c.l.b16 %v8567
    %v8703 = vunpack.c.h.b16 %v8567
    %v8704 = vunpack.c.l.b16 %v8568
    %v8705 = vunpack.c.h.b16 %v8568
    %v8706 = vunpack.c.l.b16 %v8569
    %v8707 = vunpack.c.h.b16 %v8569
    %v8708 = vunpack.c.l.b16 %v8570
    %v8709 = vunpack.c.h.b16 %v8570
    %v8710 = vunpack.c.l.b16 %v8571
    %v8711 = vunpack.c.h.b16 %v8571
    %v8712 = vunpack.c.l.b16 %v8572
    %v8713 = vunpack.c.h.b16 %v8572
    %v8714 = vunpack.c.l.b16 %v8573
    %v8715 = vunpack.c.h.b16 %v8573
    %v8716 = vunpack.c.l.b16 %v8574
    %v8717 = vunpack.c.h.b16 %v8574
    %v8718 = vunpack.c.l.b16 %v8575
    %v8719 = vunpack.c.h.b16 %v8575
    %v8720 = vunpack.c.l.b16 %v8576
    %v8721 = vunpack.c.h.b16 %v8576
    %v8722 = vunpack.c.l.b16 %v8577
    %v8723 = vunpack.c.h.b16 %v8577
    %v8724 = vunpack.c.l.b16 %v8578
    %v8725 = vunpack.c.h.b16 %v8578
    %v8726 = vunpack.c.l.b16 %v8579
    %v8727 = vunpack.c.h.b16 %v8579
    %v8728 = vunpack.c.l.b16 %v8580
    %v8729 = vunpack.c.h.b16 %v8580
    %v8730 = vunpack.c.l.b16 %v8581
    %v8731 = vunpack.c.h.b16 %v8581
    %v8732 = vunpack.c.l.b16 %v8582
    %v8733 = vunpack.c.h.b16 %v8582
    %v8734 = vunpack.c.l.b16 %v8583
    %v8735 = vunpack.c.h.b16 %v8583
    %v8736 = vunpack.c.l.b16 %v8584
    %v8737 = vunpack.c.h.b16 %v8584
    %v8738 = vunpack.c.l.b16 %v8585
    %v8739 = vunpack.c.h.b16 %v8585
    %v8740 = vunpack.c.l.b16 %v8586
    %v8741 = vunpack.c.h.b16 %v8586
    %v8742 = vunpack.c.l.b16 %v8587
    %v8743 = vunpack.c.h.b16 %v8587
    %v8744 = vunpack.c.l.b16 %v8588
    %v8745 = vunpack.c.h.b16 %v8588
    %v8746 = vunpack.c.l.b16 %v8589
    %v8747 = vunpack.c.h.b16 %v8589
    %v8748 = vunpack.c.l.b16 %v8590
    %v8749 = vunpack.c.h.b16 %v8590
    %v8750 = vunpack.c.l.b16 %v8591
    %v8751 = vunpack.c.h.b16 %v8591
    %v8752 = vunpack.c.l.b16 %v8592
    %v8753 = vunpack.c.h.b16 %v8592
    %v8754 = vunpack.c.l.b16 %v8593
    %v8755 = vunpack.c.h.b16 %v8593
    %v8756 = vunpack.c.l.b16 %v8594
    %v8757 = vunpack.c.h.b16 %v8594
    %v8758 = vunpack.c.l.b16 %v8595
    %v8759 = vunpack.c.h.b16 %v8595
    %v8760 = vunpack.c.l.b16 %v8596
    %v8761 = vunpack.c.h.b16 %v8596
    %v8762 = vunpack.c.l.b16 %v8597
    %v8763 = vunpack.c.h.b16 %v8597
    %v8764 = vunpack.c.l.b16 %v8598
    %v8765 = vunpack.c.h.b16 %v8598
    %v8766 = vunpack.c.l.b16 %v8599
    %v8767 = vunpack.c.h.b16 %v8599
    %v8768 = vpack.c.b16 %v8660, %v8656
    %v8769 = vpack.c.b16 %v8661, %v8657
    %v8770 = vpack.c.b16 %v8662, %v8658
    %v8771 = vpack.c.b16 %v8663, %v8659
    %v8772 = vpack.c.b16 %v8668, %v8664
    %v8773 = vpack.c.b16 %v8669, %v8665
    %v8774 = vpack.c.b16 %v8670, %v8666
    %v8775 = vpack.c.b16 %v8671, %v8667
    %v8776 = vpack.c.b16 %v8676, %v8672
    %v8777 = vpack.c.b16 %v8677, %v8673
    %v8778 = vpack.c.b16 %v8678, %v8674
    %v8779 = vpack.c.b16 %v8679, %v8675
    %v8780 = vpack.c.b16 %v8684, %v8680
    %v8781 = vpack.c.b16 %v8685, %v8681
    %v8782 = vpack.c.b16 %v8686, %v8682
    %v8783 = vpack.c.b16 %v8687, %v8683
    %v8784 = vpack.c.b16 %v8692, %v8688
    %v8785 = vpack.c.b16 %v8693, %v8689
    %v8786 = vpack.c.b16 %v8694, %v8690
    %v8787 = vpack.c.b16 %v8695, %v8691
    %v8788 = vpack.c.b16 %v8700, %v8696
    %v8789 = vpack.c.b16 %v8701, %v8697
    %v8790 = vpack.c.b16 %v8702, %v8698
    %v8791 = vpack.c.b16 %v8703, %v8699
    %v8792 = vpack.c.b16 %v8708, %v8704
    %v8793 = vpack.c.b16 %v8709, %v8705
    %v8794 = vpack.c.b16 %v8710, %v8706
    %v8795 = vpack.c.b16 %v8711, %v8707
    %v8796 = vpack.c.b16 %v8716, %v8712
    %v8797 = vpack.c.b16 %v8717, %v8713
    %v8798 = vpack.c.b16 %v8718, %v8714
    %v8799 = vpack.c.b16 %v8719, %v8715
    %v8800 = vpack.c.b16 %v8724, %v8720
    %v8801 = vpack.c.b16 %v8725, %v8721
    %v8802 = vpack.c.b16 %v8726, %v8722
    %v8803 = vpack.c.b16 %v8727, %v8723
    %v8804 = vpack.c.b16 %v8732, %v8728
    %v8805 = vpack.c.b16 %v8733, %v8729
    %v8806 = vpack.c.b16 %v8734, %v8730
    %v8807 = vpack.c.b16 %v8735, %v8731
    %v8808 = vpack.c.b16 %v8740, %v8736
    %v8809 = vpack.c.b16 %v8741, %v8737
    %v8810 = vpack.c.b16 %v8742, %v8738
    %v8811 = vpack.c.b16 %v8743, %v8739
    %v8812 = vpack.c.b16 %v8748, %v8744
    %v8813 = vpack.c.b16 %v8749, %v8745
    %v8814 = vpack.c.b16 %v8750, %v8746
    %v8815 = vpack.c.b16 %v8751, %v8747
    %v8816 = vpack.c.b16 %v8756, %v8752
    %v8817 = vpack.c.b16 %v8757, %v8753
    %v8818 = vpack.c.b16 %v8758, %v8754
    %v8819 = vpack.c.b16 %v8759, %v8755
    %v8820 = vpack.c.b16 %v8764, %v8760
    %v8821 = vpack.c.b16 %v8765, %v8761
    %v8822 = vpack.c.b16 %v8766, %v8762
    %v8823 = vpack.c.b16 %v8767, %v8763
    %8880 = vmatpush.bf16.msra.mxu0 %v8796
    %8881 = vmatpush.bf16.msra.mxu0 %v8792
    %8882 = vmatpush.bf16.msra.mxu0 %v8788
    %8883 = vmatpush.bf16.msra.mxu0 %v8784
    %8884 = vmatpush.bf16.msra.mxu0 %v8780
    %8885 = vmatpush.bf16.msra.mxu0 %v8776
    %8886 = vmatpush.bf16.msra.mxu0 %v8772
    %8887 = vmatpush.bf16.msra.mxu0 %v8768
    %8888 = vmatmul.bf16.gmra.mxu0 %v3685
    %v8889 = vpop.f32.mrf.mxu0
    %v8890 = vadd.f32 0.0, %v8889
    %v8891 = vpop.f32.mrf.mxu0
    %v8892 = vadd.f32 0.0, %v8891
    %8893 = vmatmul.bf16.gmra.mxu0 %v3687
    %v8894 = vpop.f32.mrf.mxu0
    %v8895 = vadd.f32 0.0, %v8894
    %v8896 = vpop.f32.mrf.mxu0
    %v8897 = vadd.f32 0.0, %v8896
    %8898 = vmatmul.bf16.gmra.mxu0 %v3689
    %v8899 = vpop.f32.mrf.mxu0
    %v8900 = vadd.f32 0.0, %v8899
    %v8901 = vpop.f32.mrf.mxu0
    %v8902 = vadd.f32 0.0, %v8901
    %8903 = vmatmul.bf16.gmra.mxu0 %v3691
    %v8904 = vpop.f32.mrf.mxu0
    %v8905 = vadd.f32 0.0, %v8904
    %v8906 = vpop.f32.mrf.mxu0
    %v8907 = vadd.f32 0.0, %v8906
    %8908 = vmatmul.bf16.gmra.mxu0 %v3693
    %v8909 = vpop.f32.mrf.mxu0
    %v8910 = vadd.f32 0.0, %v8909
    %v8911 = vpop.f32.mrf.mxu0
    %v8912 = vadd.f32 0.0, %v8911
    %8913 = vmatmul.bf16.gmra.mxu0 %v3695
    %v8914 = vpop.f32.mrf.mxu0
    %v8915 = vadd.f32 0.0, %v8914
    %v8916 = vpop.f32.mrf.mxu0
    %v8917 = vadd.f32 0.0, %v8916
    %8918 = vmatmul.bf16.gmra.mxu0 %v3697
    %v8919 = vpop.f32.mrf.mxu0
    %v8920 = vadd.f32 0.0, %v8919
    %v8921 = vpop.f32.mrf.mxu0
    %v8922 = vadd.f32 0.0, %v8921
    %8923 = vmatmul.bf16.gmra.mxu0 %v3699
    %v8924 = vpop.f32.mrf.mxu0
    %v8925 = vadd.f32 0.0, %v8924
    %v8926 = vpop.f32.mrf.mxu0
    %v8927 = vadd.f32 0.0, %v8926
    %8928 = vmatmul.bf16.gmra.mxu0 %v3701
    %v8929 = vpop.f32.mrf.mxu0
    %v8930 = vadd.f32 0.0, %v8929
    %v8931 = vpop.f32.mrf.mxu0
    %v8932 = vadd.f32 0.0, %v8931
    %8933 = vmatmul.bf16.gmra.mxu0 %v3703
    %v8934 = vpop.f32.mrf.mxu0
    %v8935 = vadd.f32 0.0, %v8934
    %v8936 = vpop.f32.mrf.mxu0
    %v8937 = vadd.f32 0.0, %v8936
    %8938 = vmatmul.bf16.gmra.mxu0 %v3705
    %v8939 = vpop.f32.mrf.mxu0
    %v8940 = vadd.f32 0.0, %v8939
    %v8941 = vpop.f32.mrf.mxu0
    %v8942 = vadd.f32 0.0, %v8941
    %8943 = vmatmul.bf16.gmra.mxu0 %v3707
    %v8944 = vpop.f32.mrf.mxu0
    %v8945 = vadd.f32 0.0, %v8944
    %v8946 = vpop.f32.mrf.mxu0
    %v8947 = vadd.f32 0.0, %v8946
    %8948 = vdwg.mxu0
    %8949 = vmatpush.bf16.msra.mxu0 0
    %8950 = vmatpush.bf16.msra.mxu0 0
    %8951 = vmatpush.bf16.msra.mxu0 %v8820
    %8952 = vmatpush.bf16.msra.mxu0 %v8816
    %8953 = vmatpush.bf16.msra.mxu0 %v8812
    %8954 = vmatpush.bf16.msra.mxu0 %v8808
    %8955 = vmatpush.bf16.msra.mxu0 %v8804
    %8956 = vmatpush.bf16.msra.mxu0 %v8800
    %8957 = vmatmul.bf16.gmra.mxu0 %v4010
    %v8958 = vpop.f32.mrf.mxu0
    %v8959 = vadd.f32 %v8890, %v8958
    %v8960 = vpop.f32.mrf.mxu0
    %v8961 = vadd.f32 %v8892, %v8960
    %8962 = vmatmul.bf16.gmra.mxu0 %v4013
    %v8963 = vpop.f32.mrf.mxu0
    %v8964 = vadd.f32 %v8895, %v8963
    %v8965 = vpop.f32.mrf.mxu0
    %v8966 = vadd.f32 %v8897, %v8965
    %8967 = vmatmul.bf16.gmra.mxu0 %v4016
    %v8968 = vpop.f32.mrf.mxu0
    %v8969 = vadd.f32 %v8900, %v8968
    %v8970 = vpop.f32.mrf.mxu0
    %v8971 = vadd.f32 %v8902, %v8970
    %8972 = vmatmul.bf16.gmra.mxu0 %v4019
    %v8973 = vpop.f32.mrf.mxu0
    %v8974 = vadd.f32 %v8905, %v8973
    %v8975 = vpop.f32.mrf.mxu0
    %v8976 = vadd.f32 %v8907, %v8975
    %8977 = vmatmul.bf16.gmra.mxu0 %v4022
    %v8978 = vpop.f32.mrf.mxu0
    %v8979 = vadd.f32 %v8910, %v8978
    %v8980 = vpop.f32.mrf.mxu0
    %v8981 = vadd.f32 %v8912, %v8980
    %8982 = vmatmul.bf16.gmra.mxu0 %v4025
    %v8983 = vpop.f32.mrf.mxu0
    %v8984 = vadd.f32 %v8915, %v8983
    %v8985 = vpop.f32.mrf.mxu0
    %v8986 = vadd.f32 %v8917, %v8985
    %8987 = vmatmul.bf16.gmra.mxu0 %v4028
    %v8988 = vpop.f32.mrf.mxu0
    %v8989 = vadd.f32 %v8920, %v8988
    %v8990 = vpop.f32.mrf.mxu0
    %v8991 = vadd.f32 %v8922, %v8990
    %8992 = vmatmul.bf16.gmra.mxu0 %v4031
    %v8993 = vpop.f32.mrf.mxu0
    %v8994 = vadd.f32 %v8925, %v8993
    %v8995 = vpop.f32.mrf.mxu0
    %v8996 = vadd.f32 %v8927, %v8995
    %8997 = vmatmul.bf16.gmra.mxu0 %v4034
    %v8998 = vpop.f32.mrf.mxu0
    %v8999 = vadd.f32 %v8930, %v8998
    %v9000 = vpop.f32.mrf.mxu0
    %v9001 = vadd.f32 %v8932, %v9000
    %9002 = vmatmul.bf16.gmra.mxu0 %v4037
    %v9003 = vpop.f32.mrf.mxu0
    %v9004 = vadd.f32 %v8935, %v9003
    %v9005 = vpop.f32.mrf.mxu0
    %v9006 = vadd.f32 %v8937, %v9005
    %9007 = vmatmul.bf16.gmra.mxu0 %v4040
    %v9008 = vpop.f32.mrf.mxu0
    %v9009 = vadd.f32 %v8940, %v9008
    %v9010 = vpop.f32.mrf.mxu0
    %v9011 = vadd.f32 %v8942, %v9010
    %9012 = vmatmul.bf16.gmra.mxu0 %v4043
    %v9013 = vpop.f32.mrf.mxu0
    %v9014 = vadd.f32 %v8945, %v9013
    %v9015 = vpop.f32.mrf.mxu0
    %v9016 = vadd.f32 %v8947, %v9015
    %9017 = vdwg.mxu0
    %9018 = vmatpush.bf16.msra.mxu0 %v8797
    %9019 = vmatpush.bf16.msra.mxu0 %v8793
    %9020 = vmatpush.bf16.msra.mxu0 %v8789
    %9021 = vmatpush.bf16.msra.mxu0 %v8785
    %9022 = vmatpush.bf16.msra.mxu0 %v8781
    %9023 = vmatpush.bf16.msra.mxu0 %v8777
    %9024 = vmatpush.bf16.msra.mxu0 %v8773
    %9025 = vmatpush.bf16.msra.mxu0 %v8769
    %9026 = vmatmul.bf16.gmra.mxu0 %v3685
    %v9027 = vpop.f32.mrf.mxu0
    %v9028 = vadd.f32 0.0, %v9027
    %v9029 = vpop.f32.mrf.mxu0
    %v9030 = vadd.f32 0.0, %v9029
    %9031 = vmatmul.bf16.gmra.mxu0 %v3687
    %v9032 = vpop.f32.mrf.mxu0
    %v9033 = vadd.f32 0.0, %v9032
    %v9034 = vpop.f32.mrf.mxu0
    %v9035 = vadd.f32 0.0, %v9034
    %9036 = vmatmul.bf16.gmra.mxu0 %v3689
    %v9037 = vpop.f32.mrf.mxu0
    %v9038 = vadd.f32 0.0, %v9037
    %v9039 = vpop.f32.mrf.mxu0
    %v9040 = vadd.f32 0.0, %v9039
    %9041 = vmatmul.bf16.gmra.mxu0 %v3691
    %v9042 = vpop.f32.mrf.mxu0
    %v9043 = vadd.f32 0.0, %v9042
    %v9044 = vpop.f32.mrf.mxu0
    %v9045 = vadd.f32 0.0, %v9044
    %9046 = vmatmul.bf16.gmra.mxu0 %v3693
    %v9047 = vpop.f32.mrf.mxu0
    %v9048 = vadd.f32 0.0, %v9047
    %v9049 = vpop.f32.mrf.mxu0
    %v9050 = vadd.f32 0.0, %v9049
    %9051 = vmatmul.bf16.gmra.mxu0 %v3695
    %v9052 = vpop.f32.mrf.mxu0
    %v9053 = vadd.f32 0.0, %v9052
    %v9054 = vpop.f32.mrf.mxu0
    %v9055 = vadd.f32 0.0, %v9054
    %9056 = vmatmul.bf16.gmra.mxu0 %v3697
    %v9057 = vpop.f32.mrf.mxu0
    %v9058 = vadd.f32 0.0, %v9057
    %v9059 = vpop.f32.mrf.mxu0
    %v9060 = vadd.f32 0.0, %v9059
    %9061 = vmatmul.bf16.gmra.mxu0 %v3699
    %v9062 = vpop.f32.mrf.mxu0
    %v9063 = vadd.f32 0.0, %v9062
    %v9064 = vpop.f32.mrf.mxu0
    %v9065 = vadd.f32 0.0, %v9064
    %9066 = vmatmul.bf16.gmra.mxu0 %v3701
    %v9067 = vpop.f32.mrf.mxu0
    %v9068 = vadd.f32 0.0, %v9067
    %v9069 = vpop.f32.mrf.mxu0
    %v9070 = vadd.f32 0.0, %v9069
    %9071 = vmatmul.bf16.gmra.mxu0 %v3703
    %v9072 = vpop.f32.mrf.mxu0
    %v9073 = vadd.f32 0.0, %v9072
    %v9074 = vpop.f32.mrf.mxu0
    %v9075 = vadd.f32 0.0, %v9074
    %9076 = vmatmul.bf16.gmra.mxu0 %v3705
    %v9077 = vpop.f32.mrf.mxu0
    %v9078 = vadd.f32 0.0, %v9077
    %v9079 = vpop.f32.mrf.mxu0
    %v9080 = vadd.f32 0.0, %v9079
    %9081 = vmatmul.bf16.gmra.mxu0 %v3707
    %v9082 = vpop.f32.mrf.mxu0
    %v9083 = vadd.f32 0.0, %v9082
    %v9084 = vpop.f32.mrf.mxu0
    %v9085 = vadd.f32 0.0, %v9084
    %9086 = vdwg.mxu0
    %9087 = vmatpush.bf16.msra.mxu0 0
    %9088 = vmatpush.bf16.msra.mxu0 0
    %9089 = vmatpush.bf16.msra.mxu0 %v8821
    %9090 = vmatpush.bf16.msra.mxu0 %v8817
    %9091 = vmatpush.bf16.msra.mxu0 %v8813
    %9092 = vmatpush.bf16.msra.mxu0 %v8809
    %9093 = vmatpush.bf16.msra.mxu0 %v8805
    %9094 = vmatpush.bf16.msra.mxu0 %v8801
    %9095 = vmatmul.bf16.gmra.mxu0 %v4010
    %v9096 = vpop.f32.mrf.mxu0
    %v9097 = vadd.f32 %v9028, %v9096
    %v9098 = vpop.f32.mrf.mxu0
    %v9099 = vadd.f32 %v9030, %v9098
    %9100 = vmatmul.bf16.gmra.mxu0 %v4013
    %v9101 = vpop.f32.mrf.mxu0
    %v9102 = vadd.f32 %v9033, %v9101
    %v9103 = vpop.f32.mrf.mxu0
    %v9104 = vadd.f32 %v9035, %v9103
    %9105 = vmatmul.bf16.gmra.mxu0 %v4016
    %v9106 = vpop.f32.mrf.mxu0
    %v9107 = vadd.f32 %v9038, %v9106
    %v9108 = vpop.f32.mrf.mxu0
    %v9109 = vadd.f32 %v9040, %v9108
    %9110 = vmatmul.bf16.gmra.mxu0 %v4019
    %v9111 = vpop.f32.mrf.mxu0
    %v9112 = vadd.f32 %v9043, %v9111
    %v9113 = vpop.f32.mrf.mxu0
    %v9114 = vadd.f32 %v9045, %v9113
    %9115 = vmatmul.bf16.gmra.mxu0 %v4022
    %v9116 = vpop.f32.mrf.mxu0
    %v9117 = vadd.f32 %v9048, %v9116
    %v9118 = vpop.f32.mrf.mxu0
    %v9119 = vadd.f32 %v9050, %v9118
    %9120 = vmatmul.bf16.gmra.mxu0 %v4025
    %v9121 = vpop.f32.mrf.mxu0
    %v9122 = vadd.f32 %v9053, %v9121
    %v9123 = vpop.f32.mrf.mxu0
    %v9124 = vadd.f32 %v9055, %v9123
    %9125 = vmatmul.bf16.gmra.mxu0 %v4028
    %v9126 = vpop.f32.mrf.mxu0
    %v9127 = vadd.f32 %v9058, %v9126
    %v9128 = vpop.f32.mrf.mxu0
    %v9129 = vadd.f32 %v9060, %v9128
    %9130 = vmatmul.bf16.gmra.mxu0 %v4031
    %v9131 = vpop.f32.mrf.mxu0
    %v9132 = vadd.f32 %v9063, %v9131
    %v9133 = vpop.f32.mrf.mxu0
    %v9134 = vadd.f32 %v9065, %v9133
    %9135 = vmatmul.bf16.gmra.mxu0 %v4034
    %v9136 = vpop.f32.mrf.mxu0
    %v9137 = vadd.f32 %v9068, %v9136
    %v9138 = vpop.f32.mrf.mxu0
    %v9139 = vadd.f32 %v9070, %v9138
    %9140 = vmatmul.bf16.gmra.mxu0 %v4037
    %v9141 = vpop.f32.mrf.mxu0
    %v9142 = vadd.f32 %v9073, %v9141
    %v9143 = vpop.f32.mrf.mxu0
    %v9144 = vadd.f32 %v9075, %v9143
    %9145 = vmatmul.bf16.gmra.mxu0 %v4040
    %v9146 = vpop.f32.mrf.mxu0
    %v9147 = vadd.f32 %v9078, %v9146
    %v9148 = vpop.f32.mrf.mxu0
    %v9149 = vadd.f32 %v9080, %v9148
    %9150 = vmatmul.bf16.gmra.mxu0 %v4043
    %v9151 = vpop.f32.mrf.mxu0
    %v9152 = vadd.f32 %v9083, %v9151
    %v9153 = vpop.f32.mrf.mxu0
    %v9154 = vadd.f32 %v9085, %v9153
    %9155 = vdwg.mxu0
    %9156 = vmatpush.bf16.msra.mxu0 %v8798
    %9157 = vmatpush.bf16.msra.mxu0 %v8794
    %9158 = vmatpush.bf16.msra.mxu0 %v8790
    %9159 = vmatpush.bf16.msra.mxu0 %v8786
    %9160 = vmatpush.bf16.msra.mxu0 %v8782
    %9161 = vmatpush.bf16.msra.mxu0 %v8778
    %9162 = vmatpush.bf16.msra.mxu0 %v8774
    %9163 = vmatpush.bf16.msra.mxu0 %v8770
    %9164 = vmatmul.bf16.gmra.mxu0 %v3685
    %v9165 = vpop.f32.mrf.mxu0
    %v9166 = vadd.f32 0.0, %v9165
    %v9167 = vpop.f32.mrf.mxu0
    %v9168 = vadd.f32 0.0, %v9167
    %9169 = vmatmul.bf16.gmra.mxu0 %v3687
    %v9170 = vpop.f32.mrf.mxu0
    %v9171 = vadd.f32 0.0, %v9170
    %v9172 = vpop.f32.mrf.mxu0
    %v9173 = vadd.f32 0.0, %v9172
    %9174 = vmatmul.bf16.gmra.mxu0 %v3689
    %v9175 = vpop.f32.mrf.mxu0
    %v9176 = vadd.f32 0.0, %v9175
    %v9177 = vpop.f32.mrf.mxu0
    %v9178 = vadd.f32 0.0, %v9177
    %9179 = vmatmul.bf16.gmra.mxu0 %v3691
    %v9180 = vpop.f32.mrf.mxu0
    %v9181 = vadd.f32 0.0, %v9180
    %v9182 = vpop.f32.mrf.mxu0
    %v9183 = vadd.f32 0.0, %v9182
    %9184 = vmatmul.bf16.gmra.mxu0 %v3693
    %v9185 = vpop.f32.mrf.mxu0
    %v9186 = vadd.f32 0.0, %v9185
    %v9187 = vpop.f32.mrf.mxu0
    %v9188 = vadd.f32 0.0, %v9187
    %9189 = vmatmul.bf16.gmra.mxu0 %v3695
    %v9190 = vpop.f32.mrf.mxu0
    %v9191 = vadd.f32 0.0, %v9190
    %v9192 = vpop.f32.mrf.mxu0
    %v9193 = vadd.f32 0.0, %v9192
    %9194 = vmatmul.bf16.gmra.mxu0 %v3697
    %v9195 = vpop.f32.mrf.mxu0
    %v9196 = vadd.f32 0.0, %v9195
    %v9197 = vpop.f32.mrf.mxu0
    %v9198 = vadd.f32 0.0, %v9197
    %9199 = vmatmul.bf16.gmra.mxu0 %v3699
    %v9200 = vpop.f32.mrf.mxu0
    %v9201 = vadd.f32 0.0, %v9200
    %v9202 = vpop.f32.mrf.mxu0
    %v9203 = vadd.f32 0.0, %v9202
    %9204 = vmatmul.bf16.gmra.mxu0 %v3701
    %v9205 = vpop.f32.mrf.mxu0
    %v9206 = vadd.f32 0.0, %v9205
    %v9207 = vpop.f32.mrf.mxu0
    %v9208 = vadd.f32 0.0, %v9207
    %9209 = vmatmul.bf16.gmra.mxu0 %v3703
    %v9210 = vpop.f32.mrf.mxu0
    %v9211 = vadd.f32 0.0, %v9210
    %v9212 = vpop.f32.mrf.mxu0
    %v9213 = vadd.f32 0.0, %v9212
    %9214 = vmatmul.bf16.gmra.mxu0 %v3705
    %v9215 = vpop.f32.mrf.mxu0
    %v9216 = vadd.f32 0.0, %v9215
    %v9217 = vpop.f32.mrf.mxu0
    %v9218 = vadd.f32 0.0, %v9217
    %9219 = vmatmul.bf16.gmra.mxu0 %v3707
    %v9220 = vpop.f32.mrf.mxu0
    %v9221 = vadd.f32 0.0, %v9220
    %v9222 = vpop.f32.mrf.mxu0
    %v9223 = vadd.f32 0.0, %v9222
    %9224 = vdwg.mxu0
    %9225 = vmatpush.bf16.msra.mxu0 0
    %9226 = vmatpush.bf16.msra.mxu0 0
    %9227 = vmatpush.bf16.msra.mxu0 %v8822
    %9228 = vmatpush.bf16.msra.mxu0 %v8818
    %9229 = vmatpush.bf16.msra.mxu0 %v8814
    %9230 = vmatpush.bf16.msra.mxu0 %v8810
    %9231 = vmatpush.bf16.msra.mxu0 %v8806
    %9232 = vmatpush.bf16.msra.mxu0 %v8802
    %9233 = vmatmul.bf16.gmra.mxu0 %v4010
    %v9234 = vpop.f32.mrf.mxu0
    %v9235 = vadd.f32 %v9166, %v9234
    %v9236 = vpop.f32.mrf.mxu0
    %v9237 = vadd.f32 %v9168, %v9236
    %9238 = vmatmul.bf16.gmra.mxu0 %v4013
    %v9239 = vpop.f32.mrf.mxu0
    %v9240 = vadd.f32 %v9171, %v9239
    %v9241 = vpop.f32.mrf.mxu0
    %v9242 = vadd.f32 %v9173, %v9241
    %9243 = vmatmul.bf16.gmra.mxu0 %v4016
    %v9244 = vpop.f32.mrf.mxu0
    %v9245 = vadd.f32 %v9176, %v9244
    %v9246 = vpop.f32.mrf.mxu0
    %v9247 = vadd.f32 %v9178, %v9246
    %9248 = vmatmul.bf16.gmra.mxu0 %v4019
    %v9249 = vpop.f32.mrf.mxu0
    %v9250 = vadd.f32 %v9181, %v9249
    %v9251 = vpop.f32.mrf.mxu0
    %v9252 = vadd.f32 %v9183, %v9251
    %9253 = vmatmul.bf16.gmra.mxu0 %v4022
    %v9254 = vpop.f32.mrf.mxu0
    %v9255 = vadd.f32 %v9186, %v9254
    %v9256 = vpop.f32.mrf.mxu0
    %v9257 = vadd.f32 %v9188, %v9256
    %9258 = vmatmul.bf16.gmra.mxu0 %v4025
    %v9259 = vpop.f32.mrf.mxu0
    %v9260 = vadd.f32 %v9191, %v9259
    %v9261 = vpop.f32.mrf.mxu0
    %v9262 = vadd.f32 %v9193, %v9261
    %9263 = vmatmul.bf16.gmra.mxu0 %v4028
    %v9264 = vpop.f32.mrf.mxu0
    %v9265 = vadd.f32 %v9196, %v9264
    %v9266 = vpop.f32.mrf.mxu0
    %v9267 = vadd.f32 %v9198, %v9266
    %9268 = vmatmul.bf16.gmra.mxu0 %v4031
    %v9269 = vpop.f32.mrf.mxu0
    %v9270 = vadd.f32 %v9201, %v9269
    %v9271 = vpop.f32.mrf.mxu0
    %v9272 = vadd.f32 %v9203, %v9271
    %9273 = vmatmul.bf16.gmra.mxu0 %v4034
    %v9274 = vpop.f32.mrf.mxu0
    %v9275 = vadd.f32 %v9206, %v9274
    %v9276 = vpop.f32.mrf.mxu0
    %v9277 = vadd.f32 %v9208, %v9276
    %9278 = vmatmul.bf16.gmra.mxu0 %v4037
    %v9279 = vpop.f32.mrf.mxu0
    %v9280 = vadd.f32 %v9211, %v9279
    %v9281 = vpop.f32.mrf.mxu0
    %v9282 = vadd.f32 %v9213, %v9281
    %9283 = vmatmul.bf16.gmra.mxu0 %v4040
    %v9284 = vpop.f32.mrf.mxu0
    %v9285 = vadd.f32 %v9216, %v9284
    %v9286 = vpop.f32.mrf.mxu0
    %v9287 = vadd.f32 %v9218, %v9286
    %9288 = vmatmul.bf16.gmra.mxu0 %v4043
    %v9289 = vpop.f32.mrf.mxu0
    %v9290 = vadd.f32 %v9221, %v9289
    %v9291 = vpop.f32.mrf.mxu0
    %v9292 = vadd.f32 %v9223, %v9291
    %9293 = vdwg.mxu0
    %9294 = vmatpush.bf16.msra.mxu0 %v8799
    %9295 = vmatpush.bf16.msra.mxu0 %v8795
    %9296 = vmatpush.bf16.msra.mxu0 %v8791
    %9297 = vmatpush.bf16.msra.mxu0 %v8787
    %9298 = vmatpush.bf16.msra.mxu0 %v8783
    %9299 = vmatpush.bf16.msra.mxu0 %v8779
    %9300 = vmatpush.bf16.msra.mxu0 %v8775
    %9301 = vmatpush.bf16.msra.mxu0 %v8771
    %9302 = vmatmul.bf16.gmra.mxu0 %v3685
    %v9303 = vpop.f32.mrf.mxu0
    %v9304 = vadd.f32 0.0, %v9303
    %v9305 = vpop.f32.mrf.mxu0
    %v9306 = vadd.f32 0.0, %v9305
    %9307 = vmatmul.bf16.gmra.mxu0 %v3687
    %v9308 = vpop.f32.mrf.mxu0
    %v9309 = vadd.f32 0.0, %v9308
    %v9310 = vpop.f32.mrf.mxu0
    %v9311 = vadd.f32 0.0, %v9310
    %9312 = vmatmul.bf16.gmra.mxu0 %v3689
    %v9313 = vpop.f32.mrf.mxu0
    %v9314 = vadd.f32 0.0, %v9313
    %v9315 = vpop.f32.mrf.mxu0
    %v9316 = vadd.f32 0.0, %v9315
    %9317 = vmatmul.bf16.gmra.mxu0 %v3691
    %v9318 = vpop.f32.mrf.mxu0
    %v9319 = vadd.f32 0.0, %v9318
    %v9320 = vpop.f32.mrf.mxu0
    %v9321 = vadd.f32 0.0, %v9320
    %9322 = vmatmul.bf16.gmra.mxu0 %v3693
    %v9323 = vpop.f32.mrf.mxu0
    %v9324 = vadd.f32 0.0, %v9323
    %v9325 = vpop.f32.mrf.mxu0
    %v9326 = vadd.f32 0.0, %v9325
    %9327 = vmatmul.bf16.gmra.mxu0 %v3695
    %v9328 = vpop.f32.mrf.mxu0
    %v9329 = vadd.f32 0.0, %v9328
    %v9330 = vpop.f32.mrf.mxu0
    %v9331 = vadd.f32 0.0, %v9330
    %9332 = vmatmul.bf16.gmra.mxu0 %v3697
    %v9333 = vpop.f32.mrf.mxu0
    %v9334 = vadd.f32 0.0, %v9333
    %v9335 = vpop.f32.mrf.mxu0
    %v9336 = vadd.f32 0.0, %v9335
    %9337 = vmatmul.bf16.gmra.mxu0 %v3699
    %v9338 = vpop.f32.mrf.mxu0
    %v9339 = vadd.f32 0.0, %v9338
    %v9340 = vpop.f32.mrf.mxu0
    %v9341 = vadd.f32 0.0, %v9340
    %9342 = vmatmul.bf16.gmra.mxu0 %v3701
    %v9343 = vpop.f32.mrf.mxu0
    %v9344 = vadd.f32 0.0, %v9343
    %v9345 = vpop.f32.mrf.mxu0
    %v9346 = vadd.f32 0.0, %v9345
    %9347 = vmatmul.bf16.gmra.mxu0 %v3703
    %v9348 = vpop.f32.mrf.mxu0
    %v9349 = vadd.f32 0.0, %v9348
    %v9350 = vpop.f32.mrf.mxu0
    %v9351 = vadd.f32 0.0, %v9350
    %9352 = vmatmul.bf16.gmra.mxu0 %v3705
    %v9353 = vpop.f32.mrf.mxu0
    %v9354 = vadd.f32 0.0, %v9353
    %v9355 = vpop.f32.mrf.mxu0
    %v9356 = vadd.f32 0.0, %v9355
    %9357 = vmatmul.bf16.gmra.mxu0 %v3707
    %v9358 = vpop.f32.mrf.mxu0
    %v9359 = vadd.f32 0.0, %v9358
    %v9360 = vpop.f32.mrf.mxu0
    %v9361 = vadd.f32 0.0, %v9360
    %9362 = vdwg.mxu0
    %9363 = vmatpush.bf16.msra.mxu0 0
    %9364 = vmatpush.bf16.msra.mxu0 0
    %9365 = vmatpush.bf16.msra.mxu0 %v8823
    %9366 = vmatpush.bf16.msra.mxu0 %v8819
    %9367 = vmatpush.bf16.msra.mxu0 %v8815
    %9368 = vmatpush.bf16.msra.mxu0 %v8811
    %9369 = vmatpush.bf16.msra.mxu0 %v8807
    %9370 = vmatpush.bf16.msra.mxu0 %v8803
    %9371 = vmatmul.bf16.gmra.mxu0 %v4010
    %v9372 = vpop.f32.mrf.mxu0
    %v9373 = vadd.f32 %v9304, %v9372
    %v9374 = vpop.f32.mrf.mxu0
    %v9375 = vadd.f32 %v9306, %v9374
    %9376 = vmatmul.bf16.gmra.mxu0 %v4013
    %v9377 = vpop.f32.mrf.mxu0
    %v9378 = vadd.f32 %v9309, %v9377
    %v9379 = vpop.f32.mrf.mxu0
    %v9380 = vadd.f32 %v9311, %v9379
    %9381 = vmatmul.bf16.gmra.mxu0 %v4016
    %v9382 = vpop.f32.mrf.mxu0
    %v9383 = vadd.f32 %v9314, %v9382
    %v9384 = vpop.f32.mrf.mxu0
    %v9385 = vadd.f32 %v9316, %v9384
    %9386 = vmatmul.bf16.gmra.mxu0 %v4019
    %v9387 = vpop.f32.mrf.mxu0
    %v9388 = vadd.f32 %v9319, %v9387
    %v9389 = vpop.f32.mrf.mxu0
    %v9390 = vadd.f32 %v9321, %v9389
    %9391 = vmatmul.bf16.gmra.mxu0 %v4022
    %v9392 = vpop.f32.mrf.mxu0
    %v9393 = vadd.f32 %v9324, %v9392
    %v9394 = vpop.f32.mrf.mxu0
    %v9395 = vadd.f32 %v9326, %v9394
    %9396 = vmatmul.bf16.gmra.mxu0 %v4025
    %v9397 = vpop.f32.mrf.mxu0
    %v9398 = vadd.f32 %v9329, %v9397
    %v9399 = vpop.f32.mrf.mxu0
    %v9400 = vadd.f32 %v9331, %v9399
    %9401 = vmatmul.bf16.gmra.mxu0 %v4028
    %v9402 = vpop.f32.mrf.mxu0
    %v9403 = vadd.f32 %v9334, %v9402
    %v9404 = vpop.f32.mrf.mxu0
    %v9405 = vadd.f32 %v9336, %v9404
    %9406 = vmatmul.bf16.gmra.mxu0 %v4031
    %v9407 = vpop.f32.mrf.mxu0
    %v9408 = vadd.f32 %v9339, %v9407
    %v9409 = vpop.f32.mrf.mxu0
    %v9410 = vadd.f32 %v9341, %v9409
    %9411 = vmatmul.bf16.gmra.mxu0 %v4034
    %v9412 = vpop.f32.mrf.mxu0
    %v9413 = vadd.f32 %v9344, %v9412
    %v9414 = vpop.f32.mrf.mxu0
    %v9415 = vadd.f32 %v9346, %v9414
    %9416 = vmatmul.bf16.gmra.mxu0 %v4037
    %v9417 = vpop.f32.mrf.mxu0
    %v9418 = vadd.f32 %v9349, %v9417
    %v9419 = vpop.f32.mrf.mxu0
    %v9420 = vadd.f32 %v9351, %v9419
    %9421 = vmatmul.bf16.gmra.mxu0 %v4040
    %v9422 = vpop.f32.mrf.mxu0
    %v9423 = vadd.f32 %v9354, %v9422
    %v9424 = vpop.f32.mrf.mxu0
    %v9425 = vadd.f32 %v9356, %v9424
    %9426 = vmatmul.bf16.gmra.mxu0 %v4043
    %v9427 = vpop.f32.mrf.mxu0
    %v9428 = vadd.f32 %v9359, %v9427
    %v9429 = vpop.f32.mrf.mxu0
    %v9430 = vadd.f32 %v9361, %v9429
    %9431 = vdwg.mxu0
    %v9432 = vadd.f32 %v8447, %v8959
    %v9433 = vadd.f32 %v8448, %v9097
    %v9434 = vadd.f32 %v8449, %v9235
    %v9435 = vadd.f32 %v8450, %v9373
    %v9436 = vadd.f32 %v8451, %v8961
    %v9437 = vadd.f32 %v8452, %v9099
    %v9438 = vadd.f32 %v8453, %v9237
    %v9439 = vadd.f32 %v8454, %v9375
    %v9440 = vadd.f32 %v8455, %v8964
    %v9441 = vadd.f32 %v8456, %v9102
    %v9442 = vadd.f32 %v8457, %v9240
    %v9443 = vadd.f32 %v8458, %v9378
    %v9444 = vadd.f32 %v8459, %v8966
    %v9445 = vadd.f32 %v8460, %v9104
    %v9446 = vadd.f32 %v8461, %v9242
    %v9447 = vadd.f32 %v8462, %v9380
    %v9448 = vadd.f32 %v8463, %v8969
    %v9449 = vadd.f32 %v8464, %v9107
    %v9450 = vadd.f32 %v8465, %v9245
    %v9451 = vadd.f32 %v8466, %v9383
    %v9452 = vadd.f32 %v8467, %v8971
    %v9453 = vadd.f32 %v8468, %v9109
    %v9454 = vadd.f32 %v8469, %v9247
    %v9455 = vadd.f32 %v8470, %v9385
    %v9456 = vadd.f32 %v8471, %v8974
    %v9457 = vadd.f32 %v8472, %v9112
    %v9458 = vadd.f32 %v8473, %v9250
    %v9459 = vadd.f32 %v8474, %v9388
    %v9460 = vadd.f32 %v8475, %v8976
    %v9461 = vadd.f32 %v8476, %v9114
    %v9462 = vadd.f32 %v8477, %v9252
    %v9463 = vadd.f32 %v8478, %v9390
    %v9464 = vadd.f32 %v8479, %v8979
    %v9465 = vadd.f32 %v8480, %v9117
    %v9466 = vadd.f32 %v8481, %v9255
    %v9467 = vadd.f32 %v8482, %v9393
    %v9468 = vadd.f32 %v8483, %v8981
    %v9469 = vadd.f32 %v8484, %v9119
    %v9470 = vadd.f32 %v8485, %v9257
    %v9471 = vadd.f32 %v8486, %v9395
    %v9472 = vadd.f32 %v8487, %v8984
    %v9473 = vadd.f32 %v8488, %v9122
    %v9474 = vadd.f32 %v8489, %v9260
    %v9475 = vadd.f32 %v8490, %v9398
    %v9476 = vadd.f32 %v8491, %v8986
    %v9477 = vadd.f32 %v8492, %v9124
    %v9478 = vadd.f32 %v8493, %v9262
    %v9479 = vadd.f32 %v8494, %v9400
    %v9480 = vadd.f32 %v8495, %v8989
    %v9481 = vadd.f32 %v8496, %v9127
    %v9482 = vadd.f32 %v8497, %v9265
    %v9483 = vadd.f32 %v8498, %v9403
    %v9484 = vadd.f32 %v8499, %v8991
    %v9485 = vadd.f32 %v8500, %v9129
    %v9486 = vadd.f32 %v8501, %v9267
    %v9487 = vadd.f32 %v8502, %v9405
    %v9488 = vadd.f32 %v8503, %v8994
    %v9489 = vadd.f32 %v8504, %v9132
    %v9490 = vadd.f32 %v8505, %v9270
    %v9491 = vadd.f32 %v8506, %v9408
    %v9492 = vadd.f32 %v8507, %v8996
    %v9493 = vadd.f32 %v8508, %v9134
    %v9494 = vadd.f32 %v8509, %v9272
    %v9495 = vadd.f32 %v8510, %v9410
    %v9496 = vadd.f32 %v8511, %v8999
    %v9497 = vadd.f32 %v8512, %v9137
    %v9498 = vadd.f32 %v8513, %v9275
    %v9499 = vadd.f32 %v8514, %v9413
    %v9500 = vadd.f32 %v8515, %v9001
    %v9501 = vadd.f32 %v8516, %v9139
    %v9502 = vadd.f32 %v8517, %v9277
    %v9503 = vadd.f32 %v8518, %v9415
    %v9504 = vadd.f32 %v8519, %v9004
    %v9505 = vadd.f32 %v8520, %v9142
    %v9506 = vadd.f32 %v8521, %v9280
    %v9507 = vadd.f32 %v8522, %v9418
    %v9508 = vadd.f32 %v8523, %v9006
    %v9509 = vadd.f32 %v8524, %v9144
    %v9510 = vadd.f32 %v8525, %v9282
    %v9511 = vadd.f32 %v8526, %v9420
    %v9512 = vadd.f32 %v8527, %v9009
    %v9513 = vadd.f32 %v8528, %v9147
    %v9514 = vadd.f32 %v8529, %v9285
    %v9515 = vadd.f32 %v8530, %v9423
    %v9516 = vadd.f32 %v8531, %v9011
    %v9517 = vadd.f32 %v8532, %v9149
    %v9518 = vadd.f32 %v8533, %v9287
    %v9519 = vadd.f32 %v8534, %v9425
    %v9520 = vadd.f32 %v8535, %v9014
    %v9521 = vadd.f32 %v8536, %v9152
    %v9522 = vadd.f32 %v8537, %v9290
    %v9523 = vadd.f32 %v8538, %v9428
    %v9524 = vadd.f32 %v8539, %v9016
    %v9525 = vadd.f32 %v8540, %v9154
    %v9526 = vadd.f32 %v8541, %v9292
    %v9527 = vadd.f32 %v8542, %v9430
    %9528 = vst [vmem:[#allocation2] sm:$0xff] %v9432
    %9529 = vst [vmem:[#allocation2 + $0x8] sm:$0xff] %v9433
    %9530 = vst [vmem:[#allocation2 + $0x10] sm:$0xff] %v9434
    %9531 = vst.msk [vmem:[#allocation2 + $0x18] sm:$0xff] %vm662, %v9435
    %9532 = vst [vmem:[#allocation2 + $0x20] sm:$0xff] %v9436
    %9533 = vst [vmem:[#allocation2 + $0x28] sm:$0xff] %v9437
    %9534 = vst [vmem:[#allocation2 + $0x30] sm:$0xff] %v9438
    %9535 = vst.msk [vmem:[#allocation2 + $0x38] sm:$0xff] %vm662, %v9439
    %9536 = vst [vmem:[#allocation2 + $0x40] sm:$0xff] %v9440
    %9537 = vst [vmem:[#allocation2 + $0x48] sm:$0xff] %v9441
    %9538 = vst [vmem:[#allocation2 + $0x50] sm:$0xff] %v9442
    %9539 = vst.msk [vmem:[#allocation2 + $0x58] sm:$0xff] %vm662, %v9443
    %9540 = vst [vmem:[#allocation2 + $0x60] sm:$0xff] %v9444
    %9541 = vst [vmem:[#allocation2 + $0x68] sm:$0xff] %v9445
    %9542 = vst [vmem:[#allocation2 + $0x70] sm:$0xff] %v9446
    %9543 = vst.msk [vmem:[#allocation2 + $0x78] sm:$0xff] %vm662, %v9447
    %9544 = vst [vmem:[#allocation2 + $0x80] sm:$0xff] %v9448
    %9545 = vst [vmem:[#allocation2 + $0x88] sm:$0xff] %v9449
    %9546 = vst [vmem:[#allocation2 + $0x90] sm:$0xff] %v9450
    %9547 = vst.msk [vmem:[#allocation2 + $0x98] sm:$0xff] %vm662, %v9451
    %9548 = vst [vmem:[#allocation2 + $0xa0] sm:$0xff] %v9452
    %9549 = vst [vmem:[#allocation2 + $0xa8] sm:$0xff] %v9453
    %9550 = vst [vmem:[#allocation2 + $0xb0] sm:$0xff] %v9454
    %9551 = vst.msk [vmem:[#allocation2 + $0xb8] sm:$0xff] %vm662, %v9455
    %9552 = vst [vmem:[#allocation2 + $0xc0] sm:$0xff] %v9456
    %9553 = vst [vmem:[#allocation2 + $0xc8] sm:$0xff] %v9457
    %9554 = vst [vmem:[#allocation2 + $0xd0] sm:$0xff] %v9458
    %9555 = vst.msk [vmem:[#allocation2 + $0xd8] sm:$0xff] %vm662, %v9459
    %9556 = vst [vmem:[#allocation2 + $0xe0] sm:$0xff] %v9460
    %9557 = vst [vmem:[#allocation2 + $0xe8] sm:$0xff] %v9461
    %9558 = vst [vmem:[#allocation2 + $0xf0] sm:$0xff] %v9462
    %9559 = vst.msk [vmem:[#allocation2 + $0xf8] sm:$0xff] %vm662, %v9463
    %9560 = vst [vmem:[#allocation2 + $0x100] sm:$0xff] %v9464
    %9561 = vst [vmem:[#allocation2 + $0x108] sm:$0xff] %v9465
    %9562 = vst [vmem:[#allocation2 + $0x110] sm:$0xff] %v9466
    %9563 = vst.msk [vmem:[#allocation2 + $0x118] sm:$0xff] %vm662, %v9467
    %9564 = vst [vmem:[#allocation2 + $0x120] sm:$0xff] %v9468
    %9565 = vst [vmem:[#allocation2 + $0x128] sm:$0xff] %v9469
    %9566 = vst [vmem:[#allocation2 + $0x130] sm:$0xff] %v9470
    %9567 = vst.msk [vmem:[#allocation2 + $0x138] sm:$0xff] %vm662, %v9471
    %9568 = vst [vmem:[#allocation2 + $0x140] sm:$0xff] %v9472
    %9569 = vst [vmem:[#allocation2 + $0x148] sm:$0xff] %v9473
    %9570 = vst [vmem:[#allocation2 + $0x150] sm:$0xff] %v9474
    %9571 = vst.msk [vmem:[#allocation2 + $0x158] sm:$0xff] %vm662, %v9475
    %9572 = vst [vmem:[#allocation2 + $0x160] sm:$0xff] %v9476
    %9573 = vst [vmem:[#allocation2 + $0x168] sm:$0xff] %v9477
    %9574 = vst [vmem:[#allocation2 + $0x170] sm:$0xff] %v9478
    %9575 = vst.msk [vmem:[#allocation2 + $0x178] sm:$0xff] %vm662, %v9479
    %9576 = vst [vmem:[#allocation2 + $0x180] sm:$0xff] %v9480
    %9577 = vst [vmem:[#allocation2 + $0x188] sm:$0xff] %v9481
    %9578 = vst [vmem:[#allocation2 + $0x190] sm:$0xff] %v9482
    %9579 = vst.msk [vmem:[#allocation2 + $0x198] sm:$0xff] %vm662, %v9483
    %9580 = vst [vmem:[#allocation2 + $0x1a0] sm:$0xff] %v9484
    %9581 = vst [vmem:[#allocation2 + $0x1a8] sm:$0xff] %v9485
    %9582 = vst [vmem:[#allocation2 + $0x1b0] sm:$0xff] %v9486
    %9583 = vst.msk [vmem:[#allocation2 + $0x1b8] sm:$0xff] %vm662, %v9487
    %9584 = vst [vmem:[#allocation2 + $0x1c0] sm:$0xff] %v9488
    %9585 = vst [vmem:[#allocation2 + $0x1c8] sm:$0xff] %v9489
    %9586 = vst [vmem:[#allocation2 + $0x1d0] sm:$0xff] %v9490
    %9587 = vst.msk [vmem:[#allocation2 + $0x1d8] sm:$0xff] %vm662, %v9491
    %9588 = vst [vmem:[#allocation2 + $0x1e0] sm:$0xff] %v9492
    %9589 = vst [vmem:[#allocation2 + $0x1e8] sm:$0xff] %v9493
    %9590 = vst [vmem:[#allocation2 + $0x1f0] sm:$0xff] %v9494
    %9591 = vst.msk [vmem:[#allocation2 + $0x1f8] sm:$0xff] %vm662, %v9495
    %9592 = vst [vmem:[#allocation2 + $0x200] sm:$0xff] %v9496
    %9593 = vst [vmem:[#allocation2 + $0x208] sm:$0xff] %v9497
    %9594 = vst [vmem:[#allocation2 + $0x210] sm:$0xff] %v9498
    %9595 = vst.msk [vmem:[#allocation2 + $0x218] sm:$0xff] %vm662, %v9499
    %9596 = vst [vmem:[#allocation2 + $0x220] sm:$0xff] %v9500
    %9597 = vst [vmem:[#allocation2 + $0x228] sm:$0xff] %v9501
    %9598 = vst [vmem:[#allocation2 + $0x230] sm:$0xff] %v9502
    %9599 = vst.msk [vmem:[#allocation2 + $0x238] sm:$0xff] %vm662, %v9503
    %9600 = vst [vmem:[#allocation2 + $0x240] sm:$0xff] %v9504
    %9601 = vst [vmem:[#allocation2 + $0x248] sm:$0xff] %v9505
    %9602 = vst [vmem:[#allocation2 + $0x250] sm:$0xff] %v9506
    %9603 = vst.msk [vmem:[#allocation2 + $0x258] sm:$0xff] %vm662, %v9507
    %9604 = vst [vmem:[#allocation2 + $0x260] sm:$0xff] %v9508
    %9605 = vst [vmem:[#allocation2 + $0x268] sm:$0xff] %v9509
    %9606 = vst [vmem:[#allocation2 + $0x270] sm:$0xff] %v9510
    %9607 = vst.msk [vmem:[#allocation2 + $0x278] sm:$0xff] %vm662, %v9511
    %9608 = vst [vmem:[#allocation2 + $0x280] sm:$0xff] %v9512
    %9609 = vst [vmem:[#allocation2 + $0x288] sm:$0xff] %v9513
    %9610 = vst [vmem:[#allocation2 + $0x290] sm:$0xff] %v9514
    %9611 = vst.msk [vmem:[#allocation2 + $0x298] sm:$0xff] %vm662, %v9515
    %9612 = vst [vmem:[#allocation2 + $0x2a0] sm:$0xff] %v9516
    %9613 = vst [vmem:[#allocation2 + $0x2a8] sm:$0xff] %v9517
    %9614 = vst [vmem:[#allocation2 + $0x2b0] sm:$0xff] %v9518
    %9615 = vst.msk [vmem:[#allocation2 + $0x2b8] sm:$0xff] %vm662, %v9519
    %9616 = vst [vmem:[#allocation2 + $0x2c0] sm:$0xff] %v9520
    %9617 = vst [vmem:[#allocation2 + $0x2c8] sm:$0xff] %v9521
    %9618 = vst [vmem:[#allocation2 + $0x2d0] sm:$0xff] %v9522
    %9619 = vst.msk [vmem:[#allocation2 + $0x2d8] sm:$0xff] %vm662, %v9523
    %9620 = vst [vmem:[#allocation2 + $0x2e0] sm:$0xff] %v9524
    %9621 = vst [vmem:[#allocation2 + $0x2e8] sm:$0xff] %v9525
    %9622 = vst [vmem:[#allocation2 + $0x2f0] sm:$0xff] %v9526
    %9623 = vst.msk [vmem:[#allocation2 + $0x2f8] sm:$0xff] %vm662, %v9527
    %v9624 = vld [vmem:[#allocation2] sm:$0xff]
    %v9625 = vld [vmem:[#allocation2 + $0x8] sm:$0xff]
    %v9626 = vld [vmem:[#allocation2 + $0x10] sm:$0xff]
    %v9627 = vld [vmem:[#allocation2 + $0x18] sm:$0xff]
    %v9628 = vld [vmem:[#allocation2 + $0x20] sm:$0xff]
    %v9629 = vld [vmem:[#allocation2 + $0x28] sm:$0xff]
    %v9630 = vld [vmem:[#allocation2 + $0x30] sm:$0xff]
    %v9631 = vld [vmem:[#allocation2 + $0x38] sm:$0xff]
    %v9632 = vld [vmem:[#allocation2 + $0x40] sm:$0xff]
    %v9633 = vld [vmem:[#allocation2 + $0x48] sm:$0xff]
    %v9634 = vld [vmem:[#allocation2 + $0x50] sm:$0xff]
    %v9635 = vld [vmem:[#allocation2 + $0x58] sm:$0xff]
    %v9636 = vld [vmem:[#allocation2 + $0x60] sm:$0xff]
    %v9637 = vld [vmem:[#allocation2 + $0x68] sm:$0xff]
    %v9638 = vld [vmem:[#allocation2 + $0x70] sm:$0xff]
    %v9639 = vld [vmem:[#allocation2 + $0x78] sm:$0xff]
    %v9640 = vld [vmem:[#allocation2 + $0x80] sm:$0xff]
    %v9641 = vld [vmem:[#allocation2 + $0x88] sm:$0xff]
    %v9642 = vld [vmem:[#allocation2 + $0x90] sm:$0xff]
    %v9643 = vld [vmem:[#allocation2 + $0x98] sm:$0xff]
    %v9644 = vld [vmem:[#allocation2 + $0xa0] sm:$0xff]
    %v9645 = vld [vmem:[#allocation2 + $0xa8] sm:$0xff]
    %v9646 = vld [vmem:[#allocation2 + $0xb0] sm:$0xff]
    %v9647 = vld [vmem:[#allocation2 + $0xb8] sm:$0xff]
    %v9648 = vld [vmem:[#allocation2 + $0xc0] sm:$0xff]
    %v9649 = vld [vmem:[#allocation2 + $0xc8] sm:$0xff]
    %v9650 = vld [vmem:[#allocation2 + $0xd0] sm:$0xff]
    %v9651 = vld [vmem:[#allocation2 + $0xd8] sm:$0xff]
    %v9652 = vld [vmem:[#allocation2 + $0xe0] sm:$0xff]
    %v9653 = vld [vmem:[#allocation2 + $0xe8] sm:$0xff]
    %v9654 = vld [vmem:[#allocation2 + $0xf0] sm:$0xff]
    %v9655 = vld [vmem:[#allocation2 + $0xf8] sm:$0xff]
    %v9656 = vld [vmem:[#allocation2 + $0x100] sm:$0xff]
    %v9657 = vld [vmem:[#allocation2 + $0x108] sm:$0xff]
    %v9658 = vld [vmem:[#allocation2 + $0x110] sm:$0xff]
    %v9659 = vld [vmem:[#allocation2 + $0x118] sm:$0xff]
    %v9660 = vld [vmem:[#allocation2 + $0x120] sm:$0xff]
    %v9661 = vld [vmem:[#allocation2 + $0x128] sm:$0xff]
    %v9662 = vld [vmem:[#allocation2 + $0x130] sm:$0xff]
    %v9663 = vld [vmem:[#allocation2 + $0x138] sm:$0xff]
    %v9664 = vld [vmem:[#allocation2 + $0x140] sm:$0xff]
    %v9665 = vld [vmem:[#allocation2 + $0x148] sm:$0xff]
    %v9666 = vld [vmem:[#allocation2 + $0x150] sm:$0xff]
    %v9667 = vld [vmem:[#allocation2 + $0x158] sm:$0xff]
    %v9668 = vld [vmem:[#allocation2 + $0x160] sm:$0xff]
    %v9669 = vld [vmem:[#allocation2 + $0x168] sm:$0xff]
    %v9670 = vld [vmem:[#allocation2 + $0x170] sm:$0xff]
    %v9671 = vld [vmem:[#allocation2 + $0x178] sm:$0xff]
    %v9672 = vld [vmem:[#allocation2 + $0x180] sm:$0xff]
    %v9673 = vld [vmem:[#allocation2 + $0x188] sm:$0xff]
    %v9674 = vld [vmem:[#allocation2 + $0x190] sm:$0xff]
    %v9675 = vld [vmem:[#allocation2 + $0x198] sm:$0xff]
    %v9676 = vld [vmem:[#allocation2 + $0x1a0] sm:$0xff]
    %v9677 = vld [vmem:[#allocation2 + $0x1a8] sm:$0xff]
    %v9678 = vld [vmem:[#allocation2 + $0x1b0] sm:$0xff]
    %v9679 = vld [vmem:[#allocation2 + $0x1b8] sm:$0xff]
    %v9680 = vld [vmem:[#allocation2 + $0x1c0] sm:$0xff]
    %v9681 = vld [vmem:[#allocation2 + $0x1c8] sm:$0xff]
    %v9682 = vld [vmem:[#allocation2 + $0x1d0] sm:$0xff]
    %v9683 = vld [vmem:[#allocation2 + $0x1d8] sm:$0xff]
    %v9684 = vld [vmem:[#allocation2 + $0x1e0] sm:$0xff]
    %v9685 = vld [vmem:[#allocation2 + $0x1e8] sm:$0xff]
    %v9686 = vld [vmem:[#allocation2 + $0x1f0] sm:$0xff]
    %v9687 = vld [vmem:[#allocation2 + $0x1f8] sm:$0xff]
    %v9688 = vld [vmem:[#allocation2 + $0x200] sm:$0xff]
    %v9689 = vld [vmem:[#allocation2 + $0x208] sm:$0xff]
    %v9690 = vld [vmem:[#allocation2 + $0x210] sm:$0xff]
    %v9691 = vld [vmem:[#allocation2 + $0x218] sm:$0xff]
    %v9692 = vld [vmem:[#allocation2 + $0x220] sm:$0xff]
    %v9693 = vld [vmem:[#allocation2 + $0x228] sm:$0xff]
    %v9694 = vld [vmem:[#allocation2 + $0x230] sm:$0xff]
    %v9695 = vld [vmem:[#allocation2 + $0x238] sm:$0xff]
    %v9696 = vld [vmem:[#allocation2 + $0x240] sm:$0xff]
    %v9697 = vld [vmem:[#allocation2 + $0x248] sm:$0xff]
    %v9698 = vld [vmem:[#allocation2 + $0x250] sm:$0xff]
    %v9699 = vld [vmem:[#allocation2 + $0x258] sm:$0xff]
    %v9700 = vld [vmem:[#allocation2 + $0x260] sm:$0xff]
    %v9701 = vld [vmem:[#allocation2 + $0x268] sm:$0xff]
    %v9702 = vld [vmem:[#allocation2 + $0x270] sm:$0xff]
    %v9703 = vld [vmem:[#allocation2 + $0x278] sm:$0xff]
    %v9704 = vld [vmem:[#allocation2 + $0x280] sm:$0xff]
    %v9705 = vld [vmem:[#allocation2 + $0x288] sm:$0xff]
    %v9706 = vld [vmem:[#allocation2 + $0x290] sm:$0xff]
    %v9707 = vld [vmem:[#allocation2 + $0x298] sm:$0xff]
    %v9708 = vld [vmem:[#allocation2 + $0x2a0] sm:$0xff]
    %v9709 = vld [vmem:[#allocation2 + $0x2a8] sm:$0xff]
    %v9710 = vld [vmem:[#allocation2 + $0x2b0] sm:$0xff]
    %v9711 = vld [vmem:[#allocation2 + $0x2b8] sm:$0xff]
    %v9712 = vld [vmem:[#allocation2 + $0x2c0] sm:$0xff]
    %v9713 = vld [vmem:[#allocation2 + $0x2c8] sm:$0xff]
    %v9714 = vld [vmem:[#allocation2 + $0x2d0] sm:$0xff]
    %v9715 = vld [vmem:[#allocation2 + $0x2d8] sm:$0xff]
    %v9716 = vld [vmem:[#allocation2 + $0x2e0] sm:$0xff]
    %v9717 = vld [vmem:[#allocation2 + $0x2e8] sm:$0xff]
    %v9718 = vld [vmem:[#allocation2 + $0x2f0] sm:$0xff]
    %v9719 = vld [vmem:[#allocation2 + $0x2f8] sm:$0xff]
    %v9720 = vld [vmem:[#allocation2 + $0x300] sm:$0xff]
    %v9721 = vld [vmem:[#allocation2 + $0x308] sm:$0xff]
    %v9722 = vld [vmem:[#allocation2 + $0x310] sm:$0xff]
    %v9723 = vld [vmem:[#allocation2 + $0x318] sm:$0xff]
    %v9724 = vld [vmem:[#allocation2 + $0x320] sm:$0xff]
    %v9725 = vld [vmem:[#allocation2 + $0x328] sm:$0xff]
    %v9726 = vld [vmem:[#allocation2 + $0x330] sm:$0xff]
    %v9727 = vld [vmem:[#allocation2 + $0x338] sm:$0xff]
    %v9728 = vld [vmem:[#allocation2 + $0x340] sm:$0xff]
    %v9729 = vld [vmem:[#allocation2 + $0x348] sm:$0xff]
    %v9730 = vld [vmem:[#allocation2 + $0x350] sm:$0xff]
    %v9731 = vld [vmem:[#allocation2 + $0x358] sm:$0xff]
    %v9732 = vld [vmem:[#allocation2 + $0x360] sm:$0xff]
    %v9733 = vld [vmem:[#allocation2 + $0x368] sm:$0xff]
    %v9734 = vld [vmem:[#allocation2 + $0x370] sm:$0xff]
    %v9735 = vld [vmem:[#allocation2 + $0x378] sm:$0xff]
    %v9736 = vld [vmem:[#allocation8] sm:$0xf]
    %v9738 = vperm.slane %v9736, 0
    %v9739 = vperm.slane %v9736, 1
    %v9740 = vperm.slane %v9736, 2
    %v9741 = vperm.slane %v9736, 3
    %v9746 = vadd.f32 %v9624, %v9738
    %v9747 = vadd.f32 %v9625, %v9739
    %v9748 = vadd.f32 %v9626, %v9740
    %v9749 = vadd.f32 %v9627, %v9741
    %v9750 = vadd.f32 %v9628, %v9738
    %v9751 = vadd.f32 %v9629, %v9739
    %v9752 = vadd.f32 %v9630, %v9740
    %v9753 = vadd.f32 %v9631, %v9741
    %v9754 = vadd.f32 %v9632, %v9738
    %v9755 = vadd.f32 %v9633, %v9739
    %v9756 = vadd.f32 %v9634, %v9740
    %v9757 = vadd.f32 %v9635, %v9741
    %v9758 = vadd.f32 %v9636, %v9738
    %v9759 = vadd.f32 %v9637, %v9739
    %v9760 = vadd.f32 %v9638, %v9740
    %v9761 = vadd.f32 %v9639, %v9741
    %v9762 = vadd.f32 %v9640, %v9738
    %v9763 = vadd.f32 %v9641, %v9739
    %v9764 = vadd.f32 %v9642, %v9740
    %v9765 = vadd.f32 %v9643, %v9741
    %v9766 = vadd.f32 %v9644, %v9738
    %v9767 = vadd.f32 %v9645, %v9739
    %v9768 = vadd.f32 %v9646, %v9740
    %v9769 = vadd.f32 %v9647, %v9741
    %v9770 = vadd.f32 %v9648, %v9738
    %v9771 = vadd.f32 %v9649, %v9739
    %v9772 = vadd.f32 %v9650, %v9740
    %v9773 = vadd.f32 %v9651, %v9741
    %v9774 = vadd.f32 %v9652, %v9738
    %v9775 = vadd.f32 %v9653, %v9739
    %v9776 = vadd.f32 %v9654, %v9740
    %v9777 = vadd.f32 %v9655, %v9741
    %v9778 = vadd.f32 %v9656, %v9738
    %v9779 = vadd.f32 %v9657, %v9739
    %v9780 = vadd.f32 %v9658, %v9740
    %v9781 = vadd.f32 %v9659, %v9741
    %v9782 = vadd.f32 %v9660, %v9738
    %v9783 = vadd.f32 %v9661, %v9739
    %v9784 = vadd.f32 %v9662, %v9740
    %v9785 = vadd.f32 %v9663, %v9741
    %v9786 = vadd.f32 %v9664, %v9738
    %v9787 = vadd.f32 %v9665, %v9739
    %v9788 = vadd.f32 %v9666, %v9740
    %v9789 = vadd.f32 %v9667, %v9741
    %v9790 = vadd.f32 %v9668, %v9738
    %v9791 = vadd.f32 %v9669, %v9739
    %v9792 = vadd.f32 %v9670, %v9740
    %v9793 = vadd.f32 %v9671, %v9741
    %v9794 = vadd.f32 %v9672, %v9738
    %v9795 = vadd.f32 %v9673, %v9739
    %v9796 = vadd.f32 %v9674, %v9740
    %v9797 = vadd.f32 %v9675, %v9741
    %v9798 = vadd.f32 %v9676, %v9738
    %v9799 = vadd.f32 %v9677, %v9739
    %v9800 = vadd.f32 %v9678, %v9740
    %v9801 = vadd.f32 %v9679, %v9741
    %v9802 = vadd.f32 %v9680, %v9738
    %v9803 = vadd.f32 %v9681, %v9739
    %v9804 = vadd.f32 %v9682, %v9740
    %v9805 = vadd.f32 %v9683, %v9741
    %v9806 = vadd.f32 %v9684, %v9738
    %v9807 = vadd.f32 %v9685, %v9739
    %v9808 = vadd.f32 %v9686, %v9740
    %v9809 = vadd.f32 %v9687, %v9741
    %v9810 = vadd.f32 %v9688, %v9738
    %v9811 = vadd.f32 %v9689, %v9739
    %v9812 = vadd.f32 %v9690, %v9740
    %v9813 = vadd.f32 %v9691, %v9741
    %v9814 = vadd.f32 %v9692, %v9738
    %v9815 = vadd.f32 %v9693, %v9739
    %v9816 = vadd.f32 %v9694, %v9740
    %v9817 = vadd.f32 %v9695, %v9741
    %v9818 = vadd.f32 %v9696, %v9738
    %v9819 = vadd.f32 %v9697, %v9739
    %v9820 = vadd.f32 %v9698, %v9740
    %v9821 = vadd.f32 %v9699, %v9741
    %v9822 = vadd.f32 %v9700, %v9738
    %v9823 = vadd.f32 %v9701, %v9739
    %v9824 = vadd.f32 %v9702, %v9740
    %v9825 = vadd.f32 %v9703, %v9741
    %v9826 = vadd.f32 %v9704, %v9738
    %v9827 = vadd.f32 %v9705, %v9739
    %v9828 = vadd.f32 %v9706, %v9740
    %v9829 = vadd.f32 %v9707, %v9741
    %v9830 = vadd.f32 %v9708, %v9738
    %v9831 = vadd.f32 %v9709, %v9739
    %v9832 = vadd.f32 %v9710, %v9740
    %v9833 = vadd.f32 %v9711, %v9741
    %v9834 = vadd.f32 %v9712, %v9738
    %v9835 = vadd.f32 %v9713, %v9739
    %v9836 = vadd.f32 %v9714, %v9740
    %v9837 = vadd.f32 %v9715, %v9741
    %v9838 = vadd.f32 %v9716, %v9738
    %v9839 = vadd.f32 %v9717, %v9739
    %v9840 = vadd.f32 %v9718, %v9740
    %v9841 = vadd.f32 %v9719, %v9741
    %v9842 = vadd.f32 %v9720, %v9738
    %v9843 = vadd.f32 %v9721, %v9739
    %v9844 = vadd.f32 %v9722, %v9740
    %v9845 = vadd.f32 %v9723, %v9741
    %v9846 = vadd.f32 %v9724, %v9738
    %v9847 = vadd.f32 %v9725, %v9739
    %v9848 = vadd.f32 %v9726, %v9740
    %v9849 = vadd.f32 %v9727, %v9741
    %v9850 = vadd.f32 %v9728, %v9738
    %v9851 = vadd.f32 %v9729, %v9739
    %v9852 = vadd.f32 %v9730, %v9740
    %v9853 = vadd.f32 %v9731, %v9741
    %v9854 = vadd.f32 %v9732, %v9738
    %v9855 = vadd.f32 %v9733, %v9739
    %v9856 = vadd.f32 %v9734, %v9740
    %v9857 = vadd.f32 %v9735, %v9741
    %v9858 = vmax.f32 %v9746, 0.0
    %v9859 = vmax.f32 %v9747, 0.0
    %v9860 = vmax.f32 %v9748, 0.0
    %v9861 = vmax.f32 %v9749, 0.0
    %v9862 = vmax.f32 %v9750, 0.0
    %v9863 = vmax.f32 %v9751, 0.0
    %v9864 = vmax.f32 %v9752, 0.0
    %v9865 = vmax.f32 %v9753, 0.0
    %v9866 = vmax.f32 %v9754, 0.0
    %v9867 = vmax.f32 %v9755, 0.0
    %v9868 = vmax.f32 %v9756, 0.0
    %v9869 = vmax.f32 %v9757, 0.0
    %v9870 = vmax.f32 %v9758, 0.0
    %v9871 = vmax.f32 %v9759, 0.0
    %v9872 = vmax.f32 %v9760, 0.0
    %v9873 = vmax.f32 %v9761, 0.0
    %v9874 = vmax.f32 %v9762, 0.0
    %v9875 = vmax.f32 %v9763, 0.0
    %v9876 = vmax.f32 %v9764, 0.0
    %v9877 = vmax.f32 %v9765, 0.0
    %v9878 = vmax.f32 %v9766, 0.0
    %v9879 = vmax.f32 %v9767, 0.0
    %v9880 = vmax.f32 %v9768, 0.0
    %v9881 = vmax.f32 %v9769, 0.0
    %v9882 = vmax.f32 %v9770, 0.0
    %v9883 = vmax.f32 %v9771, 0.0
    %v9884 = vmax.f32 %v9772, 0.0
    %v9885 = vmax.f32 %v9773, 0.0
    %v9886 = vmax.f32 %v9774, 0.0
    %v9887 = vmax.f32 %v9775, 0.0
    %v9888 = vmax.f32 %v9776, 0.0
    %v9889 = vmax.f32 %v9777, 0.0
    %v9890 = vmax.f32 %v9778, 0.0
    %v9891 = vmax.f32 %v9779, 0.0
    %v9892 = vmax.f32 %v9780, 0.0
    %v9893 = vmax.f32 %v9781, 0.0
    %v9894 = vmax.f32 %v9782, 0.0
    %v9895 = vmax.f32 %v9783, 0.0
    %v9896 = vmax.f32 %v9784, 0.0
    %v9897 = vmax.f32 %v9785, 0.0
    %v9898 = vmax.f32 %v9786, 0.0
    %v9899 = vmax.f32 %v9787, 0.0
    %v9900 = vmax.f32 %v9788, 0.0
    %v9901 = vmax.f32 %v9789, 0.0
    %v9902 = vmax.f32 %v9790, 0.0
    %v9903 = vmax.f32 %v9791, 0.0
    %v9904 = vmax.f32 %v9792, 0.0
    %v9905 = vmax.f32 %v9793, 0.0
    %v9906 = vmax.f32 %v9794, 0.0
    %v9907 = vmax.f32 %v9795, 0.0
    %v9908 = vmax.f32 %v9796, 0.0
    %v9909 = vmax.f32 %v9797, 0.0
    %v9910 = vmax.f32 %v9798, 0.0
    %v9911 = vmax.f32 %v9799, 0.0
    %v9912 = vmax.f32 %v9800, 0.0
    %v9913 = vmax.f32 %v9801, 0.0
    %v9914 = vmax.f32 %v9802, 0.0
    %v9915 = vmax.f32 %v9803, 0.0
    %v9916 = vmax.f32 %v9804, 0.0
    %v9917 = vmax.f32 %v9805, 0.0
    %v9918 = vmax.f32 %v9806, 0.0
    %v9919 = vmax.f32 %v9807, 0.0
    %v9920 = vmax.f32 %v9808, 0.0
    %v9921 = vmax.f32 %v9809, 0.0
    %v9922 = vmax.f32 %v9810, 0.0
    %v9923 = vmax.f32 %v9811, 0.0
    %v9924 = vmax.f32 %v9812, 0.0
    %v9925 = vmax.f32 %v9813, 0.0
    %v9926 = vmax.f32 %v9814, 0.0
    %v9927 = vmax.f32 %v9815, 0.0
    %v9928 = vmax.f32 %v9816, 0.0
    %v9929 = vmax.f32 %v9817, 0.0
    %v9930 = vmax.f32 %v9818, 0.0
    %v9931 = vmax.f32 %v9819, 0.0
    %v9932 = vmax.f32 %v9820, 0.0
    %v9933 = vmax.f32 %v9821, 0.0
    %v9934 = vmax.f32 %v9822, 0.0
    %v9935 = vmax.f32 %v9823, 0.0
    %v9936 = vmax.f32 %v9824, 0.0
    %v9937 = vmax.f32 %v9825, 0.0
    %v9938 = vmax.f32 %v9826, 0.0
    %v9939 = vmax.f32 %v9827, 0.0
    %v9940 = vmax.f32 %v9828, 0.0
    %v9941 = vmax.f32 %v9829, 0.0
    %v9942 = vmax.f32 %v9830, 0.0
    %v9943 = vmax.f32 %v9831, 0.0
    %v9944 = vmax.f32 %v9832, 0.0
    %v9945 = vmax.f32 %v9833, 0.0
    %v9946 = vmax.f32 %v9834, 0.0
    %v9947 = vmax.f32 %v9835, 0.0
    %v9948 = vmax.f32 %v9836, 0.0
    %v9949 = vmax.f32 %v9837, 0.0
    %v9950 = vmax.f32 %v9838, 0.0
    %v9951 = vmax.f32 %v9839, 0.0
    %v9952 = vmax.f32 %v9840, 0.0
    %v9953 = vmax.f32 %v9841, 0.0
    %v9954 = vmax.f32 %v9842, 0.0
    %v9955 = vmax.f32 %v9843, 0.0
    %v9956 = vmax.f32 %v9844, 0.0
    %v9957 = vmax.f32 %v9845, 0.0
    %v9958 = vmax.f32 %v9846, 0.0
    %v9959 = vmax.f32 %v9847, 0.0
    %v9960 = vmax.f32 %v9848, 0.0
    %v9961 = vmax.f32 %v9849, 0.0
    %v9962 = vmax.f32 %v9850, 0.0
    %v9963 = vmax.f32 %v9851, 0.0
    %v9964 = vmax.f32 %v9852, 0.0
    %v9965 = vmax.f32 %v9853, 0.0
    %v9966 = vmax.f32 %v9854, 0.0
    %v9967 = vmax.f32 %v9855, 0.0
    %v9968 = vmax.f32 %v9856, 0.0
    %v9969 = vmax.f32 %v9857, 0.0
    %v9970 = vpack.c.bf16 %v9859, %v9858
    %v9971 = vpack.c.bf16 %v9861, %v9860
    %v9972 = vpack.c.bf16 %v9863, %v9862
    %v9973 = vpack.c.bf16 %v9865, %v9864
    %v9974 = vpack.c.bf16 %v9867, %v9866
    %v9975 = vpack.c.bf16 %v9869, %v9868
    %v9976 = vpack.c.bf16 %v9871, %v9870
    %v9977 = vpack.c.bf16 %v9873, %v9872
    %v9978 = vpack.c.bf16 %v9875, %v9874
    %v9979 = vpack.c.bf16 %v9877, %v9876
    %v9980 = vpack.c.bf16 %v9879, %v9878
    %v9981 = vpack.c.bf16 %v9881, %v9880
    %v9982 = vpack.c.bf16 %v9883, %v9882
    %v9983 = vpack.c.bf16 %v9885, %v9884
    %v9984 = vpack.c.bf16 %v9887, %v9886
    %v9985 = vpack.c.bf16 %v9889, %v9888
    %v9986 = vpack.c.bf16 %v9891, %v9890
    %v9987 = vpack.c.bf16 %v9893, %v9892
    %v9988 = vpack.c.bf16 %v9895, %v9894
    %v9989 = vpack.c.bf16 %v9897, %v9896
    %v9990 = vpack.c.bf16 %v9899, %v9898
    %v9991 = vpack.c.bf16 %v9901, %v9900
    %v9992 = vpack.c.bf16 %v9903, %v9902
    %v9993 = vpack.c.bf16 %v9905, %v9904
    %v9994 = vpack.c.bf16 %v9907, %v9906
    %v9995 = vpack.c.bf16 %v9909, %v9908
    %v9996 = vpack.c.bf16 %v9911, %v9910
    %v9997 = vpack.c.bf16 %v9913, %v9912
    %v9998 = vpack.c.bf16 %v9915, %v9914
    %v9999 = vpack.c.bf16 %v9917, %v9916
    %v10000 = vpack.c.bf16 %v9919, %v9918
    %v10001 = vpack.c.bf16 %v9921, %v9920
    %v10002 = vpack.c.bf16 %v9923, %v9922
    %v10003 = vpack.c.bf16 %v9925, %v9924
    %v10004 = vpack.c.bf16 %v9927, %v9926
    %v10005 = vpack.c.bf16 %v9929, %v9928
    %v10006 = vpack.c.bf16 %v9931, %v9930
    %v10007 = vpack.c.bf16 %v9933, %v9932
    %v10008 = vpack.c.bf16 %v9935, %v9934
    %v10009 = vpack.c.bf16 %v9937, %v9936
    %v10010 = vpack.c.bf16 %v9939, %v9938
    %v10011 = vpack.c.bf16 %v9941, %v9940
    %v10012 = vpack.c.bf16 %v9943, %v9942
    %v10013 = vpack.c.bf16 %v9945, %v9944
    %v10014 = vpack.c.bf16 %v9947, %v9946
    %v10015 = vpack.c.bf16 %v9949, %v9948
    %v10016 = vpack.c.bf16 %v9951, %v9950
    %v10017 = vpack.c.bf16 %v9953, %v9952
    %v10018 = vpack.c.bf16 %v9955, %v9954
    %v10019 = vpack.c.bf16 %v9957, %v9956
    %v10020 = vpack.c.bf16 %v9959, %v9958
    %v10021 = vpack.c.bf16 %v9961, %v9960
    %v10022 = vpack.c.bf16 %v9963, %v9962
    %v10023 = vpack.c.bf16 %v9965, %v9964
    %v10024 = vpack.c.bf16 %v9967, %v9966
    %v10025 = vpack.c.bf16 %v9969, %v9968
    %v10026 = vunpack.c.l.bf16 %v9970
    %v10027 = vunpack.c.h.bf16 %v9970
    %v10028 = vunpack.c.l.bf16 %v9971
    %v10029 = vunpack.c.h.bf16 %v9971
    %v10030 = vunpack.c.l.bf16 %v9972
    %v10031 = vunpack.c.h.bf16 %v9972
    %v10032 = vunpack.c.l.bf16 %v9973
    %v10033 = vunpack.c.h.bf16 %v9973
    %v10034 = vunpack.c.l.bf16 %v9978
    %v10035 = vunpack.c.h.bf16 %v9978
    %v10036 = vunpack.c.l.bf16 %v9979
    %v10037 = vunpack.c.h.bf16 %v9979
    %v10038 = vunpack.c.l.bf16 %v9980
    %v10039 = vunpack.c.h.bf16 %v9980
    %v10040 = vunpack.c.l.bf16 %v9981
    %v10041 = vunpack.c.h.bf16 %v9981
    %v10042 = vunpack.c.l.bf16 %v9986
    %v10043 = vunpack.c.h.bf16 %v9986
    %v10044 = vunpack.c.l.bf16 %v9987
    %v10045 = vunpack.c.h.bf16 %v9987
    %v10046 = vunpack.c.l.bf16 %v9988
    %v10047 = vunpack.c.h.bf16 %v9988
    %v10048 = vunpack.c.l.bf16 %v9989
    %v10049 = vunpack.c.h.bf16 %v9989
    %v10050 = vunpack.c.l.bf16 %v9994
    %v10051 = vunpack.c.h.bf16 %v9994
    %v10052 = vunpack.c.l.bf16 %v9995
    %v10053 = vunpack.c.h.bf16 %v9995
    %v10054 = vunpack.c.l.bf16 %v9996
    %v10055 = vunpack.c.h.bf16 %v9996
    %v10056 = vunpack.c.l.bf16 %v9997
    %v10057 = vunpack.c.h.bf16 %v9997
    %v10058 = vunpack.c.l.bf16 %v10002
    %v10059 = vunpack.c.h.bf16 %v10002
    %v10060 = vunpack.c.l.bf16 %v10003
    %v10061 = vunpack.c.h.bf16 %v10003
    %v10062 = vunpack.c.l.bf16 %v10004
    %v10063 = vunpack.c.h.bf16 %v10004
    %v10064 = vunpack.c.l.bf16 %v10005
    %v10065 = vunpack.c.h.bf16 %v10005
    %v10066 = vunpack.c.l.bf16 %v10010
    %v10067 = vunpack.c.h.bf16 %v10010
    %v10068 = vunpack.c.l.bf16 %v10011
    %v10069 = vunpack.c.h.bf16 %v10011
    %v10070 = vunpack.c.l.bf16 %v10012
    %v10071 = vunpack.c.h.bf16 %v10012
    %v10072 = vunpack.c.l.bf16 %v10013
    %v10073 = vunpack.c.h.bf16 %v10013
    %v10074 = vunpack.c.l.bf16 %v10018
    %v10075 = vunpack.c.h.bf16 %v10018
    %v10076 = vunpack.c.l.bf16 %v10019
    %v10077 = vunpack.c.h.bf16 %v10019
    %v10078 = vunpack.c.l.bf16 %v10020
    %v10079 = vunpack.c.h.bf16 %v10020
    %v10080 = vunpack.c.l.bf16 %v10021
    %v10081 = vunpack.c.h.bf16 %v10021
    %v10082 = vunpack.c.l.bf16 %v9974
    %v10083 = vunpack.c.h.bf16 %v9974
    %v10084 = vunpack.c.l.bf16 %v9975
    %v10085 = vunpack.c.h.bf16 %v9975
    %v10086 = vunpack.c.l.bf16 %v9976
    %v10087 = vunpack.c.h.bf16 %v9976
    %v10088 = vunpack.c.l.bf16 %v9977
    %v10089 = vunpack.c.h.bf16 %v9977
    %v10090 = vunpack.c.l.bf16 %v9982
    %v10091 = vunpack.c.h.bf16 %v9982
    %v10092 = vunpack.c.l.bf16 %v9983
    %v10093 = vunpack.c.h.bf16 %v9983
    %v10094 = vunpack.c.l.bf16 %v9984
    %v10095 = vunpack.c.h.bf16 %v9984
    %v10096 = vunpack.c.l.bf16 %v9985
    %v10097 = vunpack.c.h.bf16 %v9985
    %v10098 = vunpack.c.l.bf16 %v9990
    %v10099 = vunpack.c.h.bf16 %v9990
    %v10100 = vunpack.c.l.bf16 %v9991
    %v10101 = vunpack.c.h.bf16 %v9991
    %v10102 = vunpack.c.l.bf16 %v9992
    %v10103 = vunpack.c.h.bf16 %v9992
    %v10104 = vunpack.c.l.bf16 %v9993
    %v10105 = vunpack.c.h.bf16 %v9993
    %v10106 = vunpack.c.l.bf16 %v9998
    %v10107 = vunpack.c.h.bf16 %v9998
    %v10108 = vunpack.c.l.bf16 %v9999
    %v10109 = vunpack.c.h.bf16 %v9999
    %v10110 = vunpack.c.l.bf16 %v10000
    %v10111 = vunpack.c.h.bf16 %v10000
    %v10112 = vunpack.c.l.bf16 %v10001
    %v10113 = vunpack.c.h.bf16 %v10001
    %v10114 = vunpack.c.l.bf16 %v10006
    %v10115 = vunpack.c.h.bf16 %v10006
    %v10116 = vunpack.c.l.bf16 %v10007
    %v10117 = vunpack.c.h.bf16 %v10007
    %v10118 = vunpack.c.l.bf16 %v10008
    %v10119 = vunpack.c.h.bf16 %v10008
    %v10120 = vunpack.c.l.bf16 %v10009
    %v10121 = vunpack.c.h.bf16 %v10009
    %v10122 = vunpack.c.l.bf16 %v10014
    %v10123 = vunpack.c.h.bf16 %v10014
    %v10124 = vunpack.c.l.bf16 %v10015
    %v10125 = vunpack.c.h.bf16 %v10015
    %v10126 = vunpack.c.l.bf16 %v10016
    %v10127 = vunpack.c.h.bf16 %v10016
    %v10128 = vunpack.c.l.bf16 %v10017
    %v10129 = vunpack.c.h.bf16 %v10017
    %v10130 = vunpack.c.l.bf16 %v10022
    %v10131 = vunpack.c.h.bf16 %v10022
    %v10132 = vunpack.c.l.bf16 %v10023
    %v10133 = vunpack.c.h.bf16 %v10023
    %v10134 = vunpack.c.l.bf16 %v10024
    %v10135 = vunpack.c.h.bf16 %v10024
    %v10136 = vunpack.c.l.bf16 %v10025
    %v10137 = vunpack.c.h.bf16 %v10025
    %v10138 = vmax.f32 %v10026, %v10082
    %v10139 = vmax.f32 %v10027, %v10083
    %v10140 = vmax.f32 %v10028, %v10084
    %v10141 = vmax.f32 %v10029, %v10085
    %v10142 = vmax.f32 %v10030, %v10086
    %v10143 = vmax.f32 %v10031, %v10087
    %v10144 = vmax.f32 %v10032, %v10088
    %v10145 = vmax.f32 %v10033, %v10089
    %v10146 = vmax.f32 %v10034, %v10090
    %v10147 = vmax.f32 %v10035, %v10091
    %v10148 = vmax.f32 %v10036, %v10092
    %v10149 = vmax.f32 %v10037, %v10093
    %v10150 = vmax.f32 %v10038, %v10094
    %v10151 = vmax.f32 %v10039, %v10095
    %v10152 = vmax.f32 %v10040, %v10096
    %v10153 = vmax.f32 %v10041, %v10097
    %v10154 = vmax.f32 %v10042, %v10098
    %v10155 = vmax.f32 %v10043, %v10099
    %v10156 = vmax.f32 %v10044, %v10100
    %v10157 = vmax.f32 %v10045, %v10101
    %v10158 = vmax.f32 %v10046, %v10102
    %v10159 = vmax.f32 %v10047, %v10103
    %v10160 = vmax.f32 %v10048, %v10104
    %v10161 = vmax.f32 %v10049, %v10105
    %v10162 = vmax.f32 %v10050, %v10106
    %v10163 = vmax.f32 %v10051, %v10107
    %v10164 = vmax.f32 %v10052, %v10108
    %v10165 = vmax.f32 %v10053, %v10109
    %v10166 = vmax.f32 %v10054, %v10110
    %v10167 = vmax.f32 %v10055, %v10111
    %v10168 = vmax.f32 %v10056, %v10112
    %v10169 = vmax.f32 %v10057, %v10113
    %v10170 = vmax.f32 %v10058, %v10114
    %v10171 = vmax.f32 %v10059, %v10115
    %v10172 = vmax.f32 %v10060, %v10116
    %v10173 = vmax.f32 %v10061, %v10117
    %v10174 = vmax.f32 %v10062, %v10118
    %v10175 = vmax.f32 %v10063, %v10119
    %v10176 = vmax.f32 %v10064, %v10120
    %v10177 = vmax.f32 %v10065, %v10121
    %v10178 = vmax.f32 %v10066, %v10122
    %v10179 = vmax.f32 %v10067, %v10123
    %v10180 = vmax.f32 %v10068, %v10124
    %v10181 = vmax.f32 %v10069, %v10125
    %v10182 = vmax.f32 %v10070, %v10126
    %v10183 = vmax.f32 %v10071, %v10127
    %v10184 = vmax.f32 %v10072, %v10128
    %v10185 = vmax.f32 %v10073, %v10129
    %v10186 = vmax.f32 %v10074, %v10130
    %v10187 = vmax.f32 %v10075, %v10131
    %v10188 = vmax.f32 %v10076, %v10132
    %v10189 = vmax.f32 %v10077, %v10133
    %v10190 = vmax.f32 %v10078, %v10134
    %v10191 = vmax.f32 %v10079, %v10135
    %v10192 = vmax.f32 %v10080, %v10136
    %v10193 = vmax.f32 %v10081, %v10137
    %v10194 = vpack.c.bf16 %v10139, %v10138
    %v10195 = vpack.c.bf16 %v10141, %v10140
    %v10196 = vpack.c.bf16 %v10143, %v10142
    %v10197 = vpack.c.bf16 %v10145, %v10144
    %v10198 = vpack.c.bf16 %v10147, %v10146
    %v10199 = vpack.c.bf16 %v10149, %v10148
    %v10200 = vpack.c.bf16 %v10151, %v10150
    %v10201 = vpack.c.bf16 %v10153, %v10152
    %v10202 = vpack.c.bf16 %v10155, %v10154
    %v10203 = vpack.c.bf16 %v10157, %v10156
    %v10204 = vpack.c.bf16 %v10159, %v10158
    %v10205 = vpack.c.bf16 %v10161, %v10160
    %v10206 = vpack.c.bf16 %v10163, %v10162
    %v10207 = vpack.c.bf16 %v10165, %v10164
    %v10208 = vpack.c.bf16 %v10167, %v10166
    %v10209 = vpack.c.bf16 %v10169, %v10168
    %v10210 = vpack.c.bf16 %v10171, %v10170
    %v10211 = vpack.c.bf16 %v10173, %v10172
    %v10212 = vpack.c.bf16 %v10175, %v10174
    %v10213 = vpack.c.bf16 %v10177, %v10176
    %v10214 = vpack.c.bf16 %v10179, %v10178
    %v10215 = vpack.c.bf16 %v10181, %v10180
    %v10216 = vpack.c.bf16 %v10183, %v10182
    %v10217 = vpack.c.bf16 %v10185, %v10184
    %v10218 = vpack.c.bf16 %v10187, %v10186
    %v10219 = vpack.c.bf16 %v10189, %v10188
    %v10220 = vpack.c.bf16 %v10191, %v10190
    %v10221 = vpack.c.bf16 %v10193, %v10192
    %v10222 = vunpack.c.l.bf16 %v10194
    %v10223 = vunpack.c.h.bf16 %v10194
    %v10224 = vunpack.c.l.bf16 %v10196
    %v10225 = vunpack.c.h.bf16 %v10196
    %v10226 = vunpack.c.l.bf16 %v10198
    %v10227 = vunpack.c.h.bf16 %v10198
    %v10228 = vunpack.c.l.bf16 %v10200
    %v10229 = vunpack.c.h.bf16 %v10200
    %v10230 = vunpack.c.l.bf16 %v10202
    %v10231 = vunpack.c.h.bf16 %v10202
    %v10232 = vunpack.c.l.bf16 %v10204
    %v10233 = vunpack.c.h.bf16 %v10204
    %v10234 = vunpack.c.l.bf16 %v10206
    %v10235 = vunpack.c.h.bf16 %v10206
    %v10236 = vunpack.c.l.bf16 %v10208
    %v10237 = vunpack.c.h.bf16 %v10208
    %v10238 = vunpack.c.l.bf16 %v10210
    %v10239 = vunpack.c.h.bf16 %v10210
    %v10240 = vunpack.c.l.bf16 %v10212
    %v10241 = vunpack.c.h.bf16 %v10212
    %v10242 = vunpack.c.l.bf16 %v10214
    %v10243 = vunpack.c.h.bf16 %v10214
    %v10244 = vunpack.c.l.bf16 %v10216
    %v10245 = vunpack.c.h.bf16 %v10216
    %v10246 = vunpack.c.l.bf16 %v10218
    %v10247 = vunpack.c.h.bf16 %v10218
    %v10248 = vunpack.c.l.bf16 %v10220
    %v10249 = vunpack.c.h.bf16 %v10220
    %10278 = vrot.lane.b32.xlu0 %v10194, 32
    %v10279 = vpop.permute.xlu0 %10278
    %10280 = vrot.lane.b32.xlu0 %v10195, 32
    %v10281 = vpop.permute.xlu0 %10280
    %10282 = vrot.lane.b32.xlu0 %v10196, 32
    %v10283 = vpop.permute.xlu0 %10282
    %10284 = vrot.lane.b32.xlu0 %v10197, 32
    %v10285 = vpop.permute.xlu0 %10284
    %10286 = vrot.lane.b32.xlu0 %v10198, 32
    %v10287 = vpop.permute.xlu0 %10286
    %10288 = vrot.lane.b32.xlu0 %v10199, 32
    %v10289 = vpop.permute.xlu0 %10288
    %10290 = vrot.lane.b32.xlu0 %v10200, 32
    %v10291 = vpop.permute.xlu0 %10290
    %10292 = vrot.lane.b32.xlu0 %v10201, 32
    %v10293 = vpop.permute.xlu0 %10292
    %10294 = vrot.lane.b32.xlu0 %v10202, 32
    %v10295 = vpop.permute.xlu0 %10294
    %10296 = vrot.lane.b32.xlu0 %v10203, 32
    %v10297 = vpop.permute.xlu0 %10296
    %10298 = vrot.lane.b32.xlu0 %v10204, 32
    %v10299 = vpop.permute.xlu0 %10298
    %10300 = vrot.lane.b32.xlu0 %v10205, 32
    %v10301 = vpop.permute.xlu0 %10300
    %10302 = vrot.lane.b32.xlu0 %v10206, 32
    %v10303 = vpop.permute.xlu0 %10302
    %10304 = vrot.lane.b32.xlu0 %v10207, 32
    %v10305 = vpop.permute.xlu0 %10304
    %10306 = vrot.lane.b32.xlu0 %v10208, 32
    %v10307 = vpop.permute.xlu0 %10306
    %10308 = vrot.lane.b32.xlu0 %v10209, 32
    %v10309 = vpop.permute.xlu0 %10308
    %10310 = vrot.lane.b32.xlu0 %v10210, 32
    %v10311 = vpop.permute.xlu0 %10310
    %10312 = vrot.lane.b32.xlu0 %v10211, 32
    %v10313 = vpop.permute.xlu0 %10312
    %10314 = vrot.lane.b32.xlu0 %v10212, 32
    %v10315 = vpop.permute.xlu0 %10314
    %10316 = vrot.lane.b32.xlu0 %v10213, 32
    %v10317 = vpop.permute.xlu0 %10316
    %10318 = vrot.lane.b32.xlu0 %v10214, 32
    %v10319 = vpop.permute.xlu0 %10318
    %10320 = vrot.lane.b32.xlu0 %v10215, 32
    %v10321 = vpop.permute.xlu0 %10320
    %10322 = vrot.lane.b32.xlu0 %v10216, 32
    %v10323 = vpop.permute.xlu0 %10322
    %10324 = vrot.lane.b32.xlu0 %v10217, 32
    %v10325 = vpop.permute.xlu0 %10324
    %10326 = vrot.lane.b32.xlu0 %v10218, 32
    %v10327 = vpop.permute.xlu0 %10326
    %10328 = vrot.lane.b32.xlu0 %v10219, 32
    %v10329 = vpop.permute.xlu0 %10328
    %10330 = vrot.lane.b32.xlu0 %v10220, 32
    %v10331 = vpop.permute.xlu0 %10330
    %10332 = vrot.lane.b32.xlu0 %v10221, 32
    %v10333 = vpop.permute.xlu0 %10332
    %v10334 = vrot.slane %v10279, 4
    %v10335 = vrot.slane %v10281, 4
    %v10336 = vrot.slane %v10283, 4
    %v10337 = vrot.slane %v10285, 4
    %v10338 = vrot.slane %v10287, 4
    %v10339 = vrot.slane %v10289, 4
    %v10340 = vrot.slane %v10291, 4
    %v10341 = vrot.slane %v10293, 4
    %v10342 = vrot.slane %v10295, 4
    %v10343 = vrot.slane %v10297, 4
    %v10344 = vrot.slane %v10299, 4
    %v10345 = vrot.slane %v10301, 4
    %v10346 = vrot.slane %v10303, 4
    %v10347 = vrot.slane %v10305, 4
    %v10348 = vrot.slane %v10307, 4
    %v10349 = vrot.slane %v10309, 4
    %v10350 = vrot.slane %v10311, 4
    %v10351 = vrot.slane %v10313, 4
    %v10352 = vrot.slane %v10315, 4
    %v10353 = vrot.slane %v10317, 4
    %v10354 = vrot.slane %v10319, 4
    %v10355 = vrot.slane %v10321, 4
    %v10356 = vrot.slane %v10323, 4
    %v10357 = vrot.slane %v10325, 4
    %v10358 = vrot.slane %v10327, 4
    %v10359 = vrot.slane %v10329, 4
    %v10360 = vrot.slane %v10331, 4
    %v10361 = vrot.slane %v10333, 4
    %v10362 = vsel %vm3314, %v10334, %v10335
    %v10363 = vsel %vm3316, %v10362, %v10281
    %v10364 = vsel %vm3314, %v10336, %v10337
    %v10365 = vsel %vm3316, %v10364, %v10285
    %v10366 = vsel %vm3314, %v10338, %v10339
    %v10367 = vsel %vm3316, %v10366, %v10289
    %v10368 = vsel %vm3314, %v10340, %v10341
    %v10369 = vsel %vm3316, %v10368, %v10293
    %v10370 = vsel %vm3314, %v10342, %v10343
    %v10371 = vsel %vm3316, %v10370, %v10297
    %v10372 = vsel %vm3314, %v10344, %v10345
    %v10373 = vsel %vm3316, %v10372, %v10301
    %v10374 = vsel %vm3314, %v10346, %v10347
    %v10375 = vsel %vm3316, %v10374, %v10305
    %v10376 = vsel %vm3314, %v10348, %v10349
    %v10377 = vsel %vm3316, %v10376, %v10309
    %v10378 = vsel %vm3314, %v10350, %v10351
    %v10379 = vsel %vm3316, %v10378, %v10313
    %v10380 = vsel %vm3314, %v10352, %v10353
    %v10381 = vsel %vm3316, %v10380, %v10317
    %v10382 = vsel %vm3314, %v10354, %v10355
    %v10383 = vsel %vm3316, %v10382, %v10321
    %v10384 = vsel %vm3314, %v10356, %v10357
    %v10385 = vsel %vm3316, %v10384, %v10325
    %v10386 = vsel %vm3314, %v10358, %v10359
    %v10387 = vsel %vm3316, %v10386, %v10329
    %v10388 = vsel %vm3314, %v10360, %v10361
    %v10389 = vsel %vm3316, %v10388, %v10333
    %v10404 = vunpack.c.l.bf16 %v10363
    %v10405 = vunpack.c.h.bf16 %v10363
    %v10406 = vunpack.c.l.bf16 %v10365
    %v10407 = vunpack.c.h.bf16 %v10365
    %v10408 = vunpack.c.l.bf16 %v10367
    %v10409 = vunpack.c.h.bf16 %v10367
    %v10410 = vunpack.c.l.bf16 %v10369
    %v10411 = vunpack.c.h.bf16 %v10369
    %v10412 = vunpack.c.l.bf16 %v10371
    %v10413 = vunpack.c.h.bf16 %v10371
    %v10414 = vunpack.c.l.bf16 %v10373
    %v10415 = vunpack.c.h.bf16 %v10373
    %v10416 = vunpack.c.l.bf16 %v10375
    %v10417 = vunpack.c.h.bf16 %v10375
    %v10418 = vunpack.c.l.bf16 %v10377
    %v10419 = vunpack.c.h.bf16 %v10377
    %v10420 = vunpack.c.l.bf16 %v10379
    %v10421 = vunpack.c.h.bf16 %v10379
    %v10422 = vunpack.c.l.bf16 %v10381
    %v10423 = vunpack.c.h.bf16 %v10381
    %v10424 = vunpack.c.l.bf16 %v10383
    %v10425 = vunpack.c.h.bf16 %v10383
    %v10426 = vunpack.c.l.bf16 %v10385
    %v10427 = vunpack.c.h.bf16 %v10385
    %v10428 = vunpack.c.l.bf16 %v10387
    %v10429 = vunpack.c.h.bf16 %v10387
    %v10430 = vunpack.c.l.bf16 %v10389
    %v10431 = vunpack.c.h.bf16 %v10389
    %v10432 = vmax.f32 %v10222, %v10404
    %v10433 = vmax.f32 %v10223, %v10405
    %v10434 = vmax.f32 %v10224, %v10406
    %v10435 = vmax.f32 %v10225, %v10407
    %v10436 = vmax.f32 %v10226, %v10408
    %v10437 = vmax.f32 %v10227, %v10409
    %v10438 = vmax.f32 %v10228, %v10410
    %v10439 = vmax.f32 %v10229, %v10411
    %v10440 = vmax.f32 %v10230, %v10412
    %v10441 = vmax.f32 %v10231, %v10413
    %v10442 = vmax.f32 %v10232, %v10414
    %v10443 = vmax.f32 %v10233, %v10415
    %v10444 = vmax.f32 %v10234, %v10416
    %v10445 = vmax.f32 %v10235, %v10417
    %v10446 = vmax.f32 %v10236, %v10418
    %v10447 = vmax.f32 %v10237, %v10419
    %v10448 = vmax.f32 %v10238, %v10420
    %v10449 = vmax.f32 %v10239, %v10421
    %v10450 = vmax.f32 %v10240, %v10422
    %v10451 = vmax.f32 %v10241, %v10423
    %v10452 = vmax.f32 %v10242, %v10424
    %v10453 = vmax.f32 %v10243, %v10425
    %v10454 = vmax.f32 %v10244, %v10426
    %v10455 = vmax.f32 %v10245, %v10427
    %v10456 = vmax.f32 %v10246, %v10428
    %v10457 = vmax.f32 %v10247, %v10429
    %v10458 = vmax.f32 %v10248, %v10430
    %v10459 = vmax.f32 %v10249, %v10431
    %v10460 = vpack.c.bf16 %v10433, %v10432
    %v10461 = vpack.c.bf16 %v10435, %v10434
    %v10462 = vpack.c.bf16 %v10437, %v10436
    %v10463 = vpack.c.bf16 %v10439, %v10438
    %v10464 = vpack.c.bf16 %v10441, %v10440
    %v10465 = vpack.c.bf16 %v10443, %v10442
    %v10466 = vpack.c.bf16 %v10445, %v10444
    %v10467 = vpack.c.bf16 %v10447, %v10446
    %v10468 = vpack.c.bf16 %v10449, %v10448
    %v10469 = vpack.c.bf16 %v10451, %v10450
    %v10470 = vpack.c.bf16 %v10453, %v10452
    %v10471 = vpack.c.bf16 %v10455, %v10454
    %v10472 = vpack.c.bf16 %v10457, %v10456
    %v10473 = vpack.c.bf16 %v10459, %v10458
    %v10474 = vld [vmem:[#allocation10] sm:$0xff]
    %v10475 = vld [vmem:[#allocation10 + $0x8] sm:$0xff]
    %v10476 = vld [vmem:[#allocation10 + $0x10] sm:$0xff]
    %v10477 = vld [vmem:[#allocation10 + $0x18] sm:$0xff]
    %v10478 = vld [vmem:[#allocation10 + $0x20] sm:$0xff]
    %v10479 = vld [vmem:[#allocation10 + $0x28] sm:$0xff]
    %v10480 = vld [vmem:[#allocation10 + $0x30] sm:$0xff]
    %v10481 = vld [vmem:[#allocation10 + $0x38] sm:$0xff]
    %v10482 = vld [vmem:[#allocation10 + $0x40] sm:$0xff]
    %v10483 = vld [vmem:[#allocation10 + $0x48] sm:$0xff]
    %v10484 = vld [vmem:[#allocation10 + $0x50] sm:$0xff]
    %v10485 = vld [vmem:[#allocation10 + $0x58] sm:$0xff]
    %v10486 = vld [vmem:[#allocation10 + $0x60] sm:$0xff]
    %v10487 = vld [vmem:[#allocation10 + $0x68] sm:$0xff]
    %v10488 = vld [vmem:[#allocation10 + $0x70] sm:$0xff]
    %v10489 = vld [vmem:[#allocation10 + $0x78] sm:$0xff]
    %v10490 = vld [vmem:[#allocation10 + $0x80] sm:$0xff]
    %v10491 = vld [vmem:[#allocation10 + $0x88] sm:$0xff]
    %v10492 = vld [vmem:[#allocation10 + $0x90] sm:$0xff]
    %v10493 = vld [vmem:[#allocation10 + $0x98] sm:$0xff]
    %v10494 = vld [vmem:[#allocation10 + $0xa0] sm:$0xff]
    %v10495 = vld [vmem:[#allocation10 + $0xa8] sm:$0xff]
    %v10496 = vld [vmem:[#allocation10 + $0xb0] sm:$0xff]
    %v10497 = vld [vmem:[#allocation10 + $0xb8] sm:$0xff]
    %v10498 = vld [vmem:[#allocation10 + $0xc0] sm:$0xff]
    %v10499 = vld [vmem:[#allocation10 + $0xc8] sm:$0xff]
    %v10500 = vld [vmem:[#allocation10 + $0xd0] sm:$0xff]
    %v10501 = vld [vmem:[#allocation10 + $0xd8] sm:$0xff]
    %s10502 = scalar_lea.vmem [#allocation10], 224
    %v10503 = vld [vmem:[%s10502] sm:$0xff]
    %v10504 = vld [vmem:[%s10502 + $0x8] sm:$0xff]
    %v10505 = vld [vmem:[%s10502 + $0x10] sm:$0xff]
    %v10506 = vld [vmem:[%s10502 + $0x18] sm:$0xff]
    %v10507 = vld [vmem:[%s10502 + $0x20] sm:$0xff]
    %v10508 = vld [vmem:[%s10502 + $0x28] sm:$0xff]
    %v10509 = vld [vmem:[%s10502 + $0x30] sm:$0xff]
    %v10510 = vld [vmem:[%s10502 + $0x38] sm:$0xff]
    %v10511 = vld [vmem:[%s10502 + $0x40] sm:$0xff]
    %v10512 = vld [vmem:[%s10502 + $0x48] sm:$0xff]
    %v10513 = vld [vmem:[%s10502 + $0x50] sm:$0xff]
    %v10514 = vld [vmem:[%s10502 + $0x58] sm:$0xff]
    %v10515 = vld [vmem:[%s10502 + $0x60] sm:$0xff]
    %v10516 = vld [vmem:[%s10502 + $0x68] sm:$0xff]
    %v10517 = vld [vmem:[%s10502 + $0x70] sm:$0xff]
    %v10518 = vld [vmem:[%s10502 + $0x78] sm:$0xff]
    %v10519 = vld [vmem:[%s10502 + $0x80] sm:$0xff]
    %v10520 = vld [vmem:[%s10502 + $0x88] sm:$0xff]
    %v10521 = vld [vmem:[%s10502 + $0x90] sm:$0xff]
    %v10522 = vld [vmem:[%s10502 + $0x98] sm:$0xff]
    %v10523 = vld [vmem:[%s10502 + $0xa0] sm:$0xff]
    %v10524 = vld [vmem:[%s10502 + $0xa8] sm:$0xff]
    %v10525 = vld [vmem:[%s10502 + $0xb0] sm:$0xff]
    %v10526 = vld [vmem:[%s10502 + $0xb8] sm:$0xff]
    %v10527 = vld [vmem:[%s10502 + $0xc0] sm:$0xff]
    %v10528 = vld [vmem:[%s10502 + $0xc8] sm:$0xff]
    %v10529 = vld [vmem:[%s10502 + $0xd0] sm:$0xff]
    %v10530 = vld [vmem:[%s10502 + $0xd8] sm:$0xff]
    %v10539 = vunpack.c.l.b16 %v10462
    %v10540 = vunpack.c.h.b16 %v10462
    %v10541 = vunpack.c.l.b16 %v10463
    %v10542 = vunpack.c.h.b16 %v10463
    %v10543 = vunpack.c.l.b16 %v10464
    %v10544 = vunpack.c.h.b16 %v10464
    %v10545 = vunpack.c.l.b16 %v10465
    %v10546 = vunpack.c.h.b16 %v10465
    %v10547 = vunpack.c.l.b16 %v10466
    %v10548 = vunpack.c.h.b16 %v10466
    %v10549 = vunpack.c.l.b16 %v10467
    %v10550 = vunpack.c.h.b16 %v10467
    %v10551 = vunpack.c.l.b16 %v10468
    %v10552 = vunpack.c.h.b16 %v10468
    %v10553 = vunpack.c.l.b16 %v10469
    %v10554 = vunpack.c.h.b16 %v10469
    %v10555 = vpack.c.b16 %v10541, %v10539
    %v10556 = vpack.c.b16 %v10542, %v10540
    %v10557 = vpack.c.b16 %v10545, %v10543
    %v10558 = vpack.c.b16 %v10546, %v10544
    %v10559 = vpack.c.b16 %v10549, %v10547
    %v10560 = vpack.c.b16 %v10550, %v10548
    %v10561 = vpack.c.b16 %v10553, %v10551
    %v10562 = vpack.c.b16 %v10554, %v10552
    %v10595 = vunpack.c.l.b16 %v10503
    %v10596 = vunpack.c.h.b16 %v10503
    %v10597 = vunpack.c.l.b16 %v10504
    %v10598 = vunpack.c.h.b16 %v10504
    %v10599 = vunpack.c.l.b16 %v10505
    %v10600 = vunpack.c.h.b16 %v10505
    %v10601 = vunpack.c.l.b16 %v10506
    %v10602 = vunpack.c.h.b16 %v10506
    %v10603 = vunpack.c.l.b16 %v10507
    %v10604 = vunpack.c.h.b16 %v10507
    %v10605 = vunpack.c.l.b16 %v10508
    %v10606 = vunpack.c.h.b16 %v10508
    %v10607 = vunpack.c.l.b16 %v10509
    %v10608 = vunpack.c.h.b16 %v10509
    %v10609 = vunpack.c.l.b16 %v10510
    %v10610 = vunpack.c.h.b16 %v10510
    %v10611 = vunpack.c.l.b16 %v10511
    %v10612 = vunpack.c.h.b16 %v10511
    %v10613 = vunpack.c.l.b16 %v10512
    %v10614 = vunpack.c.h.b16 %v10512
    %v10615 = vunpack.c.l.b16 %v10513
    %v10616 = vunpack.c.h.b16 %v10513
    %v10617 = vunpack.c.l.b16 %v10514
    %v10618 = vunpack.c.h.b16 %v10514
    %v10619 = vunpack.c.l.b16 %v10515
    %v10620 = vunpack.c.h.b16 %v10515
    %v10621 = vunpack.c.l.b16 %v10516
    %v10622 = vunpack.c.h.b16 %v10516
    %v10623 = vunpack.c.l.b16 %v10517
    %v10624 = vunpack.c.h.b16 %v10517
    %v10625 = vunpack.c.l.b16 %v10518
    %v10626 = vunpack.c.h.b16 %v10518
    %v10627 = vunpack.c.l.b16 %v10519
    %v10628 = vunpack.c.h.b16 %v10519
    %v10629 = vunpack.c.l.b16 %v10520
    %v10630 = vunpack.c.h.b16 %v10520
    %v10631 = vunpack.c.l.b16 %v10521
    %v10632 = vunpack.c.h.b16 %v10521
    %v10633 = vunpack.c.l.b16 %v10522
    %v10634 = vunpack.c.h.b16 %v10522
    %v10635 = vunpack.c.l.b16 %v10523
    %v10636 = vunpack.c.h.b16 %v10523
    %v10637 = vunpack.c.l.b16 %v10524
    %v10638 = vunpack.c.h.b16 %v10524
    %v10639 = vunpack.c.l.b16 %v10525
    %v10640 = vunpack.c.h.b16 %v10525
    %v10641 = vunpack.c.l.b16 %v10526
    %v10642 = vunpack.c.h.b16 %v10526
    %v10643 = vunpack.c.l.b16 %v10527
    %v10644 = vunpack.c.h.b16 %v10527
    %v10645 = vunpack.c.l.b16 %v10528
    %v10646 = vunpack.c.h.b16 %v10528
    %v10647 = vunpack.c.l.b16 %v10529
    %v10648 = vunpack.c.h.b16 %v10529
    %v10649 = vunpack.c.l.b16 %v10530
    %v10650 = vunpack.c.h.b16 %v10530
    %v10651 = vpack.c.b16 %v10597, %v10595
    %v10652 = vpack.c.b16 %v10598, %v10596
    %v10653 = vpack.c.b16 %v10601, %v10599
    %v10654 = vpack.c.b16 %v10602, %v10600
    %v10655 = vpack.c.b16 %v10605, %v10603
    %v10656 = vpack.c.b16 %v10606, %v10604
    %v10657 = vpack.c.b16 %v10609, %v10607
    %v10658 = vpack.c.b16 %v10610, %v10608
    %v10659 = vpack.c.b16 %v10613, %v10611
    %v10660 = vpack.c.b16 %v10614, %v10612
    %v10661 = vpack.c.b16 %v10617, %v10615
    %v10662 = vpack.c.b16 %v10618, %v10616
    %v10663 = vpack.c.b16 %v10621, %v10619
    %v10664 = vpack.c.b16 %v10622, %v10620
    %v10665 = vpack.c.b16 %v10625, %v10623
    %v10666 = vpack.c.b16 %v10626, %v10624
    %v10667 = vpack.c.b16 %v10629, %v10627
    %v10668 = vpack.c.b16 %v10630, %v10628
    %v10669 = vpack.c.b16 %v10633, %v10631
    %v10670 = vpack.c.b16 %v10634, %v10632
    %v10671 = vpack.c.b16 %v10637, %v10635
    %v10672 = vpack.c.b16 %v10638, %v10636
    %v10673 = vpack.c.b16 %v10641, %v10639
    %v10674 = vpack.c.b16 %v10642, %v10640
    %v10675 = vpack.c.b16 %v10645, %v10643
    %v10676 = vpack.c.b16 %v10646, %v10644
    %v10677 = vpack.c.b16 %v10649, %v10647
    %v10678 = vpack.c.b16 %v10650, %v10648
    %v10708 = vsel %vm719, %v10556, 0
    %v10711 = vsel %vm719, %v10558, 0
    %v10714 = vsel %vm719, %v10560, 0
    %v10717 = vsel %vm719, %v10562, 0
    %10719 = vmatpush.bf16.msra.mxu0 %v10665
    %10720 = vmatpush.bf16.msra.mxu0 %v10663
    %10721 = vmatpush.bf16.msra.mxu0 %v10661
    %10722 = vmatpush.bf16.msra.mxu0 %v10659
    %10723 = vmatpush.bf16.msra.mxu0 %v10657
    %10724 = vmatpush.bf16.msra.mxu0 %v10655
    %10725 = vmatpush.bf16.msra.mxu0 %v10653
    %10726 = vmatpush.bf16.msra.mxu0 %v10651
    %10727 = vmatmul.bf16.gmra.mxu0 %v10555
    %v10728 = vpop.f32.mrf.mxu0
    %v10729 = vadd.f32 0.0, %v10728
    %v10730 = vpop.f32.mrf.mxu0
    %v10731 = vadd.f32 0.0, %v10730
    %10732 = vmatmul.bf16.gmra.mxu0 %v10557
    %v10733 = vpop.f32.mrf.mxu0
    %v10734 = vadd.f32 0.0, %v10733
    %v10735 = vpop.f32.mrf.mxu0
    %v10736 = vadd.f32 0.0, %v10735
    %10737 = vmatmul.bf16.gmra.mxu0 %v10559
    %v10738 = vpop.f32.mrf.mxu0
    %v10739 = vadd.f32 0.0, %v10738
    %v10740 = vpop.f32.mrf.mxu0
    %v10741 = vadd.f32 0.0, %v10740
    %10742 = vmatmul.bf16.gmra.mxu0 %v10561
    %v10743 = vpop.f32.mrf.mxu0
    %v10744 = vadd.f32 0.0, %v10743
    %v10745 = vpop.f32.mrf.mxu0
    %v10746 = vadd.f32 0.0, %v10745
    %10747 = vdwg.mxu0
    %10748 = vmatpush.bf16.msra.mxu0 0
    %10749 = vmatpush.bf16.msra.mxu0 0
    %10750 = vmatpush.bf16.msra.mxu0 %v10677
    %10751 = vmatpush.bf16.msra.mxu0 %v10675
    %10752 = vmatpush.bf16.msra.mxu0 %v10673
    %10753 = vmatpush.bf16.msra.mxu0 %v10671
    %10754 = vmatpush.bf16.msra.mxu0 %v10669
    %10755 = vmatpush.bf16.msra.mxu0 %v10667
    %10756 = vmatmul.bf16.gmra.mxu0 %v10708
    %v10757 = vpop.f32.mrf.mxu0
    %v10758 = vadd.f32 %v10729, %v10757
    %v10759 = vpop.f32.mrf.mxu0
    %v10760 = vadd.f32 %v10731, %v10759
    %10761 = vmatmul.bf16.gmra.mxu0 %v10711
    %v10762 = vpop.f32.mrf.mxu0
    %v10763 = vadd.f32 %v10734, %v10762
    %v10764 = vpop.f32.mrf.mxu0
    %v10765 = vadd.f32 %v10736, %v10764
    %10766 = vmatmul.bf16.gmra.mxu0 %v10714
    %v10767 = vpop.f32.mrf.mxu0
    %v10768 = vadd.f32 %v10739, %v10767
    %v10769 = vpop.f32.mrf.mxu0
    %v10770 = vadd.f32 %v10741, %v10769
    %10771 = vmatmul.bf16.gmra.mxu0 %v10717
    %v10772 = vpop.f32.mrf.mxu0
    %v10773 = vadd.f32 %v10744, %v10772
    %v10774 = vpop.f32.mrf.mxu0
    %v10775 = vadd.f32 %v10746, %v10774
    %10776 = vdwg.mxu0
    %10777 = vmatpush.bf16.msra.mxu0 %v10666
    %10778 = vmatpush.bf16.msra.mxu0 %v10664
    %10779 = vmatpush.bf16.msra.mxu0 %v10662
    %10780 = vmatpush.bf16.msra.mxu0 %v10660
    %10781 = vmatpush.bf16.msra.mxu0 %v10658
    %10782 = vmatpush.bf16.msra.mxu0 %v10656
    %10783 = vmatpush.bf16.msra.mxu0 %v10654
    %10784 = vmatpush.bf16.msra.mxu0 %v10652
    %10785 = vmatmul.bf16.gmra.mxu0 %v10555
    %v10786 = vpop.f32.mrf.mxu0
    %v10787 = vadd.f32 0.0, %v10786
    %v10788 = vpop.f32.mrf.mxu0
    %v10789 = vadd.f32 0.0, %v10788
    %10790 = vmatmul.bf16.gmra.mxu0 %v10557
    %v10791 = vpop.f32.mrf.mxu0
    %v10792 = vadd.f32 0.0, %v10791
    %v10793 = vpop.f32.mrf.mxu0
    %v10794 = vadd.f32 0.0, %v10793
    %10795 = vmatmul.bf16.gmra.mxu0 %v10559
    %v10796 = vpop.f32.mrf.mxu0
    %v10797 = vadd.f32 0.0, %v10796
    %v10798 = vpop.f32.mrf.mxu0
    %v10799 = vadd.f32 0.0, %v10798
    %10800 = vmatmul.bf16.gmra.mxu0 %v10561
    %v10801 = vpop.f32.mrf.mxu0
    %v10802 = vadd.f32 0.0, %v10801
    %v10803 = vpop.f32.mrf.mxu0
    %v10804 = vadd.f32 0.0, %v10803
    %10805 = vdwg.mxu0
    %10806 = vmatpush.bf16.msra.mxu0 0
    %10807 = vmatpush.bf16.msra.mxu0 0
    %10808 = vmatpush.bf16.msra.mxu0 %v10678
    %10809 = vmatpush.bf16.msra.mxu0 %v10676
    %10810 = vmatpush.bf16.msra.mxu0 %v10674
    %10811 = vmatpush.bf16.msra.mxu0 %v10672
    %10812 = vmatpush.bf16.msra.mxu0 %v10670
    %10813 = vmatpush.bf16.msra.mxu0 %v10668
    %10814 = vmatmul.bf16.gmra.mxu0 %v10708
    %v10815 = vpop.f32.mrf.mxu0
    %v10816 = vadd.f32 %v10787, %v10815
    %v10817 = vpop.f32.mrf.mxu0
    %v10818 = vadd.f32 %v10789, %v10817
    %10819 = vmatmul.bf16.gmra.mxu0 %v10711
    %v10820 = vpop.f32.mrf.mxu0
    %v10821 = vadd.f32 %v10792, %v10820
    %v10822 = vpop.f32.mrf.mxu0
    %v10823 = vadd.f32 %v10794, %v10822
    %10824 = vmatmul.bf16.gmra.mxu0 %v10714
    %v10825 = vpop.f32.mrf.mxu0
    %v10826 = vadd.f32 %v10797, %v10825
    %v10827 = vpop.f32.mrf.mxu0
    %v10828 = vadd.f32 %v10799, %v10827
    %10829 = vmatmul.bf16.gmra.mxu0 %v10717
    %v10830 = vpop.f32.mrf.mxu0
    %v10831 = vadd.f32 %v10802, %v10830
    %v10832 = vpop.f32.mrf.mxu0
    %v10833 = vadd.f32 %v10804, %v10832
    %10834 = vdwg.mxu0
    %v10837 = vunpack.c.l.b16 %v10460
    %v10838 = vunpack.c.h.b16 %v10460
    %v10839 = vunpack.c.l.b16 %v10461
    %v10840 = vunpack.c.h.b16 %v10461
    %v10841 = vpack.c.b16 %v10839, %v10837
    %v10842 = vpack.c.b16 %v10840, %v10838
    %v10872 = vunpack.c.l.b16 %v10474
    %v10873 = vunpack.c.h.b16 %v10474
    %v10874 = vunpack.c.l.b16 %v10475
    %v10875 = vunpack.c.h.b16 %v10475
    %v10876 = vunpack.c.l.b16 %v10476
    %v10877 = vunpack.c.h.b16 %v10476
    %v10878 = vunpack.c.l.b16 %v10477
    %v10879 = vunpack.c.h.b16 %v10477
    %v10880 = vunpack.c.l.b16 %v10478
    %v10881 = vunpack.c.h.b16 %v10478
    %v10882 = vunpack.c.l.b16 %v10479
    %v10883 = vunpack.c.h.b16 %v10479
    %v10884 = vunpack.c.l.b16 %v10480
    %v10885 = vunpack.c.h.b16 %v10480
    %v10886 = vunpack.c.l.b16 %v10481
    %v10887 = vunpack.c.h.b16 %v10481
    %v10888 = vunpack.c.l.b16 %v10482
    %v10889 = vunpack.c.h.b16 %v10482
    %v10890 = vunpack.c.l.b16 %v10483
    %v10891 = vunpack.c.h.b16 %v10483
    %v10892 = vunpack.c.l.b16 %v10484
    %v10893 = vunpack.c.h.b16 %v10484
    %v10894 = vunpack.c.l.b16 %v10485
    %v10895 = vunpack.c.h.b16 %v10485
    %v10896 = vunpack.c.l.b16 %v10486
    %v10897 = vunpack.c.h.b16 %v10486
    %v10898 = vunpack.c.l.b16 %v10487
    %v10899 = vunpack.c.h.b16 %v10487
    %v10900 = vunpack.c.l.b16 %v10488
    %v10901 = vunpack.c.h.b16 %v10488
    %v10902 = vunpack.c.l.b16 %v10489
    %v10903 = vunpack.c.h.b16 %v10489
    %v10904 = vunpack.c.l.b16 %v10490
    %v10905 = vunpack.c.h.b16 %v10490
    %v10906 = vunpack.c.l.b16 %v10491
    %v10907 = vunpack.c.h.b16 %v10491
    %v10908 = vunpack.c.l.b16 %v10492
    %v10909 = vunpack.c.h.b16 %v10492
    %v10910 = vunpack.c.l.b16 %v10493
    %v10911 = vunpack.c.h.b16 %v10493
    %v10912 = vunpack.c.l.b16 %v10494
    %v10913 = vunpack.c.h.b16 %v10494
    %v10914 = vunpack.c.l.b16 %v10495
    %v10915 = vunpack.c.h.b16 %v10495
    %v10916 = vunpack.c.l.b16 %v10496
    %v10917 = vunpack.c.h.b16 %v10496
    %v10918 = vunpack.c.l.b16 %v10497
    %v10919 = vunpack.c.h.b16 %v10497
    %v10920 = vunpack.c.l.b16 %v10498
    %v10921 = vunpack.c.h.b16 %v10498
    %v10922 = vunpack.c.l.b16 %v10499
    %v10923 = vunpack.c.h.b16 %v10499
    %v10924 = vunpack.c.l.b16 %v10500
    %v10925 = vunpack.c.h.b16 %v10500
    %v10926 = vunpack.c.l.b16 %v10501
    %v10927 = vunpack.c.h.b16 %v10501
    %v10928 = vpack.c.b16 %v10874, %v10872
    %v10929 = vpack.c.b16 %v10875, %v10873
    %v10930 = vpack.c.b16 %v10878, %v10876
    %v10931 = vpack.c.b16 %v10879, %v10877
    %v10932 = vpack.c.b16 %v10882, %v10880
    %v10933 = vpack.c.b16 %v10883, %v10881
    %v10934 = vpack.c.b16 %v10886, %v10884
    %v10935 = vpack.c.b16 %v10887, %v10885
    %v10936 = vpack.c.b16 %v10890, %v10888
    %v10937 = vpack.c.b16 %v10891, %v10889
    %v10938 = vpack.c.b16 %v10894, %v10892
    %v10939 = vpack.c.b16 %v10895, %v10893
    %v10940 = vpack.c.b16 %v10898, %v10896
    %v10941 = vpack.c.b16 %v10899, %v10897
    %v10942 = vpack.c.b16 %v10902, %v10900
    %v10943 = vpack.c.b16 %v10903, %v10901
    %v10944 = vpack.c.b16 %v10906, %v10904
    %v10945 = vpack.c.b16 %v10907, %v10905
    %v10946 = vpack.c.b16 %v10910, %v10908
    %v10947 = vpack.c.b16 %v10911, %v10909
    %v10948 = vpack.c.b16 %v10914, %v10912
    %v10949 = vpack.c.b16 %v10915, %v10913
    %v10950 = vpack.c.b16 %v10918, %v10916
    %v10951 = vpack.c.b16 %v10919, %v10917
    %v10952 = vpack.c.b16 %v10922, %v10920
    %v10953 = vpack.c.b16 %v10923, %v10921
    %v10954 = vpack.c.b16 %v10926, %v10924
    %v10955 = vpack.c.b16 %v10927, %v10925
    %v10985 = vsel %vm719, %v10842, 0
    %10987 = vmatpush.bf16.msra.mxu0 %v10942
    %10988 = vmatpush.bf16.msra.mxu0 %v10940
    %10989 = vmatpush.bf16.msra.mxu0 %v10938
    %10990 = vmatpush.bf16.msra.mxu0 %v10936
    %10991 = vmatpush.bf16.msra.mxu0 %v10934
    %10992 = vmatpush.bf16.msra.mxu0 %v10932
    %10993 = vmatpush.bf16.msra.mxu0 %v10930
    %10994 = vmatpush.bf16.msra.mxu0 %v10928
    %10995 = vmatmul.bf16.gmra.mxu0 %v10841
    %v10996 = vpop.f32.mrf.mxu0
    %v10997 = vadd.f32 %v10758, %v10996
    %v10998 = vpop.f32.mrf.mxu0
    %v10999 = vadd.f32 %v10760, %v10998
    %11000 = vmatmul.bf16.gmra.mxu0 %v10555
    %v11001 = vpop.f32.mrf.mxu0
    %v11002 = vadd.f32 %v10763, %v11001
    %v11003 = vpop.f32.mrf.mxu0
    %v11004 = vadd.f32 %v10765, %v11003
    %11005 = vmatmul.bf16.gmra.mxu0 %v10557
    %v11006 = vpop.f32.mrf.mxu0
    %v11007 = vadd.f32 %v10768, %v11006
    %v11008 = vpop.f32.mrf.mxu0
    %v11009 = vadd.f32 %v10770, %v11008
    %11010 = vmatmul.bf16.gmra.mxu0 %v10559
    %v11011 = vpop.f32.mrf.mxu0
    %v11012 = vadd.f32 %v10773, %v11011
    %v11013 = vpop.f32.mrf.mxu0
    %v11014 = vadd.f32 %v10775, %v11013
    %11015 = vdwg.mxu0
    %11016 = vmatpush.bf16.msra.mxu0 0
    %11017 = vmatpush.bf16.msra.mxu0 0
    %11018 = vmatpush.bf16.msra.mxu0 %v10954
    %11019 = vmatpush.bf16.msra.mxu0 %v10952
    %11020 = vmatpush.bf16.msra.mxu0 %v10950
    %11021 = vmatpush.bf16.msra.mxu0 %v10948
    %11022 = vmatpush.bf16.msra.mxu0 %v10946
    %11023 = vmatpush.bf16.msra.mxu0 %v10944
    %11024 = vmatmul.bf16.gmra.mxu0 %v10985
    %v11025 = vpop.f32.mrf.mxu0
    %v11026 = vadd.f32 %v10997, %v11025
    %v11027 = vpop.f32.mrf.mxu0
    %v11028 = vadd.f32 %v10999, %v11027
    %11029 = vmatmul.bf16.gmra.mxu0 %v10708
    %v11030 = vpop.f32.mrf.mxu0
    %v11031 = vadd.f32 %v11002, %v11030
    %v11032 = vpop.f32.mrf.mxu0
    %v11033 = vadd.f32 %v11004, %v11032
    %11034 = vmatmul.bf16.gmra.mxu0 %v10711
    %v11035 = vpop.f32.mrf.mxu0
    %v11036 = vadd.f32 %v11007, %v11035
    %v11037 = vpop.f32.mrf.mxu0
    %v11038 = vadd.f32 %v11009, %v11037
    %11039 = vmatmul.bf16.gmra.mxu0 %v10714
    %v11040 = vpop.f32.mrf.mxu0
    %v11041 = vadd.f32 %v11012, %v11040
    %v11042 = vpop.f32.mrf.mxu0
    %v11043 = vadd.f32 %v11014, %v11042
    %11044 = vdwg.mxu0
    %11045 = vmatpush.bf16.msra.mxu0 %v10943
    %11046 = vmatpush.bf16.msra.mxu0 %v10941
    %11047 = vmatpush.bf16.msra.mxu0 %v10939
    %11048 = vmatpush.bf16.msra.mxu0 %v10937
    %11049 = vmatpush.bf16.msra.mxu0 %v10935
    %11050 = vmatpush.bf16.msra.mxu0 %v10933
    %11051 = vmatpush.bf16.msra.mxu0 %v10931
    %11052 = vmatpush.bf16.msra.mxu0 %v10929
    %11053 = vmatmul.bf16.gmra.mxu0 %v10841
    %v11054 = vpop.f32.mrf.mxu0
    %v11055 = vadd.f32 %v10816, %v11054
    %v11056 = vpop.f32.mrf.mxu0
    %v11057 = vadd.f32 %v10818, %v11056
    %11058 = vmatmul.bf16.gmra.mxu0 %v10555
    %v11059 = vpop.f32.mrf.mxu0
    %v11060 = vadd.f32 %v10821, %v11059
    %v11061 = vpop.f32.mrf.mxu0
    %v11062 = vadd.f32 %v10823, %v11061
    %11063 = vmatmul.bf16.gmra.mxu0 %v10557
    %v11064 = vpop.f32.mrf.mxu0
    %v11065 = vadd.f32 %v10826, %v11064
    %v11066 = vpop.f32.mrf.mxu0
    %v11067 = vadd.f32 %v10828, %v11066
    %11068 = vmatmul.bf16.gmra.mxu0 %v10559
    %v11069 = vpop.f32.mrf.mxu0
    %v11070 = vadd.f32 %v10831, %v11069
    %v11071 = vpop.f32.mrf.mxu0
    %v11072 = vadd.f32 %v10833, %v11071
    %11073 = vdwg.mxu0
    %11074 = vmatpush.bf16.msra.mxu0 0
    %11075 = vmatpush.bf16.msra.mxu0 0
    %11076 = vmatpush.bf16.msra.mxu0 %v10955
    %11077 = vmatpush.bf16.msra.mxu0 %v10953
    %11078 = vmatpush.bf16.msra.mxu0 %v10951
    %11079 = vmatpush.bf16.msra.mxu0 %v10949
    %11080 = vmatpush.bf16.msra.mxu0 %v10947
    %11081 = vmatpush.bf16.msra.mxu0 %v10945
    %11082 = vmatmul.bf16.gmra.mxu0 %v10985
    %v11083 = vpop.f32.mrf.mxu0
    %v11084 = vadd.f32 %v11055, %v11083
    %v11085 = vpop.f32.mrf.mxu0
    %v11086 = vadd.f32 %v11057, %v11085
    %11087 = vmatmul.bf16.gmra.mxu0 %v10708
    %v11088 = vpop.f32.mrf.mxu0
    %v11089 = vadd.f32 %v11060, %v11088
    %v11090 = vpop.f32.mrf.mxu0
    %v11091 = vadd.f32 %v11062, %v11090
    %11092 = vmatmul.bf16.gmra.mxu0 %v10711
    %v11093 = vpop.f32.mrf.mxu0
    %v11094 = vadd.f32 %v11065, %v11093
    %v11095 = vpop.f32.mrf.mxu0
    %v11096 = vadd.f32 %v11067, %v11095
    %11097 = vmatmul.bf16.gmra.mxu0 %v10714
    %v11098 = vpop.f32.mrf.mxu0
    %v11099 = vadd.f32 %v11070, %v11098
    %v11100 = vpop.f32.mrf.mxu0
    %v11101 = vadd.f32 %v11072, %v11100
    %11102 = vdwg.mxu0
    %s11103 = scalar_lea.vmem [#allocation10], 448
    %v11104 = vld [vmem:[%s11103] sm:$0xff]
    %v11105 = vld [vmem:[%s11103 + $0x8] sm:$0xff]
    %v11106 = vld [vmem:[%s11103 + $0x10] sm:$0xff]
    %v11107 = vld [vmem:[%s11103 + $0x18] sm:$0xff]
    %v11108 = vld [vmem:[%s11103 + $0x20] sm:$0xff]
    %v11109 = vld [vmem:[%s11103 + $0x28] sm:$0xff]
    %v11110 = vld [vmem:[%s11103 + $0x30] sm:$0xff]
    %v11111 = vld [vmem:[%s11103 + $0x38] sm:$0xff]
    %v11112 = vld [vmem:[%s11103 + $0x40] sm:$0xff]
    %v11113 = vld [vmem:[%s11103 + $0x48] sm:$0xff]
    %v11114 = vld [vmem:[%s11103 + $0x50] sm:$0xff]
    %v11115 = vld [vmem:[%s11103 + $0x58] sm:$0xff]
    %v11116 = vld [vmem:[%s11103 + $0x60] sm:$0xff]
    %v11117 = vld [vmem:[%s11103 + $0x68] sm:$0xff]
    %v11118 = vld [vmem:[%s11103 + $0x70] sm:$0xff]
    %v11119 = vld [vmem:[%s11103 + $0x78] sm:$0xff]
    %v11120 = vld [vmem:[%s11103 + $0x80] sm:$0xff]
    %v11121 = vld [vmem:[%s11103 + $0x88] sm:$0xff]
    %v11122 = vld [vmem:[%s11103 + $0x90] sm:$0xff]
    %v11123 = vld [vmem:[%s11103 + $0x98] sm:$0xff]
    %v11124 = vld [vmem:[%s11103 + $0xa0] sm:$0xff]
    %v11125 = vld [vmem:[%s11103 + $0xa8] sm:$0xff]
    %v11126 = vld [vmem:[%s11103 + $0xb0] sm:$0xff]
    %v11127 = vld [vmem:[%s11103 + $0xb8] sm:$0xff]
    %v11128 = vld [vmem:[%s11103 + $0xc0] sm:$0xff]
    %v11129 = vld [vmem:[%s11103 + $0xc8] sm:$0xff]
    %v11130 = vld [vmem:[%s11103 + $0xd0] sm:$0xff]
    %v11131 = vld [vmem:[%s11103 + $0xd8] sm:$0xff]
    %v11134 = vunpack.c.l.b16 %v10470
    %v11135 = vunpack.c.h.b16 %v10470
    %v11136 = vunpack.c.l.b16 %v10471
    %v11137 = vunpack.c.h.b16 %v10471
    %v11138 = vpack.c.b16 %v11136, %v11134
    %v11139 = vpack.c.b16 %v11137, %v11135
    %v11169 = vunpack.c.l.b16 %v11104
    %v11170 = vunpack.c.h.b16 %v11104
    %v11171 = vunpack.c.l.b16 %v11105
    %v11172 = vunpack.c.h.b16 %v11105
    %v11173 = vunpack.c.l.b16 %v11106
    %v11174 = vunpack.c.h.b16 %v11106
    %v11175 = vunpack.c.l.b16 %v11107
    %v11176 = vunpack.c.h.b16 %v11107
    %v11177 = vunpack.c.l.b16 %v11108
    %v11178 = vunpack.c.h.b16 %v11108
    %v11179 = vunpack.c.l.b16 %v11109
    %v11180 = vunpack.c.h.b16 %v11109
    %v11181 = vunpack.c.l.b16 %v11110
    %v11182 = vunpack.c.h.b16 %v11110
    %v11183 = vunpack.c.l.b16 %v11111
    %v11184 = vunpack.c.h.b16 %v11111
    %v11185 = vunpack.c.l.b16 %v11112
    %v11186 = vunpack.c.h.b16 %v11112
    %v11187 = vunpack.c.l.b16 %v11113
    %v11188 = vunpack.c.h.b16 %v11113
    %v11189 = vunpack.c.l.b16 %v11114
    %v11190 = vunpack.c.h.b16 %v11114
    %v11191 = vunpack.c.l.b16 %v11115
    %v11192 = vunpack.c.h.b16 %v11115
    %v11193 = vunpack.c.l.b16 %v11116
    %v11194 = vunpack.c.h.b16 %v11116
    %v11195 = vunpack.c.l.b16 %v11117
    %v11196 = vunpack.c.h.b16 %v11117
    %v11197 = vunpack.c.l.b16 %v11118
    %v11198 = vunpack.c.h.b16 %v11118
    %v11199 = vunpack.c.l.b16 %v11119
    %v11200 = vunpack.c.h.b16 %v11119
    %v11201 = vunpack.c.l.b16 %v11120
    %v11202 = vunpack.c.h.b16 %v11120
    %v11203 = vunpack.c.l.b16 %v11121
    %v11204 = vunpack.c.h.b16 %v11121
    %v11205 = vunpack.c.l.b16 %v11122
    %v11206 = vunpack.c.h.b16 %v11122
    %v11207 = vunpack.c.l.b16 %v11123
    %v11208 = vunpack.c.h.b16 %v11123
    %v11209 = vunpack.c.l.b16 %v11124
    %v11210 = vunpack.c.h.b16 %v11124
    %v11211 = vunpack.c.l.b16 %v11125
    %v11212 = vunpack.c.h.b16 %v11125
    %v11213 = vunpack.c.l.b16 %v11126
    %v11214 = vunpack.c.h.b16 %v11126
    %v11215 = vunpack.c.l.b16 %v11127
    %v11216 = vunpack.c.h.b16 %v11127
    %v11217 = vunpack.c.l.b16 %v11128
    %v11218 = vunpack.c.h.b16 %v11128
    %v11219 = vunpack.c.l.b16 %v11129
    %v11220 = vunpack.c.h.b16 %v11129
    %v11221 = vunpack.c.l.b16 %v11130
    %v11222 = vunpack.c.h.b16 %v11130
    %v11223 = vunpack.c.l.b16 %v11131
    %v11224 = vunpack.c.h.b16 %v11131
    %v11225 = vpack.c.b16 %v11171, %v11169
    %v11226 = vpack.c.b16 %v11172, %v11170
    %v11227 = vpack.c.b16 %v11175, %v11173
    %v11228 = vpack.c.b16 %v11176, %v11174
    %v11229 = vpack.c.b16 %v11179, %v11177
    %v11230 = vpack.c.b16 %v11180, %v11178
    %v11231 = vpack.c.b16 %v11183, %v11181
    %v11232 = vpack.c.b16 %v11184, %v11182
    %v11233 = vpack.c.b16 %v11187, %v11185
    %v11234 = vpack.c.b16 %v11188, %v11186
    %v11235 = vpack.c.b16 %v11191, %v11189
    %v11236 = vpack.c.b16 %v11192, %v11190
    %v11237 = vpack.c.b16 %v11195, %v11193
    %v11238 = vpack.c.b16 %v11196, %v11194
    %v11239 = vpack.c.b16 %v11199, %v11197
    %v11240 = vpack.c.b16 %v11200, %v11198
    %v11241 = vpack.c.b16 %v11203, %v11201
    %v11242 = vpack.c.b16 %v11204, %v11202
    %v11243 = vpack.c.b16 %v11207, %v11205
    %v11244 = vpack.c.b16 %v11208, %v11206
    %v11245 = vpack.c.b16 %v11211, %v11209
    %v11246 = vpack.c.b16 %v11212, %v11210
    %v11247 = vpack.c.b16 %v11215, %v11213
    %v11248 = vpack.c.b16 %v11216, %v11214
    %v11249 = vpack.c.b16 %v11219, %v11217
    %v11250 = vpack.c.b16 %v11220, %v11218
    %v11251 = vpack.c.b16 %v11223, %v11221
    %v11252 = vpack.c.b16 %v11224, %v11222
    %v11282 = vsel %vm719, %v11139, 0
    %11284 = vmatpush.bf16.msra.mxu0 %v11239
    %11285 = vmatpush.bf16.msra.mxu0 %v11237
    %11286 = vmatpush.bf16.msra.mxu0 %v11235
    %11287 = vmatpush.bf16.msra.mxu0 %v11233
    %11288 = vmatpush.bf16.msra.mxu0 %v11231
    %11289 = vmatpush.bf16.msra.mxu0 %v11229
    %11290 = vmatpush.bf16.msra.mxu0 %v11227
    %11291 = vmatpush.bf16.msra.mxu0 %v11225
    %11292 = vmatmul.bf16.gmra.mxu0 %v10557
    %v11293 = vpop.f32.mrf.mxu0
    %v11294 = vadd.f32 0.0, %v11293
    %v11295 = vpop.f32.mrf.mxu0
    %v11296 = vadd.f32 0.0, %v11295
    %11297 = vmatmul.bf16.gmra.mxu0 %v10559
    %v11298 = vpop.f32.mrf.mxu0
    %v11299 = vadd.f32 0.0, %v11298
    %v11300 = vpop.f32.mrf.mxu0
    %v11301 = vadd.f32 0.0, %v11300
    %11302 = vmatmul.bf16.gmra.mxu0 %v10561
    %v11303 = vpop.f32.mrf.mxu0
    %v11304 = vadd.f32 0.0, %v11303
    %v11305 = vpop.f32.mrf.mxu0
    %v11306 = vadd.f32 0.0, %v11305
    %11307 = vmatmul.bf16.gmra.mxu0 %v11138
    %v11308 = vpop.f32.mrf.mxu0
    %v11309 = vadd.f32 0.0, %v11308
    %v11310 = vpop.f32.mrf.mxu0
    %v11311 = vadd.f32 0.0, %v11310
    %11312 = vdwg.mxu0
    %11313 = vmatpush.bf16.msra.mxu0 0
    %11314 = vmatpush.bf16.msra.mxu0 0
    %11315 = vmatpush.bf16.msra.mxu0 %v11251
    %11316 = vmatpush.bf16.msra.mxu0 %v11249
    %11317 = vmatpush.bf16.msra.mxu0 %v11247
    %11318 = vmatpush.bf16.msra.mxu0 %v11245
    %11319 = vmatpush.bf16.msra.mxu0 %v11243
    %11320 = vmatpush.bf16.msra.mxu0 %v11241
    %11321 = vmatmul.bf16.gmra.mxu0 %v10711
    %v11322 = vpop.f32.mrf.mxu0
    %v11323 = vadd.f32 %v11294, %v11322
    %v11324 = vpop.f32.mrf.mxu0
    %v11325 = vadd.f32 %v11296, %v11324
    %11326 = vmatmul.bf16.gmra.mxu0 %v10714
    %v11327 = vpop.f32.mrf.mxu0
    %v11328 = vadd.f32 %v11299, %v11327
    %v11329 = vpop.f32.mrf.mxu0
    %v11330 = vadd.f32 %v11301, %v11329
    %11331 = vmatmul.bf16.gmra.mxu0 %v10717
    %v11332 = vpop.f32.mrf.mxu0
    %v11333 = vadd.f32 %v11304, %v11332
    %v11334 = vpop.f32.mrf.mxu0
    %v11335 = vadd.f32 %v11306, %v11334
    %11336 = vmatmul.bf16.gmra.mxu0 %v11282
    %v11337 = vpop.f32.mrf.mxu0
    %v11338 = vadd.f32 %v11309, %v11337
    %v11339 = vpop.f32.mrf.mxu0
    %v11340 = vadd.f32 %v11311, %v11339
    %11341 = vdwg.mxu0
    %11342 = vmatpush.bf16.msra.mxu0 %v11240
    %11343 = vmatpush.bf16.msra.mxu0 %v11238
    %11344 = vmatpush.bf16.msra.mxu0 %v11236
    %11345 = vmatpush.bf16.msra.mxu0 %v11234
    %11346 = vmatpush.bf16.msra.mxu0 %v11232
    %11347 = vmatpush.bf16.msra.mxu0 %v11230
    %11348 = vmatpush.bf16.msra.mxu0 %v11228
    %11349 = vmatpush.bf16.msra.mxu0 %v11226
    %11350 = vmatmul.bf16.gmra.mxu0 %v10557
    %v11351 = vpop.f32.mrf.mxu0
    %v11352 = vadd.f32 0.0, %v11351
    %v11353 = vpop.f32.mrf.mxu0
    %v11354 = vadd.f32 0.0, %v11353
    %11355 = vmatmul.bf16.gmra.mxu0 %v10559
    %v11356 = vpop.f32.mrf.mxu0
    %v11357 = vadd.f32 0.0, %v11356
    %v11358 = vpop.f32.mrf.mxu0
    %v11359 = vadd.f32 0.0, %v11358
    %11360 = vmatmul.bf16.gmra.mxu0 %v10561
    %v11361 = vpop.f32.mrf.mxu0
    %v11362 = vadd.f32 0.0, %v11361
    %v11363 = vpop.f32.mrf.mxu0
    %v11364 = vadd.f32 0.0, %v11363
    %11365 = vmatmul.bf16.gmra.mxu0 %v11138
    %v11366 = vpop.f32.mrf.mxu0
    %v11367 = vadd.f32 0.0, %v11366
    %v11368 = vpop.f32.mrf.mxu0
    %v11369 = vadd.f32 0.0, %v11368
    %11370 = vdwg.mxu0
    %11371 = vmatpush.bf16.msra.mxu0 0
    %11372 = vmatpush.bf16.msra.mxu0 0
    %11373 = vmatpush.bf16.msra.mxu0 %v11252
    %11374 = vmatpush.bf16.msra.mxu0 %v11250
    %11375 = vmatpush.bf16.msra.mxu0 %v11248
    %11376 = vmatpush.bf16.msra.mxu0 %v11246
    %11377 = vmatpush.bf16.msra.mxu0 %v11244
    %11378 = vmatpush.bf16.msra.mxu0 %v11242
    %11379 = vmatmul.bf16.gmra.mxu0 %v10711
    %v11380 = vpop.f32.mrf.mxu0
    %v11381 = vadd.f32 %v11352, %v11380
    %v11382 = vpop.f32.mrf.mxu0
    %v11383 = vadd.f32 %v11354, %v11382
    %11384 = vmatmul.bf16.gmra.mxu0 %v10714
    %v11385 = vpop.f32.mrf.mxu0
    %v11386 = vadd.f32 %v11357, %v11385
    %v11387 = vpop.f32.mrf.mxu0
    %v11388 = vadd.f32 %v11359, %v11387
    %11389 = vmatmul.bf16.gmra.mxu0 %v10717
    %v11390 = vpop.f32.mrf.mxu0
    %v11391 = vadd.f32 %v11362, %v11390
    %v11392 = vpop.f32.mrf.mxu0
    %v11393 = vadd.f32 %v11364, %v11392
    %11394 = vmatmul.bf16.gmra.mxu0 %v11282
    %v11395 = vpop.f32.mrf.mxu0
    %v11396 = vadd.f32 %v11367, %v11395
    %v11397 = vpop.f32.mrf.mxu0
    %v11398 = vadd.f32 %v11369, %v11397
    %11399 = vdwg.mxu0
    %v11400 = vadd.f32 %v11026, %v11323
    %v11401 = vadd.f32 %v11084, %v11381
    %v11402 = vadd.f32 %v11028, %v11325
    %v11403 = vadd.f32 %v11086, %v11383
    %v11404 = vadd.f32 %v11031, %v11328
    %v11405 = vadd.f32 %v11089, %v11386
    %v11406 = vadd.f32 %v11033, %v11330
    %v11407 = vadd.f32 %v11091, %v11388
    %v11408 = vadd.f32 %v11036, %v11333
    %v11409 = vadd.f32 %v11094, %v11391
    %v11410 = vadd.f32 %v11038, %v11335
    %v11411 = vadd.f32 %v11096, %v11393
    %v11412 = vadd.f32 %v11041, %v11338
    %v11413 = vadd.f32 %v11099, %v11396
    %v11414 = vadd.f32 %v11043, %v11340
    %v11415 = vadd.f32 %v11101, %v11398
    %s11416 = scalar_lea.vmem [#allocation10], 672
    %v11417 = vld [vmem:[%s11416] sm:$0xff]
    %v11418 = vld [vmem:[%s11416 + $0x8] sm:$0xff]
    %v11419 = vld [vmem:[%s11416 + $0x10] sm:$0xff]
    %v11420 = vld [vmem:[%s11416 + $0x18] sm:$0xff]
    %v11421 = vld [vmem:[%s11416 + $0x20] sm:$0xff]
    %v11422 = vld [vmem:[%s11416 + $0x28] sm:$0xff]
    %v11423 = vld [vmem:[%s11416 + $0x30] sm:$0xff]
    %v11424 = vld [vmem:[%s11416 + $0x38] sm:$0xff]
    %v11425 = vld [vmem:[%s11416 + $0x40] sm:$0xff]
    %v11426 = vld [vmem:[%s11416 + $0x48] sm:$0xff]
    %v11427 = vld [vmem:[%s11416 + $0x50] sm:$0xff]
    %v11428 = vld [vmem:[%s11416 + $0x58] sm:$0xff]
    %v11429 = vld [vmem:[%s11416 + $0x60] sm:$0xff]
    %v11430 = vld [vmem:[%s11416 + $0x68] sm:$0xff]
    %v11431 = vld [vmem:[%s11416 + $0x70] sm:$0xff]
    %v11432 = vld [vmem:[%s11416 + $0x78] sm:$0xff]
    %v11433 = vld [vmem:[%s11416 + $0x80] sm:$0xff]
    %v11434 = vld [vmem:[%s11416 + $0x88] sm:$0xff]
    %v11435 = vld [vmem:[%s11416 + $0x90] sm:$0xff]
    %v11436 = vld [vmem:[%s11416 + $0x98] sm:$0xff]
    %v11437 = vld [vmem:[%s11416 + $0xa0] sm:$0xff]
    %v11438 = vld [vmem:[%s11416 + $0xa8] sm:$0xff]
    %v11439 = vld [vmem:[%s11416 + $0xb0] sm:$0xff]
    %v11440 = vld [vmem:[%s11416 + $0xb8] sm:$0xff]
    %v11441 = vld [vmem:[%s11416 + $0xc0] sm:$0xff]
    %v11442 = vld [vmem:[%s11416 + $0xc8] sm:$0xff]
    %v11443 = vld [vmem:[%s11416 + $0xd0] sm:$0xff]
    %v11444 = vld [vmem:[%s11416 + $0xd8] sm:$0xff]
    %v11447 = vunpack.c.l.b16 %v10472
    %v11448 = vunpack.c.h.b16 %v10472
    %v11449 = vunpack.c.l.b16 %v10473
    %v11450 = vunpack.c.h.b16 %v10473
    %v11451 = vpack.c.b16 %v11449, %v11447
    %v11452 = vpack.c.b16 %v11450, %v11448
    %v11482 = vunpack.c.l.b16 %v11417
    %v11483 = vunpack.c.h.b16 %v11417
    %v11484 = vunpack.c.l.b16 %v11418
    %v11485 = vunpack.c.h.b16 %v11418
    %v11486 = vunpack.c.l.b16 %v11419
    %v11487 = vunpack.c.h.b16 %v11419
    %v11488 = vunpack.c.l.b16 %v11420
    %v11489 = vunpack.c.h.b16 %v11420
    %v11490 = vunpack.c.l.b16 %v11421
    %v11491 = vunpack.c.h.b16 %v11421
    %v11492 = vunpack.c.l.b16 %v11422
    %v11493 = vunpack.c.h.b16 %v11422
    %v11494 = vunpack.c.l.b16 %v11423
    %v11495 = vunpack.c.h.b16 %v11423
    %v11496 = vunpack.c.l.b16 %v11424
    %v11497 = vunpack.c.h.b16 %v11424
    %v11498 = vunpack.c.l.b16 %v11425
    %v11499 = vunpack.c.h.b16 %v11425
    %v11500 = vunpack.c.l.b16 %v11426
    %v11501 = vunpack.c.h.b16 %v11426
    %v11502 = vunpack.c.l.b16 %v11427
    %v11503 = vunpack.c.h.b16 %v11427
    %v11504 = vunpack.c.l.b16 %v11428
    %v11505 = vunpack.c.h.b16 %v11428
    %v11506 = vunpack.c.l.b16 %v11429
    %v11507 = vunpack.c.h.b16 %v11429
    %v11508 = vunpack.c.l.b16 %v11430
    %v11509 = vunpack.c.h.b16 %v11430
    %v11510 = vunpack.c.l.b16 %v11431
    %v11511 = vunpack.c.h.b16 %v11431
    %v11512 = vunpack.c.l.b16 %v11432
    %v11513 = vunpack.c.h.b16 %v11432
    %v11514 = vunpack.c.l.b16 %v11433
    %v11515 = vunpack.c.h.b16 %v11433
    %v11516 = vunpack.c.l.b16 %v11434
    %v11517 = vunpack.c.h.b16 %v11434
    %v11518 = vunpack.c.l.b16 %v11435
    %v11519 = vunpack.c.h.b16 %v11435
    %v11520 = vunpack.c.l.b16 %v11436
    %v11521 = vunpack.c.h.b16 %v11436
    %v11522 = vunpack.c.l.b16 %v11437
    %v11523 = vunpack.c.h.b16 %v11437
    %v11524 = vunpack.c.l.b16 %v11438
    %v11525 = vunpack.c.h.b16 %v11438
    %v11526 = vunpack.c.l.b16 %v11439
    %v11527 = vunpack.c.h.b16 %v11439
    %v11528 = vunpack.c.l.b16 %v11440
    %v11529 = vunpack.c.h.b16 %v11440
    %v11530 = vunpack.c.l.b16 %v11441
    %v11531 = vunpack.c.h.b16 %v11441
    %v11532 = vunpack.c.l.b16 %v11442
    %v11533 = vunpack.c.h.b16 %v11442
    %v11534 = vunpack.c.l.b16 %v11443
    %v11535 = vunpack.c.h.b16 %v11443
    %v11536 = vunpack.c.l.b16 %v11444
    %v11537 = vunpack.c.h.b16 %v11444
    %v11538 = vpack.c.b16 %v11484, %v11482
    %v11539 = vpack.c.b16 %v11485, %v11483
    %v11540 = vpack.c.b16 %v11488, %v11486
    %v11541 = vpack.c.b16 %v11489, %v11487
    %v11542 = vpack.c.b16 %v11492, %v11490
    %v11543 = vpack.c.b16 %v11493, %v11491
    %v11544 = vpack.c.b16 %v11496, %v11494
    %v11545 = vpack.c.b16 %v11497, %v11495
    %v11546 = vpack.c.b16 %v11500, %v11498
    %v11547 = vpack.c.b16 %v11501, %v11499
    %v11548 = vpack.c.b16 %v11504, %v11502
    %v11549 = vpack.c.b16 %v11505, %v11503
    %v11550 = vpack.c.b16 %v11508, %v11506
    %v11551 = vpack.c.b16 %v11509, %v11507
    %v11552 = vpack.c.b16 %v11512, %v11510
    %v11553 = vpack.c.b16 %v11513, %v11511
    %v11554 = vpack.c.b16 %v11516, %v11514
    %v11555 = vpack.c.b16 %v11517, %v11515
    %v11556 = vpack.c.b16 %v11520, %v11518
    %v11557 = vpack.c.b16 %v11521, %v11519
    %v11558 = vpack.c.b16 %v11524, %v11522
    %v11559 = vpack.c.b16 %v11525, %v11523
    %v11560 = vpack.c.b16 %v11528, %v11526
    %v11561 = vpack.c.b16 %v11529, %v11527
    %v11562 = vpack.c.b16 %v11532, %v11530
    %v11563 = vpack.c.b16 %v11533, %v11531
    %v11564 = vpack.c.b16 %v11536, %v11534
    %v11565 = vpack.c.b16 %v11537, %v11535
    %v11595 = vsel %vm719, %v11452, 0
    %11597 = vmatpush.bf16.msra.mxu0 %v11552
    %11598 = vmatpush.bf16.msra.mxu0 %v11550
    %11599 = vmatpush.bf16.msra.mxu0 %v11548
    %11600 = vmatpush.bf16.msra.mxu0 %v11546
    %11601 = vmatpush.bf16.msra.mxu0 %v11544
    %11602 = vmatpush.bf16.msra.mxu0 %v11542
    %11603 = vmatpush.bf16.msra.mxu0 %v11540
    %11604 = vmatpush.bf16.msra.mxu0 %v11538
    %11605 = vmatmul.bf16.gmra.mxu0 %v10559
    %v11606 = vpop.f32.mrf.mxu0
    %v11607 = vadd.f32 0.0, %v11606
    %v11608 = vpop.f32.mrf.mxu0
    %v11609 = vadd.f32 0.0, %v11608
    %11610 = vmatmul.bf16.gmra.mxu0 %v10561
    %v11611 = vpop.f32.mrf.mxu0
    %v11612 = vadd.f32 0.0, %v11611
    %v11613 = vpop.f32.mrf.mxu0
    %v11614 = vadd.f32 0.0, %v11613
    %11615 = vmatmul.bf16.gmra.mxu0 %v11138
    %v11616 = vpop.f32.mrf.mxu0
    %v11617 = vadd.f32 0.0, %v11616
    %v11618 = vpop.f32.mrf.mxu0
    %v11619 = vadd.f32 0.0, %v11618
    %11620 = vmatmul.bf16.gmra.mxu0 %v11451
    %v11621 = vpop.f32.mrf.mxu0
    %v11622 = vadd.f32 0.0, %v11621
    %v11623 = vpop.f32.mrf.mxu0
    %v11624 = vadd.f32 0.0, %v11623
    %11625 = vdwg.mxu0
    %11626 = vmatpush.bf16.msra.mxu0 0
    %11627 = vmatpush.bf16.msra.mxu0 0
    %11628 = vmatpush.bf16.msra.mxu0 %v11564
    %11629 = vmatpush.bf16.msra.mxu0 %v11562
    %11630 = vmatpush.bf16.msra.mxu0 %v11560
    %11631 = vmatpush.bf16.msra.mxu0 %v11558
    %11632 = vmatpush.bf16.msra.mxu0 %v11556
    %11633 = vmatpush.bf16.msra.mxu0 %v11554
    %11634 = vmatmul.bf16.gmra.mxu0 %v10714
    %v11635 = vpop.f32.mrf.mxu0
    %v11636 = vadd.f32 %v11607, %v11635
    %v11637 = vpop.f32.mrf.mxu0
    %v11638 = vadd.f32 %v11609, %v11637
    %11639 = vmatmul.bf16.gmra.mxu0 %v10717
    %v11640 = vpop.f32.mrf.mxu0
    %v11641 = vadd.f32 %v11612, %v11640
    %v11642 = vpop.f32.mrf.mxu0
    %v11643 = vadd.f32 %v11614, %v11642
    %11644 = vmatmul.bf16.gmra.mxu0 %v11282
    %v11645 = vpop.f32.mrf.mxu0
    %v11646 = vadd.f32 %v11617, %v11645
    %v11647 = vpop.f32.mrf.mxu0
    %v11648 = vadd.f32 %v11619, %v11647
    %11649 = vmatmul.bf16.gmra.mxu0 %v11595
    %v11650 = vpop.f32.mrf.mxu0
    %v11651 = vadd.f32 %v11622, %v11650
    %v11652 = vpop.f32.mrf.mxu0
    %v11653 = vadd.f32 %v11624, %v11652
    %11654 = vdwg.mxu0
    %11655 = vmatpush.bf16.msra.mxu0 %v11553
    %11656 = vmatpush.bf16.msra.mxu0 %v11551
    %11657 = vmatpush.bf16.msra.mxu0 %v11549
    %11658 = vmatpush.bf16.msra.mxu0 %v11547
    %11659 = vmatpush.bf16.msra.mxu0 %v11545
    %11660 = vmatpush.bf16.msra.mxu0 %v11543
    %11661 = vmatpush.bf16.msra.mxu0 %v11541
    %11662 = vmatpush.bf16.msra.mxu0 %v11539
    %11663 = vmatmul.bf16.gmra.mxu0 %v10559
    %v11664 = vpop.f32.mrf.mxu0
    %v11665 = vadd.f32 0.0, %v11664
    %v11666 = vpop.f32.mrf.mxu0
    %v11667 = vadd.f32 0.0, %v11666
    %11668 = vmatmul.bf16.gmra.mxu0 %v10561
    %v11669 = vpop.f32.mrf.mxu0
    %v11670 = vadd.f32 0.0, %v11669
    %v11671 = vpop.f32.mrf.mxu0
    %v11672 = vadd.f32 0.0, %v11671
    %11673 = vmatmul.bf16.gmra.mxu0 %v11138
    %v11674 = vpop.f32.mrf.mxu0
    %v11675 = vadd.f32 0.0, %v11674
    %v11676 = vpop.f32.mrf.mxu0
    %v11677 = vadd.f32 0.0, %v11676
    %11678 = vmatmul.bf16.gmra.mxu0 %v11451
    %v11679 = vpop.f32.mrf.mxu0
    %v11680 = vadd.f32 0.0, %v11679
    %v11681 = vpop.f32.mrf.mxu0
    %v11682 = vadd.f32 0.0, %v11681
    %11683 = vdwg.mxu0
    %11684 = vmatpush.bf16.msra.mxu0 0
    %11685 = vmatpush.bf16.msra.mxu0 0
    %11686 = vmatpush.bf16.msra.mxu0 %v11565
    %11687 = vmatpush.bf16.msra.mxu0 %v11563
    %11688 = vmatpush.bf16.msra.mxu0 %v11561
    %11689 = vmatpush.bf16.msra.mxu0 %v11559
    %11690 = vmatpush.bf16.msra.mxu0 %v11557
    %11691 = vmatpush.bf16.msra.mxu0 %v11555
    %11692 = vmatmul.bf16.gmra.mxu0 %v10714
    %v11693 = vpop.f32.mrf.mxu0
    %v11694 = vadd.f32 %v11665, %v11693
    %v11695 = vpop.f32.mrf.mxu0
    %v11696 = vadd.f32 %v11667, %v11695
    %11697 = vmatmul.bf16.gmra.mxu0 %v10717
    %v11698 = vpop.f32.mrf.mxu0
    %v11699 = vadd.f32 %v11670, %v11698
    %v11700 = vpop.f32.mrf.mxu0
    %v11701 = vadd.f32 %v11672, %v11700
    %11702 = vmatmul.bf16.gmra.mxu0 %v11282
    %v11703 = vpop.f32.mrf.mxu0
    %v11704 = vadd.f32 %v11675, %v11703
    %v11705 = vpop.f32.mrf.mxu0
    %v11706 = vadd.f32 %v11677, %v11705
    %11707 = vmatmul.bf16.gmra.mxu0 %v11595
    %v11708 = vpop.f32.mrf.mxu0
    %v11709 = vadd.f32 %v11680, %v11708
    %v11710 = vpop.f32.mrf.mxu0
    %v11711 = vadd.f32 %v11682, %v11710
    %11712 = vdwg.mxu0
    %v11713 = vadd.f32 %v11400, %v11636
    %v11714 = vadd.f32 %v11401, %v11694
    %v11715 = vadd.f32 %v11402, %v11638
    %v11716 = vadd.f32 %v11403, %v11696
    %v11717 = vadd.f32 %v11404, %v11641
    %v11718 = vadd.f32 %v11405, %v11699
    %v11719 = vadd.f32 %v11406, %v11643
    %v11720 = vadd.f32 %v11407, %v11701
    %v11721 = vadd.f32 %v11408, %v11646
    %v11722 = vadd.f32 %v11409, %v11704
    %v11723 = vadd.f32 %v11410, %v11648
    %v11724 = vadd.f32 %v11411, %v11706
    %v11725 = vadd.f32 %v11412, %v11651
    %v11726 = vadd.f32 %v11413, %v11709
    %v11727 = vadd.f32 %v11414, %v11653
    %v11728 = vadd.f32 %v11415, %v11711
    %v11729 = vld [vmem:[#allocation11] sm:$0x3]
    %v11731 = vperm.slane %v11729, 0
    %v11732 = vperm.slane %v11729, 1
    %v11735 = vadd.f32 %v11713, %v11731
    %v11736 = vadd.f32 %v11714, %v11732
    %v11737 = vadd.f32 %v11715, %v11731
    %v11738 = vadd.f32 %v11716, %v11732
    %v11739 = vadd.f32 %v11717, %v11731
    %v11740 = vadd.f32 %v11718, %v11732
    %v11741 = vadd.f32 %v11719, %v11731
    %v11742 = vadd.f32 %v11720, %v11732
    %v11743 = vadd.f32 %v11721, %v11731
    %v11744 = vadd.f32 %v11722, %v11732
    %v11745 = vadd.f32 %v11723, %v11731
    %v11746 = vadd.f32 %v11724, %v11732
    %v11747 = vadd.f32 %v11725, %v11731
    %v11748 = vadd.f32 %v11726, %v11732
    %v11749 = vadd.f32 %v11727, %v11731
    %v11750 = vadd.f32 %v11728, %v11732
    %v11751 = vmax.f32 %v11735, 0.0
    %v11752 = vmax.f32 %v11736, 0.0
    %v11753 = vmax.f32 %v11737, 0.0
    %v11754 = vmax.f32 %v11738, 0.0
    %v11755 = vmax.f32 %v11739, 0.0
    %v11756 = vmax.f32 %v11740, 0.0
    %v11757 = vmax.f32 %v11741, 0.0
    %v11758 = vmax.f32 %v11742, 0.0
    %v11759 = vmax.f32 %v11743, 0.0
    %v11760 = vmax.f32 %v11744, 0.0
    %v11761 = vmax.f32 %v11745, 0.0
    %v11762 = vmax.f32 %v11746, 0.0
    %v11763 = vmax.f32 %v11747, 0.0
    %v11764 = vmax.f32 %v11748, 0.0
    %v11765 = vmax.f32 %v11749, 0.0
    %v11766 = vmax.f32 %v11750, 0.0
    %v11767 = vpack.c.bf16 %v11752, %v11751
    %v11768 = vpack.c.bf16 %v11754, %v11753
    %v11769 = vpack.c.bf16 %v11756, %v11755
    %v11770 = vpack.c.bf16 %v11758, %v11757
    %v11771 = vpack.c.bf16 %v11760, %v11759
    %v11772 = vpack.c.bf16 %v11762, %v11761
    %v11773 = vpack.c.bf16 %v11764, %v11763
    %v11774 = vpack.c.bf16 %v11766, %v11765
    %v11775 = vunpack.c.l.bf16 %v11767
    %v11776 = vunpack.c.h.bf16 %v11767
    %v11777 = vunpack.c.l.bf16 %v11768
    %v11778 = vunpack.c.h.bf16 %v11768
    %v11779 = vunpack.c.l.bf16 %v11771
    %v11780 = vunpack.c.h.bf16 %v11771
    %v11781 = vunpack.c.l.bf16 %v11772
    %v11782 = vunpack.c.h.bf16 %v11772
    %v11783 = vunpack.c.l.bf16 %v11769
    %v11784 = vunpack.c.h.bf16 %v11769
    %v11785 = vunpack.c.l.bf16 %v11770
    %v11786 = vunpack.c.h.bf16 %v11770
    %v11787 = vunpack.c.l.bf16 %v11773
    %v11788 = vunpack.c.h.bf16 %v11773
    %v11789 = vunpack.c.l.bf16 %v11774
    %v11790 = vunpack.c.h.bf16 %v11774
    %v11791 = vmax.f32 %v11775, %v11783
    %v11792 = vmax.f32 %v11776, %v11784
    %v11793 = vmax.f32 %v11777, %v11785
    %v11794 = vmax.f32 %v11778, %v11786
    %v11795 = vmax.f32 %v11779, %v11787
    %v11796 = vmax.f32 %v11780, %v11788
    %v11797 = vmax.f32 %v11781, %v11789
    %v11798 = vmax.f32 %v11782, %v11790
    %v11799 = vpack.c.bf16 %v11792, %v11791
    %v11800 = vpack.c.bf16 %v11794, %v11793
    %v11801 = vpack.c.bf16 %v11796, %v11795
    %v11802 = vpack.c.bf16 %v11798, %v11797
    %v11803 = vunpack.c.l.bf16 %v11799
    %v11804 = vunpack.c.l.bf16 %v11800
    %v11805 = vunpack.c.l.bf16 %v11801
    %v11806 = vunpack.c.l.bf16 %v11802
    %v11811 = vrot.slane %v11799, 4
    %v11812 = vrot.slane %v11800, 4
    %v11813 = vrot.slane %v11801, 4
    %v11814 = vrot.slane %v11802, 4
    %v11819 = vunpack.c.l.bf16 %v11811
    %v11820 = vunpack.c.l.bf16 %v11812
    %v11821 = vunpack.c.l.bf16 %v11813
    %v11822 = vunpack.c.l.bf16 %v11814
    %v11823 = vmax.f32 %v11803, %v11819
    %v11824 = vmax.f32 %v11804, %v11820
    %v11825 = vmax.f32 %v11805, %v11821
    %v11826 = vmax.f32 %v11806, %v11822
    %v11827 = vpack.c.bf16 %v11823, %v11823
    %v11828 = vpack.c.bf16 %v11824, %v11824
    %v11829 = vpack.c.bf16 %v11825, %v11825
    %v11830 = vpack.c.bf16 %v11826, %v11826
    %v11831 = vld [vmem:[#allocation13] sm:$0xf]
    %v11832 = vld [vmem:[#allocation13 + $0x4] sm:$0xf]
    %v11833 = vld [vmem:[#allocation13 + $0x8] sm:$0xf]
    %v11834 = vld [vmem:[#allocation13 + $0xc] sm:$0xf]
    %v11835 = vld [vmem:[#allocation13 + $0x10] sm:$0xf]
    %v11836 = vld [vmem:[#allocation13 + $0x14] sm:$0xf]
    %v11837 = vld [vmem:[#allocation13 + $0x18] sm:$0xf]
    %v11838 = vld [vmem:[#allocation13 + $0x1c] sm:$0xf]
    %v11839 = vld [vmem:[#allocation13 + $0x20] sm:$0xf]
    %v11840 = vld [vmem:[#allocation13 + $0x24] sm:$0xf]
    %v11841 = vld [vmem:[#allocation13 + $0x28] sm:$0xf]
    %v11842 = vld [vmem:[#allocation13 + $0x2c] sm:$0xf]
    %v11843 = vld [vmem:[#allocation13 + $0x30] sm:$0xf]
    %v11844 = vld [vmem:[#allocation13 + $0x34] sm:$0xf]
    %v11845 = vld [vmem:[#allocation13 + $0x38] sm:$0xf]
    %v11846 = vld [vmem:[#allocation13 + $0x3c] sm:$0xf]
    %s11847 = scalar_lea.vmem [#allocation13], 64
    %v11848 = vld [vmem:[%s11847] sm:$0xf]
    %v11849 = vld [vmem:[%s11847 + $0x4] sm:$0xf]
    %v11850 = vld [vmem:[%s11847 + $0x8] sm:$0xf]
    %v11851 = vld [vmem:[%s11847 + $0xc] sm:$0xf]
    %v11852 = vld [vmem:[%s11847 + $0x10] sm:$0xf]
    %v11853 = vld [vmem:[%s11847 + $0x14] sm:$0xf]
    %v11854 = vld [vmem:[%s11847 + $0x18] sm:$0xf]
    %v11855 = vld [vmem:[%s11847 + $0x1c] sm:$0xf]
    %v11856 = vld [vmem:[%s11847 + $0x20] sm:$0xf]
    %v11857 = vld [vmem:[%s11847 + $0x24] sm:$0xf]
    %v11858 = vld [vmem:[%s11847 + $0x28] sm:$0xf]
    %v11859 = vld [vmem:[%s11847 + $0x2c] sm:$0xf]
    %v11860 = vld [vmem:[%s11847 + $0x30] sm:$0xf]
    %v11861 = vld [vmem:[%s11847 + $0x34] sm:$0xf]
    %v11862 = vld [vmem:[%s11847 + $0x38] sm:$0xf]
    %v11863 = vld [vmem:[%s11847 + $0x3c] sm:$0xf]
    %v11866 = vunpack.c.l.b16 %v11829
    %v11867 = vunpack.c.l.b16 %v11830
    %v11868 = vpack.c.b16 %v11867, %v11866
    %v11886 = vunpack.c.l.b16 %v11848
    %v11887 = vunpack.c.l.b16 %v11849
    %v11888 = vunpack.c.l.b16 %v11850
    %v11889 = vunpack.c.l.b16 %v11851
    %v11890 = vunpack.c.l.b16 %v11852
    %v11891 = vunpack.c.l.b16 %v11853
    %v11892 = vunpack.c.l.b16 %v11854
    %v11893 = vunpack.c.l.b16 %v11855
    %v11894 = vunpack.c.l.b16 %v11856
    %v11895 = vunpack.c.l.b16 %v11857
    %v11896 = vunpack.c.l.b16 %v11858
    %v11897 = vunpack.c.l.b16 %v11859
    %v11898 = vunpack.c.l.b16 %v11860
    %v11899 = vunpack.c.l.b16 %v11861
    %v11900 = vunpack.c.l.b16 %v11862
    %v11901 = vunpack.c.l.b16 %v11863
    %v11902 = vpack.c.b16 %v11887, %v11886
    %v11903 = vpack.c.b16 %v11889, %v11888
    %v11904 = vpack.c.b16 %v11891, %v11890
    %v11905 = vpack.c.b16 %v11893, %v11892
    %v11906 = vpack.c.b16 %v11895, %v11894
    %v11907 = vpack.c.b16 %v11897, %v11896
    %v11908 = vpack.c.b16 %v11899, %v11898
    %v11909 = vpack.c.b16 %v11901, %v11900
    %11918 = vmatpush.bf16.msra.mxu0 %v11909
    %11919 = vmatpush.bf16.msra.mxu0 %v11908
    %11920 = vmatpush.bf16.msra.mxu0 %v11907
    %11921 = vmatpush.bf16.msra.mxu0 %v11906
    %11922 = vmatpush.bf16.msra.mxu0 %v11905
    %11923 = vmatpush.bf16.msra.mxu0 %v11904
    %11924 = vmatpush.bf16.msra.mxu0 %v11903
    %11925 = vmatpush.bf16.msra.mxu0 %v11902
    %11926 = vmatmul.bf16.gmra.mxu0 %v11868
    %v11927 = vpop.f32.mrf.mxu0
    %v11928 = vadd.f32 0.0, %v11927
    %v11929 = vpop.f32.mrf.mxu0
    %v11930 = vadd.f32 0.0, %v11929
    %11931 = vdwg.mxu0
    %v11934 = vunpack.c.l.b16 %v11827
    %v11935 = vunpack.c.l.b16 %v11828
    %v11936 = vpack.c.b16 %v11935, %v11934
    %v11954 = vunpack.c.l.b16 %v11831
    %v11955 = vunpack.c.l.b16 %v11832
    %v11956 = vunpack.c.l.b16 %v11833
    %v11957 = vunpack.c.l.b16 %v11834
    %v11958 = vunpack.c.l.b16 %v11835
    %v11959 = vunpack.c.l.b16 %v11836
    %v11960 = vunpack.c.l.b16 %v11837
    %v11961 = vunpack.c.l.b16 %v11838
    %v11962 = vunpack.c.l.b16 %v11839
    %v11963 = vunpack.c.l.b16 %v11840
    %v11964 = vunpack.c.l.b16 %v11841
    %v11965 = vunpack.c.l.b16 %v11842
    %v11966 = vunpack.c.l.b16 %v11843
    %v11967 = vunpack.c.l.b16 %v11844
    %v11968 = vunpack.c.l.b16 %v11845
    %v11969 = vunpack.c.l.b16 %v11846
    %v11970 = vpack.c.b16 %v11955, %v11954
    %v11971 = vpack.c.b16 %v11957, %v11956
    %v11972 = vpack.c.b16 %v11959, %v11958
    %v11973 = vpack.c.b16 %v11961, %v11960
    %v11974 = vpack.c.b16 %v11963, %v11962
    %v11975 = vpack.c.b16 %v11965, %v11964
    %v11976 = vpack.c.b16 %v11967, %v11966
    %v11977 = vpack.c.b16 %v11969, %v11968
    %11986 = vmatpush.bf16.msra.mxu0 %v11977
    %11987 = vmatpush.bf16.msra.mxu0 %v11976
    %11988 = vmatpush.bf16.msra.mxu0 %v11975
    %11989 = vmatpush.bf16.msra.mxu0 %v11974
    %11990 = vmatpush.bf16.msra.mxu0 %v11973
    %11991 = vmatpush.bf16.msra.mxu0 %v11972
    %11992 = vmatpush.bf16.msra.mxu0 %v11971
    %11993 = vmatpush.bf16.msra.mxu0 %v11970
    %11994 = vmatmul.bf16.gmra.mxu0 %v11936
    %v11995 = vpop.f32.mrf.mxu0
    %v11996 = vadd.f32 %v11928, %v11995
    %v11997 = vpop.f32.mrf.mxu0
    %v11998 = vadd.f32 %v11930, %v11997
    %11999 = vdwg.mxu0
    %v12000 = vld [vmem:[#allocation14] sm:$0x1]
    %v12002 = vperm.slane %v12000, 0
    %v12004 = vadd.f32 %v11996, %v12002
    %v12005 = vadd.f32 %v11998, %v12002
    %v12006 = vmax.f32 %v12004, 0.0
    %v12007 = vmax.f32 %v12005, 0.0
    %v12008 = vpack.c.bf16 %v12007, %v12006
    %v12009 = vld [vmem:[#allocation16] sm:$0xf]
    %v12010 = vld [vmem:[#allocation16 + $0x4] sm:$0xf]
    %v12011 = vld [vmem:[#allocation16 + $0x8] sm:$0xf]
    %v12012 = vld [vmem:[#allocation16 + $0xc] sm:$0xf]
    %v12013 = vld [vmem:[#allocation16 + $0x10] sm:$0xf]
    %v12014 = vld [vmem:[#allocation16 + $0x14] sm:$0xf]
    %v12015 = vld [vmem:[#allocation16 + $0x18] sm:$0xf]
    %v12016 = vld [vmem:[#allocation16 + $0x1c] sm:$0xf]
    %v12017 = vld [vmem:[#allocation16 + $0x20] sm:$0xf]
    %v12018 = vld [vmem:[#allocation16 + $0x24] sm:$0xf]
    %v12019 = vld [vmem:[#allocation16 + $0x28] sm:$0xf]
    %v12020 = vld [vmem:[#allocation16 + $0x2c] sm:$0xf]
    %v12021 = vld [vmem:[#allocation16 + $0x30] sm:$0xf]
    %v12022 = vld [vmem:[#allocation16 + $0x34] sm:$0xf]
    %v12023 = vld [vmem:[#allocation16 + $0x38] sm:$0xf]
    %v12024 = vld [vmem:[#allocation16 + $0x3c] sm:$0xf]
    %v12025 = vld [vmem:[#allocation17] sm:$0x1]
    %v12027 = vperm.slane %v12025, 0
    %v12045 = vunpack.c.l.b16 %v12009
    %v12046 = vunpack.c.l.b16 %v12010
    %v12047 = vunpack.c.l.b16 %v12011
    %v12048 = vunpack.c.l.b16 %v12012
    %v12049 = vunpack.c.l.b16 %v12013
    %v12050 = vunpack.c.l.b16 %v12014
    %v12051 = vunpack.c.l.b16 %v12015
    %v12052 = vunpack.c.l.b16 %v12016
    %v12053 = vunpack.c.l.b16 %v12017
    %v12054 = vunpack.c.l.b16 %v12018
    %v12055 = vunpack.c.l.b16 %v12019
    %v12056 = vunpack.c.l.b16 %v12020
    %v12057 = vunpack.c.l.b16 %v12021
    %v12058 = vunpack.c.l.b16 %v12022
    %v12059 = vunpack.c.l.b16 %v12023
    %v12060 = vunpack.c.l.b16 %v12024
    %v12061 = vpack.c.b16 %v12046, %v12045
    %v12062 = vpack.c.b16 %v12048, %v12047
    %v12063 = vpack.c.b16 %v12050, %v12049
    %v12064 = vpack.c.b16 %v12052, %v12051
    %v12065 = vpack.c.b16 %v12054, %v12053
    %v12066 = vpack.c.b16 %v12056, %v12055
    %v12067 = vpack.c.b16 %v12058, %v12057
    %v12068 = vpack.c.b16 %v12060, %v12059
    %12077 = vmatpush.bf16.msra.mxu0 %v12068
    %12078 = vmatpush.bf16.msra.mxu0 %v12067
    %12079 = vmatpush.bf16.msra.mxu0 %v12066
    %12080 = vmatpush.bf16.msra.mxu0 %v12065
    %12081 = vmatpush.bf16.msra.mxu0 %v12064
    %12082 = vmatpush.bf16.msra.mxu0 %v12063
    %12083 = vmatpush.bf16.msra.mxu0 %v12062
    %12084 = vmatpush.bf16.msra.mxu0 %v12061
    %12085 = vmatmul.bf16.gmra.mxu0 %v12008
    %v12086 = vpop.f32.mrf.mxu0
    %v12087 = vadd.f32 %v12027, %v12086
    %v12088 = vpop.f32.mrf.mxu0
    %v12089 = vadd.f32 %v12027, %v12088
    %12090 = vdwg.mxu0
    %12091 = vst [vmem:[%s11] sm:$0xff] %v12087
    %12092 = vst [vmem:[%s11 + $0x8] sm:$0xff] %v12089
    // Predicated region
    $region86: #{cnn_forward.1} parent=1 // pred_check
      _
    $region87: #{cnn_forward.1} parent=1 // pred_check_branch
      %12094 = sbr.rel (0) target = $region89
    $region88: #{cnn_forward.1} parent=1 // pred_region
      _
    $region89: #{cnn_forward.1} parent=1 // pred_fallthru
      _
    // Predicated region
    $region90: #{cnn_forward.1} parent=1 // pred_check
      _
    $region91: #{cnn_forward.1} parent=1 // pred_check_branch
      %12096 = sbr.rel (0) target = $region93
    $region92: #{cnn_forward.1} parent=1 // pred_region
      _
    $region93: #{cnn_forward.1} parent=1 // pred_fallthru
      _
    %12097 = vsyncpa [#allocation4], 1
    %12098 = vsyncpa [#allocation6], 1
    %12099 = vsyncpa [#allocation9], 1
    %12100 = vsyncpa [#allocation12], 1
    %12101 = vsyncpa [#allocation15], 1
    %12102 = vsyncpa [#allocation18], 1

</llo_original>
